<compile_context>
chip_gen: v5e
topology: v5e:2x2
jax: 0.10.0
libtpu: 0.0.40
codegen_flags: <defaults>
</compile_context>

<pallas_src>
import functools

import jax
import jax.numpy as jnp
from jax import lax
from jax.experimental import pallas as pl
from jax.experimental.pallas import tpu as pltpu


# ----------------------------------------------------------------------------
# Kernel
# ----------------------------------------------------------------------------
def _conv_sequence_kernel(mxu_dtype,
                          xpad_ref, sel_ref,
                          cw_ref, cb_ref,
                          r1w1_ref, r1b1_ref, r1w2_ref, r1b2_ref,
                          r2w1_ref, r2b1_ref, r2w2_ref, r2b2_ref,
                          out_ref,
                          cpad_ref, hpad_ref):
    B, Hp, Wp, _ = xpad_ref.shape
    H, W = Hp - 2, Wp - 2
    _, Hop, Wop, Cout = hpad_ref.shape
    Ho, Wo = Hop - 2, Wop - 2

    def conv3x3(xp, w_ref, b_ref, hh, ww):
        """3x3 'same' conv on an already padded (B, hh+2, ww+2, cin) tile.

        Batch folded into the matmul M dim; the 9 taps are lane-concatenated
        into a single K = 9*cin contraction (one MXU dot per conv).
        f32 accumulate, f32 bias add.
        """
        cin = xp.shape[-1]
        taps = [xp[:, ky:ky + hh, kx:kx + ww, :]
                for ky in range(3) for kx in range(3)]
        patch = jnp.concatenate(taps, axis=-1).reshape(B * hh * ww, 9 * cin)
        y = jnp.dot(patch, w_ref[...], preferred_element_type=jnp.float32)
        return y + b_ref[...]

    # ---- stem conv (input already in mxu_dtype; no activation) --------------
    c = conv3x3(xpad_ref[...], cw_ref, cb_ref, H, W)        # (B*H*W, Cout) f32

    # ---- MaxPool2d(kernel=3, stride=2, padding=1) ----------------------------
    # -inf ring: only the border strips are rewritten each step (interior is
    # fully overwritten below before any read).
    ninf_row = jnp.full((B, 1, W + 2, Cout), -jnp.inf, jnp.float32)
    cpad_ref[:, 0:1, :, :] = ninf_row
    cpad_ref[:, H + 1:H + 2, :, :] = ninf_row
    ninf_col = jnp.full((B, H + 2, 1, Cout), -jnp.inf, jnp.float32)
    cpad_ref[:, :, 0:1, :] = ninf_col
    cpad_ref[:, :, W + 1:W + 2, :] = ninf_col
    cpad_ref[:, 1:H + 1, 1:W + 1, :] = c.reshape(B, H, W, Cout)

    cp = cpad_ref[...]
    dense = cp[:, 0:H, 0:W, :]
    for t in range(1, 9):                    # dense 3x3 max at full resolution
        ky, kx = divmod(t, 3)
        dense = jnp.maximum(dense, cp[:, ky:ky + H, kx:kx + W, :])
    # Stride-2 subsample via the hoisted one-hot selection matmul.  `dense`
    # is finite everywhere (each full-res window contains its real centre
    # pixel), so 0 * x never produces NaN.
    dense_m = dense.astype(mxu_dtype)
    pooled = [jnp.dot(sel_ref[...], dense_m[b].reshape(H * W, Cout),
                      preferred_element_type=jnp.float32)
              for b in range(B)]
    x = jnp.concatenate(pooled, axis=0)                     # (B*Ho*Wo, Cout) f32

    # ---- residual blocks (all intermediates stay in VMEM) --------------------
    # Zero ring in mxu_dtype (relu(0)=0 keeps it valid); border-only rewrite.
    zrow = jnp.zeros((B, 1, Wo + 2, Cout), mxu_dtype)
    hpad_ref[:, 0:1, :, :] = zrow
    hpad_ref[:, Ho + 1:Ho + 2, :, :] = zrow
    zcol = jnp.zeros((B, Ho + 2, 1, Cout), mxu_dtype)
    hpad_ref[:, :, 0:1, :] = zcol
    hpad_ref[:, :, Wo + 1:Wo + 2, :] = zcol

    def res_block(x_in, w1_ref, b1_ref, w2_ref, b2_ref):
        # y = conv2(relu(conv1(relu(x)))) + x ; the cast to mxu_dtype happens
        # only at the scratch-ring write (the MXU boundary); elementwise math
        # stays f32.
        hpad_ref[:, 1:Ho + 1, 1:Wo + 1, :] = (
            jnp.maximum(x_in, 0.0).reshape(B, Ho, Wo, Cout).astype(mxu_dtype))
        h = conv3x3(hpad_ref[...], w1_ref, b1_ref, Ho, Wo)
        hpad_ref[:, 1:Ho + 1, 1:Wo + 1, :] = (
            jnp.maximum(h, 0.0).reshape(B, Ho, Wo, Cout).astype(mxu_dtype))
        y = conv3x3(hpad_ref[...], w2_ref, b2_ref, Ho, Wo)
        return y + x_in

    x = res_block(x, r1w1_ref, r1b1_ref, r1w2_ref, r1b2_ref)
    x = res_block(x, r2w1_ref, r2b1_ref, r2w2_ref, r2b2_ref)

    # Lane-dense store: (B*Ho*Wo, Cout) -> (Cout, B*Ho*Wo) puts pixels in the
    # lane dimension (last dim a multiple of 128) instead of masked
    # 8-of-128-lane stores.
    out_ref[...] = x.T


# ----------------------------------------------------------------------------
# Wrapper: NCHW in / NCHW out, matching the PyTorch ConvSequence.
# ----------------------------------------------------------------------------
def _flat_w(w, dtype):
    """HWIO (3,3,ci,co) -> (9*ci, co), tap-major (matches the in-kernel concat)."""
    kh, kw, ci, co = w.shape
    return w.reshape(kh * kw * ci, co).astype(dtype)


def conv_sequence(x_nchw, params, *, mxu_dtype=jnp.bfloat16, batch_block=8):
    x = jnp.transpose(x_nchw, (0, 2, 3, 1)).astype(jnp.float32)    # NCHW->NHWC
    N, H, W, Cin = x.shape
    Cout = params["conv_w"].shape[-1]
    Ho = (H - 1) // 2 + 1
    Wo = (W - 1) // 2 + 1

    # Batch blocking: B_blk images per grid step.
    B_blk = max(1, min(batch_block, N))
    n_blocks = -(-N // B_blk)
    if n_blocks > 1 and (B_blk * Ho * Wo) % 128 != 0:
        B_blk, n_blocks = N, 1           # keep the lane-dense out block legal
    N_pad = n_blocks * B_blk
    if N_pad != N:
        x = jnp.pad(x, ((0, N_pad - N), (0, 0), (0, 0), (0, 0)))

    # Zero-pad once in HBM for the stem conv; cast to mxu_dtype here so the
    # input DMA moves half the bytes on the bf16 path.
    xpad = jnp.pad(x, ((0, 0), (1, 1), (1, 1), (0, 0))).astype(mxu_dtype)

    # Hoisted stride-2 one-hot selection matrix (0/1 are exact in bf16).
    r = jnp.arange(Ho * Wo, dtype=jnp.int32)[:, None]
    m = jnp.arange(H * W, dtype=jnp.int32)[None, :]
    tgt = 2 * (r // Wo) * W + 2 * (r % Wo)
    sel = (m == tgt).astype(mxu_dtype)

    cw = _flat_w(params["conv_w"], mxu_dtype)
    cb = params["conv_b"].reshape(1, Cout).astype(jnp.float32)
    res_args = []
    for key in ("res1", "res2"):
        p = params[key]
        res_args += [_flat_w(p["w1"], mxu_dtype),
                     p["b1"].reshape(1, Cout).astype(jnp.float32),
                     _flat_w(p["w2"], mxu_dtype),
                     p["b2"].reshape(1, Cout).astype(jnp.float32)]

    inputs = [xpad, sel, cw, cb] + res_args

    def const_spec(a):
        nd = a.ndim
        return pl.BlockSpec(a.shape, lambda n, _nd=nd: (0,) * _nd)

    in_specs = [pl.BlockSpec((B_blk, H + 2, W + 2, Cin),
                             lambda n: (n, 0, 0, 0))]
    in_specs += [const_spec(a) for a in inputs[1:]]

    out = pl.pallas_call(
        functools.partial(_conv_sequence_kernel, mxu_dtype),
        out_shape=jax.ShapeDtypeStruct((Cout, N_pad * Ho * Wo), jnp.float32),
        grid=(n_blocks,),
        in_specs=in_specs,
        out_specs=pl.BlockSpec((Cout, B_blk * Ho * Wo), lambda n: (0, n)),
        scratch_shapes=[
            pltpu.VMEM((B_blk, H + 2, W + 2, Cout), jnp.float32),   # -inf ring
            pltpu.VMEM((B_blk, Ho + 2, Wo + 2, Cout), mxu_dtype),   # zero ring
        ],
        compiler_params=pltpu.CompilerParams(
            dimension_semantics=("parallel",)),     # megacore sharding on v7x
    )(*inputs)

    out = out.reshape(Cout, N_pad, Ho, Wo)[:, :N]
    return jnp.transpose(out, (1, 0, 2, 3))                         # -> NCHW


# ----------------------------------------------------------------------------
# Pure-JAX reference (for correctness check only).
# ----------------------------------------------------------------------------
def _ref_conv(x, w, b):
    y = lax.conv_general_dilated(
        x, w, window_strides=(1, 1), padding=((1, 1), (1, 1)),
        dimension_numbers=("NHWC", "HWIO", "NHWC"))
    return y + b


def ref_forward(x_nchw, params):
    x = jnp.transpose(x_nchw, (0, 2, 3, 1))
    x = _ref_conv(x, params["conv_w"], params["conv_b"])
    x = lax.reduce_window(x, -jnp.inf, lax.max,
                          window_dimensions=(1, 3, 3, 1),
                          window_strides=(1, 2, 2, 1),
                          padding=((0, 0), (1, 1), (1, 1), (0, 0)))
    for key in ("res1", "res2"):
        p = params[key]
        h = _ref_conv(jax.nn.relu(x), p["w1"], p["b1"])
        x = _ref_conv(jax.nn.relu(h), p["w2"], p["b2"]) + x
    return jnp.transpose(x, (0, 3, 1, 2))


# ----------------------------------------------------------------------------
def make_params(key, input_depth, output_depth):
    ks = jax.random.split(key, 10)

    def w(k, cin, cout):
        return 0.1 * jax.random.normal(k, (3, 3, cin, cout), jnp.float32)

    def b(k, cout):
        return 0.05 * jax.random.normal(k, (cout,), jnp.float32)

    return {
        "conv_w": w(ks[0], input_depth, output_depth),
        "conv_b": b(ks[1], output_depth),
        "res1": {"w1": w(ks[2], output_depth, output_depth), "b1": b(ks[3], output_depth),
                 "w2": w(ks[4], output_depth, output_depth), "b2": b(ks[5], output_depth)},
        "res2": {"w1": w(ks[6], output_depth, output_depth), "b1": b(ks[7], output_depth),
                 "w2": w(ks[8], output_depth, output_depth), "b2": b(ks[9], output_depth)},
    }


if __name__ == "__main__":
    key = jax.random.PRNGKey(0)
    k_x, k_p = jax.random.split(key)

    N, input_depth, H, W = 2, 4, 16, 16
    output_depth = 8

    x = jax.random.normal(k_x, (N, input_depth, H, W), jnp.float32)  # NCHW
    params = make_params(k_p, input_depth, output_depth)

    ref = jax.block_until_ready(ref_forward(x, params))

    # Exact path: f32 MXU inputs (tight tolerance vs. XLA reference).
    out_f32 = jax.block_until_ready(
        jax.jit(functools.partial(conv_sequence, mxu_dtype=jnp.float32))(x, params))
    assert out_f32.shape == (N, output_depth, H // 2, W // 2), out_f32.shape
    assert jnp.allclose(out_f32, ref, atol=5e-4, rtol=1e-4), (
        float(jnp.max(jnp.abs(out_f32 - ref))))

    # Fast path (default): bf16 MXU inputs, f32 accumulate/elementwise.
    out_bf16 = jax.block_until_ready(jax.jit(conv_sequence)(x, params))
    assert out_bf16.shape == (N, output_depth, H // 2, W // 2), out_bf16.shape
    assert jnp.allclose(out_bf16, ref, atol=5e-2, rtol=5e-2), (
        float(jnp.max(jnp.abs(out_bf16 - ref))))

    print("KERNEL_OK")
</pallas_src>

<mosaic_0001>
module attributes {stable_mosaic.version = 11 : i64} {
  func.func @_conv_sequence_kernel(%arg0: i32, %arg1: memref<2x18x18x4xf32, #tpu.memory_space<vmem>>, %arg2: memref<64x256xf32, #tpu.memory_space<vmem>>, %arg3: memref<36x8xf32, #tpu.memory_space<vmem>>, %arg4: memref<1x8xf32, #tpu.memory_space<vmem>>, %arg5: memref<72x8xf32, #tpu.memory_space<vmem>>, %arg6: memref<1x8xf32, #tpu.memory_space<vmem>>, %arg7: memref<72x8xf32, #tpu.memory_space<vmem>>, %arg8: memref<1x8xf32, #tpu.memory_space<vmem>>, %arg9: memref<72x8xf32, #tpu.memory_space<vmem>>, %arg10: memref<1x8xf32, #tpu.memory_space<vmem>>, %arg11: memref<72x8xf32, #tpu.memory_space<vmem>>, %arg12: memref<1x8xf32, #tpu.memory_space<vmem>>, %arg13: memref<8x128xf32, #tpu.memory_space<vmem>>, %arg14: memref<2x18x18x8xf32, #tpu.memory_space<vmem>>, %arg15: memref<2x10x10x8xf32, #tpu.memory_space<vmem>>) attributes {dimension_semantics = [#tpu.dimension_semantics<parallel>], iteration_bounds = array<i64: 1>, scalar_prefetch = 0 : i64, scratch_operands = 2 : i64, tpu.core_type = #tpu.core_type<tc>, window_params = [{transform_indices = @transform_0, window_bounds = array<i64: 2, 18, 18, 4>}, {pipeline_mode = #tpu.pipeline_mode<synchronous>, transform_indices = @transform_1, window_bounds = array<i64: 64, 256>}, {pipeline_mode = #tpu.pipeline_mode<synchronous>, transform_indices = @transform_2, window_bounds = array<i64: 36, 8>}, {pipeline_mode = #tpu.pipeline_mode<synchronous>, transform_indices = @transform_3, window_bounds = array<i64: 1, 8>}, {pipeline_mode = #tpu.pipeline_mode<synchronous>, transform_indices = @transform_4, window_bounds = array<i64: 72, 8>}, {pipeline_mode = #tpu.pipeline_mode<synchronous>, transform_indices = @transform_5, window_bounds = array<i64: 1, 8>}, {pipeline_mode = #tpu.pipeline_mode<synchronous>, transform_indices = @transform_6, window_bounds = array<i64: 72, 8>}, {pipeline_mode = #tpu.pipeline_mode<synchronous>, transform_indices = @transform_7, window_bounds = array<i64: 1, 8>}, {pipeline_mode = #tpu.pipeline_mode<synchronous>, transform_indices = @transform_8, window_bounds = array<i64: 72, 8>}, {pipeline_mode = #tpu.pipeline_mode<synchronous>, transform_indices = @transform_9, window_bounds = array<i64: 1, 8>}, {pipeline_mode = #tpu.pipeline_mode<synchronous>, transform_indices = @transform_10, window_bounds = array<i64: 72, 8>}, {pipeline_mode = #tpu.pipeline_mode<synchronous>, transform_indices = @transform_11, window_bounds = array<i64: 1, 8>}, {transform_indices = @transform_12, window_bounds = array<i64: 8, 128>}]} {
    %c0 = arith.constant 0 : index
    %c0_0 = arith.constant 0 : index
    %c0_1 = arith.constant 0 : index
    %c0_2 = arith.constant 0 : index
    %0 = vector.load %arg1[%c0, %c0_0, %c0_1, %c0_2] : memref<2x18x18x4xf32, #tpu.memory_space<vmem>>, vector<2x18x18x4xf32>
    %1 = vector.extract_strided_slice %0 {offsets = [0, 0, 0, 0], sizes = [2, 16, 16, 4], strides = [1, 1, 1, 1]} : vector<2x18x18x4xf32> to vector<2x16x16x4xf32>
    %2 = vector.extract_strided_slice %0 {offsets = [0, 0, 1, 0], sizes = [2, 16, 16, 4], strides = [1, 1, 1, 1]} : vector<2x18x18x4xf32> to vector<2x16x16x4xf32>
    %3 = vector.extract_strided_slice %0 {offsets = [0, 0, 2, 0], sizes = [2, 16, 16, 4], strides = [1, 1, 1, 1]} : vector<2x18x18x4xf32> to vector<2x16x16x4xf32>
    %4 = vector.extract_strided_slice %0 {offsets = [0, 1, 0, 0], sizes = [2, 16, 16, 4], strides = [1, 1, 1, 1]} : vector<2x18x18x4xf32> to vector<2x16x16x4xf32>
    %5 = vector.extract_strided_slice %0 {offsets = [0, 1, 1, 0], sizes = [2, 16, 16, 4], strides = [1, 1, 1, 1]} : vector<2x18x18x4xf32> to vector<2x16x16x4xf32>
    %6 = vector.extract_strided_slice %0 {offsets = [0, 1, 2, 0], sizes = [2, 16, 16, 4], strides = [1, 1, 1, 1]} : vector<2x18x18x4xf32> to vector<2x16x16x4xf32>
    %7 = vector.extract_strided_slice %0 {offsets = [0, 2, 0, 0], sizes = [2, 16, 16, 4], strides = [1, 1, 1, 1]} : vector<2x18x18x4xf32> to vector<2x16x16x4xf32>
    %8 = vector.extract_strided_slice %0 {offsets = [0, 2, 1, 0], sizes = [2, 16, 16, 4], strides = [1, 1, 1, 1]} : vector<2x18x18x4xf32> to vector<2x16x16x4xf32>
    %9 = vector.extract_strided_slice %0 {offsets = [0, 2, 2, 0], sizes = [2, 16, 16, 4], strides = [1, 1, 1, 1]} : vector<2x18x18x4xf32> to vector<2x16x16x4xf32>
    %10 = tpu.concatenate %1, %2, %3, %4, %5, %6, %7, %8, %9 in 3 : vector<2x16x16x4xf32>, vector<2x16x16x4xf32>, vector<2x16x16x4xf32>, vector<2x16x16x4xf32>, vector<2x16x16x4xf32>, vector<2x16x16x4xf32>, vector<2x16x16x4xf32>, vector<2x16x16x4xf32>, vector<2x16x16x4xf32> -> vector<2x16x16x36xf32>
    %11 = vector.shape_cast %10 : vector<2x16x16x36xf32> to vector<512x36xf32>
    %c0_3 = arith.constant 0 : index
    %c0_4 = arith.constant 0 : index
    %12 = vector.load %arg3[%c0_3, %c0_4] : memref<36x8xf32, #tpu.memory_space<vmem>>, vector<36x8xf32>
    %cst = arith.constant dense<0.000000e+00> : vector<512x8xf32>
    %13 = tpu.matmul %11, %12, %cst {dimension_numbers = #tpu.dot_dimension_numbers<[1], [0], [0], [1], [0, 0, 1, 1], [], []>} : vector<512x36xf32>, vector<36x8xf32>, vector<512x8xf32> -> vector<512x8xf32>
    %c0_5 = arith.constant 0 : index
    %c0_6 = arith.constant 0 : index
    %14 = vector.load %arg4[%c0_5, %c0_6] : memref<1x8xf32, #tpu.memory_space<vmem>>, vector<1x8xf32>
    %15 = vector.broadcast %14 : vector<1x8xf32> to vector<512x8xf32>
    %16 = arith.addf %13, %15 : vector<512x8xf32>
    %cst_7 = arith.constant 0xFF800000 : f32
    %17 = vector.broadcast %cst_7 : f32 to vector<2x1x18x8xf32>
    %c0_8 = arith.constant 0 : index
    %c0_9 = arith.constant 0 : index
    %c0_10 = arith.constant 0 : index
    %c0_11 = arith.constant 0 : index
    %18 = vector.load %arg14[%c0_8, %c0_9, %c0_10, %c0_11] : memref<2x18x18x8xf32, #tpu.memory_space<vmem>>, vector<2x1x18x8xf32>
    tpu.vector_store %arg14[%c0_8, %c0_9, %c0_10, %c0_11], %17 {strides = array<i32>} : memref<2x18x18x8xf32, #tpu.memory_space<vmem>>, vector<2x1x18x8xf32>,
    %c0_12 = arith.constant 0 : index
    %c17 = arith.constant 17 : index
    %c0_13 = arith.constant 0 : index
    %c0_14 = arith.constant 0 : index
    %19 = vector.load %arg14[%c0_12, %c17, %c0_13, %c0_14] : memref<2x18x18x8xf32, #tpu.memory_space<vmem>>, vector<2x1x18x8xf32>
    tpu.vector_store %arg14[%c0_12, %c17, %c0_13, %c0_14], %17 {strides = array<i32>} : memref<2x18x18x8xf32, #tpu.memory_space<vmem>>, vector<2x1x18x8xf32>,
    %cst_15 = arith.constant 0xFF800000 : f32
    %20 = vector.broadcast %cst_15 : f32 to vector<2x18x1x8xf32>
    %c0_16 = arith.constant 0 : index
    %c0_17 = arith.constant 0 : index
    %c0_18 = arith.constant 0 : index
    %c0_19 = arith.constant 0 : index
    %21 = vector.load %arg14[%c0_16, %c0_17, %c0_18, %c0_19] : memref<2x18x18x8xf32, #tpu.memory_space<vmem>>, vector<2x18x1x8xf32>
    tpu.vector_store %arg14[%c0_16, %c0_17, %c0_18, %c0_19], %20 {strides = array<i32>} : memref<2x18x18x8xf32, #tpu.memory_space<vmem>>, vector<2x18x1x8xf32>,
    %c0_20 = arith.constant 0 : index
    %c0_21 = arith.constant 0 : index
    %c17_22 = arith.constant 17 : index
    %c0_23 = arith.constant 0 : index
    %22 = vector.load %arg14[%c0_20, %c0_21, %c17_22, %c0_23] : memref<2x18x18x8xf32, #tpu.memory_space<vmem>>, vector<2x18x1x8xf32>
    tpu.vector_store %arg14[%c0_20, %c0_21, %c17_22, %c0_23], %20 {strides = array<i32>} : memref<2x18x18x8xf32, #tpu.memory_space<vmem>>, vector<2x18x1x8xf32>,
    %23 = vector.shape_cast %16 : vector<512x8xf32> to vector<2x16x16x8xf32>
    %c0_24 = arith.constant 0 : index
    %c1 = arith.constant 1 : index
    %c1_25 = arith.constant 1 : index
    %c0_26 = arith.constant 0 : index
    %24 = vector.load %arg14[%c0_24, %c1, %c1_25, %c0_26] : memref<2x18x18x8xf32, #tpu.memory_space<vmem>>, vector<2x16x16x8xf32>
    tpu.vector_store %arg14[%c0_24, %c1, %c1_25, %c0_26], %23 {strides = array<i32>} : memref<2x18x18x8xf32, #tpu.memory_space<vmem>>, vector<2x16x16x8xf32>,
    %c0_27 = arith.constant 0 : index
    %c0_28 = arith.constant 0 : index
    %c0_29 = arith.constant 0 : index
    %c0_30 = arith.constant 0 : index
    %25 = vector.load %arg14[%c0_27, %c0_28, %c0_29, %c0_30] : memref<2x18x18x8xf32, #tpu.memory_space<vmem>>, vector<2x18x18x8xf32>
    %26 = vector.extract_strided_slice %25 {offsets = [0, 0, 0, 0], sizes = [2, 16, 16, 8], strides = [1, 1, 1, 1]} : vector<2x18x18x8xf32> to vector<2x16x16x8xf32>
    %27 = vector.extract_strided_slice %25 {offsets = [0, 0, 1, 0], sizes = [2, 16, 16, 8], strides = [1, 1, 1, 1]} : vector<2x18x18x8xf32> to vector<2x16x16x8xf32>
    %28 = arith.maximumf %26, %27 : vector<2x16x16x8xf32>
    %29 = vector.extract_strided_slice %25 {offsets = [0, 0, 2, 0], sizes = [2, 16, 16, 8], strides = [1, 1, 1, 1]} : vector<2x18x18x8xf32> to vector<2x16x16x8xf32>
    %30 = arith.maximumf %28, %29 : vector<2x16x16x8xf32>
    %31 = vector.extract_strided_slice %25 {offsets = [0, 1, 0, 0], sizes = [2, 16, 16, 8], strides = [1, 1, 1, 1]} : vector<2x18x18x8xf32> to vector<2x16x16x8xf32>
    %32 = arith.maximumf %30, %31 : vector<2x16x16x8xf32>
    %33 = vector.extract_strided_slice %25 {offsets = [0, 1, 1, 0], sizes = [2, 16, 16, 8], strides = [1, 1, 1, 1]} : vector<2x18x18x8xf32> to vector<2x16x16x8xf32>
    %34 = arith.maximumf %32, %33 : vector<2x16x16x8xf32>
    %35 = vector.extract_strided_slice %25 {offsets = [0, 1, 2, 0], sizes = [2, 16, 16, 8], strides = [1, 1, 1, 1]} : vector<2x18x18x8xf32> to vector<2x16x16x8xf32>
    %36 = arith.maximumf %34, %35 : vector<2x16x16x8xf32>
    %37 = vector.extract_strided_slice %25 {offsets = [0, 2, 0, 0], sizes = [2, 16, 16, 8], strides = [1, 1, 1, 1]} : vector<2x18x18x8xf32> to vector<2x16x16x8xf32>
    %38 = arith.maximumf %36, %37 : vector<2x16x16x8xf32>
    %39 = vector.extract_strided_slice %25 {offsets = [0, 2, 1, 0], sizes = [2, 16, 16, 8], strides = [1, 1, 1, 1]} : vector<2x18x18x8xf32> to vector<2x16x16x8xf32>
    %40 = arith.maximumf %38, %39 : vector<2x16x16x8xf32>
    %41 = vector.extract_strided_slice %25 {offsets = [0, 2, 2, 0], sizes = [2, 16, 16, 8], strides = [1, 1, 1, 1]} : vector<2x18x18x8xf32> to vector<2x16x16x8xf32>
    %42 = arith.maximumf %40, %41 : vector<2x16x16x8xf32>
    %c0_31 = arith.constant 0 : index
    %c0_32 = arith.constant 0 : index
    %43 = vector.load %arg2[%c0_31, %c0_32] : memref<64x256xf32, #tpu.memory_space<vmem>>, vector<64x256xf32>
    %44 = vector.extract_strided_slice %42 {offsets = [0, 0, 0, 0], sizes = [1, 16, 16, 8], strides = [1, 1, 1, 1]} : vector<2x16x16x8xf32> to vector<1x16x16x8xf32>
    %45 = vector.shape_cast %44 : vector<1x16x16x8xf32> to vector<16x16x8xf32>
    %46 = vector.shape_cast %45 : vector<16x16x8xf32> to vector<256x8xf32>
    %cst_33 = arith.constant dense<0.000000e+00> : vector<64x8xf32>
    %47 = tpu.matmul %43, %46, %cst_33 {dimension_numbers = #tpu.dot_dimension_numbers<[1], [0], [0], [1], [0, 0, 1, 1], [], []>} : vector<64x256xf32>, vector<256x8xf32>, vector<64x8xf32> -> vector<64x8xf32>
    %c0_34 = arith.constant 0 : index
    %c0_35 = arith.constant 0 : index
    %48 = vector.load %arg2[%c0_34, %c0_35] : memref<64x256xf32, #tpu.memory_space<vmem>>, vector<64x256xf32>
    %49 = vector.extract_strided_slice %42 {offsets = [1, 0, 0, 0], sizes = [1, 16, 16, 8], strides = [1, 1, 1, 1]} : vector<2x16x16x8xf32> to vector<1x16x16x8xf32>
    %50 = vector.shape_cast %49 : vector<1x16x16x8xf32> to vector<16x16x8xf32>
    %51 = vector.shape_cast %50 : vector<16x16x8xf32> to vector<256x8xf32>
    %cst_36 = arith.constant dense<0.000000e+00> : vector<64x8xf32>
    %52 = tpu.matmul %48, %51, %cst_36 {dimension_numbers = #tpu.dot_dimension_numbers<[1], [0], [0], [1], [0, 0, 1, 1], [], []>} : vector<64x256xf32>, vector<256x8xf32>, vector<64x8xf32> -> vector<64x8xf32>
    %53 = tpu.concatenate %47, %52 in 0 : vector<64x8xf32>, vector<64x8xf32> -> vector<128x8xf32>
    %cst_37 = arith.constant 0.000000e+00 : f32
    %54 = vector.broadcast %cst_37 : f32 to vector<2x1x10x8xf32>
    %c0_38 = arith.constant 0 : index
    %c0_39 = arith.constant 0 : index
    %c0_40 = arith.constant 0 : index
    %c0_41 = arith.constant 0 : index
    %55 = vector.load %arg15[%c0_38, %c0_39, %c0_40, %c0_41] : memref<2x10x10x8xf32, #tpu.memory_space<vmem>>, vector<2x1x10x8xf32>
    tpu.vector_store %arg15[%c0_38, %c0_39, %c0_40, %c0_41], %54 {strides = array<i32>} : memref<2x10x10x8xf32, #tpu.memory_space<vmem>>, vector<2x1x10x8xf32>,
    %c0_42 = arith.constant 0 : index
    %c9 = arith.constant 9 : index
    %c0_43 = arith.constant 0 : index
    %c0_44 = arith.constant 0 : index
    %56 = vector.load %arg15[%c0_42, %c9, %c0_43, %c0_44] : memref<2x10x10x8xf32, #tpu.memory_space<vmem>>, vector<2x1x10x8xf32>
    tpu.vector_store %arg15[%c0_42, %c9, %c0_43, %c0_44], %54 {strides = array<i32>} : memref<2x10x10x8xf32, #tpu.memory_space<vmem>>, vector<2x1x10x8xf32>,
    %cst_45 = arith.constant 0.000000e+00 : f32
    %57 = vector.broadcast %cst_45 : f32 to vector<2x10x1x8xf32>
    %c0_46 = arith.constant 0 : index
    %c0_47 = arith.constant 0 : index
    %c0_48 = arith.constant 0 : index
    %c0_49 = arith.constant 0 : index
    %58 = vector.load %arg15[%c0_46, %c0_47, %c0_48, %c0_49] : memref<2x10x10x8xf32, #tpu.memory_space<vmem>>, vector<2x10x1x8xf32>
    tpu.vector_store %arg15[%c0_46, %c0_47, %c0_48, %c0_49], %57 {strides = array<i32>} : memref<2x10x10x8xf32, #tpu.memory_space<vmem>>, vector<2x10x1x8xf32>,
    %c0_50 = arith.constant 0 : index
    %c0_51 = arith.constant 0 : index
    %c9_52 = arith.constant 9 : index
    %c0_53 = arith.constant 0 : index
    %59 = vector.load %arg15[%c0_50, %c0_51, %c9_52, %c0_53] : memref<2x10x10x8xf32, #tpu.memory_space<vmem>>, vector<2x10x1x8xf32>
    tpu.vector_store %arg15[%c0_50, %c0_51, %c9_52, %c0_53], %57 {strides = array<i32>} : memref<2x10x10x8xf32, #tpu.memory_space<vmem>>, vector<2x10x1x8xf32>,
    %cst_54 = arith.constant 0.000000e+00 : f32
    %60 = vector.broadcast %cst_54 : f32 to vector<128x8xf32>
    %61 = arith.maximumf %53, %60 : vector<128x8xf32>
    %62 = vector.shape_cast %61 : vector<128x8xf32> to vector<2x8x8x8xf32>
    %c0_55 = arith.constant 0 : index
    %c1_56 = arith.constant 1 : index
    %c1_57 = arith.constant 1 : index
    %c0_58 = arith.constant 0 : index
    %63 = vector.load %arg15[%c0_55, %c1_56, %c1_57, %c0_58] : memref<2x10x10x8xf32, #tpu.memory_space<vmem>>, vector<2x8x8x8xf32>
    tpu.vector_store %arg15[%c0_55, %c1_56, %c1_57, %c0_58], %62 {strides = array<i32>} : memref<2x10x10x8xf32, #tpu.memory_space<vmem>>, vector<2x8x8x8xf32>,
    %c0_59 = arith.constant 0 : index
    %c0_60 = arith.constant 0 : index
    %c0_61 = arith.constant 0 : index
    %c0_62 = arith.constant 0 : index
    %64 = vector.load %arg15[%c0_59, %c0_60, %c0_61, %c0_62] : memref<2x10x10x8xf32, #tpu.memory_space<vmem>>, vector<2x10x10x8xf32>
    %65 = vector.extract_strided_slice %64 {offsets = [0, 0, 0, 0], sizes = [2, 8, 8, 8], strides = [1, 1, 1, 1]} : vector<2x10x10x8xf32> to vector<2x8x8x8xf32>
    %66 = vector.extract_strided_slice %64 {offsets = [0, 0, 1, 0], sizes = [2, 8, 8, 8], strides = [1, 1, 1, 1]} : vector<2x10x10x8xf32> to vector<2x8x8x8xf32>
    %67 = vector.extract_strided_slice %64 {offsets = [0, 0, 2, 0], sizes = [2, 8, 8, 8], strides = [1, 1, 1, 1]} : vector<2x10x10x8xf32> to vector<2x8x8x8xf32>
    %68 = vector.extract_strided_slice %64 {offsets = [0, 1, 0, 0], sizes = [2, 8, 8, 8], strides = [1, 1, 1, 1]} : vector<2x10x10x8xf32> to vector<2x8x8x8xf32>
    %69 = vector.extract_strided_slice %64 {offsets = [0, 1, 1, 0], sizes = [2, 8, 8, 8], strides = [1, 1, 1, 1]} : vector<2x10x10x8xf32> to vector<2x8x8x8xf32>
    %70 = vector.extract_strided_slice %64 {offsets = [0, 1, 2, 0], sizes = [2, 8, 8, 8], strides = [1, 1, 1, 1]} : vector<2x10x10x8xf32> to vector<2x8x8x8xf32>
    %71 = vector.extract_strided_slice %64 {offsets = [0, 2, 0, 0], sizes = [2, 8, 8, 8], strides = [1, 1, 1, 1]} : vector<2x10x10x8xf32> to vector<2x8x8x8xf32>
    %72 = vector.extract_strided_slice %64 {offsets = [0, 2, 1, 0], sizes = [2, 8, 8, 8], strides = [1, 1, 1, 1]} : vector<2x10x10x8xf32> to vector<2x8x8x8xf32>
    %73 = vector.extract_strided_slice %64 {offsets = [0, 2, 2, 0], sizes = [2, 8, 8, 8], strides = [1, 1, 1, 1]} : vector<2x10x10x8xf32> to vector<2x8x8x8xf32>
    %74 = tpu.concatenate %65, %66, %67, %68, %69, %70, %71, %72, %73 in 3 : vector<2x8x8x8xf32>, vector<2x8x8x8xf32>, vector<2x8x8x8xf32>, vector<2x8x8x8xf32>, vector<2x8x8x8xf32>, vector<2x8x8x8xf32>, vector<2x8x8x8xf32>, vector<2x8x8x8xf32>, vector<2x8x8x8xf32> -> vector<2x8x8x72xf32>
    %75 = vector.shape_cast %74 : vector<2x8x8x72xf32> to vector<128x72xf32>
    %c0_63 = arith.constant 0 : index
    %c0_64 = arith.constant 0 : index
    %76 = vector.load %arg5[%c0_63, %c0_64] : memref<72x8xf32, #tpu.memory_space<vmem>>, vector<72x8xf32>
    %cst_65 = arith.constant dense<0.000000e+00> : vector<128x8xf32>
    %77 = tpu.matmul %75, %76, %cst_65 {dimension_numbers = #tpu.dot_dimension_numbers<[1], [0], [0], [1], [0, 0, 1, 1], [], []>} : vector<128x72xf32>, vector<72x8xf32>, vector<128x8xf32> -> vector<128x8xf32>
    %c0_66 = arith.constant 0 : index
    %c0_67 = arith.constant 0 : index
    %78 = vector.load %arg6[%c0_66, %c0_67] : memref<1x8xf32, #tpu.memory_space<vmem>>, vector<1x8xf32>
    %79 = vector.broadcast %78 : vector<1x8xf32> to vector<128x8xf32>
    %80 = arith.addf %77, %79 : vector<128x8xf32>
    %cst_68 = arith.constant 0.000000e+00 : f32
    %81 = vector.broadcast %cst_68 : f32 to vector<128x8xf32>
    %82 = arith.maximumf %80, %81 : vector<128x8xf32>
    %83 = vector.shape_cast %82 : vector<128x8xf32> to vector<2x8x8x8xf32>
    %c0_69 = arith.constant 0 : index
    %c1_70 = arith.constant 1 : index
    %c1_71 = arith.constant 1 : index
    %c0_72 = arith.constant 0 : index
    %84 = vector.load %arg15[%c0_69, %c1_70, %c1_71, %c0_72] : memref<2x10x10x8xf32, #tpu.memory_space<vmem>>, vector<2x8x8x8xf32>
    tpu.vector_store %arg15[%c0_69, %c1_70, %c1_71, %c0_72], %83 {strides = array<i32>} : memref<2x10x10x8xf32, #tpu.memory_space<vmem>>, vector<2x8x8x8xf32>,
    %c0_73 = arith.constant 0 : index
    %c0_74 = arith.constant 0 : index
    %c0_75 = arith.constant 0 : index
    %c0_76 = arith.constant 0 : index
    %85 = vector.load %arg15[%c0_73, %c0_74, %c0_75, %c0_76] : memref<2x10x10x8xf32, #tpu.memory_space<vmem>>, vector<2x10x10x8xf32>
    %86 = vector.extract_strided_slice %85 {offsets = [0, 0, 0, 0], sizes = [2, 8, 8, 8], strides = [1, 1, 1, 1]} : vector<2x10x10x8xf32> to vector<2x8x8x8xf32>
    %87 = vector.extract_strided_slice %85 {offsets = [0, 0, 1, 0], sizes = [2, 8, 8, 8], strides = [1, 1, 1, 1]} : vector<2x10x10x8xf32> to vector<2x8x8x8xf32>
    %88 = vector.extract_strided_slice %85 {offsets = [0, 0, 2, 0], sizes = [2, 8, 8, 8], strides = [1, 1, 1, 1]} : vector<2x10x10x8xf32> to vector<2x8x8x8xf32>
    %89 = vector.extract_strided_slice %85 {offsets = [0, 1, 0, 0], sizes = [2, 8, 8, 8], strides = [1, 1, 1, 1]} : vector<2x10x10x8xf32> to vector<2x8x8x8xf32>
    %90 = vector.extract_strided_slice %85 {offsets = [0, 1, 1, 0], sizes = [2, 8, 8, 8], strides = [1, 1, 1, 1]} : vector<2x10x10x8xf32> to vector<2x8x8x8xf32>
    %91 = vector.extract_strided_slice %85 {offsets = [0, 1, 2, 0], sizes = [2, 8, 8, 8], strides = [1, 1, 1, 1]} : vector<2x10x10x8xf32> to vector<2x8x8x8xf32>
    %92 = vector.extract_strided_slice %85 {offsets = [0, 2, 0, 0], sizes = [2, 8, 8, 8], strides = [1, 1, 1, 1]} : vector<2x10x10x8xf32> to vector<2x8x8x8xf32>
    %93 = vector.extract_strided_slice %85 {offsets = [0, 2, 1, 0], sizes = [2, 8, 8, 8], strides = [1, 1, 1, 1]} : vector<2x10x10x8xf32> to vector<2x8x8x8xf32>
    %94 = vector.extract_strided_slice %85 {offsets = [0, 2, 2, 0], sizes = [2, 8, 8, 8], strides = [1, 1, 1, 1]} : vector<2x10x10x8xf32> to vector<2x8x8x8xf32>
    %95 = tpu.concatenate %86, %87, %88, %89, %90, %91, %92, %93, %94 in 3 : vector<2x8x8x8xf32>, vector<2x8x8x8xf32>, vector<2x8x8x8xf32>, vector<2x8x8x8xf32>, vector<2x8x8x8xf32>, vector<2x8x8x8xf32>, vector<2x8x8x8xf32>, vector<2x8x8x8xf32>, vector<2x8x8x8xf32> -> vector<2x8x8x72xf32>
    %96 = vector.shape_cast %95 : vector<2x8x8x72xf32> to vector<128x72xf32>
    %c0_77 = arith.constant 0 : index
    %c0_78 = arith.constant 0 : index
    %97 = vector.load %arg7[%c0_77, %c0_78] : memref<72x8xf32, #tpu.memory_space<vmem>>, vector<72x8xf32>
    %cst_79 = arith.constant dense<0.000000e+00> : vector<128x8xf32>
    %98 = tpu.matmul %96, %97, %cst_79 {dimension_numbers = #tpu.dot_dimension_numbers<[1], [0], [0], [1], [0, 0, 1, 1], [], []>} : vector<128x72xf32>, vector<72x8xf32>, vector<128x8xf32> -> vector<128x8xf32>
    %c0_80 = arith.constant 0 : index
    %c0_81 = arith.constant 0 : index
    %99 = vector.load %arg8[%c0_80, %c0_81] : memref<1x8xf32, #tpu.memory_space<vmem>>, vector<1x8xf32>
    %100 = vector.broadcast %99 : vector<1x8xf32> to vector<128x8xf32>
    %101 = arith.addf %98, %100 : vector<128x8xf32>
    %102 = arith.addf %101, %53 : vector<128x8xf32>
    %cst_82 = arith.constant 0.000000e+00 : f32
    %103 = vector.broadcast %cst_82 : f32 to vector<128x8xf32>
    %104 = arith.maximumf %102, %103 : vector<128x8xf32>
    %105 = vector.shape_cast %104 : vector<128x8xf32> to vector<2x8x8x8xf32>
    %c0_83 = arith.constant 0 : index
    %c1_84 = arith.constant 1 : index
    %c1_85 = arith.constant 1 : index
    %c0_86 = arith.constant 0 : index
    %106 = vector.load %arg15[%c0_83, %c1_84, %c1_85, %c0_86] : memref<2x10x10x8xf32, #tpu.memory_space<vmem>>, vector<2x8x8x8xf32>
    tpu.vector_store %arg15[%c0_83, %c1_84, %c1_85, %c0_86], %105 {strides = array<i32>} : memref<2x10x10x8xf32, #tpu.memory_space<vmem>>, vector<2x8x8x8xf32>,
    %c0_87 = arith.constant 0 : index
    %c0_88 = arith.constant 0 : index
    %c0_89 = arith.constant 0 : index
    %c0_90 = arith.constant 0 : index
    %107 = vector.load %arg15[%c0_87, %c0_88, %c0_89, %c0_90] : memref<2x10x10x8xf32, #tpu.memory_space<vmem>>, vector<2x10x10x8xf32>
    %108 = vector.extract_strided_slice %107 {offsets = [0, 0, 0, 0], sizes = [2, 8, 8, 8], strides = [1, 1, 1, 1]} : vector<2x10x10x8xf32> to vector<2x8x8x8xf32>
    %109 = vector.extract_strided_slice %107 {offsets = [0, 0, 1, 0], sizes = [2, 8, 8, 8], strides = [1, 1, 1, 1]} : vector<2x10x10x8xf32> to vector<2x8x8x8xf32>
    %110 = vector.extract_strided_slice %107 {offsets = [0, 0, 2, 0], sizes = [2, 8, 8, 8], strides = [1, 1, 1, 1]} : vector<2x10x10x8xf32> to vector<2x8x8x8xf32>
    %111 = vector.extract_strided_slice %107 {offsets = [0, 1, 0, 0], sizes = [2, 8, 8, 8], strides = [1, 1, 1, 1]} : vector<2x10x10x8xf32> to vector<2x8x8x8xf32>
    %112 = vector.extract_strided_slice %107 {offsets = [0, 1, 1, 0], sizes = [2, 8, 8, 8], strides = [1, 1, 1, 1]} : vector<2x10x10x8xf32> to vector<2x8x8x8xf32>
    %113 = vector.extract_strided_slice %107 {offsets = [0, 1, 2, 0], sizes = [2, 8, 8, 8], strides = [1, 1, 1, 1]} : vector<2x10x10x8xf32> to vector<2x8x8x8xf32>
    %114 = vector.extract_strided_slice %107 {offsets = [0, 2, 0, 0], sizes = [2, 8, 8, 8], strides = [1, 1, 1, 1]} : vector<2x10x10x8xf32> to vector<2x8x8x8xf32>
    %115 = vector.extract_strided_slice %107 {offsets = [0, 2, 1, 0], sizes = [2, 8, 8, 8], strides = [1, 1, 1, 1]} : vector<2x10x10x8xf32> to vector<2x8x8x8xf32>
    %116 = vector.extract_strided_slice %107 {offsets = [0, 2, 2, 0], sizes = [2, 8, 8, 8], strides = [1, 1, 1, 1]} : vector<2x10x10x8xf32> to vector<2x8x8x8xf32>
    %117 = tpu.concatenate %108, %109, %110, %111, %112, %113, %114, %115, %116 in 3 : vector<2x8x8x8xf32>, vector<2x8x8x8xf32>, vector<2x8x8x8xf32>, vector<2x8x8x8xf32>, vector<2x8x8x8xf32>, vector<2x8x8x8xf32>, vector<2x8x8x8xf32>, vector<2x8x8x8xf32>, vector<2x8x8x8xf32> -> vector<2x8x8x72xf32>
    %118 = vector.shape_cast %117 : vector<2x8x8x72xf32> to vector<128x72xf32>
    %c0_91 = arith.constant 0 : index
    %c0_92 = arith.constant 0 : index
    %119 = vector.load %arg9[%c0_91, %c0_92] : memref<72x8xf32, #tpu.memory_space<vmem>>, vector<72x8xf32>
    %cst_93 = arith.constant dense<0.000000e+00> : vector<128x8xf32>
    %120 = tpu.matmul %118, %119, %cst_93 {dimension_numbers = #tpu.dot_dimension_numbers<[1], [0], [0], [1], [0, 0, 1, 1], [], []>} : vector<128x72xf32>, vector<72x8xf32>, vector<128x8xf32> -> vector<128x8xf32>
    %c0_94 = arith.constant 0 : index
    %c0_95 = arith.constant 0 : index
    %121 = vector.load %arg10[%c0_94, %c0_95] : memref<1x8xf32, #tpu.memory_space<vmem>>, vector<1x8xf32>
    %122 = vector.broadcast %121 : vector<1x8xf32> to vector<128x8xf32>
    %123 = arith.addf %120, %122 : vector<128x8xf32>
    %cst_96 = arith.constant 0.000000e+00 : f32
    %124 = vector.broadcast %cst_96 : f32 to vector<128x8xf32>
    %125 = arith.maximumf %123, %124 : vector<128x8xf32>
    %126 = vector.shape_cast %125 : vector<128x8xf32> to vector<2x8x8x8xf32>
    %c0_97 = arith.constant 0 : index
    %c1_98 = arith.constant 1 : index
    %c1_99 = arith.constant 1 : index
    %c0_100 = arith.constant 0 : index
    %127 = vector.load %arg15[%c0_97, %c1_98, %c1_99, %c0_100] : memref<2x10x10x8xf32, #tpu.memory_space<vmem>>, vector<2x8x8x8xf32>
    tpu.vector_store %arg15[%c0_97, %c1_98, %c1_99, %c0_100], %126 {strides = array<i32>} : memref<2x10x10x8xf32, #tpu.memory_space<vmem>>, vector<2x8x8x8xf32>,
    %c0_101 = arith.constant 0 : index
    %c0_102 = arith.constant 0 : index
    %c0_103 = arith.constant 0 : index
    %c0_104 = arith.constant 0 : index
    %128 = vector.load %arg15[%c0_101, %c0_102, %c0_103, %c0_104] : memref<2x10x10x8xf32, #tpu.memory_space<vmem>>, vector<2x10x10x8xf32>
    %129 = vector.extract_strided_slice %128 {offsets = [0, 0, 0, 0], sizes = [2, 8, 8, 8], strides = [1, 1, 1, 1]} : vector<2x10x10x8xf32> to vector<2x8x8x8xf32>
    %130 = vector.extract_strided_slice %128 {offsets = [0, 0, 1, 0], sizes = [2, 8, 8, 8], strides = [1, 1, 1, 1]} : vector<2x10x10x8xf32> to vector<2x8x8x8xf32>
    %131 = vector.extract_strided_slice %128 {offsets = [0, 0, 2, 0], sizes = [2, 8, 8, 8], strides = [1, 1, 1, 1]} : vector<2x10x10x8xf32> to vector<2x8x8x8xf32>
    %132 = vector.extract_strided_slice %128 {offsets = [0, 1, 0, 0], sizes = [2, 8, 8, 8], strides = [1, 1, 1, 1]} : vector<2x10x10x8xf32> to vector<2x8x8x8xf32>
    %133 = vector.extract_strided_slice %128 {offsets = [0, 1, 1, 0], sizes = [2, 8, 8, 8], strides = [1, 1, 1, 1]} : vector<2x10x10x8xf32> to vector<2x8x8x8xf32>
    %134 = vector.extract_strided_slice %128 {offsets = [0, 1, 2, 0], sizes = [2, 8, 8, 8], strides = [1, 1, 1, 1]} : vector<2x10x10x8xf32> to vector<2x8x8x8xf32>
    %135 = vector.extract_strided_slice %128 {offsets = [0, 2, 0, 0], sizes = [2, 8, 8, 8], strides = [1, 1, 1, 1]} : vector<2x10x10x8xf32> to vector<2x8x8x8xf32>
    %136 = vector.extract_strided_slice %128 {offsets = [0, 2, 1, 0], sizes = [2, 8, 8, 8], strides = [1, 1, 1, 1]} : vector<2x10x10x8xf32> to vector<2x8x8x8xf32>
    %137 = vector.extract_strided_slice %128 {offsets = [0, 2, 2, 0], sizes = [2, 8, 8, 8], strides = [1, 1, 1, 1]} : vector<2x10x10x8xf32> to vector<2x8x8x8xf32>
    %138 = tpu.concatenate %129, %130, %131, %132, %133, %134, %135, %136, %137 in 3 : vector<2x8x8x8xf32>, vector<2x8x8x8xf32>, vector<2x8x8x8xf32>, vector<2x8x8x8xf32>, vector<2x8x8x8xf32>, vector<2x8x8x8xf32>, vector<2x8x8x8xf32>, vector<2x8x8x8xf32>, vector<2x8x8x8xf32> -> vector<2x8x8x72xf32>
    %139 = vector.shape_cast %138 : vector<2x8x8x72xf32> to vector<128x72xf32>
    %c0_105 = arith.constant 0 : index
    %c0_106 = arith.constant 0 : index
    %140 = vector.load %arg11[%c0_105, %c0_106] : memref<72x8xf32, #tpu.memory_space<vmem>>, vector<72x8xf32>
    %cst_107 = arith.constant dense<0.000000e+00> : vector<128x8xf32>
    %141 = tpu.matmul %139, %140, %cst_107 {dimension_numbers = #tpu.dot_dimension_numbers<[1], [0], [0], [1], [0, 0, 1, 1], [], []>} : vector<128x72xf32>, vector<72x8xf32>, vector<128x8xf32> -> vector<128x8xf32>
    %c0_108 = arith.constant 0 : index
    %c0_109 = arith.constant 0 : index
    %142 = vector.load %arg12[%c0_108, %c0_109] : memref<1x8xf32, #tpu.memory_space<vmem>>, vector<1x8xf32>
    %143 = vector.broadcast %142 : vector<1x8xf32> to vector<128x8xf32>
    %144 = arith.addf %141, %143 : vector<128x8xf32>
    %145 = arith.addf %144, %102 : vector<128x8xf32>
    %146 = tpu.transpose %145, [1, 0] : vector<128x8xf32> -> vector<8x128xf32>
    %c0_110 = arith.constant 0 : index
    %c0_111 = arith.constant 0 : index
    %147 = vector.load %arg13[%c0_110, %c0_111] : memref<8x128xf32, #tpu.memory_space<vmem>>, vector<8x128xf32>
    tpu.vector_store %arg13[%c0_110, %c0_111], %146 {strides = array<i32>} : memref<8x128xf32, #tpu.memory_space<vmem>>, vector<8x128xf32>,
    return
  }
  func.func @transform_0(%arg0: i32) -> (i32, i32, i32, i32) {
    %c0_i32 = arith.constant 0 : i32
    %c0_i32_0 = arith.constant 0 : i32
    %c0_i32_1 = arith.constant 0 : i32
    %c0_i32_2 = arith.constant 0 : i32
    return %arg0, %c0_i32, %c0_i32_0, %c0_i32_1 : i32, i32, i32, i32
  }
  func.func @transform_1(%arg0: i32) -> (i32, i32) {
    %c0_i32 = arith.constant 0 : i32
    %c0_i32_0 = arith.constant 0 : i32
    %c0_i32_1 = arith.constant 0 : i32
    return %c0_i32, %c0_i32_0 : i32, i32
  }
  func.func @transform_2(%arg0: i32) -> (i32, i32) {
    %c0_i32 = arith.constant 0 : i32
    %c0_i32_0 = arith.constant 0 : i32
    %c0_i32_1 = arith.constant 0 : i32
    return %c0_i32, %c0_i32_0 : i32, i32
  }
  func.func @transform_3(%arg0: i32) -> (i32, i32) {
    %c0_i32 = arith.constant 0 : i32
    %c0_i32_0 = arith.constant 0 : i32
    %c0_i32_1 = arith.constant 0 : i32
    return %c0_i32, %c0_i32_0 : i32, i32
  }
  func.func @transform_4(%arg0: i32) -> (i32, i32) {
    %c0_i32 = arith.constant 0 : i32
    %c0_i32_0 = arith.constant 0 : i32
    %c0_i32_1 = arith.constant 0 : i32
    return %c0_i32, %c0_i32_0 : i32, i32
  }
  func.func @transform_5(%arg0: i32) -> (i32, i32) {
    %c0_i32 = arith.constant 0 : i32
    %c0_i32_0 = arith.constant 0 : i32
    %c0_i32_1 = arith.constant 0 : i32
    return %c0_i32, %c0_i32_0 : i32, i32
  }
  func.func @transform_6(%arg0: i32) -> (i32, i32) {
    %c0_i32 = arith.constant 0 : i32
    %c0_i32_0 = arith.constant 0 : i32
    %c0_i32_1 = arith.constant 0 : i32
    return %c0_i32, %c0_i32_0 : i32, i32
  }
  func.func @transform_7(%arg0: i32) -> (i32, i32) {
    %c0_i32 = arith.constant 0 : i32
    %c0_i32_0 = arith.constant 0 : i32
    %c0_i32_1 = arith.constant 0 : i32
    return %c0_i32, %c0_i32_0 : i32, i32
  }
  func.func @transform_8(%arg0: i32) -> (i32, i32) {
    %c0_i32 = arith.constant 0 : i32
    %c0_i32_0 = arith.constant 0 : i32
    %c0_i32_1 = arith.constant 0 : i32
    return %c0_i32, %c0_i32_0 : i32, i32
  }
  func.func @transform_9(%arg0: i32) -> (i32, i32) {
    %c0_i32 = arith.constant 0 : i32
    %c0_i32_0 = arith.constant 0 : i32
    %c0_i32_1 = arith.constant 0 : i32
    return %c0_i32, %c0_i32_0 : i32, i32
  }
  func.func @transform_10(%arg0: i32) -> (i32, i32) {
    %c0_i32 = arith.constant 0 : i32
    %c0_i32_0 = arith.constant 0 : i32
    %c0_i32_1 = arith.constant 0 : i32
    return %c0_i32, %c0_i32_0 : i32, i32
  }
  func.func @transform_11(%arg0: i32) -> (i32, i32) {
    %c0_i32 = arith.constant 0 : i32
    %c0_i32_0 = arith.constant 0 : i32
    %c0_i32_1 = arith.constant 0 : i32
    return %c0_i32, %c0_i32_0 : i32, i32
  }
  func.func @transform_12(%arg0: i32) -> (i32, i32) {
    %c0_i32 = arith.constant 0 : i32
    %c0_i32_0 = arith.constant 0 : i32
    return %c0_i32, %arg0 : i32, i32
  }
}

</mosaic_0001>

<llo_original>
// kernel: conv_sequence.1
$region0: #{conv_sequence.1}
  #allocation0 [shape = 'u32[]', space=smem, size = 0x4, offset = 0x4, fixed_abs, tag = 'smem constant byte address 0x4 - core index']
  #allocation1 [shape = 'u32[72,128]{1,0:T(1,128)}', space=vmem, size = 0x9000, scoped, tag = 'internal scratch']
  #allocation2 [shape = 'f32[2,18,18,8]{3,2,1,0:T(8,128)}', space=vmem, size = 0x6c000, scoped, tag = 'scratch operand']
  #allocation3 [shape = 'f32[2,10,10,8]{3,2,1,0:T(8,128)}', space=vmem, size = 0x28000, scoped, tag = 'scratch operand']
  %s0 = inlined_call_operand.vmem [shape: f32[2,18,18,4], index: 0, kind: input, shape index: {}]
  %s1 = inlined_call_operand.vmem [shape: f32[64,256], index: 1, kind: input, shape index: {}]
  %s2 = inlined_call_operand.vmem [shape: f32[36,8], index: 2, kind: input, shape index: {}]
  %s3 = inlined_call_operand.vmem [shape: f32[1,8], index: 3, kind: input, shape index: {}]
  %s4 = inlined_call_operand.vmem [shape: f32[72,8], index: 4, kind: input, shape index: {}]
  %s5 = inlined_call_operand.vmem [shape: f32[1,8], index: 5, kind: input, shape index: {}]
  %s6 = inlined_call_operand.vmem [shape: f32[72,8], index: 6, kind: input, shape index: {}]
  %s7 = inlined_call_operand.vmem [shape: f32[1,8], index: 7, kind: input, shape index: {}]
  %s8 = inlined_call_operand.vmem [shape: f32[72,8], index: 8, kind: input, shape index: {}]
  %s9 = inlined_call_operand.vmem [shape: f32[1,8], index: 9, kind: input, shape index: {}]
  %s10 = inlined_call_operand.vmem [shape: f32[72,8], index: 10, kind: input, shape index: {}]
  %s11 = inlined_call_operand.vmem [shape: f32[1,8], index: 11, kind: input, shape index: {}]
  %s12 = inlined_call_operand.vmem [shape: f32[8,128], index: 12, kind: output, shape index: {}]
  %s13 = sld [smem:[#allocation0]]
  $region58: #{conv_sequence.1} parent=0
    _
  %s15 = ssub.s32 1, %s13
  %s16 = scalar_select 0, %s15, %s13
  // Predicated region
  $region2: #{conv_sequence.1} parent=0 // pred_check
    _
  $region3: #{conv_sequence.1} parent=0 // pred_check_branch
    %18 = sbr.rel (0) target = $region5
  $region4: #{conv_sequence.1} parent=0 // pred_region
    _
  $region5: #{conv_sequence.1} parent=0 // pred_fallthru
    _
  // Predicated region
  $region6: #{conv_sequence.1} parent=0 // pred_check
    _
  $region7: #{conv_sequence.1} parent=0 // pred_check_branch
    %20 = sbr.rel (0) target = $region9
  $region8: #{conv_sequence.1} parent=0 // pred_region
    _
  $region9: #{conv_sequence.1} parent=0 // pred_fallthru
    _
  // Predicated region
  $region10: #{conv_sequence.1} parent=0 // pred_check
    _
  $region11: #{conv_sequence.1} parent=0 // pred_check_branch
    %22 = sbr.rel (0) target = $region13
  $region12: #{conv_sequence.1} parent=0 // pred_region
    _
  $region13: #{conv_sequence.1} parent=0 // pred_fallthru
    _
  // Predicated region
  $region14: #{conv_sequence.1} parent=0 // pred_check
    _
  $region15: #{conv_sequence.1} parent=0 // pred_check_branch
    %24 = sbr.rel (0) target = $region17
  $region16: #{conv_sequence.1} parent=0 // pred_region
    _
  $region17: #{conv_sequence.1} parent=0 // pred_fallthru
    _
  // Predicated region
  $region18: #{conv_sequence.1} parent=0 // pred_check
    _
  $region19: #{conv_sequence.1} parent=0 // pred_check_branch
    %26 = sbr.rel (0) target = $region21
  $region20: #{conv_sequence.1} parent=0 // pred_region
    _
  $region21: #{conv_sequence.1} parent=0 // pred_fallthru
    _
  // Predicated region
  $region22: #{conv_sequence.1} parent=0 // pred_check
    _
  $region23: #{conv_sequence.1} parent=0 // pred_check_branch
    %28 = sbr.rel (0) target = $region25
  $region24: #{conv_sequence.1} parent=0 // pred_region
    _
  $region25: #{conv_sequence.1} parent=0 // pred_fallthru
    _
  // Predicated region
  $region26: #{conv_sequence.1} parent=0 // pred_check
    _
  $region27: #{conv_sequence.1} parent=0 // pred_check_branch
    %30 = sbr.rel (0) target = $region29
  $region28: #{conv_sequence.1} parent=0 // pred_region
    _
  $region29: #{conv_sequence.1} parent=0 // pred_fallthru
    _
  // Predicated region
  $region30: #{conv_sequence.1} parent=0 // pred_check
    _
  $region31: #{conv_sequence.1} parent=0 // pred_check_branch
    %32 = sbr.rel (0) target = $region33
  $region32: #{conv_sequence.1} parent=0 // pred_region
    _
  $region33: #{conv_sequence.1} parent=0 // pred_fallthru
    _
  // Predicated region
  $region34: #{conv_sequence.1} parent=0 // pred_check
    _
  $region35: #{conv_sequence.1} parent=0 // pred_check_branch
    %34 = sbr.rel (0) target = $region37
  $region36: #{conv_sequence.1} parent=0 // pred_region
    _
  $region37: #{conv_sequence.1} parent=0 // pred_fallthru
    _
  // Predicated region
  $region38: #{conv_sequence.1} parent=0 // pred_check
    _
  $region39: #{conv_sequence.1} parent=0 // pred_check_branch
    %36 = sbr.rel (0) target = $region41
  $region40: #{conv_sequence.1} parent=0 // pred_region
    _
  $region41: #{conv_sequence.1} parent=0 // pred_fallthru
    _
  // Predicated region
  $region42: #{conv_sequence.1} parent=0 // pred_check
    _
  $region43: #{conv_sequence.1} parent=0 // pred_check_branch
    %38 = sbr.rel (0) target = $region45
  $region44: #{conv_sequence.1} parent=0 // pred_region
    _
  $region45: #{conv_sequence.1} parent=0 // pred_fallthru
    _
  // Predicated region
  $region46: #{conv_sequence.1} parent=0 // pred_check
    _
  $region47: #{conv_sequence.1} parent=0 // pred_check_branch
    %40 = sbr.rel (0) target = $region49
  $region48: #{conv_sequence.1} parent=0 // pred_region
    _
  $region49: #{conv_sequence.1} parent=0 // pred_fallthru
    _
  %v41 = vld [vmem:[%s0] sm:$0xff]
  %v42 = vld [vmem:[%s0 + $0x8] sm:$0xff]
  %v43 = vld [vmem:[%s0 + $0x10] sm:$0x3]
  %v44 = vld [vmem:[%s0 + $0x18] sm:$0xff]
  %v45 = vld [vmem:[%s0 + $0x20] sm:$0xff]
  %v46 = vld [vmem:[%s0 + $0x28] sm:$0x3]
  %v47 = vld [vmem:[%s0 + $0x30] sm:$0xff]
  %v48 = vld [vmem:[%s0 + $0x38] sm:$0xff]
  %v49 = vld [vmem:[%s0 + $0x40] sm:$0x3]
  %v50 = vld [vmem:[%s0 + $0x48] sm:$0xff]
  %v51 = vld [vmem:[%s0 + $0x50] sm:$0xff]
  %v52 = vld [vmem:[%s0 + $0x58] sm:$0x3]
  %v53 = vld [vmem:[%s0 + $0x60] sm:$0xff]
  %v54 = vld [vmem:[%s0 + $0x68] sm:$0xff]
  %v55 = vld [vmem:[%s0 + $0x70] sm:$0x3]
  %v56 = vld [vmem:[%s0 + $0x78] sm:$0xff]
  %v57 = vld [vmem:[%s0 + $0x80] sm:$0xff]
  %v58 = vld [vmem:[%s0 + $0x88] sm:$0x3]
  %v59 = vld [vmem:[%s0 + $0x90] sm:$0xff]
  %v60 = vld [vmem:[%s0 + $0x98] sm:$0xff]
  %v61 = vld [vmem:[%s0 + $0xa0] sm:$0x3]
  %v62 = vld [vmem:[%s0 + $0xa8] sm:$0xff]
  %v63 = vld [vmem:[%s0 + $0xb0] sm:$0xff]
  %v64 = vld [vmem:[%s0 + $0xb8] sm:$0x3]
  %v65 = vld [vmem:[%s0 + $0xc0] sm:$0xff]
  %v66 = vld [vmem:[%s0 + $0xc8] sm:$0xff]
  %v67 = vld [vmem:[%s0 + $0xd0] sm:$0x3]
  %v68 = vld [vmem:[%s0 + $0xd8] sm:$0xff]
  %v69 = vld [vmem:[%s0 + $0xe0] sm:$0xff]
  %v70 = vld [vmem:[%s0 + $0xe8] sm:$0x3]
  %v71 = vld [vmem:[%s0 + $0xf0] sm:$0xff]
  %v72 = vld [vmem:[%s0 + $0xf8] sm:$0xff]
  %v73 = vld [vmem:[%s0 + $0x100] sm:$0x3]
  %v74 = vld [vmem:[%s0 + $0x108] sm:$0xff]
  %v75 = vld [vmem:[%s0 + $0x110] sm:$0xff]
  %v76 = vld [vmem:[%s0 + $0x118] sm:$0x3]
  %v77 = vld [vmem:[%s0 + $0x120] sm:$0xff]
  %v78 = vld [vmem:[%s0 + $0x128] sm:$0xff]
  %v79 = vld [vmem:[%s0 + $0x130] sm:$0x3]
  %v80 = vld [vmem:[%s0 + $0x138] sm:$0xff]
  %v81 = vld [vmem:[%s0 + $0x140] sm:$0xff]
  %v82 = vld [vmem:[%s0 + $0x148] sm:$0x3]
  %v83 = vld [vmem:[%s0 + $0x150] sm:$0xff]
  %v84 = vld [vmem:[%s0 + $0x158] sm:$0xff]
  %v85 = vld [vmem:[%s0 + $0x160] sm:$0x3]
  %v86 = vld [vmem:[%s0 + $0x168] sm:$0xff]
  %v87 = vld [vmem:[%s0 + $0x170] sm:$0xff]
  %v88 = vld [vmem:[%s0 + $0x178] sm:$0x3]
  %v89 = vld [vmem:[%s0 + $0x180] sm:$0xff]
  %v90 = vld [vmem:[%s0 + $0x188] sm:$0xff]
  %v91 = vld [vmem:[%s0 + $0x190] sm:$0x3]
  %v92 = vld [vmem:[%s0 + $0x198] sm:$0xff]
  %v93 = vld [vmem:[%s0 + $0x1a0] sm:$0xff]
  %v94 = vld [vmem:[%s0 + $0x1a8] sm:$0x3]
  %v95 = vld [vmem:[%s0 + $0x1b0] sm:$0xff]
  %v96 = vld [vmem:[%s0 + $0x1b8] sm:$0xff]
  %v97 = vld [vmem:[%s0 + $0x1c0] sm:$0x3]
  %v98 = vld [vmem:[%s0 + $0x1c8] sm:$0xff]
  %v99 = vld [vmem:[%s0 + $0x1d0] sm:$0xff]
  %v100 = vld [vmem:[%s0 + $0x1d8] sm:$0x3]
  %v101 = vld [vmem:[%s0 + $0x1e0] sm:$0xff]
  %v102 = vld [vmem:[%s0 + $0x1e8] sm:$0xff]
  %v103 = vld [vmem:[%s0 + $0x1f0] sm:$0x3]
  %v104 = vld [vmem:[%s0 + $0x1f8] sm:$0xff]
  %v105 = vld [vmem:[%s0 + $0x200] sm:$0xff]
  %v106 = vld [vmem:[%s0 + $0x208] sm:$0x3]
  %v107 = vld [vmem:[%s0 + $0x210] sm:$0xff]
  %v108 = vld [vmem:[%s0 + $0x218] sm:$0xff]
  %v109 = vld [vmem:[%s0 + $0x220] sm:$0x3]
  %v110 = vld [vmem:[%s0 + $0x228] sm:$0xff]
  %v111 = vld [vmem:[%s0 + $0x230] sm:$0xff]
  %v112 = vld [vmem:[%s0 + $0x238] sm:$0x3]
  %v113 = vld [vmem:[%s0 + $0x240] sm:$0xff]
  %v114 = vld [vmem:[%s0 + $0x248] sm:$0xff]
  %v115 = vld [vmem:[%s0 + $0x250] sm:$0x3]
  %v116 = vld [vmem:[%s0 + $0x258] sm:$0xff]
  %v117 = vld [vmem:[%s0 + $0x260] sm:$0xff]
  %v118 = vld [vmem:[%s0 + $0x268] sm:$0x3]
  %v119 = vld [vmem:[%s0 + $0x270] sm:$0xff]
  %v120 = vld [vmem:[%s0 + $0x278] sm:$0xff]
  %v121 = vld [vmem:[%s0 + $0x280] sm:$0x3]
  %v122 = vld [vmem:[%s0 + $0x288] sm:$0xff]
  %v123 = vld [vmem:[%s0 + $0x290] sm:$0xff]
  %v124 = vld [vmem:[%s0 + $0x298] sm:$0x3]
  %v125 = vld [vmem:[%s0 + $0x2a0] sm:$0xff]
  %v126 = vld [vmem:[%s0 + $0x2a8] sm:$0xff]
  %v127 = vld [vmem:[%s0 + $0x2b0] sm:$0x3]
  %v128 = vld [vmem:[%s0 + $0x2b8] sm:$0xff]
  %v129 = vld [vmem:[%s0 + $0x2c0] sm:$0xff]
  %v130 = vld [vmem:[%s0 + $0x2c8] sm:$0x3]
  %v131 = vld [vmem:[%s0 + $0x2d0] sm:$0xff]
  %v132 = vld [vmem:[%s0 + $0x2d8] sm:$0xff]
  %v133 = vld [vmem:[%s0 + $0x2e0] sm:$0x3]
  %v134 = vld [vmem:[%s0 + $0x2e8] sm:$0xff]
  %v135 = vld [vmem:[%s0 + $0x2f0] sm:$0xff]
  %v136 = vld [vmem:[%s0 + $0x2f8] sm:$0x3]
  %v137 = vld [vmem:[%s0 + $0x300] sm:$0xff]
  %v138 = vld [vmem:[%s0 + $0x308] sm:$0xff]
  %v139 = vld [vmem:[%s0 + $0x310] sm:$0x3]
  %v140 = vld [vmem:[%s0 + $0x318] sm:$0xff]
  %v141 = vld [vmem:[%s0 + $0x320] sm:$0xff]
  %v142 = vld [vmem:[%s0 + $0x328] sm:$0x3]
  %v143 = vld [vmem:[%s0 + $0x330] sm:$0xff]
  %v144 = vld [vmem:[%s0 + $0x338] sm:$0xff]
  %v145 = vld [vmem:[%s0 + $0x340] sm:$0x3]
  %v146 = vld [vmem:[%s0 + $0x348] sm:$0xff]
  %v147 = vld [vmem:[%s0 + $0x350] sm:$0xff]
  %v148 = vld [vmem:[%s0 + $0x358] sm:$0x3]
  %vm245 = vcmask 1046528
  %v246 = vrot.slane %v41, 1
  %v247 = vrot.slane %v42, 1
  %v248 = vsel %vm245, %v246, %v247
  %v249 = vrot.slane %v43, 1
  %v250 = vsel %vm245, %v247, %v249
  %v251 = vrot.slane %v44, 1
  %v252 = vrot.slane %v45, 1
  %v253 = vsel %vm245, %v251, %v252
  %v254 = vrot.slane %v46, 1
  %v255 = vsel %vm245, %v252, %v254
  %v256 = vrot.slane %v47, 1
  %v257 = vrot.slane %v48, 1
  %v258 = vsel %vm245, %v256, %v257
  %v259 = vrot.slane %v49, 1
  %v260 = vsel %vm245, %v257, %v259
  %v261 = vrot.slane %v50, 1
  %v262 = vrot.slane %v51, 1
  %v263 = vsel %vm245, %v261, %v262
  %v264 = vrot.slane %v52, 1
  %v265 = vsel %vm245, %v262, %v264
  %v266 = vrot.slane %v53, 1
  %v267 = vrot.slane %v54, 1
  %v268 = vsel %vm245, %v266, %v267
  %v269 = vrot.slane %v55, 1
  %v270 = vsel %vm245, %v267, %v269
  %v271 = vrot.slane %v56, 1
  %v272 = vrot.slane %v57, 1
  %v273 = vsel %vm245, %v271, %v272
  %v274 = vrot.slane %v58, 1
  %v275 = vsel %vm245, %v272, %v274
  %v276 = vrot.slane %v59, 1
  %v277 = vrot.slane %v60, 1
  %v278 = vsel %vm245, %v276, %v277
  %v279 = vrot.slane %v61, 1
  %v280 = vsel %vm245, %v277, %v279
  %v281 = vrot.slane %v62, 1
  %v282 = vrot.slane %v63, 1
  %v283 = vsel %vm245, %v281, %v282
  %v284 = vrot.slane %v64, 1
  %v285 = vsel %vm245, %v282, %v284
  %v286 = vrot.slane %v65, 1
  %v287 = vrot.slane %v66, 1
  %v288 = vsel %vm245, %v286, %v287
  %v289 = vrot.slane %v67, 1
  %v290 = vsel %vm245, %v287, %v289
  %v291 = vrot.slane %v68, 1
  %v292 = vrot.slane %v69, 1
  %v293 = vsel %vm245, %v291, %v292
  %v294 = vrot.slane %v70, 1
  %v295 = vsel %vm245, %v292, %v294
  %v296 = vrot.slane %v71, 1
  %v297 = vrot.slane %v72, 1
  %v298 = vsel %vm245, %v296, %v297
  %v299 = vrot.slane %v73, 1
  %v300 = vsel %vm245, %v297, %v299
  %v301 = vrot.slane %v74, 1
  %v302 = vrot.slane %v75, 1
  %v303 = vsel %vm245, %v301, %v302
  %v304 = vrot.slane %v76, 1
  %v305 = vsel %vm245, %v302, %v304
  %v306 = vrot.slane %v77, 1
  %v307 = vrot.slane %v78, 1
  %v308 = vsel %vm245, %v306, %v307
  %v309 = vrot.slane %v79, 1
  %v310 = vsel %vm245, %v307, %v309
  %v311 = vrot.slane %v80, 1
  %v312 = vrot.slane %v81, 1
  %v313 = vsel %vm245, %v311, %v312
  %v314 = vrot.slane %v82, 1
  %v315 = vsel %vm245, %v312, %v314
  %v316 = vrot.slane %v83, 1
  %v317 = vrot.slane %v84, 1
  %v318 = vsel %vm245, %v316, %v317
  %v319 = vrot.slane %v85, 1
  %v320 = vsel %vm245, %v317, %v319
  %v321 = vrot.slane %v86, 1
  %v322 = vrot.slane %v87, 1
  %v323 = vsel %vm245, %v321, %v322
  %v324 = vrot.slane %v88, 1
  %v325 = vsel %vm245, %v322, %v324
  %v326 = vrot.slane %v95, 1
  %v327 = vrot.slane %v96, 1
  %v328 = vsel %vm245, %v326, %v327
  %v329 = vrot.slane %v97, 1
  %v330 = vsel %vm245, %v327, %v329
  %v331 = vrot.slane %v98, 1
  %v332 = vrot.slane %v99, 1
  %v333 = vsel %vm245, %v331, %v332
  %v334 = vrot.slane %v100, 1
  %v335 = vsel %vm245, %v332, %v334
  %v336 = vrot.slane %v101, 1
  %v337 = vrot.slane %v102, 1
  %v338 = vsel %vm245, %v336, %v337
  %v339 = vrot.slane %v103, 1
  %v340 = vsel %vm245, %v337, %v339
  %v341 = vrot.slane %v104, 1
  %v342 = vrot.slane %v105, 1
  %v343 = vsel %vm245, %v341, %v342
  %v344 = vrot.slane %v106, 1
  %v345 = vsel %vm245, %v342, %v344
  %v346 = vrot.slane %v107, 1
  %v347 = vrot.slane %v108, 1
  %v348 = vsel %vm245, %v346, %v347
  %v349 = vrot.slane %v109, 1
  %v350 = vsel %vm245, %v347, %v349
  %v351 = vrot.slane %v110, 1
  %v352 = vrot.slane %v111, 1
  %v353 = vsel %vm245, %v351, %v352
  %v354 = vrot.slane %v112, 1
  %v355 = vsel %vm245, %v352, %v354
  %v356 = vrot.slane %v113, 1
  %v357 = vrot.slane %v114, 1
  %v358 = vsel %vm245, %v356, %v357
  %v359 = vrot.slane %v115, 1
  %v360 = vsel %vm245, %v357, %v359
  %v361 = vrot.slane %v116, 1
  %v362 = vrot.slane %v117, 1
  %v363 = vsel %vm245, %v361, %v362
  %v364 = vrot.slane %v118, 1
  %v365 = vsel %vm245, %v362, %v364
  %v366 = vrot.slane %v119, 1
  %v367 = vrot.slane %v120, 1
  %v368 = vsel %vm245, %v366, %v367
  %v369 = vrot.slane %v121, 1
  %v370 = vsel %vm245, %v367, %v369
  %v371 = vrot.slane %v122, 1
  %v372 = vrot.slane %v123, 1
  %v373 = vsel %vm245, %v371, %v372
  %v374 = vrot.slane %v124, 1
  %v375 = vsel %vm245, %v372, %v374
  %v376 = vrot.slane %v125, 1
  %v377 = vrot.slane %v126, 1
  %v378 = vsel %vm245, %v376, %v377
  %v379 = vrot.slane %v127, 1
  %v380 = vsel %vm245, %v377, %v379
  %v381 = vrot.slane %v128, 1
  %v382 = vrot.slane %v129, 1
  %v383 = vsel %vm245, %v381, %v382
  %v384 = vrot.slane %v130, 1
  %v385 = vsel %vm245, %v382, %v384
  %v386 = vrot.slane %v131, 1
  %v387 = vrot.slane %v132, 1
  %v388 = vsel %vm245, %v386, %v387
  %v389 = vrot.slane %v133, 1
  %v390 = vsel %vm245, %v387, %v389
  %v391 = vrot.slane %v134, 1
  %v392 = vrot.slane %v135, 1
  %v393 = vsel %vm245, %v391, %v392
  %v394 = vrot.slane %v136, 1
  %v395 = vsel %vm245, %v392, %v394
  %v396 = vrot.slane %v137, 1
  %v397 = vrot.slane %v138, 1
  %v398 = vsel %vm245, %v396, %v397
  %v399 = vrot.slane %v139, 1
  %v400 = vsel %vm245, %v397, %v399
  %v401 = vrot.slane %v140, 1
  %v402 = vrot.slane %v141, 1
  %v403 = vsel %vm245, %v401, %v402
  %v404 = vrot.slane %v142, 1
  %v405 = vsel %vm245, %v402, %v404
  %406 = vrot.lane.b32.xlu0 %v248, 4
  %v407 = vpop.permute.xlu0 %406
  %408 = vrot.lane.b32.xlu0 %v250, 4
  %v409 = vpop.permute.xlu0 %408
  %410 = vrot.lane.b32.xlu0 %v253, 4
  %v411 = vpop.permute.xlu0 %410
  %412 = vrot.lane.b32.xlu0 %v255, 4
  %v413 = vpop.permute.xlu0 %412
  %414 = vrot.lane.b32.xlu0 %v258, 4
  %v415 = vpop.permute.xlu0 %414
  %416 = vrot.lane.b32.xlu0 %v260, 4
  %v417 = vpop.permute.xlu0 %416
  %418 = vrot.lane.b32.xlu0 %v263, 4
  %v419 = vpop.permute.xlu0 %418
  %420 = vrot.lane.b32.xlu0 %v265, 4
  %v421 = vpop.permute.xlu0 %420
  %422 = vrot.lane.b32.xlu0 %v268, 4
  %v423 = vpop.permute.xlu0 %422
  %424 = vrot.lane.b32.xlu0 %v270, 4
  %v425 = vpop.permute.xlu0 %424
  %426 = vrot.lane.b32.xlu0 %v273, 4
  %v427 = vpop.permute.xlu0 %426
  %428 = vrot.lane.b32.xlu0 %v275, 4
  %v429 = vpop.permute.xlu0 %428
  %430 = vrot.lane.b32.xlu0 %v278, 4
  %v431 = vpop.permute.xlu0 %430
  %432 = vrot.lane.b32.xlu0 %v280, 4
  %v433 = vpop.permute.xlu0 %432
  %434 = vrot.lane.b32.xlu0 %v283, 4
  %v435 = vpop.permute.xlu0 %434
  %436 = vrot.lane.b32.xlu0 %v285, 4
  %v437 = vpop.permute.xlu0 %436
  %438 = vrot.lane.b32.xlu0 %v288, 4
  %v439 = vpop.permute.xlu0 %438
  %440 = vrot.lane.b32.xlu0 %v290, 4
  %v441 = vpop.permute.xlu0 %440
  %442 = vrot.lane.b32.xlu0 %v293, 4
  %v443 = vpop.permute.xlu0 %442
  %444 = vrot.lane.b32.xlu0 %v295, 4
  %v445 = vpop.permute.xlu0 %444
  %446 = vrot.lane.b32.xlu0 %v298, 4
  %v447 = vpop.permute.xlu0 %446
  %448 = vrot.lane.b32.xlu0 %v300, 4
  %v449 = vpop.permute.xlu0 %448
  %450 = vrot.lane.b32.xlu0 %v303, 4
  %v451 = vpop.permute.xlu0 %450
  %452 = vrot.lane.b32.xlu0 %v305, 4
  %v453 = vpop.permute.xlu0 %452
  %454 = vrot.lane.b32.xlu0 %v308, 4
  %v455 = vpop.permute.xlu0 %454
  %456 = vrot.lane.b32.xlu0 %v310, 4
  %v457 = vpop.permute.xlu0 %456
  %458 = vrot.lane.b32.xlu0 %v313, 4
  %v459 = vpop.permute.xlu0 %458
  %460 = vrot.lane.b32.xlu0 %v315, 4
  %v461 = vpop.permute.xlu0 %460
  %462 = vrot.lane.b32.xlu0 %v318, 4
  %v463 = vpop.permute.xlu0 %462
  %464 = vrot.lane.b32.xlu0 %v320, 4
  %v465 = vpop.permute.xlu0 %464
  %466 = vrot.lane.b32.xlu0 %v323, 4
  %v467 = vpop.permute.xlu0 %466
  %468 = vrot.lane.b32.xlu0 %v325, 4
  %v469 = vpop.permute.xlu0 %468
  %470 = vrot.lane.b32.xlu0 %v328, 4
  %v471 = vpop.permute.xlu0 %470
  %472 = vrot.lane.b32.xlu0 %v330, 4
  %v473 = vpop.permute.xlu0 %472
  %474 = vrot.lane.b32.xlu0 %v333, 4
  %v475 = vpop.permute.xlu0 %474
  %476 = vrot.lane.b32.xlu0 %v335, 4
  %v477 = vpop.permute.xlu0 %476
  %478 = vrot.lane.b32.xlu0 %v338, 4
  %v479 = vpop.permute.xlu0 %478
  %480 = vrot.lane.b32.xlu0 %v340, 4
  %v481 = vpop.permute.xlu0 %480
  %482 = vrot.lane.b32.xlu0 %v343, 4
  %v483 = vpop.permute.xlu0 %482
  %484 = vrot.lane.b32.xlu0 %v345, 4
  %v485 = vpop.permute.xlu0 %484
  %486 = vrot.lane.b32.xlu0 %v348, 4
  %v487 = vpop.permute.xlu0 %486
  %488 = vrot.lane.b32.xlu0 %v350, 4
  %v489 = vpop.permute.xlu0 %488
  %490 = vrot.lane.b32.xlu0 %v353, 4
  %v491 = vpop.permute.xlu0 %490
  %492 = vrot.lane.b32.xlu0 %v355, 4
  %v493 = vpop.permute.xlu0 %492
  %494 = vrot.lane.b32.xlu0 %v358, 4
  %v495 = vpop.permute.xlu0 %494
  %496 = vrot.lane.b32.xlu0 %v360, 4
  %v497 = vpop.permute.xlu0 %496
  %498 = vrot.lane.b32.xlu0 %v363, 4
  %v499 = vpop.permute.xlu0 %498
  %500 = vrot.lane.b32.xlu0 %v365, 4
  %v501 = vpop.permute.xlu0 %500
  %502 = vrot.lane.b32.xlu0 %v368, 4
  %v503 = vpop.permute.xlu0 %502
  %504 = vrot.lane.b32.xlu0 %v370, 4
  %v505 = vpop.permute.xlu0 %504
  %506 = vrot.lane.b32.xlu0 %v373, 4
  %v507 = vpop.permute.xlu0 %506
  %508 = vrot.lane.b32.xlu0 %v375, 4
  %v509 = vpop.permute.xlu0 %508
  %510 = vrot.lane.b32.xlu0 %v378, 4
  %v511 = vpop.permute.xlu0 %510
  %512 = vrot.lane.b32.xlu0 %v380, 4
  %v513 = vpop.permute.xlu0 %512
  %514 = vrot.lane.b32.xlu0 %v383, 4
  %v515 = vpop.permute.xlu0 %514
  %516 = vrot.lane.b32.xlu0 %v385, 4
  %v517 = vpop.permute.xlu0 %516
  %518 = vrot.lane.b32.xlu0 %v388, 4
  %v519 = vpop.permute.xlu0 %518
  %520 = vrot.lane.b32.xlu0 %v390, 4
  %v521 = vpop.permute.xlu0 %520
  %522 = vrot.lane.b32.xlu0 %v393, 4
  %v523 = vpop.permute.xlu0 %522
  %524 = vrot.lane.b32.xlu0 %v395, 4
  %v525 = vpop.permute.xlu0 %524
  %526 = vrot.lane.b32.xlu0 %v398, 4
  %v527 = vpop.permute.xlu0 %526
  %528 = vrot.lane.b32.xlu0 %v400, 4
  %v529 = vpop.permute.xlu0 %528
  %530 = vrot.lane.b32.xlu0 %v403, 4
  %v531 = vpop.permute.xlu0 %530
  %532 = vrot.lane.b32.xlu0 %v405, 4
  %v533 = vpop.permute.xlu0 %532
  %vm598 = vcmask 1045504
  %v599 = vrot.slane %v41, 2
  %v600 = vrot.slane %v42, 2
  %v601 = vsel %vm598, %v599, %v600
  %v602 = vrot.slane %v43, 2
  %v603 = vsel %vm598, %v600, %v602
  %v604 = vrot.slane %v44, 2
  %v605 = vrot.slane %v45, 2
  %v606 = vsel %vm598, %v604, %v605
  %v607 = vrot.slane %v46, 2
  %v608 = vsel %vm598, %v605, %v607
  %v609 = vrot.slane %v47, 2
  %v610 = vrot.slane %v48, 2
  %v611 = vsel %vm598, %v609, %v610
  %v612 = vrot.slane %v49, 2
  %v613 = vsel %vm598, %v610, %v612
  %v614 = vrot.slane %v50, 2
  %v615 = vrot.slane %v51, 2
  %v616 = vsel %vm598, %v614, %v615
  %v617 = vrot.slane %v52, 2
  %v618 = vsel %vm598, %v615, %v617
  %v619 = vrot.slane %v53, 2
  %v620 = vrot.slane %v54, 2
  %v621 = vsel %vm598, %v619, %v620
  %v622 = vrot.slane %v55, 2
  %v623 = vsel %vm598, %v620, %v622
  %v624 = vrot.slane %v56, 2
  %v625 = vrot.slane %v57, 2
  %v626 = vsel %vm598, %v624, %v625
  %v627 = vrot.slane %v58, 2
  %v628 = vsel %vm598, %v625, %v627
  %v629 = vrot.slane %v59, 2
  %v630 = vrot.slane %v60, 2
  %v631 = vsel %vm598, %v629, %v630
  %v632 = vrot.slane %v61, 2
  %v633 = vsel %vm598, %v630, %v632
  %v634 = vrot.slane %v62, 2
  %v635 = vrot.slane %v63, 2
  %v636 = vsel %vm598, %v634, %v635
  %v637 = vrot.slane %v64, 2
  %v638 = vsel %vm598, %v635, %v637
  %v639 = vrot.slane %v65, 2
  %v640 = vrot.slane %v66, 2
  %v641 = vsel %vm598, %v639, %v640
  %v642 = vrot.slane %v67, 2
  %v643 = vsel %vm598, %v640, %v642
  %v644 = vrot.slane %v68, 2
  %v645 = vrot.slane %v69, 2
  %v646 = vsel %vm598, %v644, %v645
  %v647 = vrot.slane %v70, 2
  %v648 = vsel %vm598, %v645, %v647
  %v649 = vrot.slane %v71, 2
  %v650 = vrot.slane %v72, 2
  %v651 = vsel %vm598, %v649, %v650
  %v652 = vrot.slane %v73, 2
  %v653 = vsel %vm598, %v650, %v652
  %v654 = vrot.slane %v74, 2
  %v655 = vrot.slane %v75, 2
  %v656 = vsel %vm598, %v654, %v655
  %v657 = vrot.slane %v76, 2
  %v658 = vsel %vm598, %v655, %v657
  %v659 = vrot.slane %v77, 2
  %v660 = vrot.slane %v78, 2
  %v661 = vsel %vm598, %v659, %v660
  %v662 = vrot.slane %v79, 2
  %v663 = vsel %vm598, %v660, %v662
  %v664 = vrot.slane %v80, 2
  %v665 = vrot.slane %v81, 2
  %v666 = vsel %vm598, %v664, %v665
  %v667 = vrot.slane %v82, 2
  %v668 = vsel %vm598, %v665, %v667
  %v669 = vrot.slane %v83, 2
  %v670 = vrot.slane %v84, 2
  %v671 = vsel %vm598, %v669, %v670
  %v672 = vrot.slane %v85, 2
  %v673 = vsel %vm598, %v670, %v672
  %v674 = vrot.slane %v86, 2
  %v675 = vrot.slane %v87, 2
  %v676 = vsel %vm598, %v674, %v675
  %v677 = vrot.slane %v88, 2
  %v678 = vsel %vm598, %v675, %v677
  %v679 = vrot.slane %v95, 2
  %v680 = vrot.slane %v96, 2
  %v681 = vsel %vm598, %v679, %v680
  %v682 = vrot.slane %v97, 2
  %v683 = vsel %vm598, %v680, %v682
  %v684 = vrot.slane %v98, 2
  %v685 = vrot.slane %v99, 2
  %v686 = vsel %vm598, %v684, %v685
  %v687 = vrot.slane %v100, 2
  %v688 = vsel %vm598, %v685, %v687
  %v689 = vrot.slane %v101, 2
  %v690 = vrot.slane %v102, 2
  %v691 = vsel %vm598, %v689, %v690
  %v692 = vrot.slane %v103, 2
  %v693 = vsel %vm598, %v690, %v692
  %v694 = vrot.slane %v104, 2
  %v695 = vrot.slane %v105, 2
  %v696 = vsel %vm598, %v694, %v695
  %v697 = vrot.slane %v106, 2
  %v698 = vsel %vm598, %v695, %v697
  %v699 = vrot.slane %v107, 2
  %v700 = vrot.slane %v108, 2
  %v701 = vsel %vm598, %v699, %v700
  %v702 = vrot.slane %v109, 2
  %v703 = vsel %vm598, %v700, %v702
  %v704 = vrot.slane %v110, 2
  %v705 = vrot.slane %v111, 2
  %v706 = vsel %vm598, %v704, %v705
  %v707 = vrot.slane %v112, 2
  %v708 = vsel %vm598, %v705, %v707
  %v709 = vrot.slane %v113, 2
  %v710 = vrot.slane %v114, 2
  %v711 = vsel %vm598, %v709, %v710
  %v712 = vrot.slane %v115, 2
  %v713 = vsel %vm598, %v710, %v712
  %v714 = vrot.slane %v116, 2
  %v715 = vrot.slane %v117, 2
  %v716 = vsel %vm598, %v714, %v715
  %v717 = vrot.slane %v118, 2
  %v718 = vsel %vm598, %v715, %v717
  %v719 = vrot.slane %v119, 2
  %v720 = vrot.slane %v120, 2
  %v721 = vsel %vm598, %v719, %v720
  %v722 = vrot.slane %v121, 2
  %v723 = vsel %vm598, %v720, %v722
  %v724 = vrot.slane %v122, 2
  %v725 = vrot.slane %v123, 2
  %v726 = vsel %vm598, %v724, %v725
  %v727 = vrot.slane %v124, 2
  %v728 = vsel %vm598, %v725, %v727
  %v729 = vrot.slane %v125, 2
  %v730 = vrot.slane %v126, 2
  %v731 = vsel %vm598, %v729, %v730
  %v732 = vrot.slane %v127, 2
  %v733 = vsel %vm598, %v730, %v732
  %v734 = vrot.slane %v128, 2
  %v735 = vrot.slane %v129, 2
  %v736 = vsel %vm598, %v734, %v735
  %v737 = vrot.slane %v130, 2
  %v738 = vsel %vm598, %v735, %v737
  %v739 = vrot.slane %v131, 2
  %v740 = vrot.slane %v132, 2
  %v741 = vsel %vm598, %v739, %v740
  %v742 = vrot.slane %v133, 2
  %v743 = vsel %vm598, %v740, %v742
  %v744 = vrot.slane %v134, 2
  %v745 = vrot.slane %v135, 2
  %v746 = vsel %vm598, %v744, %v745
  %v747 = vrot.slane %v136, 2
  %v748 = vsel %vm598, %v745, %v747
  %v749 = vrot.slane %v137, 2
  %v750 = vrot.slane %v138, 2
  %v751 = vsel %vm598, %v749, %v750
  %v752 = vrot.slane %v139, 2
  %v753 = vsel %vm598, %v750, %v752
  %v754 = vrot.slane %v140, 2
  %v755 = vrot.slane %v141, 2
  %v756 = vsel %vm598, %v754, %v755
  %v757 = vrot.slane %v142, 2
  %v758 = vsel %vm598, %v755, %v757
  %759 = vrot.lane.b32.xlu0 %v601, 8
  %v760 = vpop.permute.xlu0 %759
  %761 = vrot.lane.b32.xlu0 %v603, 8
  %v762 = vpop.permute.xlu0 %761
  %763 = vrot.lane.b32.xlu0 %v606, 8
  %v764 = vpop.permute.xlu0 %763
  %765 = vrot.lane.b32.xlu0 %v608, 8
  %v766 = vpop.permute.xlu0 %765
  %767 = vrot.lane.b32.xlu0 %v611, 8
  %v768 = vpop.permute.xlu0 %767
  %769 = vrot.lane.b32.xlu0 %v613, 8
  %v770 = vpop.permute.xlu0 %769
  %771 = vrot.lane.b32.xlu0 %v616, 8
  %v772 = vpop.permute.xlu0 %771
  %773 = vrot.lane.b32.xlu0 %v618, 8
  %v774 = vpop.permute.xlu0 %773
  %775 = vrot.lane.b32.xlu0 %v621, 8
  %v776 = vpop.permute.xlu0 %775
  %777 = vrot.lane.b32.xlu0 %v623, 8
  %v778 = vpop.permute.xlu0 %777
  %779 = vrot.lane.b32.xlu0 %v626, 8
  %v780 = vpop.permute.xlu0 %779
  %781 = vrot.lane.b32.xlu0 %v628, 8
  %v782 = vpop.permute.xlu0 %781
  %783 = vrot.lane.b32.xlu0 %v631, 8
  %v784 = vpop.permute.xlu0 %783
  %785 = vrot.lane.b32.xlu0 %v633, 8
  %v786 = vpop.permute.xlu0 %785
  %787 = vrot.lane.b32.xlu0 %v636, 8
  %v788 = vpop.permute.xlu0 %787
  %789 = vrot.lane.b32.xlu0 %v638, 8
  %v790 = vpop.permute.xlu0 %789
  %791 = vrot.lane.b32.xlu0 %v641, 8
  %v792 = vpop.permute.xlu0 %791
  %793 = vrot.lane.b32.xlu0 %v643, 8
  %v794 = vpop.permute.xlu0 %793
  %795 = vrot.lane.b32.xlu0 %v646, 8
  %v796 = vpop.permute.xlu0 %795
  %797 = vrot.lane.b32.xlu0 %v648, 8
  %v798 = vpop.permute.xlu0 %797
  %799 = vrot.lane.b32.xlu0 %v651, 8
  %v800 = vpop.permute.xlu0 %799
  %801 = vrot.lane.b32.xlu0 %v653, 8
  %v802 = vpop.permute.xlu0 %801
  %803 = vrot.lane.b32.xlu0 %v656, 8
  %v804 = vpop.permute.xlu0 %803
  %805 = vrot.lane.b32.xlu0 %v658, 8
  %v806 = vpop.permute.xlu0 %805
  %807 = vrot.lane.b32.xlu0 %v661, 8
  %v808 = vpop.permute.xlu0 %807
  %809 = vrot.lane.b32.xlu0 %v663, 8
  %v810 = vpop.permute.xlu0 %809
  %811 = vrot.lane.b32.xlu0 %v666, 8
  %v812 = vpop.permute.xlu0 %811
  %813 = vrot.lane.b32.xlu0 %v668, 8
  %v814 = vpop.permute.xlu0 %813
  %815 = vrot.lane.b32.xlu0 %v671, 8
  %v816 = vpop.permute.xlu0 %815
  %817 = vrot.lane.b32.xlu0 %v673, 8
  %v818 = vpop.permute.xlu0 %817
  %819 = vrot.lane.b32.xlu0 %v676, 8
  %v820 = vpop.permute.xlu0 %819
  %821 = vrot.lane.b32.xlu0 %v678, 8
  %v822 = vpop.permute.xlu0 %821
  %823 = vrot.lane.b32.xlu0 %v681, 8
  %v824 = vpop.permute.xlu0 %823
  %825 = vrot.lane.b32.xlu0 %v683, 8
  %v826 = vpop.permute.xlu0 %825
  %827 = vrot.lane.b32.xlu0 %v686, 8
  %v828 = vpop.permute.xlu0 %827
  %829 = vrot.lane.b32.xlu0 %v688, 8
  %v830 = vpop.permute.xlu0 %829
  %831 = vrot.lane.b32.xlu0 %v691, 8
  %v832 = vpop.permute.xlu0 %831
  %833 = vrot.lane.b32.xlu0 %v693, 8
  %v834 = vpop.permute.xlu0 %833
  %835 = vrot.lane.b32.xlu0 %v696, 8
  %v836 = vpop.permute.xlu0 %835
  %837 = vrot.lane.b32.xlu0 %v698, 8
  %v838 = vpop.permute.xlu0 %837
  %839 = vrot.lane.b32.xlu0 %v701, 8
  %v840 = vpop.permute.xlu0 %839
  %841 = vrot.lane.b32.xlu0 %v703, 8
  %v842 = vpop.permute.xlu0 %841
  %843 = vrot.lane.b32.xlu0 %v706, 8
  %v844 = vpop.permute.xlu0 %843
  %845 = vrot.lane.b32.xlu0 %v708, 8
  %v846 = vpop.permute.xlu0 %845
  %847 = vrot.lane.b32.xlu0 %v711, 8
  %v848 = vpop.permute.xlu0 %847
  %849 = vrot.lane.b32.xlu0 %v713, 8
  %v850 = vpop.permute.xlu0 %849
  %851 = vrot.lane.b32.xlu0 %v716, 8
  %v852 = vpop.permute.xlu0 %851
  %853 = vrot.lane.b32.xlu0 %v718, 8
  %v854 = vpop.permute.xlu0 %853
  %855 = vrot.lane.b32.xlu0 %v721, 8
  %v856 = vpop.permute.xlu0 %855
  %857 = vrot.lane.b32.xlu0 %v723, 8
  %v858 = vpop.permute.xlu0 %857
  %859 = vrot.lane.b32.xlu0 %v726, 8
  %v860 = vpop.permute.xlu0 %859
  %861 = vrot.lane.b32.xlu0 %v728, 8
  %v862 = vpop.permute.xlu0 %861
  %863 = vrot.lane.b32.xlu0 %v731, 8
  %v864 = vpop.permute.xlu0 %863
  %865 = vrot.lane.b32.xlu0 %v733, 8
  %v866 = vpop.permute.xlu0 %865
  %867 = vrot.lane.b32.xlu0 %v736, 8
  %v868 = vpop.permute.xlu0 %867
  %869 = vrot.lane.b32.xlu0 %v738, 8
  %v870 = vpop.permute.xlu0 %869
  %871 = vrot.lane.b32.xlu0 %v741, 8
  %v872 = vpop.permute.xlu0 %871
  %873 = vrot.lane.b32.xlu0 %v743, 8
  %v874 = vpop.permute.xlu0 %873
  %875 = vrot.lane.b32.xlu0 %v746, 8
  %v876 = vpop.permute.xlu0 %875
  %877 = vrot.lane.b32.xlu0 %v748, 8
  %v878 = vpop.permute.xlu0 %877
  %879 = vrot.lane.b32.xlu0 %v751, 8
  %v880 = vpop.permute.xlu0 %879
  %881 = vrot.lane.b32.xlu0 %v753, 8
  %v882 = vpop.permute.xlu0 %881
  %883 = vrot.lane.b32.xlu0 %v756, 8
  %v884 = vpop.permute.xlu0 %883
  %885 = vrot.lane.b32.xlu0 %v758, 8
  %v886 = vpop.permute.xlu0 %885
  %955 = vrot.lane.b32.xlu0 %v44, 12
  %v956 = vpop.permute.xlu0 %955
  %957 = vrot.lane.b32.xlu0 %v45, 12
  %v958 = vpop.permute.xlu0 %957
  %959 = vrot.lane.b32.xlu0 %v47, 12
  %v960 = vpop.permute.xlu0 %959
  %961 = vrot.lane.b32.xlu0 %v48, 12
  %v962 = vpop.permute.xlu0 %961
  %963 = vrot.lane.b32.xlu0 %v50, 12
  %v964 = vpop.permute.xlu0 %963
  %965 = vrot.lane.b32.xlu0 %v51, 12
  %v966 = vpop.permute.xlu0 %965
  %967 = vrot.lane.b32.xlu0 %v53, 12
  %v968 = vpop.permute.xlu0 %967
  %969 = vrot.lane.b32.xlu0 %v54, 12
  %v970 = vpop.permute.xlu0 %969
  %971 = vrot.lane.b32.xlu0 %v56, 12
  %v972 = vpop.permute.xlu0 %971
  %973 = vrot.lane.b32.xlu0 %v57, 12
  %v974 = vpop.permute.xlu0 %973
  %975 = vrot.lane.b32.xlu0 %v59, 12
  %v976 = vpop.permute.xlu0 %975
  %977 = vrot.lane.b32.xlu0 %v60, 12
  %v978 = vpop.permute.xlu0 %977
  %979 = vrot.lane.b32.xlu0 %v62, 12
  %v980 = vpop.permute.xlu0 %979
  %981 = vrot.lane.b32.xlu0 %v63, 12
  %v982 = vpop.permute.xlu0 %981
  %983 = vrot.lane.b32.xlu0 %v65, 12
  %v984 = vpop.permute.xlu0 %983
  %985 = vrot.lane.b32.xlu0 %v66, 12
  %v986 = vpop.permute.xlu0 %985
  %987 = vrot.lane.b32.xlu0 %v68, 12
  %v988 = vpop.permute.xlu0 %987
  %989 = vrot.lane.b32.xlu0 %v69, 12
  %v990 = vpop.permute.xlu0 %989
  %991 = vrot.lane.b32.xlu0 %v71, 12
  %v992 = vpop.permute.xlu0 %991
  %993 = vrot.lane.b32.xlu0 %v72, 12
  %v994 = vpop.permute.xlu0 %993
  %995 = vrot.lane.b32.xlu0 %v74, 12
  %v996 = vpop.permute.xlu0 %995
  %997 = vrot.lane.b32.xlu0 %v75, 12
  %v998 = vpop.permute.xlu0 %997
  %999 = vrot.lane.b32.xlu0 %v77, 12
  %v1000 = vpop.permute.xlu0 %999
  %1001 = vrot.lane.b32.xlu0 %v78, 12
  %v1002 = vpop.permute.xlu0 %1001
  %1003 = vrot.lane.b32.xlu0 %v80, 12
  %v1004 = vpop.permute.xlu0 %1003
  %1005 = vrot.lane.b32.xlu0 %v81, 12
  %v1006 = vpop.permute.xlu0 %1005
  %1007 = vrot.lane.b32.xlu0 %v83, 12
  %v1008 = vpop.permute.xlu0 %1007
  %1009 = vrot.lane.b32.xlu0 %v84, 12
  %v1010 = vpop.permute.xlu0 %1009
  %1011 = vrot.lane.b32.xlu0 %v86, 12
  %v1012 = vpop.permute.xlu0 %1011
  %1013 = vrot.lane.b32.xlu0 %v87, 12
  %v1014 = vpop.permute.xlu0 %1013
  %1015 = vrot.lane.b32.xlu0 %v89, 12
  %v1016 = vpop.permute.xlu0 %1015
  %1017 = vrot.lane.b32.xlu0 %v90, 12
  %v1018 = vpop.permute.xlu0 %1017
  %1019 = vrot.lane.b32.xlu0 %v98, 12
  %v1020 = vpop.permute.xlu0 %1019
  %1021 = vrot.lane.b32.xlu0 %v99, 12
  %v1022 = vpop.permute.xlu0 %1021
  %1023 = vrot.lane.b32.xlu0 %v101, 12
  %v1024 = vpop.permute.xlu0 %1023
  %1025 = vrot.lane.b32.xlu0 %v102, 12
  %v1026 = vpop.permute.xlu0 %1025
  %1027 = vrot.lane.b32.xlu0 %v104, 12
  %v1028 = vpop.permute.xlu0 %1027
  %1029 = vrot.lane.b32.xlu0 %v105, 12
  %v1030 = vpop.permute.xlu0 %1029
  %1031 = vrot.lane.b32.xlu0 %v107, 12
  %v1032 = vpop.permute.xlu0 %1031
  %1033 = vrot.lane.b32.xlu0 %v108, 12
  %v1034 = vpop.permute.xlu0 %1033
  %1035 = vrot.lane.b32.xlu0 %v110, 12
  %v1036 = vpop.permute.xlu0 %1035
  %1037 = vrot.lane.b32.xlu0 %v111, 12
  %v1038 = vpop.permute.xlu0 %1037
  %1039 = vrot.lane.b32.xlu0 %v113, 12
  %v1040 = vpop.permute.xlu0 %1039
  %1041 = vrot.lane.b32.xlu0 %v114, 12
  %v1042 = vpop.permute.xlu0 %1041
  %1043 = vrot.lane.b32.xlu0 %v116, 12
  %v1044 = vpop.permute.xlu0 %1043
  %1045 = vrot.lane.b32.xlu0 %v117, 12
  %v1046 = vpop.permute.xlu0 %1045
  %1047 = vrot.lane.b32.xlu0 %v119, 12
  %v1048 = vpop.permute.xlu0 %1047
  %1049 = vrot.lane.b32.xlu0 %v120, 12
  %v1050 = vpop.permute.xlu0 %1049
  %1051 = vrot.lane.b32.xlu0 %v122, 12
  %v1052 = vpop.permute.xlu0 %1051
  %1053 = vrot.lane.b32.xlu0 %v123, 12
  %v1054 = vpop.permute.xlu0 %1053
  %1055 = vrot.lane.b32.xlu0 %v125, 12
  %v1056 = vpop.permute.xlu0 %1055
  %1057 = vrot.lane.b32.xlu0 %v126, 12
  %v1058 = vpop.permute.xlu0 %1057
  %1059 = vrot.lane.b32.xlu0 %v128, 12
  %v1060 = vpop.permute.xlu0 %1059
  %1061 = vrot.lane.b32.xlu0 %v129, 12
  %v1062 = vpop.permute.xlu0 %1061
  %1063 = vrot.lane.b32.xlu0 %v131, 12
  %v1064 = vpop.permute.xlu0 %1063
  %1065 = vrot.lane.b32.xlu0 %v132, 12
  %v1066 = vpop.permute.xlu0 %1065
  %1067 = vrot.lane.b32.xlu0 %v134, 12
  %v1068 = vpop.permute.xlu0 %1067
  %1069 = vrot.lane.b32.xlu0 %v135, 12
  %v1070 = vpop.permute.xlu0 %1069
  %1071 = vrot.lane.b32.xlu0 %v137, 12
  %v1072 = vpop.permute.xlu0 %1071
  %1073 = vrot.lane.b32.xlu0 %v138, 12
  %v1074 = vpop.permute.xlu0 %1073
  %1075 = vrot.lane.b32.xlu0 %v140, 12
  %v1076 = vpop.permute.xlu0 %1075
  %1077 = vrot.lane.b32.xlu0 %v141, 12
  %v1078 = vpop.permute.xlu0 %1077
  %1079 = vrot.lane.b32.xlu0 %v143, 12
  %v1080 = vpop.permute.xlu0 %1079
  %1081 = vrot.lane.b32.xlu0 %v144, 12
  %v1082 = vpop.permute.xlu0 %1081
  %v1149 = vrot.slane %v89, 1
  %v1150 = vrot.slane %v90, 1
  %v1151 = vsel %vm245, %v1149, %v1150
  %v1152 = vrot.slane %v91, 1
  %v1153 = vsel %vm245, %v1150, %v1152
  %v1154 = vrot.slane %v143, 1
  %v1155 = vrot.slane %v144, 1
  %v1156 = vsel %vm245, %v1154, %v1155
  %v1157 = vrot.slane %v145, 1
  %v1158 = vsel %vm245, %v1155, %v1157
  %1159 = vrot.lane.b32.xlu0 %v253, 16
  %v1160 = vpop.permute.xlu0 %1159
  %1161 = vrot.lane.b32.xlu0 %v255, 16
  %v1162 = vpop.permute.xlu0 %1161
  %1163 = vrot.lane.b32.xlu0 %v258, 16
  %v1164 = vpop.permute.xlu0 %1163
  %1165 = vrot.lane.b32.xlu0 %v260, 16
  %v1166 = vpop.permute.xlu0 %1165
  %1167 = vrot.lane.b32.xlu0 %v263, 16
  %v1168 = vpop.permute.xlu0 %1167
  %1169 = vrot.lane.b32.xlu0 %v265, 16
  %v1170 = vpop.permute.xlu0 %1169
  %1171 = vrot.lane.b32.xlu0 %v268, 16
  %v1172 = vpop.permute.xlu0 %1171
  %1173 = vrot.lane.b32.xlu0 %v270, 16
  %v1174 = vpop.permute.xlu0 %1173
  %1175 = vrot.lane.b32.xlu0 %v273, 16
  %v1176 = vpop.permute.xlu0 %1175
  %1177 = vrot.lane.b32.xlu0 %v275, 16
  %v1178 = vpop.permute.xlu0 %1177
  %1179 = vrot.lane.b32.xlu0 %v278, 16
  %v1180 = vpop.permute.xlu0 %1179
  %1181 = vrot.lane.b32.xlu0 %v280, 16
  %v1182 = vpop.permute.xlu0 %1181
  %1183 = vrot.lane.b32.xlu0 %v283, 16
  %v1184 = vpop.permute.xlu0 %1183
  %1185 = vrot.lane.b32.xlu0 %v285, 16
  %v1186 = vpop.permute.xlu0 %1185
  %1187 = vrot.lane.b32.xlu0 %v288, 16
  %v1188 = vpop.permute.xlu0 %1187
  %1189 = vrot.lane.b32.xlu0 %v290, 16
  %v1190 = vpop.permute.xlu0 %1189
  %1191 = vrot.lane.b32.xlu0 %v293, 16
  %v1192 = vpop.permute.xlu0 %1191
  %1193 = vrot.lane.b32.xlu0 %v295, 16
  %v1194 = vpop.permute.xlu0 %1193
  %1195 = vrot.lane.b32.xlu0 %v298, 16
  %v1196 = vpop.permute.xlu0 %1195
  %1197 = vrot.lane.b32.xlu0 %v300, 16
  %v1198 = vpop.permute.xlu0 %1197
  %1199 = vrot.lane.b32.xlu0 %v303, 16
  %v1200 = vpop.permute.xlu0 %1199
  %1201 = vrot.lane.b32.xlu0 %v305, 16
  %v1202 = vpop.permute.xlu0 %1201
  %1203 = vrot.lane.b32.xlu0 %v308, 16
  %v1204 = vpop.permute.xlu0 %1203
  %1205 = vrot.lane.b32.xlu0 %v310, 16
  %v1206 = vpop.permute.xlu0 %1205
  %1207 = vrot.lane.b32.xlu0 %v313, 16
  %v1208 = vpop.permute.xlu0 %1207
  %1209 = vrot.lane.b32.xlu0 %v315, 16
  %v1210 = vpop.permute.xlu0 %1209
  %1211 = vrot.lane.b32.xlu0 %v318, 16
  %v1212 = vpop.permute.xlu0 %1211
  %1213 = vrot.lane.b32.xlu0 %v320, 16
  %v1214 = vpop.permute.xlu0 %1213
  %1215 = vrot.lane.b32.xlu0 %v323, 16
  %v1216 = vpop.permute.xlu0 %1215
  %1217 = vrot.lane.b32.xlu0 %v325, 16
  %v1218 = vpop.permute.xlu0 %1217
  %1219 = vrot.lane.b32.xlu0 %v1151, 16
  %v1220 = vpop.permute.xlu0 %1219
  %1221 = vrot.lane.b32.xlu0 %v1153, 16
  %v1222 = vpop.permute.xlu0 %1221
  %1223 = vrot.lane.b32.xlu0 %v333, 16
  %v1224 = vpop.permute.xlu0 %1223
  %1225 = vrot.lane.b32.xlu0 %v335, 16
  %v1226 = vpop.permute.xlu0 %1225
  %1227 = vrot.lane.b32.xlu0 %v338, 16
  %v1228 = vpop.permute.xlu0 %1227
  %1229 = vrot.lane.b32.xlu0 %v340, 16
  %v1230 = vpop.permute.xlu0 %1229
  %1231 = vrot.lane.b32.xlu0 %v343, 16
  %v1232 = vpop.permute.xlu0 %1231
  %1233 = vrot.lane.b32.xlu0 %v345, 16
  %v1234 = vpop.permute.xlu0 %1233
  %1235 = vrot.lane.b32.xlu0 %v348, 16
  %v1236 = vpop.permute.xlu0 %1235
  %1237 = vrot.lane.b32.xlu0 %v350, 16
  %v1238 = vpop.permute.xlu0 %1237
  %1239 = vrot.lane.b32.xlu0 %v353, 16
  %v1240 = vpop.permute.xlu0 %1239
  %1241 = vrot.lane.b32.xlu0 %v355, 16
  %v1242 = vpop.permute.xlu0 %1241
  %1243 = vrot.lane.b32.xlu0 %v358, 16
  %v1244 = vpop.permute.xlu0 %1243
  %1245 = vrot.lane.b32.xlu0 %v360, 16
  %v1246 = vpop.permute.xlu0 %1245
  %1247 = vrot.lane.b32.xlu0 %v363, 16
  %v1248 = vpop.permute.xlu0 %1247
  %1249 = vrot.lane.b32.xlu0 %v365, 16
  %v1250 = vpop.permute.xlu0 %1249
  %1251 = vrot.lane.b32.xlu0 %v368, 16
  %v1252 = vpop.permute.xlu0 %1251
  %1253 = vrot.lane.b32.xlu0 %v370, 16
  %v1254 = vpop.permute.xlu0 %1253
  %1255 = vrot.lane.b32.xlu0 %v373, 16
  %v1256 = vpop.permute.xlu0 %1255
  %1257 = vrot.lane.b32.xlu0 %v375, 16
  %v1258 = vpop.permute.xlu0 %1257
  %1259 = vrot.lane.b32.xlu0 %v378, 16
  %v1260 = vpop.permute.xlu0 %1259
  %1261 = vrot.lane.b32.xlu0 %v380, 16
  %v1262 = vpop.permute.xlu0 %1261
  %1263 = vrot.lane.b32.xlu0 %v383, 16
  %v1264 = vpop.permute.xlu0 %1263
  %1265 = vrot.lane.b32.xlu0 %v385, 16
  %v1266 = vpop.permute.xlu0 %1265
  %1267 = vrot.lane.b32.xlu0 %v388, 16
  %v1268 = vpop.permute.xlu0 %1267
  %1269 = vrot.lane.b32.xlu0 %v390, 16
  %v1270 = vpop.permute.xlu0 %1269
  %1271 = vrot.lane.b32.xlu0 %v393, 16
  %v1272 = vpop.permute.xlu0 %1271
  %1273 = vrot.lane.b32.xlu0 %v395, 16
  %v1274 = vpop.permute.xlu0 %1273
  %1275 = vrot.lane.b32.xlu0 %v398, 16
  %v1276 = vpop.permute.xlu0 %1275
  %1277 = vrot.lane.b32.xlu0 %v400, 16
  %v1278 = vpop.permute.xlu0 %1277
  %1279 = vrot.lane.b32.xlu0 %v403, 16
  %v1280 = vpop.permute.xlu0 %1279
  %1281 = vrot.lane.b32.xlu0 %v405, 16
  %v1282 = vpop.permute.xlu0 %1281
  %1283 = vrot.lane.b32.xlu0 %v1156, 16
  %v1284 = vpop.permute.xlu0 %1283
  %1285 = vrot.lane.b32.xlu0 %v1158, 16
  %v1286 = vpop.permute.xlu0 %1285
  %v1351 = vrot.slane %v89, 2
  %v1352 = vrot.slane %v90, 2
  %v1353 = vsel %vm598, %v1351, %v1352
  %v1354 = vrot.slane %v91, 2
  %v1355 = vsel %vm598, %v1352, %v1354
  %v1356 = vrot.slane %v143, 2
  %v1357 = vrot.slane %v144, 2
  %v1358 = vsel %vm598, %v1356, %v1357
  %v1359 = vrot.slane %v145, 2
  %v1360 = vsel %vm598, %v1357, %v1359
  %1361 = vrot.lane.b32.xlu0 %v606, 20
  %v1362 = vpop.permute.xlu0 %1361
  %1363 = vrot.lane.b32.xlu0 %v608, 20
  %v1364 = vpop.permute.xlu0 %1363
  %1365 = vrot.lane.b32.xlu0 %v611, 20
  %v1366 = vpop.permute.xlu0 %1365
  %1367 = vrot.lane.b32.xlu0 %v613, 20
  %v1368 = vpop.permute.xlu0 %1367
  %1369 = vrot.lane.b32.xlu0 %v616, 20
  %v1370 = vpop.permute.xlu0 %1369
  %1371 = vrot.lane.b32.xlu0 %v618, 20
  %v1372 = vpop.permute.xlu0 %1371
  %1373 = vrot.lane.b32.xlu0 %v621, 20
  %v1374 = vpop.permute.xlu0 %1373
  %1375 = vrot.lane.b32.xlu0 %v623, 20
  %v1376 = vpop.permute.xlu0 %1375
  %1377 = vrot.lane.b32.xlu0 %v626, 20
  %v1378 = vpop.permute.xlu0 %1377
  %1379 = vrot.lane.b32.xlu0 %v628, 20
  %v1380 = vpop.permute.xlu0 %1379
  %1381 = vrot.lane.b32.xlu0 %v631, 20
  %v1382 = vpop.permute.xlu0 %1381
  %1383 = vrot.lane.b32.xlu0 %v633, 20
  %v1384 = vpop.permute.xlu0 %1383
  %1385 = vrot.lane.b32.xlu0 %v636, 20
  %v1386 = vpop.permute.xlu0 %1385
  %1387 = vrot.lane.b32.xlu0 %v638, 20
  %v1388 = vpop.permute.xlu0 %1387
  %1389 = vrot.lane.b32.xlu0 %v641, 20
  %v1390 = vpop.permute.xlu0 %1389
  %1391 = vrot.lane.b32.xlu0 %v643, 20
  %v1392 = vpop.permute.xlu0 %1391
  %1393 = vrot.lane.b32.xlu0 %v646, 20
  %v1394 = vpop.permute.xlu0 %1393
  %1395 = vrot.lane.b32.xlu0 %v648, 20
  %v1396 = vpop.permute.xlu0 %1395
  %1397 = vrot.lane.b32.xlu0 %v651, 20
  %v1398 = vpop.permute.xlu0 %1397
  %1399 = vrot.lane.b32.xlu0 %v653, 20
  %v1400 = vpop.permute.xlu0 %1399
  %1401 = vrot.lane.b32.xlu0 %v656, 20
  %v1402 = vpop.permute.xlu0 %1401
  %1403 = vrot.lane.b32.xlu0 %v658, 20
  %v1404 = vpop.permute.xlu0 %1403
  %1405 = vrot.lane.b32.xlu0 %v661, 20
  %v1406 = vpop.permute.xlu0 %1405
  %1407 = vrot.lane.b32.xlu0 %v663, 20
  %v1408 = vpop.permute.xlu0 %1407
  %1409 = vrot.lane.b32.xlu0 %v666, 20
  %v1410 = vpop.permute.xlu0 %1409
  %1411 = vrot.lane.b32.xlu0 %v668, 20
  %v1412 = vpop.permute.xlu0 %1411
  %1413 = vrot.lane.b32.xlu0 %v671, 20
  %v1414 = vpop.permute.xlu0 %1413
  %1415 = vrot.lane.b32.xlu0 %v673, 20
  %v1416 = vpop.permute.xlu0 %1415
  %1417 = vrot.lane.b32.xlu0 %v676, 20
  %v1418 = vpop.permute.xlu0 %1417
  %1419 = vrot.lane.b32.xlu0 %v678, 20
  %v1420 = vpop.permute.xlu0 %1419
  %1421 = vrot.lane.b32.xlu0 %v1353, 20
  %v1422 = vpop.permute.xlu0 %1421
  %1423 = vrot.lane.b32.xlu0 %v1355, 20
  %v1424 = vpop.permute.xlu0 %1423
  %1425 = vrot.lane.b32.xlu0 %v686, 20
  %v1426 = vpop.permute.xlu0 %1425
  %1427 = vrot.lane.b32.xlu0 %v688, 20
  %v1428 = vpop.permute.xlu0 %1427
  %1429 = vrot.lane.b32.xlu0 %v691, 20
  %v1430 = vpop.permute.xlu0 %1429
  %1431 = vrot.lane.b32.xlu0 %v693, 20
  %v1432 = vpop.permute.xlu0 %1431
  %1433 = vrot.lane.b32.xlu0 %v696, 20
  %v1434 = vpop.permute.xlu0 %1433
  %1435 = vrot.lane.b32.xlu0 %v698, 20
  %v1436 = vpop.permute.xlu0 %1435
  %1437 = vrot.lane.b32.xlu0 %v701, 20
  %v1438 = vpop.permute.xlu0 %1437
  %1439 = vrot.lane.b32.xlu0 %v703, 20
  %v1440 = vpop.permute.xlu0 %1439
  %1441 = vrot.lane.b32.xlu0 %v706, 20
  %v1442 = vpop.permute.xlu0 %1441
  %1443 = vrot.lane.b32.xlu0 %v708, 20
  %v1444 = vpop.permute.xlu0 %1443
  %1445 = vrot.lane.b32.xlu0 %v711, 20
  %v1446 = vpop.permute.xlu0 %1445
  %1447 = vrot.lane.b32.xlu0 %v713, 20
  %v1448 = vpop.permute.xlu0 %1447
  %1449 = vrot.lane.b32.xlu0 %v716, 20
  %v1450 = vpop.permute.xlu0 %1449
  %1451 = vrot.lane.b32.xlu0 %v718, 20
  %v1452 = vpop.permute.xlu0 %1451
  %1453 = vrot.lane.b32.xlu0 %v721, 20
  %v1454 = vpop.permute.xlu0 %1453
  %1455 = vrot.lane.b32.xlu0 %v723, 20
  %v1456 = vpop.permute.xlu0 %1455
  %1457 = vrot.lane.b32.xlu0 %v726, 20
  %v1458 = vpop.permute.xlu0 %1457
  %1459 = vrot.lane.b32.xlu0 %v728, 20
  %v1460 = vpop.permute.xlu0 %1459
  %1461 = vrot.lane.b32.xlu0 %v731, 20
  %v1462 = vpop.permute.xlu0 %1461
  %1463 = vrot.lane.b32.xlu0 %v733, 20
  %v1464 = vpop.permute.xlu0 %1463
  %1465 = vrot.lane.b32.xlu0 %v736, 20
  %v1466 = vpop.permute.xlu0 %1465
  %1467 = vrot.lane.b32.xlu0 %v738, 20
  %v1468 = vpop.permute.xlu0 %1467
  %1469 = vrot.lane.b32.xlu0 %v741, 20
  %v1470 = vpop.permute.xlu0 %1469
  %1471 = vrot.lane.b32.xlu0 %v743, 20
  %v1472 = vpop.permute.xlu0 %1471
  %1473 = vrot.lane.b32.xlu0 %v746, 20
  %v1474 = vpop.permute.xlu0 %1473
  %1475 = vrot.lane.b32.xlu0 %v748, 20
  %v1476 = vpop.permute.xlu0 %1475
  %1477 = vrot.lane.b32.xlu0 %v751, 20
  %v1478 = vpop.permute.xlu0 %1477
  %1479 = vrot.lane.b32.xlu0 %v753, 20
  %v1480 = vpop.permute.xlu0 %1479
  %1481 = vrot.lane.b32.xlu0 %v756, 20
  %v1482 = vpop.permute.xlu0 %1481
  %1483 = vrot.lane.b32.xlu0 %v758, 20
  %v1484 = vpop.permute.xlu0 %1483
  %1485 = vrot.lane.b32.xlu0 %v1358, 20
  %v1486 = vpop.permute.xlu0 %1485
  %1487 = vrot.lane.b32.xlu0 %v1360, 20
  %v1488 = vpop.permute.xlu0 %1487
  %1557 = vrot.lane.b32.xlu0 %v47, 24
  %v1558 = vpop.permute.xlu0 %1557
  %1559 = vrot.lane.b32.xlu0 %v48, 24
  %v1560 = vpop.permute.xlu0 %1559
  %1561 = vrot.lane.b32.xlu0 %v50, 24
  %v1562 = vpop.permute.xlu0 %1561
  %1563 = vrot.lane.b32.xlu0 %v51, 24
  %v1564 = vpop.permute.xlu0 %1563
  %1565 = vrot.lane.b32.xlu0 %v53, 24
  %v1566 = vpop.permute.xlu0 %1565
  %1567 = vrot.lane.b32.xlu0 %v54, 24
  %v1568 = vpop.permute.xlu0 %1567
  %1569 = vrot.lane.b32.xlu0 %v56, 24
  %v1570 = vpop.permute.xlu0 %1569
  %1571 = vrot.lane.b32.xlu0 %v57, 24
  %v1572 = vpop.permute.xlu0 %1571
  %1573 = vrot.lane.b32.xlu0 %v59, 24
  %v1574 = vpop.permute.xlu0 %1573
  %1575 = vrot.lane.b32.xlu0 %v60, 24
  %v1576 = vpop.permute.xlu0 %1575
  %1577 = vrot.lane.b32.xlu0 %v62, 24
  %v1578 = vpop.permute.xlu0 %1577
  %1579 = vrot.lane.b32.xlu0 %v63, 24
  %v1580 = vpop.permute.xlu0 %1579
  %1581 = vrot.lane.b32.xlu0 %v65, 24
  %v1582 = vpop.permute.xlu0 %1581
  %1583 = vrot.lane.b32.xlu0 %v66, 24
  %v1584 = vpop.permute.xlu0 %1583
  %1585 = vrot.lane.b32.xlu0 %v68, 24
  %v1586 = vpop.permute.xlu0 %1585
  %1587 = vrot.lane.b32.xlu0 %v69, 24
  %v1588 = vpop.permute.xlu0 %1587
  %1589 = vrot.lane.b32.xlu0 %v71, 24
  %v1590 = vpop.permute.xlu0 %1589
  %1591 = vrot.lane.b32.xlu0 %v72, 24
  %v1592 = vpop.permute.xlu0 %1591
  %1593 = vrot.lane.b32.xlu0 %v74, 24
  %v1594 = vpop.permute.xlu0 %1593
  %1595 = vrot.lane.b32.xlu0 %v75, 24
  %v1596 = vpop.permute.xlu0 %1595
  %1597 = vrot.lane.b32.xlu0 %v77, 24
  %v1598 = vpop.permute.xlu0 %1597
  %1599 = vrot.lane.b32.xlu0 %v78, 24
  %v1600 = vpop.permute.xlu0 %1599
  %1601 = vrot.lane.b32.xlu0 %v80, 24
  %v1602 = vpop.permute.xlu0 %1601
  %1603 = vrot.lane.b32.xlu0 %v81, 24
  %v1604 = vpop.permute.xlu0 %1603
  %1605 = vrot.lane.b32.xlu0 %v83, 24
  %v1606 = vpop.permute.xlu0 %1605
  %1607 = vrot.lane.b32.xlu0 %v84, 24
  %v1608 = vpop.permute.xlu0 %1607
  %1609 = vrot.lane.b32.xlu0 %v86, 24
  %v1610 = vpop.permute.xlu0 %1609
  %1611 = vrot.lane.b32.xlu0 %v87, 24
  %v1612 = vpop.permute.xlu0 %1611
  %1613 = vrot.lane.b32.xlu0 %v89, 24
  %v1614 = vpop.permute.xlu0 %1613
  %1615 = vrot.lane.b32.xlu0 %v90, 24
  %v1616 = vpop.permute.xlu0 %1615
  %1617 = vrot.lane.b32.xlu0 %v92, 24
  %v1618 = vpop.permute.xlu0 %1617
  %1619 = vrot.lane.b32.xlu0 %v93, 24
  %v1620 = vpop.permute.xlu0 %1619
  %1621 = vrot.lane.b32.xlu0 %v101, 24
  %v1622 = vpop.permute.xlu0 %1621
  %1623 = vrot.lane.b32.xlu0 %v102, 24
  %v1624 = vpop.permute.xlu0 %1623
  %1625 = vrot.lane.b32.xlu0 %v104, 24
  %v1626 = vpop.permute.xlu0 %1625
  %1627 = vrot.lane.b32.xlu0 %v105, 24
  %v1628 = vpop.permute.xlu0 %1627
  %1629 = vrot.lane.b32.xlu0 %v107, 24
  %v1630 = vpop.permute.xlu0 %1629
  %1631 = vrot.lane.b32.xlu0 %v108, 24
  %v1632 = vpop.permute.xlu0 %1631
  %1633 = vrot.lane.b32.xlu0 %v110, 24
  %v1634 = vpop.permute.xlu0 %1633
  %1635 = vrot.lane.b32.xlu0 %v111, 24
  %v1636 = vpop.permute.xlu0 %1635
  %1637 = vrot.lane.b32.xlu0 %v113, 24
  %v1638 = vpop.permute.xlu0 %1637
  %1639 = vrot.lane.b32.xlu0 %v114, 24
  %v1640 = vpop.permute.xlu0 %1639
  %1641 = vrot.lane.b32.xlu0 %v116, 24
  %v1642 = vpop.permute.xlu0 %1641
  %1643 = vrot.lane.b32.xlu0 %v117, 24
  %v1644 = vpop.permute.xlu0 %1643
  %1645 = vrot.lane.b32.xlu0 %v119, 24
  %v1646 = vpop.permute.xlu0 %1645
  %1647 = vrot.lane.b32.xlu0 %v120, 24
  %v1648 = vpop.permute.xlu0 %1647
  %1649 = vrot.lane.b32.xlu0 %v122, 24
  %v1650 = vpop.permute.xlu0 %1649
  %1651 = vrot.lane.b32.xlu0 %v123, 24
  %v1652 = vpop.permute.xlu0 %1651
  %1653 = vrot.lane.b32.xlu0 %v125, 24
  %v1654 = vpop.permute.xlu0 %1653
  %1655 = vrot.lane.b32.xlu0 %v126, 24
  %v1656 = vpop.permute.xlu0 %1655
  %1657 = vrot.lane.b32.xlu0 %v128, 24
  %v1658 = vpop.permute.xlu0 %1657
  %1659 = vrot.lane.b32.xlu0 %v129, 24
  %v1660 = vpop.permute.xlu0 %1659
  %1661 = vrot.lane.b32.xlu0 %v131, 24
  %v1662 = vpop.permute.xlu0 %1661
  %1663 = vrot.lane.b32.xlu0 %v132, 24
  %v1664 = vpop.permute.xlu0 %1663
  %1665 = vrot.lane.b32.xlu0 %v134, 24
  %v1666 = vpop.permute.xlu0 %1665
  %1667 = vrot.lane.b32.xlu0 %v135, 24
  %v1668 = vpop.permute.xlu0 %1667
  %1669 = vrot.lane.b32.xlu0 %v137, 24
  %v1670 = vpop.permute.xlu0 %1669
  %1671 = vrot.lane.b32.xlu0 %v138, 24
  %v1672 = vpop.permute.xlu0 %1671
  %1673 = vrot.lane.b32.xlu0 %v140, 24
  %v1674 = vpop.permute.xlu0 %1673
  %1675 = vrot.lane.b32.xlu0 %v141, 24
  %v1676 = vpop.permute.xlu0 %1675
  %1677 = vrot.lane.b32.xlu0 %v143, 24
  %v1678 = vpop.permute.xlu0 %1677
  %1679 = vrot.lane.b32.xlu0 %v144, 24
  %v1680 = vpop.permute.xlu0 %1679
  %1681 = vrot.lane.b32.xlu0 %v146, 24
  %v1682 = vpop.permute.xlu0 %1681
  %1683 = vrot.lane.b32.xlu0 %v147, 24
  %v1684 = vpop.permute.xlu0 %1683
  %v1751 = vrot.slane %v92, 1
  %v1752 = vrot.slane %v93, 1
  %v1753 = vsel %vm245, %v1751, %v1752
  %v1754 = vrot.slane %v94, 1
  %v1755 = vsel %vm245, %v1752, %v1754
  %v1756 = vrot.slane %v146, 1
  %v1757 = vrot.slane %v147, 1
  %v1758 = vsel %vm245, %v1756, %v1757
  %v1759 = vrot.slane %v148, 1
  %v1760 = vsel %vm245, %v1757, %v1759
  %1761 = vrot.lane.b32.xlu0 %v258, 28
  %v1762 = vpop.permute.xlu0 %1761
  %1763 = vrot.lane.b32.xlu0 %v260, 28
  %v1764 = vpop.permute.xlu0 %1763
  %1765 = vrot.lane.b32.xlu0 %v263, 28
  %v1766 = vpop.permute.xlu0 %1765
  %1767 = vrot.lane.b32.xlu0 %v265, 28
  %v1768 = vpop.permute.xlu0 %1767
  %1769 = vrot.lane.b32.xlu0 %v268, 28
  %v1770 = vpop.permute.xlu0 %1769
  %1771 = vrot.lane.b32.xlu0 %v270, 28
  %v1772 = vpop.permute.xlu0 %1771
  %1773 = vrot.lane.b32.xlu0 %v273, 28
  %v1774 = vpop.permute.xlu0 %1773
  %1775 = vrot.lane.b32.xlu0 %v275, 28
  %v1776 = vpop.permute.xlu0 %1775
  %1777 = vrot.lane.b32.xlu0 %v278, 28
  %v1778 = vpop.permute.xlu0 %1777
  %1779 = vrot.lane.b32.xlu0 %v280, 28
  %v1780 = vpop.permute.xlu0 %1779
  %1781 = vrot.lane.b32.xlu0 %v283, 28
  %v1782 = vpop.permute.xlu0 %1781
  %1783 = vrot.lane.b32.xlu0 %v285, 28
  %v1784 = vpop.permute.xlu0 %1783
  %1785 = vrot.lane.b32.xlu0 %v288, 28
  %v1786 = vpop.permute.xlu0 %1785
  %1787 = vrot.lane.b32.xlu0 %v290, 28
  %v1788 = vpop.permute.xlu0 %1787
  %1789 = vrot.lane.b32.xlu0 %v293, 28
  %v1790 = vpop.permute.xlu0 %1789
  %1791 = vrot.lane.b32.xlu0 %v295, 28
  %v1792 = vpop.permute.xlu0 %1791
  %1793 = vrot.lane.b32.xlu0 %v298, 28
  %v1794 = vpop.permute.xlu0 %1793
  %1795 = vrot.lane.b32.xlu0 %v300, 28
  %v1796 = vpop.permute.xlu0 %1795
  %1797 = vrot.lane.b32.xlu0 %v303, 28
  %v1798 = vpop.permute.xlu0 %1797
  %1799 = vrot.lane.b32.xlu0 %v305, 28
  %v1800 = vpop.permute.xlu0 %1799
  %1801 = vrot.lane.b32.xlu0 %v308, 28
  %v1802 = vpop.permute.xlu0 %1801
  %1803 = vrot.lane.b32.xlu0 %v310, 28
  %v1804 = vpop.permute.xlu0 %1803
  %1805 = vrot.lane.b32.xlu0 %v313, 28
  %v1806 = vpop.permute.xlu0 %1805
  %1807 = vrot.lane.b32.xlu0 %v315, 28
  %v1808 = vpop.permute.xlu0 %1807
  %1809 = vrot.lane.b32.xlu0 %v318, 28
  %v1810 = vpop.permute.xlu0 %1809
  %1811 = vrot.lane.b32.xlu0 %v320, 28
  %v1812 = vpop.permute.xlu0 %1811
  %1813 = vrot.lane.b32.xlu0 %v323, 28
  %v1814 = vpop.permute.xlu0 %1813
  %1815 = vrot.lane.b32.xlu0 %v325, 28
  %v1816 = vpop.permute.xlu0 %1815
  %1817 = vrot.lane.b32.xlu0 %v1151, 28
  %v1818 = vpop.permute.xlu0 %1817
  %1819 = vrot.lane.b32.xlu0 %v1153, 28
  %v1820 = vpop.permute.xlu0 %1819
  %1821 = vrot.lane.b32.xlu0 %v1753, 28
  %v1822 = vpop.permute.xlu0 %1821
  %1823 = vrot.lane.b32.xlu0 %v1755, 28
  %v1824 = vpop.permute.xlu0 %1823
  %1825 = vrot.lane.b32.xlu0 %v338, 28
  %v1826 = vpop.permute.xlu0 %1825
  %1827 = vrot.lane.b32.xlu0 %v340, 28
  %v1828 = vpop.permute.xlu0 %1827
  %1829 = vrot.lane.b32.xlu0 %v343, 28
  %v1830 = vpop.permute.xlu0 %1829
  %1831 = vrot.lane.b32.xlu0 %v345, 28
  %v1832 = vpop.permute.xlu0 %1831
  %1833 = vrot.lane.b32.xlu0 %v348, 28
  %v1834 = vpop.permute.xlu0 %1833
  %1835 = vrot.lane.b32.xlu0 %v350, 28
  %v1836 = vpop.permute.xlu0 %1835
  %1837 = vrot.lane.b32.xlu0 %v353, 28
  %v1838 = vpop.permute.xlu0 %1837
  %1839 = vrot.lane.b32.xlu0 %v355, 28
  %v1840 = vpop.permute.xlu0 %1839
  %1841 = vrot.lane.b32.xlu0 %v358, 28
  %v1842 = vpop.permute.xlu0 %1841
  %1843 = vrot.lane.b32.xlu0 %v360, 28
  %v1844 = vpop.permute.xlu0 %1843
  %1845 = vrot.lane.b32.xlu0 %v363, 28
  %v1846 = vpop.permute.xlu0 %1845
  %1847 = vrot.lane.b32.xlu0 %v365, 28
  %v1848 = vpop.permute.xlu0 %1847
  %1849 = vrot.lane.b32.xlu0 %v368, 28
  %v1850 = vpop.permute.xlu0 %1849
  %1851 = vrot.lane.b32.xlu0 %v370, 28
  %v1852 = vpop.permute.xlu0 %1851
  %1853 = vrot.lane.b32.xlu0 %v373, 28
  %v1854 = vpop.permute.xlu0 %1853
  %1855 = vrot.lane.b32.xlu0 %v375, 28
  %v1856 = vpop.permute.xlu0 %1855
  %1857 = vrot.lane.b32.xlu0 %v378, 28
  %v1858 = vpop.permute.xlu0 %1857
  %1859 = vrot.lane.b32.xlu0 %v380, 28
  %v1860 = vpop.permute.xlu0 %1859
  %1861 = vrot.lane.b32.xlu0 %v383, 28
  %v1862 = vpop.permute.xlu0 %1861
  %1863 = vrot.lane.b32.xlu0 %v385, 28
  %v1864 = vpop.permute.xlu0 %1863
  %1865 = vrot.lane.b32.xlu0 %v388, 28
  %v1866 = vpop.permute.xlu0 %1865
  %1867 = vrot.lane.b32.xlu0 %v390, 28
  %v1868 = vpop.permute.xlu0 %1867
  %1869 = vrot.lane.b32.xlu0 %v393, 28
  %v1870 = vpop.permute.xlu0 %1869
  %1871 = vrot.lane.b32.xlu0 %v395, 28
  %v1872 = vpop.permute.xlu0 %1871
  %1873 = vrot.lane.b32.xlu0 %v398, 28
  %v1874 = vpop.permute.xlu0 %1873
  %1875 = vrot.lane.b32.xlu0 %v400, 28
  %v1876 = vpop.permute.xlu0 %1875
  %1877 = vrot.lane.b32.xlu0 %v403, 28
  %v1878 = vpop.permute.xlu0 %1877
  %1879 = vrot.lane.b32.xlu0 %v405, 28
  %v1880 = vpop.permute.xlu0 %1879
  %1881 = vrot.lane.b32.xlu0 %v1156, 28
  %v1882 = vpop.permute.xlu0 %1881
  %1883 = vrot.lane.b32.xlu0 %v1158, 28
  %v1884 = vpop.permute.xlu0 %1883
  %1885 = vrot.lane.b32.xlu0 %v1758, 28
  %v1886 = vpop.permute.xlu0 %1885
  %1887 = vrot.lane.b32.xlu0 %v1760, 28
  %v1888 = vpop.permute.xlu0 %1887
  %v1953 = vrot.slane %v92, 2
  %v1954 = vrot.slane %v93, 2
  %v1955 = vsel %vm598, %v1953, %v1954
  %v1956 = vrot.slane %v94, 2
  %v1957 = vsel %vm598, %v1954, %v1956
  %v1958 = vrot.slane %v146, 2
  %v1959 = vrot.slane %v147, 2
  %v1960 = vsel %vm598, %v1958, %v1959
  %v1961 = vrot.slane %v148, 2
  %v1962 = vsel %vm598, %v1959, %v1961
  %1963 = vrot.lane.b32.xlu0 %v611, 32
  %v1964 = vpop.permute.xlu0 %1963
  %1965 = vrot.lane.b32.xlu0 %v613, 32
  %v1966 = vpop.permute.xlu0 %1965
  %1967 = vrot.lane.b32.xlu0 %v616, 32
  %v1968 = vpop.permute.xlu0 %1967
  %1969 = vrot.lane.b32.xlu0 %v618, 32
  %v1970 = vpop.permute.xlu0 %1969
  %1971 = vrot.lane.b32.xlu0 %v621, 32
  %v1972 = vpop.permute.xlu0 %1971
  %1973 = vrot.lane.b32.xlu0 %v623, 32
  %v1974 = vpop.permute.xlu0 %1973
  %1975 = vrot.lane.b32.xlu0 %v626, 32
  %v1976 = vpop.permute.xlu0 %1975
  %1977 = vrot.lane.b32.xlu0 %v628, 32
  %v1978 = vpop.permute.xlu0 %1977
  %1979 = vrot.lane.b32.xlu0 %v631, 32
  %v1980 = vpop.permute.xlu0 %1979
  %1981 = vrot.lane.b32.xlu0 %v633, 32
  %v1982 = vpop.permute.xlu0 %1981
  %1983 = vrot.lane.b32.xlu0 %v636, 32
  %v1984 = vpop.permute.xlu0 %1983
  %1985 = vrot.lane.b32.xlu0 %v638, 32
  %v1986 = vpop.permute.xlu0 %1985
  %1987 = vrot.lane.b32.xlu0 %v641, 32
  %v1988 = vpop.permute.xlu0 %1987
  %1989 = vrot.lane.b32.xlu0 %v643, 32
  %v1990 = vpop.permute.xlu0 %1989
  %1991 = vrot.lane.b32.xlu0 %v646, 32
  %v1992 = vpop.permute.xlu0 %1991
  %1993 = vrot.lane.b32.xlu0 %v648, 32
  %v1994 = vpop.permute.xlu0 %1993
  %1995 = vrot.lane.b32.xlu0 %v651, 32
  %v1996 = vpop.permute.xlu0 %1995
  %1997 = vrot.lane.b32.xlu0 %v653, 32
  %v1998 = vpop.permute.xlu0 %1997
  %1999 = vrot.lane.b32.xlu0 %v656, 32
  %v2000 = vpop.permute.xlu0 %1999
  %2001 = vrot.lane.b32.xlu0 %v658, 32
  %v2002 = vpop.permute.xlu0 %2001
  %2003 = vrot.lane.b32.xlu0 %v661, 32
  %v2004 = vpop.permute.xlu0 %2003
  %2005 = vrot.lane.b32.xlu0 %v663, 32
  %v2006 = vpop.permute.xlu0 %2005
  %2007 = vrot.lane.b32.xlu0 %v666, 32
  %v2008 = vpop.permute.xlu0 %2007
  %2009 = vrot.lane.b32.xlu0 %v668, 32
  %v2010 = vpop.permute.xlu0 %2009
  %2011 = vrot.lane.b32.xlu0 %v671, 32
  %v2012 = vpop.permute.xlu0 %2011
  %2013 = vrot.lane.b32.xlu0 %v673, 32
  %v2014 = vpop.permute.xlu0 %2013
  %2015 = vrot.lane.b32.xlu0 %v676, 32
  %v2016 = vpop.permute.xlu0 %2015
  %2017 = vrot.lane.b32.xlu0 %v678, 32
  %v2018 = vpop.permute.xlu0 %2017
  %2019 = vrot.lane.b32.xlu0 %v1353, 32
  %v2020 = vpop.permute.xlu0 %2019
  %2021 = vrot.lane.b32.xlu0 %v1355, 32
  %v2022 = vpop.permute.xlu0 %2021
  %2023 = vrot.lane.b32.xlu0 %v1955, 32
  %v2024 = vpop.permute.xlu0 %2023
  %2025 = vrot.lane.b32.xlu0 %v1957, 32
  %v2026 = vpop.permute.xlu0 %2025
  %2027 = vrot.lane.b32.xlu0 %v691, 32
  %v2028 = vpop.permute.xlu0 %2027
  %2029 = vrot.lane.b32.xlu0 %v693, 32
  %v2030 = vpop.permute.xlu0 %2029
  %2031 = vrot.lane.b32.xlu0 %v696, 32
  %v2032 = vpop.permute.xlu0 %2031
  %2033 = vrot.lane.b32.xlu0 %v698, 32
  %v2034 = vpop.permute.xlu0 %2033
  %2035 = vrot.lane.b32.xlu0 %v701, 32
  %v2036 = vpop.permute.xlu0 %2035
  %2037 = vrot.lane.b32.xlu0 %v703, 32
  %v2038 = vpop.permute.xlu0 %2037
  %2039 = vrot.lane.b32.xlu0 %v706, 32
  %v2040 = vpop.permute.xlu0 %2039
  %2041 = vrot.lane.b32.xlu0 %v708, 32
  %v2042 = vpop.permute.xlu0 %2041
  %2043 = vrot.lane.b32.xlu0 %v711, 32
  %v2044 = vpop.permute.xlu0 %2043
  %2045 = vrot.lane.b32.xlu0 %v713, 32
  %v2046 = vpop.permute.xlu0 %2045
  %2047 = vrot.lane.b32.xlu0 %v716, 32
  %v2048 = vpop.permute.xlu0 %2047
  %2049 = vrot.lane.b32.xlu0 %v718, 32
  %v2050 = vpop.permute.xlu0 %2049
  %2051 = vrot.lane.b32.xlu0 %v721, 32
  %v2052 = vpop.permute.xlu0 %2051
  %2053 = vrot.lane.b32.xlu0 %v723, 32
  %v2054 = vpop.permute.xlu0 %2053
  %2055 = vrot.lane.b32.xlu0 %v726, 32
  %v2056 = vpop.permute.xlu0 %2055
  %2057 = vrot.lane.b32.xlu0 %v728, 32
  %v2058 = vpop.permute.xlu0 %2057
  %2059 = vrot.lane.b32.xlu0 %v731, 32
  %v2060 = vpop.permute.xlu0 %2059
  %2061 = vrot.lane.b32.xlu0 %v733, 32
  %v2062 = vpop.permute.xlu0 %2061
  %2063 = vrot.lane.b32.xlu0 %v736, 32
  %v2064 = vpop.permute.xlu0 %2063
  %2065 = vrot.lane.b32.xlu0 %v738, 32
  %v2066 = vpop.permute.xlu0 %2065
  %2067 = vrot.lane.b32.xlu0 %v741, 32
  %v2068 = vpop.permute.xlu0 %2067
  %2069 = vrot.lane.b32.xlu0 %v743, 32
  %v2070 = vpop.permute.xlu0 %2069
  %2071 = vrot.lane.b32.xlu0 %v746, 32
  %v2072 = vpop.permute.xlu0 %2071
  %2073 = vrot.lane.b32.xlu0 %v748, 32
  %v2074 = vpop.permute.xlu0 %2073
  %2075 = vrot.lane.b32.xlu0 %v751, 32
  %v2076 = vpop.permute.xlu0 %2075
  %2077 = vrot.lane.b32.xlu0 %v753, 32
  %v2078 = vpop.permute.xlu0 %2077
  %2079 = vrot.lane.b32.xlu0 %v756, 32
  %v2080 = vpop.permute.xlu0 %2079
  %2081 = vrot.lane.b32.xlu0 %v758, 32
  %v2082 = vpop.permute.xlu0 %2081
  %2083 = vrot.lane.b32.xlu0 %v1358, 32
  %v2084 = vpop.permute.xlu0 %2083
  %2085 = vrot.lane.b32.xlu0 %v1360, 32
  %v2086 = vpop.permute.xlu0 %2085
  %2087 = vrot.lane.b32.xlu0 %v1960, 32
  %v2088 = vpop.permute.xlu0 %2087
  %2089 = vrot.lane.b32.xlu0 %v1962, 32
  %v2090 = vpop.permute.xlu0 %2089
  %vm2155 = vcmask 31744
  %v2156 = vsel %vm2155, %v41, %v407
  %v2157 = vsel %vm2155, %v42, %v409
  %v2158 = vsel %vm2155, %v44, %v411
  %v2159 = vsel %vm2155, %v45, %v413
  %v2160 = vsel %vm2155, %v47, %v415
  %v2161 = vsel %vm2155, %v48, %v417
  %v2162 = vsel %vm2155, %v50, %v419
  %v2163 = vsel %vm2155, %v51, %v421
  %v2164 = vsel %vm2155, %v53, %v423
  %v2165 = vsel %vm2155, %v54, %v425
  %v2166 = vsel %vm2155, %v56, %v427
  %v2167 = vsel %vm2155, %v57, %v429
  %v2168 = vsel %vm2155, %v59, %v431
  %v2169 = vsel %vm2155, %v60, %v433
  %v2170 = vsel %vm2155, %v62, %v435
  %v2171 = vsel %vm2155, %v63, %v437
  %v2172 = vsel %vm2155, %v65, %v439
  %v2173 = vsel %vm2155, %v66, %v441
  %v2174 = vsel %vm2155, %v68, %v443
  %v2175 = vsel %vm2155, %v69, %v445
  %v2176 = vsel %vm2155, %v71, %v447
  %v2177 = vsel %vm2155, %v72, %v449
  %v2178 = vsel %vm2155, %v74, %v451
  %v2179 = vsel %vm2155, %v75, %v453
  %v2180 = vsel %vm2155, %v77, %v455
  %v2181 = vsel %vm2155, %v78, %v457
  %v2182 = vsel %vm2155, %v80, %v459
  %v2183 = vsel %vm2155, %v81, %v461
  %v2184 = vsel %vm2155, %v83, %v463
  %v2185 = vsel %vm2155, %v84, %v465
  %v2186 = vsel %vm2155, %v86, %v467
  %v2187 = vsel %vm2155, %v87, %v469
  %v2188 = vsel %vm2155, %v95, %v471
  %v2189 = vsel %vm2155, %v96, %v473
  %v2190 = vsel %vm2155, %v98, %v475
  %v2191 = vsel %vm2155, %v99, %v477
  %v2192 = vsel %vm2155, %v101, %v479
  %v2193 = vsel %vm2155, %v102, %v481
  %v2194 = vsel %vm2155, %v104, %v483
  %v2195 = vsel %vm2155, %v105, %v485
  %v2196 = vsel %vm2155, %v107, %v487
  %v2197 = vsel %vm2155, %v108, %v489
  %v2198 = vsel %vm2155, %v110, %v491
  %v2199 = vsel %vm2155, %v111, %v493
  %v2200 = vsel %vm2155, %v113, %v495
  %v2201 = vsel %vm2155, %v114, %v497
  %v2202 = vsel %vm2155, %v116, %v499
  %v2203 = vsel %vm2155, %v117, %v501
  %v2204 = vsel %vm2155, %v119, %v503
  %v2205 = vsel %vm2155, %v120, %v505
  %v2206 = vsel %vm2155, %v122, %v507
  %v2207 = vsel %vm2155, %v123, %v509
  %v2208 = vsel %vm2155, %v125, %v511
  %v2209 = vsel %vm2155, %v126, %v513
  %v2210 = vsel %vm2155, %v128, %v515
  %v2211 = vsel %vm2155, %v129, %v517
  %v2212 = vsel %vm2155, %v131, %v519
  %v2213 = vsel %vm2155, %v132, %v521
  %v2214 = vsel %vm2155, %v134, %v523
  %v2215 = vsel %vm2155, %v135, %v525
  %v2216 = vsel %vm2155, %v137, %v527
  %v2217 = vsel %vm2155, %v138, %v529
  %v2218 = vsel %vm2155, %v140, %v531
  %v2219 = vsel %vm2155, %v141, %v533
  %vm2220 = vcmask 64512
  %v2221 = vsel %vm2220, %v2156, %v760
  %v2222 = vsel %vm2220, %v2157, %v762
  %v2223 = vsel %vm2220, %v2158, %v764
  %v2224 = vsel %vm2220, %v2159, %v766
  %v2225 = vsel %vm2220, %v2160, %v768
  %v2226 = vsel %vm2220, %v2161, %v770
  %v2227 = vsel %vm2220, %v2162, %v772
  %v2228 = vsel %vm2220, %v2163, %v774
  %v2229 = vsel %vm2220, %v2164, %v776
  %v2230 = vsel %vm2220, %v2165, %v778
  %v2231 = vsel %vm2220, %v2166, %v780
  %v2232 = vsel %vm2220, %v2167, %v782
  %v2233 = vsel %vm2220, %v2168, %v784
  %v2234 = vsel %vm2220, %v2169, %v786
  %v2235 = vsel %vm2220, %v2170, %v788
  %v2236 = vsel %vm2220, %v2171, %v790
  %v2237 = vsel %vm2220, %v2172, %v792
  %v2238 = vsel %vm2220, %v2173, %v794
  %v2239 = vsel %vm2220, %v2174, %v796
  %v2240 = vsel %vm2220, %v2175, %v798
  %v2241 = vsel %vm2220, %v2176, %v800
  %v2242 = vsel %vm2220, %v2177, %v802
  %v2243 = vsel %vm2220, %v2178, %v804
  %v2244 = vsel %vm2220, %v2179, %v806
  %v2245 = vsel %vm2220, %v2180, %v808
  %v2246 = vsel %vm2220, %v2181, %v810
  %v2247 = vsel %vm2220, %v2182, %v812
  %v2248 = vsel %vm2220, %v2183, %v814
  %v2249 = vsel %vm2220, %v2184, %v816
  %v2250 = vsel %vm2220, %v2185, %v818
  %v2251 = vsel %vm2220, %v2186, %v820
  %v2252 = vsel %vm2220, %v2187, %v822
  %v2253 = vsel %vm2220, %v2188, %v824
  %v2254 = vsel %vm2220, %v2189, %v826
  %v2255 = vsel %vm2220, %v2190, %v828
  %v2256 = vsel %vm2220, %v2191, %v830
  %v2257 = vsel %vm2220, %v2192, %v832
  %v2258 = vsel %vm2220, %v2193, %v834
  %v2259 = vsel %vm2220, %v2194, %v836
  %v2260 = vsel %vm2220, %v2195, %v838
  %v2261 = vsel %vm2220, %v2196, %v840
  %v2262 = vsel %vm2220, %v2197, %v842
  %v2263 = vsel %vm2220, %v2198, %v844
  %v2264 = vsel %vm2220, %v2199, %v846
  %v2265 = vsel %vm2220, %v2200, %v848
  %v2266 = vsel %vm2220, %v2201, %v850
  %v2267 = vsel %vm2220, %v2202, %v852
  %v2268 = vsel %vm2220, %v2203, %v854
  %v2269 = vsel %vm2220, %v2204, %v856
  %v2270 = vsel %vm2220, %v2205, %v858
  %v2271 = vsel %vm2220, %v2206, %v860
  %v2272 = vsel %vm2220, %v2207, %v862
  %v2273 = vsel %vm2220, %v2208, %v864
  %v2274 = vsel %vm2220, %v2209, %v866
  %v2275 = vsel %vm2220, %v2210, %v868
  %v2276 = vsel %vm2220, %v2211, %v870
  %v2277 = vsel %vm2220, %v2212, %v872
  %v2278 = vsel %vm2220, %v2213, %v874
  %v2279 = vsel %vm2220, %v2214, %v876
  %v2280 = vsel %vm2220, %v2215, %v878
  %v2281 = vsel %vm2220, %v2216, %v880
  %v2282 = vsel %vm2220, %v2217, %v882
  %v2283 = vsel %vm2220, %v2218, %v884
  %v2284 = vsel %vm2220, %v2219, %v886
  %vm2285 = vcmask 97280
  %v2286 = vsel %vm2285, %v2221, %v956
  %v2287 = vsel %vm2285, %v2222, %v958
  %v2288 = vsel %vm2285, %v2223, %v960
  %v2289 = vsel %vm2285, %v2224, %v962
  %v2290 = vsel %vm2285, %v2225, %v964
  %v2291 = vsel %vm2285, %v2226, %v966
  %v2292 = vsel %vm2285, %v2227, %v968
  %v2293 = vsel %vm2285, %v2228, %v970
  %v2294 = vsel %vm2285, %v2229, %v972
  %v2295 = vsel %vm2285, %v2230, %v974
  %v2296 = vsel %vm2285, %v2231, %v976
  %v2297 = vsel %vm2285, %v2232, %v978
  %v2298 = vsel %vm2285, %v2233, %v980
  %v2299 = vsel %vm2285, %v2234, %v982
  %v2300 = vsel %vm2285, %v2235, %v984
  %v2301 = vsel %vm2285, %v2236, %v986
  %v2302 = vsel %vm2285, %v2237, %v988
  %v2303 = vsel %vm2285, %v2238, %v990
  %v2304 = vsel %vm2285, %v2239, %v992
  %v2305 = vsel %vm2285, %v2240, %v994
  %v2306 = vsel %vm2285, %v2241, %v996
  %v2307 = vsel %vm2285, %v2242, %v998
  %v2308 = vsel %vm2285, %v2243, %v1000
  %v2309 = vsel %vm2285, %v2244, %v1002
  %v2310 = vsel %vm2285, %v2245, %v1004
  %v2311 = vsel %vm2285, %v2246, %v1006
  %v2312 = vsel %vm2285, %v2247, %v1008
  %v2313 = vsel %vm2285, %v2248, %v1010
  %v2314 = vsel %vm2285, %v2249, %v1012
  %v2315 = vsel %vm2285, %v2250, %v1014
  %v2316 = vsel %vm2285, %v2251, %v1016
  %v2317 = vsel %vm2285, %v2252, %v1018
  %v2318 = vsel %vm2285, %v2253, %v1020
  %v2319 = vsel %vm2285, %v2254, %v1022
  %v2320 = vsel %vm2285, %v2255, %v1024
  %v2321 = vsel %vm2285, %v2256, %v1026
  %v2322 = vsel %vm2285, %v2257, %v1028
  %v2323 = vsel %vm2285, %v2258, %v1030
  %v2324 = vsel %vm2285, %v2259, %v1032
  %v2325 = vsel %vm2285, %v2260, %v1034
  %v2326 = vsel %vm2285, %v2261, %v1036
  %v2327 = vsel %vm2285, %v2262, %v1038
  %v2328 = vsel %vm2285, %v2263, %v1040
  %v2329 = vsel %vm2285, %v2264, %v1042
  %v2330 = vsel %vm2285, %v2265, %v1044
  %v2331 = vsel %vm2285, %v2266, %v1046
  %v2332 = vsel %vm2285, %v2267, %v1048
  %v2333 = vsel %vm2285, %v2268, %v1050
  %v2334 = vsel %vm2285, %v2269, %v1052
  %v2335 = vsel %vm2285, %v2270, %v1054
  %v2336 = vsel %vm2285, %v2271, %v1056
  %v2337 = vsel %vm2285, %v2272, %v1058
  %v2338 = vsel %vm2285, %v2273, %v1060
  %v2339 = vsel %vm2285, %v2274, %v1062
  %v2340 = vsel %vm2285, %v2275, %v1064
  %v2341 = vsel %vm2285, %v2276, %v1066
  %v2342 = vsel %vm2285, %v2277, %v1068
  %v2343 = vsel %vm2285, %v2278, %v1070
  %v2344 = vsel %vm2285, %v2279, %v1072
  %v2345 = vsel %vm2285, %v2280, %v1074
  %v2346 = vsel %vm2285, %v2281, %v1076
  %v2347 = vsel %vm2285, %v2282, %v1078
  %v2348 = vsel %vm2285, %v2283, %v1080
  %v2349 = vsel %vm2285, %v2284, %v1082
  %vm2350 = vcmask 130048
  %v2351 = vsel %vm2350, %v2286, %v1160
  %v2352 = vsel %vm2350, %v2287, %v1162
  %v2353 = vsel %vm2350, %v2288, %v1164
  %v2354 = vsel %vm2350, %v2289, %v1166
  %v2355 = vsel %vm2350, %v2290, %v1168
  %v2356 = vsel %vm2350, %v2291, %v1170
  %v2357 = vsel %vm2350, %v2292, %v1172
  %v2358 = vsel %vm2350, %v2293, %v1174
  %v2359 = vsel %vm2350, %v2294, %v1176
  %v2360 = vsel %vm2350, %v2295, %v1178
  %v2361 = vsel %vm2350, %v2296, %v1180
  %v2362 = vsel %vm2350, %v2297, %v1182
  %v2363 = vsel %vm2350, %v2298, %v1184
  %v2364 = vsel %vm2350, %v2299, %v1186
  %v2365 = vsel %vm2350, %v2300, %v1188
  %v2366 = vsel %vm2350, %v2301, %v1190
  %v2367 = vsel %vm2350, %v2302, %v1192
  %v2368 = vsel %vm2350, %v2303, %v1194
  %v2369 = vsel %vm2350, %v2304, %v1196
  %v2370 = vsel %vm2350, %v2305, %v1198
  %v2371 = vsel %vm2350, %v2306, %v1200
  %v2372 = vsel %vm2350, %v2307, %v1202
  %v2373 = vsel %vm2350, %v2308, %v1204
  %v2374 = vsel %vm2350, %v2309, %v1206
  %v2375 = vsel %vm2350, %v2310, %v1208
  %v2376 = vsel %vm2350, %v2311, %v1210
  %v2377 = vsel %vm2350, %v2312, %v1212
  %v2378 = vsel %vm2350, %v2313, %v1214
  %v2379 = vsel %vm2350, %v2314, %v1216
  %v2380 = vsel %vm2350, %v2315, %v1218
  %v2381 = vsel %vm2350, %v2316, %v1220
  %v2382 = vsel %vm2350, %v2317, %v1222
  %v2383 = vsel %vm2350, %v2318, %v1224
  %v2384 = vsel %vm2350, %v2319, %v1226
  %v2385 = vsel %vm2350, %v2320, %v1228
  %v2386 = vsel %vm2350, %v2321, %v1230
  %v2387 = vsel %vm2350, %v2322, %v1232
  %v2388 = vsel %vm2350, %v2323, %v1234
  %v2389 = vsel %vm2350, %v2324, %v1236
  %v2390 = vsel %vm2350, %v2325, %v1238
  %v2391 = vsel %vm2350, %v2326, %v1240
  %v2392 = vsel %vm2350, %v2327, %v1242
  %v2393 = vsel %vm2350, %v2328, %v1244
  %v2394 = vsel %vm2350, %v2329, %v1246
  %v2395 = vsel %vm2350, %v2330, %v1248
  %v2396 = vsel %vm2350, %v2331, %v1250
  %v2397 = vsel %vm2350, %v2332, %v1252
  %v2398 = vsel %vm2350, %v2333, %v1254
  %v2399 = vsel %vm2350, %v2334, %v1256
  %v2400 = vsel %vm2350, %v2335, %v1258
  %v2401 = vsel %vm2350, %v2336, %v1260
  %v2402 = vsel %vm2350, %v2337, %v1262
  %v2403 = vsel %vm2350, %v2338, %v1264
  %v2404 = vsel %vm2350, %v2339, %v1266
  %v2405 = vsel %vm2350, %v2340, %v1268
  %v2406 = vsel %vm2350, %v2341, %v1270
  %v2407 = vsel %vm2350, %v2342, %v1272
  %v2408 = vsel %vm2350, %v2343, %v1274
  %v2409 = vsel %vm2350, %v2344, %v1276
  %v2410 = vsel %vm2350, %v2345, %v1278
  %v2411 = vsel %vm2350, %v2346, %v1280
  %v2412 = vsel %vm2350, %v2347, %v1282
  %v2413 = vsel %vm2350, %v2348, %v1284
  %v2414 = vsel %vm2350, %v2349, %v1286
  %vm2415 = vcmask 162816
  %v2416 = vsel %vm2415, %v2351, %v1362
  %v2417 = vsel %vm2415, %v2352, %v1364
  %v2418 = vsel %vm2415, %v2353, %v1366
  %v2419 = vsel %vm2415, %v2354, %v1368
  %v2420 = vsel %vm2415, %v2355, %v1370
  %v2421 = vsel %vm2415, %v2356, %v1372
  %v2422 = vsel %vm2415, %v2357, %v1374
  %v2423 = vsel %vm2415, %v2358, %v1376
  %v2424 = vsel %vm2415, %v2359, %v1378
  %v2425 = vsel %vm2415, %v2360, %v1380
  %v2426 = vsel %vm2415, %v2361, %v1382
  %v2427 = vsel %vm2415, %v2362, %v1384
  %v2428 = vsel %vm2415, %v2363, %v1386
  %v2429 = vsel %vm2415, %v2364, %v1388
  %v2430 = vsel %vm2415, %v2365, %v1390
  %v2431 = vsel %vm2415, %v2366, %v1392
  %v2432 = vsel %vm2415, %v2367, %v1394
  %v2433 = vsel %vm2415, %v2368, %v1396
  %v2434 = vsel %vm2415, %v2369, %v1398
  %v2435 = vsel %vm2415, %v2370, %v1400
  %v2436 = vsel %vm2415, %v2371, %v1402
  %v2437 = vsel %vm2415, %v2372, %v1404
  %v2438 = vsel %vm2415, %v2373, %v1406
  %v2439 = vsel %vm2415, %v2374, %v1408
  %v2440 = vsel %vm2415, %v2375, %v1410
  %v2441 = vsel %vm2415, %v2376, %v1412
  %v2442 = vsel %vm2415, %v2377, %v1414
  %v2443 = vsel %vm2415, %v2378, %v1416
  %v2444 = vsel %vm2415, %v2379, %v1418
  %v2445 = vsel %vm2415, %v2380, %v1420
  %v2446 = vsel %vm2415, %v2381, %v1422
  %v2447 = vsel %vm2415, %v2382, %v1424
  %v2448 = vsel %vm2415, %v2383, %v1426
  %v2449 = vsel %vm2415, %v2384, %v1428
  %v2450 = vsel %vm2415, %v2385, %v1430
  %v2451 = vsel %vm2415, %v2386, %v1432
  %v2452 = vsel %vm2415, %v2387, %v1434
  %v2453 = vsel %vm2415, %v2388, %v1436
  %v2454 = vsel %vm2415, %v2389, %v1438
  %v2455 = vsel %vm2415, %v2390, %v1440
  %v2456 = vsel %vm2415, %v2391, %v1442
  %v2457 = vsel %vm2415, %v2392, %v1444
  %v2458 = vsel %vm2415, %v2393, %v1446
  %v2459 = vsel %vm2415, %v2394, %v1448
  %v2460 = vsel %vm2415, %v2395, %v1450
  %v2461 = vsel %vm2415, %v2396, %v1452
  %v2462 = vsel %vm2415, %v2397, %v1454
  %v2463 = vsel %vm2415, %v2398, %v1456
  %v2464 = vsel %vm2415, %v2399, %v1458
  %v2465 = vsel %vm2415, %v2400, %v1460
  %v2466 = vsel %vm2415, %v2401, %v1462
  %v2467 = vsel %vm2415, %v2402, %v1464
  %v2468 = vsel %vm2415, %v2403, %v1466
  %v2469 = vsel %vm2415, %v2404, %v1468
  %v2470 = vsel %vm2415, %v2405, %v1470
  %v2471 = vsel %vm2415, %v2406, %v1472
  %v2472 = vsel %vm2415, %v2407, %v1474
  %v2473 = vsel %vm2415, %v2408, %v1476
  %v2474 = vsel %vm2415, %v2409, %v1478
  %v2475 = vsel %vm2415, %v2410, %v1480
  %v2476 = vsel %vm2415, %v2411, %v1482
  %v2477 = vsel %vm2415, %v2412, %v1484
  %v2478 = vsel %vm2415, %v2413, %v1486
  %v2479 = vsel %vm2415, %v2414, %v1488
  %vm2480 = vcmask 195584
  %v2481 = vsel %vm2480, %v2416, %v1558
  %v2482 = vsel %vm2480, %v2417, %v1560
  %v2483 = vsel %vm2480, %v2418, %v1562
  %v2484 = vsel %vm2480, %v2419, %v1564
  %v2485 = vsel %vm2480, %v2420, %v1566
  %v2486 = vsel %vm2480, %v2421, %v1568
  %v2487 = vsel %vm2480, %v2422, %v1570
  %v2488 = vsel %vm2480, %v2423, %v1572
  %v2489 = vsel %vm2480, %v2424, %v1574
  %v2490 = vsel %vm2480, %v2425, %v1576
  %v2491 = vsel %vm2480, %v2426, %v1578
  %v2492 = vsel %vm2480, %v2427, %v1580
  %v2493 = vsel %vm2480, %v2428, %v1582
  %v2494 = vsel %vm2480, %v2429, %v1584
  %v2495 = vsel %vm2480, %v2430, %v1586
  %v2496 = vsel %vm2480, %v2431, %v1588
  %v2497 = vsel %vm2480, %v2432, %v1590
  %v2498 = vsel %vm2480, %v2433, %v1592
  %v2499 = vsel %vm2480, %v2434, %v1594
  %v2500 = vsel %vm2480, %v2435, %v1596
  %v2501 = vsel %vm2480, %v2436, %v1598
  %v2502 = vsel %vm2480, %v2437, %v1600
  %v2503 = vsel %vm2480, %v2438, %v1602
  %v2504 = vsel %vm2480, %v2439, %v1604
  %v2505 = vsel %vm2480, %v2440, %v1606
  %v2506 = vsel %vm2480, %v2441, %v1608
  %v2507 = vsel %vm2480, %v2442, %v1610
  %v2508 = vsel %vm2480, %v2443, %v1612
  %v2509 = vsel %vm2480, %v2444, %v1614
  %v2510 = vsel %vm2480, %v2445, %v1616
  %v2511 = vsel %vm2480, %v2446, %v1618
  %v2512 = vsel %vm2480, %v2447, %v1620
  %v2513 = vsel %vm2480, %v2448, %v1622
  %v2514 = vsel %vm2480, %v2449, %v1624
  %v2515 = vsel %vm2480, %v2450, %v1626
  %v2516 = vsel %vm2480, %v2451, %v1628
  %v2517 = vsel %vm2480, %v2452, %v1630
  %v2518 = vsel %vm2480, %v2453, %v1632
  %v2519 = vsel %vm2480, %v2454, %v1634
  %v2520 = vsel %vm2480, %v2455, %v1636
  %v2521 = vsel %vm2480, %v2456, %v1638
  %v2522 = vsel %vm2480, %v2457, %v1640
  %v2523 = vsel %vm2480, %v2458, %v1642
  %v2524 = vsel %vm2480, %v2459, %v1644
  %v2525 = vsel %vm2480, %v2460, %v1646
  %v2526 = vsel %vm2480, %v2461, %v1648
  %v2527 = vsel %vm2480, %v2462, %v1650
  %v2528 = vsel %vm2480, %v2463, %v1652
  %v2529 = vsel %vm2480, %v2464, %v1654
  %v2530 = vsel %vm2480, %v2465, %v1656
  %v2531 = vsel %vm2480, %v2466, %v1658
  %v2532 = vsel %vm2480, %v2467, %v1660
  %v2533 = vsel %vm2480, %v2468, %v1662
  %v2534 = vsel %vm2480, %v2469, %v1664
  %v2535 = vsel %vm2480, %v2470, %v1666
  %v2536 = vsel %vm2480, %v2471, %v1668
  %v2537 = vsel %vm2480, %v2472, %v1670
  %v2538 = vsel %vm2480, %v2473, %v1672
  %v2539 = vsel %vm2480, %v2474, %v1674
  %v2540 = vsel %vm2480, %v2475, %v1676
  %v2541 = vsel %vm2480, %v2476, %v1678
  %v2542 = vsel %vm2480, %v2477, %v1680
  %v2543 = vsel %vm2480, %v2478, %v1682
  %v2544 = vsel %vm2480, %v2479, %v1684
  %vm2545 = vcmask 228352
  %v2546 = vsel %vm2545, %v2481, %v1762
  %v2547 = vsel %vm2545, %v2482, %v1764
  %v2548 = vsel %vm2545, %v2483, %v1766
  %v2549 = vsel %vm2545, %v2484, %v1768
  %v2550 = vsel %vm2545, %v2485, %v1770
  %v2551 = vsel %vm2545, %v2486, %v1772
  %v2552 = vsel %vm2545, %v2487, %v1774
  %v2553 = vsel %vm2545, %v2488, %v1776
  %v2554 = vsel %vm2545, %v2489, %v1778
  %v2555 = vsel %vm2545, %v2490, %v1780
  %v2556 = vsel %vm2545, %v2491, %v1782
  %v2557 = vsel %vm2545, %v2492, %v1784
  %v2558 = vsel %vm2545, %v2493, %v1786
  %v2559 = vsel %vm2545, %v2494, %v1788
  %v2560 = vsel %vm2545, %v2495, %v1790
  %v2561 = vsel %vm2545, %v2496, %v1792
  %v2562 = vsel %vm2545, %v2497, %v1794
  %v2563 = vsel %vm2545, %v2498, %v1796
  %v2564 = vsel %vm2545, %v2499, %v1798
  %v2565 = vsel %vm2545, %v2500, %v1800
  %v2566 = vsel %vm2545, %v2501, %v1802
  %v2567 = vsel %vm2545, %v2502, %v1804
  %v2568 = vsel %vm2545, %v2503, %v1806
  %v2569 = vsel %vm2545, %v2504, %v1808
  %v2570 = vsel %vm2545, %v2505, %v1810
  %v2571 = vsel %vm2545, %v2506, %v1812
  %v2572 = vsel %vm2545, %v2507, %v1814
  %v2573 = vsel %vm2545, %v2508, %v1816
  %v2574 = vsel %vm2545, %v2509, %v1818
  %v2575 = vsel %vm2545, %v2510, %v1820
  %v2576 = vsel %vm2545, %v2511, %v1822
  %v2577 = vsel %vm2545, %v2512, %v1824
  %v2578 = vsel %vm2545, %v2513, %v1826
  %v2579 = vsel %vm2545, %v2514, %v1828
  %v2580 = vsel %vm2545, %v2515, %v1830
  %v2581 = vsel %vm2545, %v2516, %v1832
  %v2582 = vsel %vm2545, %v2517, %v1834
  %v2583 = vsel %vm2545, %v2518, %v1836
  %v2584 = vsel %vm2545, %v2519, %v1838
  %v2585 = vsel %vm2545, %v2520, %v1840
  %v2586 = vsel %vm2545, %v2521, %v1842
  %v2587 = vsel %vm2545, %v2522, %v1844
  %v2588 = vsel %vm2545, %v2523, %v1846
  %v2589 = vsel %vm2545, %v2524, %v1848
  %v2590 = vsel %vm2545, %v2525, %v1850
  %v2591 = vsel %vm2545, %v2526, %v1852
  %v2592 = vsel %vm2545, %v2527, %v1854
  %v2593 = vsel %vm2545, %v2528, %v1856
  %v2594 = vsel %vm2545, %v2529, %v1858
  %v2595 = vsel %vm2545, %v2530, %v1860
  %v2596 = vsel %vm2545, %v2531, %v1862
  %v2597 = vsel %vm2545, %v2532, %v1864
  %v2598 = vsel %vm2545, %v2533, %v1866
  %v2599 = vsel %vm2545, %v2534, %v1868
  %v2600 = vsel %vm2545, %v2535, %v1870
  %v2601 = vsel %vm2545, %v2536, %v1872
  %v2602 = vsel %vm2545, %v2537, %v1874
  %v2603 = vsel %vm2545, %v2538, %v1876
  %v2604 = vsel %vm2545, %v2539, %v1878
  %v2605 = vsel %vm2545, %v2540, %v1880
  %v2606 = vsel %vm2545, %v2541, %v1882
  %v2607 = vsel %vm2545, %v2542, %v1884
  %v2608 = vsel %vm2545, %v2543, %v1886
  %v2609 = vsel %vm2545, %v2544, %v1888
  %vm2610 = vcmask 261120
  %v2611 = vsel %vm2610, %v2546, %v1964
  %v2612 = vsel %vm2610, %v2547, %v1966
  %v2613 = vsel %vm2610, %v2548, %v1968
  %v2614 = vsel %vm2610, %v2549, %v1970
  %v2615 = vsel %vm2610, %v2550, %v1972
  %v2616 = vsel %vm2610, %v2551, %v1974
  %v2617 = vsel %vm2610, %v2552, %v1976
  %v2618 = vsel %vm2610, %v2553, %v1978
  %v2619 = vsel %vm2610, %v2554, %v1980
  %v2620 = vsel %vm2610, %v2555, %v1982
  %v2621 = vsel %vm2610, %v2556, %v1984
  %v2622 = vsel %vm2610, %v2557, %v1986
  %v2623 = vsel %vm2610, %v2558, %v1988
  %v2624 = vsel %vm2610, %v2559, %v1990
  %v2625 = vsel %vm2610, %v2560, %v1992
  %v2626 = vsel %vm2610, %v2561, %v1994
  %v2627 = vsel %vm2610, %v2562, %v1996
  %v2628 = vsel %vm2610, %v2563, %v1998
  %v2629 = vsel %vm2610, %v2564, %v2000
  %v2630 = vsel %vm2610, %v2565, %v2002
  %v2631 = vsel %vm2610, %v2566, %v2004
  %v2632 = vsel %vm2610, %v2567, %v2006
  %v2633 = vsel %vm2610, %v2568, %v2008
  %v2634 = vsel %vm2610, %v2569, %v2010
  %v2635 = vsel %vm2610, %v2570, %v2012
  %v2636 = vsel %vm2610, %v2571, %v2014
  %v2637 = vsel %vm2610, %v2572, %v2016
  %v2638 = vsel %vm2610, %v2573, %v2018
  %v2639 = vsel %vm2610, %v2574, %v2020
  %v2640 = vsel %vm2610, %v2575, %v2022
  %v2641 = vsel %vm2610, %v2576, %v2024
  %v2642 = vsel %vm2610, %v2577, %v2026
  %v2643 = vsel %vm2610, %v2578, %v2028
  %v2644 = vsel %vm2610, %v2579, %v2030
  %v2645 = vsel %vm2610, %v2580, %v2032
  %v2646 = vsel %vm2610, %v2581, %v2034
  %v2647 = vsel %vm2610, %v2582, %v2036
  %v2648 = vsel %vm2610, %v2583, %v2038
  %v2649 = vsel %vm2610, %v2584, %v2040
  %v2650 = vsel %vm2610, %v2585, %v2042
  %v2651 = vsel %vm2610, %v2586, %v2044
  %v2652 = vsel %vm2610, %v2587, %v2046
  %v2653 = vsel %vm2610, %v2588, %v2048
  %v2654 = vsel %vm2610, %v2589, %v2050
  %v2655 = vsel %vm2610, %v2590, %v2052
  %v2656 = vsel %vm2610, %v2591, %v2054
  %v2657 = vsel %vm2610, %v2592, %v2056
  %v2658 = vsel %vm2610, %v2593, %v2058
  %v2659 = vsel %vm2610, %v2594, %v2060
  %v2660 = vsel %vm2610, %v2595, %v2062
  %v2661 = vsel %vm2610, %v2596, %v2064
  %v2662 = vsel %vm2610, %v2597, %v2066
  %v2663 = vsel %vm2610, %v2598, %v2068
  %v2664 = vsel %vm2610, %v2599, %v2070
  %v2665 = vsel %vm2610, %v2600, %v2072
  %v2666 = vsel %vm2610, %v2601, %v2074
  %v2667 = vsel %vm2610, %v2602, %v2076
  %v2668 = vsel %vm2610, %v2603, %v2078
  %v2669 = vsel %vm2610, %v2604, %v2080
  %v2670 = vsel %vm2610, %v2605, %v2082
  %v2671 = vsel %vm2610, %v2606, %v2084
  %v2672 = vsel %vm2610, %v2607, %v2086
  %v2673 = vsel %vm2610, %v2608, %v2088
  %v2674 = vsel %vm2610, %v2609, %v2090
  %v2675 = vld [vmem:[%s2] sm:$0xff]
  %v2676 = vld [vmem:[%s2 + $0x8] sm:$0xff]
  %v2677 = vld [vmem:[%s2 + $0x10] sm:$0xff]
  %v2678 = vld [vmem:[%s2 + $0x18] sm:$0xff]
  %v2679 = vld [vmem:[%s2 + $0x20] sm:$0xf]
  %v2680 = vld [vmem:[%s3] sm:$0x1]
  %v2682 = vperm.slane %v2680, 0
  %vm2684 = vcmask 293888
  %v2686 = vsel %vm2684, %v2611, 0
  %v2689 = vsel %vm2684, %v2612, 0
  %v2692 = vsel %vm2684, %v2613, 0
  %v2695 = vsel %vm2684, %v2614, 0
  %v2698 = vsel %vm2684, %v2615, 0
  %v2701 = vsel %vm2684, %v2616, 0
  %v2704 = vsel %vm2684, %v2617, 0
  %v2707 = vsel %vm2684, %v2618, 0
  %v2710 = vsel %vm2684, %v2619, 0
  %v2713 = vsel %vm2684, %v2620, 0
  %v2716 = vsel %vm2684, %v2621, 0
  %v2719 = vsel %vm2684, %v2622, 0
  %v2722 = vsel %vm2684, %v2623, 0
  %v2725 = vsel %vm2684, %v2624, 0
  %v2728 = vsel %vm2684, %v2625, 0
  %v2731 = vsel %vm2684, %v2626, 0
  %v2734 = vsel %vm2684, %v2627, 0
  %v2737 = vsel %vm2684, %v2628, 0
  %v2740 = vsel %vm2684, %v2629, 0
  %v2743 = vsel %vm2684, %v2630, 0
  %v2746 = vsel %vm2684, %v2631, 0
  %v2749 = vsel %vm2684, %v2632, 0
  %v2752 = vsel %vm2684, %v2633, 0
  %v2755 = vsel %vm2684, %v2634, 0
  %v2758 = vsel %vm2684, %v2635, 0
  %v2761 = vsel %vm2684, %v2636, 0
  %v2764 = vsel %vm2684, %v2637, 0
  %v2767 = vsel %vm2684, %v2638, 0
  %v2770 = vsel %vm2684, %v2639, 0
  %v2773 = vsel %vm2684, %v2640, 0
  %v2776 = vsel %vm2684, %v2641, 0
  %v2779 = vsel %vm2684, %v2642, 0
  %v2782 = vsel %vm2684, %v2643, 0
  %v2785 = vsel %vm2684, %v2644, 0
  %v2788 = vsel %vm2684, %v2645, 0
  %v2791 = vsel %vm2684, %v2646, 0
  %v2794 = vsel %vm2684, %v2647, 0
  %v2797 = vsel %vm2684, %v2648, 0
  %v2800 = vsel %vm2684, %v2649, 0
  %v2803 = vsel %vm2684, %v2650, 0
  %v2806 = vsel %vm2684, %v2651, 0
  %v2809 = vsel %vm2684, %v2652, 0
  %v2812 = vsel %vm2684, %v2653, 0
  %v2815 = vsel %vm2684, %v2654, 0
  %v2818 = vsel %vm2684, %v2655, 0
  %v2821 = vsel %vm2684, %v2656, 0
  %v2824 = vsel %vm2684, %v2657, 0
  %v2827 = vsel %vm2684, %v2658, 0
  %v2830 = vsel %vm2684, %v2659, 0
  %v2833 = vsel %vm2684, %v2660, 0
  %v2836 = vsel %vm2684, %v2661, 0
  %v2839 = vsel %vm2684, %v2662, 0
  %v2842 = vsel %vm2684, %v2663, 0
  %v2845 = vsel %vm2684, %v2664, 0
  %v2848 = vsel %vm2684, %v2665, 0
  %v2851 = vsel %vm2684, %v2666, 0
  %v2854 = vsel %vm2684, %v2667, 0
  %v2857 = vsel %vm2684, %v2668, 0
  %v2860 = vsel %vm2684, %v2669, 0
  %v2863 = vsel %vm2684, %v2670, 0
  %v2866 = vsel %vm2684, %v2671, 0
  %v2869 = vsel %vm2684, %v2672, 0
  %v2872 = vsel %vm2684, %v2673, 0
  %v2875 = vsel %vm2684, %v2674, 0
  %vm2877 = vcmask 1043456
  %v2879 = vsel %vm2877, %v2679, 0
  %2881 = vmatpush.msra.mxu0 0.0
  %2882 = vmatpush.msra.mxu0 0.0
  %2883 = vmatpush.msra.mxu0 0.0
  %2884 = vmatpush.msra.mxu0 0.0
  %2885 = vmatpush.msra.mxu0 0.0
  %2886 = vmatpush.msra.mxu0 0.0
  %2887 = vmatpush.msra.mxu0 0.0
  %2888 = vmatpush.msra.mxu0 0.0
  %2889 = vmatpush.msra.mxu0 0.0
  %2890 = vmatpush.msra.mxu0 0.0
  %2891 = vmatpush.msra.mxu0 0.0
  %2892 = vmatpush.msra.mxu0 %v2879
  %2893 = vmatpush.msra.mxu0 %v2678
  %2894 = vmatpush.msra.mxu0 %v2677
  %2895 = vmatpush.msra.mxu0 %v2676
  %2896 = vmatpush.msra.mxu0 %v2675
  %2897 = vmatmul.f32.gmra.mxu0 %v2686
  %v2898 = vpop.f32.mrf.mxu0
  %v2899 = vadd.f32 %v2682, %v2898
  %2900 = vmatmul.f32.gmra.mxu0 %v2689
  %v2901 = vpop.f32.mrf.mxu0
  %v2902 = vadd.f32 %v2682, %v2901
  %2903 = vmatmul.f32.gmra.mxu0 %v2692
  %v2904 = vpop.f32.mrf.mxu0
  %v2905 = vadd.f32 %v2682, %v2904
  %2906 = vmatmul.f32.gmra.mxu0 %v2695
  %v2907 = vpop.f32.mrf.mxu0
  %v2908 = vadd.f32 %v2682, %v2907
  %2909 = vmatmul.f32.gmra.mxu0 %v2698
  %v2910 = vpop.f32.mrf.mxu0
  %v2911 = vadd.f32 %v2682, %v2910
  %2912 = vmatmul.f32.gmra.mxu0 %v2701
  %v2913 = vpop.f32.mrf.mxu0
  %v2914 = vadd.f32 %v2682, %v2913
  %2915 = vmatmul.f32.gmra.mxu0 %v2704
  %v2916 = vpop.f32.mrf.mxu0
  %v2917 = vadd.f32 %v2682, %v2916
  %2918 = vmatmul.f32.gmra.mxu0 %v2707
  %v2919 = vpop.f32.mrf.mxu0
  %v2920 = vadd.f32 %v2682, %v2919
  %2921 = vmatmul.f32.gmra.mxu0 %v2710
  %v2922 = vpop.f32.mrf.mxu0
  %v2923 = vadd.f32 %v2682, %v2922
  %2924 = vmatmul.f32.gmra.mxu0 %v2713
  %v2925 = vpop.f32.mrf.mxu0
  %v2926 = vadd.f32 %v2682, %v2925
  %2927 = vmatmul.f32.gmra.mxu0 %v2716
  %v2928 = vpop.f32.mrf.mxu0
  %v2929 = vadd.f32 %v2682, %v2928
  %2930 = vmatmul.f32.gmra.mxu0 %v2719
  %v2931 = vpop.f32.mrf.mxu0
  %v2932 = vadd.f32 %v2682, %v2931
  %2933 = vmatmul.f32.gmra.mxu0 %v2722
  %v2934 = vpop.f32.mrf.mxu0
  %v2935 = vadd.f32 %v2682, %v2934
  %2936 = vmatmul.f32.gmra.mxu0 %v2725
  %v2937 = vpop.f32.mrf.mxu0
  %v2938 = vadd.f32 %v2682, %v2937
  %2939 = vmatmul.f32.gmra.mxu0 %v2728
  %v2940 = vpop.f32.mrf.mxu0
  %v2941 = vadd.f32 %v2682, %v2940
  %2942 = vmatmul.f32.gmra.mxu0 %v2731
  %v2943 = vpop.f32.mrf.mxu0
  %v2944 = vadd.f32 %v2682, %v2943
  %2945 = vmatmul.f32.gmra.mxu0 %v2734
  %v2946 = vpop.f32.mrf.mxu0
  %v2947 = vadd.f32 %v2682, %v2946
  %2948 = vmatmul.f32.gmra.mxu0 %v2737
  %v2949 = vpop.f32.mrf.mxu0
  %v2950 = vadd.f32 %v2682, %v2949
  %2951 = vmatmul.f32.gmra.mxu0 %v2740
  %v2952 = vpop.f32.mrf.mxu0
  %v2953 = vadd.f32 %v2682, %v2952
  %2954 = vmatmul.f32.gmra.mxu0 %v2743
  %v2955 = vpop.f32.mrf.mxu0
  %v2956 = vadd.f32 %v2682, %v2955
  %2957 = vmatmul.f32.gmra.mxu0 %v2746
  %v2958 = vpop.f32.mrf.mxu0
  %v2959 = vadd.f32 %v2682, %v2958
  %2960 = vmatmul.f32.gmra.mxu0 %v2749
  %v2961 = vpop.f32.mrf.mxu0
  %v2962 = vadd.f32 %v2682, %v2961
  %2963 = vmatmul.f32.gmra.mxu0 %v2752
  %v2964 = vpop.f32.mrf.mxu0
  %v2965 = vadd.f32 %v2682, %v2964
  %2966 = vmatmul.f32.gmra.mxu0 %v2755
  %v2967 = vpop.f32.mrf.mxu0
  %v2968 = vadd.f32 %v2682, %v2967
  %2969 = vmatmul.f32.gmra.mxu0 %v2758
  %v2970 = vpop.f32.mrf.mxu0
  %v2971 = vadd.f32 %v2682, %v2970
  %2972 = vmatmul.f32.gmra.mxu0 %v2761
  %v2973 = vpop.f32.mrf.mxu0
  %v2974 = vadd.f32 %v2682, %v2973
  %2975 = vmatmul.f32.gmra.mxu0 %v2764
  %v2976 = vpop.f32.mrf.mxu0
  %v2977 = vadd.f32 %v2682, %v2976
  %2978 = vmatmul.f32.gmra.mxu0 %v2767
  %v2979 = vpop.f32.mrf.mxu0
  %v2980 = vadd.f32 %v2682, %v2979
  %2981 = vmatmul.f32.gmra.mxu0 %v2770
  %v2982 = vpop.f32.mrf.mxu0
  %v2983 = vadd.f32 %v2682, %v2982
  %2984 = vmatmul.f32.gmra.mxu0 %v2773
  %v2985 = vpop.f32.mrf.mxu0
  %v2986 = vadd.f32 %v2682, %v2985
  %2987 = vmatmul.f32.gmra.mxu0 %v2776
  %v2988 = vpop.f32.mrf.mxu0
  %v2989 = vadd.f32 %v2682, %v2988
  %2990 = vmatmul.f32.gmra.mxu0 %v2779
  %v2991 = vpop.f32.mrf.mxu0
  %v2992 = vadd.f32 %v2682, %v2991
  %2993 = vmatmul.f32.gmra.mxu0 %v2782
  %v2994 = vpop.f32.mrf.mxu0
  %v2995 = vadd.f32 %v2682, %v2994
  %2996 = vmatmul.f32.gmra.mxu0 %v2785
  %v2997 = vpop.f32.mrf.mxu0
  %v2998 = vadd.f32 %v2682, %v2997
  %2999 = vmatmul.f32.gmra.mxu0 %v2788
  %v3000 = vpop.f32.mrf.mxu0
  %v3001 = vadd.f32 %v2682, %v3000
  %3002 = vmatmul.f32.gmra.mxu0 %v2791
  %v3003 = vpop.f32.mrf.mxu0
  %v3004 = vadd.f32 %v2682, %v3003
  %3005 = vmatmul.f32.gmra.mxu0 %v2794
  %v3006 = vpop.f32.mrf.mxu0
  %v3007 = vadd.f32 %v2682, %v3006
  %3008 = vmatmul.f32.gmra.mxu0 %v2797
  %v3009 = vpop.f32.mrf.mxu0
  %v3010 = vadd.f32 %v2682, %v3009
  %3011 = vmatmul.f32.gmra.mxu0 %v2800
  %v3012 = vpop.f32.mrf.mxu0
  %v3013 = vadd.f32 %v2682, %v3012
  %3014 = vmatmul.f32.gmra.mxu0 %v2803
  %v3015 = vpop.f32.mrf.mxu0
  %v3016 = vadd.f32 %v2682, %v3015
  %3017 = vmatmul.f32.gmra.mxu0 %v2806
  %v3018 = vpop.f32.mrf.mxu0
  %v3019 = vadd.f32 %v2682, %v3018
  %3020 = vmatmul.f32.gmra.mxu0 %v2809
  %v3021 = vpop.f32.mrf.mxu0
  %v3022 = vadd.f32 %v2682, %v3021
  %3023 = vmatmul.f32.gmra.mxu0 %v2812
  %v3024 = vpop.f32.mrf.mxu0
  %v3025 = vadd.f32 %v2682, %v3024
  %3026 = vmatmul.f32.gmra.mxu0 %v2815
  %v3027 = vpop.f32.mrf.mxu0
  %v3028 = vadd.f32 %v2682, %v3027
  %3029 = vmatmul.f32.gmra.mxu0 %v2818
  %v3030 = vpop.f32.mrf.mxu0
  %v3031 = vadd.f32 %v2682, %v3030
  %3032 = vmatmul.f32.gmra.mxu0 %v2821
  %v3033 = vpop.f32.mrf.mxu0
  %v3034 = vadd.f32 %v2682, %v3033
  %3035 = vmatmul.f32.gmra.mxu0 %v2824
  %v3036 = vpop.f32.mrf.mxu0
  %v3037 = vadd.f32 %v2682, %v3036
  %3038 = vmatmul.f32.gmra.mxu0 %v2827
  %v3039 = vpop.f32.mrf.mxu0
  %v3040 = vadd.f32 %v2682, %v3039
  %3041 = vmatmul.f32.gmra.mxu0 %v2830
  %v3042 = vpop.f32.mrf.mxu0
  %v3043 = vadd.f32 %v2682, %v3042
  %3044 = vmatmul.f32.gmra.mxu0 %v2833
  %v3045 = vpop.f32.mrf.mxu0
  %v3046 = vadd.f32 %v2682, %v3045
  %3047 = vmatmul.f32.gmra.mxu0 %v2836
  %v3048 = vpop.f32.mrf.mxu0
  %v3049 = vadd.f32 %v2682, %v3048
  %3050 = vmatmul.f32.gmra.mxu0 %v2839
  %v3051 = vpop.f32.mrf.mxu0
  %v3052 = vadd.f32 %v2682, %v3051
  %3053 = vmatmul.f32.gmra.mxu0 %v2842
  %v3054 = vpop.f32.mrf.mxu0
  %v3055 = vadd.f32 %v2682, %v3054
  %3056 = vmatmul.f32.gmra.mxu0 %v2845
  %v3057 = vpop.f32.mrf.mxu0
  %v3058 = vadd.f32 %v2682, %v3057
  %3059 = vmatmul.f32.gmra.mxu0 %v2848
  %v3060 = vpop.f32.mrf.mxu0
  %v3061 = vadd.f32 %v2682, %v3060
  %3062 = vmatmul.f32.gmra.mxu0 %v2851
  %v3063 = vpop.f32.mrf.mxu0
  %v3064 = vadd.f32 %v2682, %v3063
  %3065 = vmatmul.f32.gmra.mxu0 %v2854
  %v3066 = vpop.f32.mrf.mxu0
  %v3067 = vadd.f32 %v2682, %v3066
  %3068 = vmatmul.f32.gmra.mxu0 %v2857
  %v3069 = vpop.f32.mrf.mxu0
  %v3070 = vadd.f32 %v2682, %v3069
  %3071 = vmatmul.f32.gmra.mxu0 %v2860
  %v3072 = vpop.f32.mrf.mxu0
  %v3073 = vadd.f32 %v2682, %v3072
  %3074 = vmatmul.f32.gmra.mxu0 %v2863
  %v3075 = vpop.f32.mrf.mxu0
  %v3076 = vadd.f32 %v2682, %v3075
  %3077 = vmatmul.f32.gmra.mxu0 %v2866
  %v3078 = vpop.f32.mrf.mxu0
  %v3079 = vadd.f32 %v2682, %v3078
  %3080 = vmatmul.f32.gmra.mxu0 %v2869
  %v3081 = vpop.f32.mrf.mxu0
  %v3082 = vadd.f32 %v2682, %v3081
  %3083 = vmatmul.f32.gmra.mxu0 %v2872
  %v3084 = vpop.f32.mrf.mxu0
  %v3085 = vadd.f32 %v2682, %v3084
  %3086 = vmatmul.f32.gmra.mxu0 %v2875
  %v3087 = vpop.f32.mrf.mxu0
  %v3088 = vadd.f32 %v2682, %v3087
  %3089 = vdwg.mxu0
  %3090 = vst.msk [vmem:[#allocation2] sm:$0xff] %vm2220, -inf
  %3091 = vst.msk [vmem:[#allocation2 + $0x8] sm:$0xff] %vm2220, -inf
  %vm3092 = vcmask 58368
  %3093 = vst.msk [vmem:[#allocation2 + $0x10] sm:$0x3] %vm3092, -inf
  %3094 = vst.msk [vmem:[#allocation2 + $0x1b0] sm:$0xff] %vm2220, -inf
  %3095 = vst.msk [vmem:[#allocation2 + $0x1b8] sm:$0xff] %vm2220, -inf
  %3096 = vst.msk [vmem:[#allocation2 + $0x1c0] sm:$0x3] %vm3092, -inf
  %s3097 = scalar_lea.vmem [#allocation2], 408
  %3098 = vst.msk [vmem:[%s3097] sm:$0xff] %vm2220, -inf
  %3099 = vst.msk [vmem:[%s3097 + $0x8] sm:$0xff] %vm2220, -inf
  %3100 = vst.msk [vmem:[%s3097 + $0x10] sm:$0x3] %vm3092, -inf
  %3101 = vst.msk [vmem:[%s3097 + $0x1b0] sm:$0xff] %vm2220, -inf
  %3102 = vst.msk [vmem:[%s3097 + $0x1b8] sm:$0xff] %vm2220, -inf
  %3103 = vst.msk [vmem:[%s3097 + $0x1c0] sm:$0x3] %vm3092, -inf
  %vm3104 = vcmask 57344
  %3105 = vst.msk [vmem:[#allocation2] sm:$0x1] %vm3104, -inf
  %3106 = vst.msk [vmem:[#allocation2 + $0x18] sm:$0x1] %vm3104, -inf
  %3107 = vst.msk [vmem:[#allocation2 + $0x30] sm:$0x1] %vm3104, -inf
  %3108 = vst.msk [vmem:[#allocation2 + $0x48] sm:$0x1] %vm3104, -inf
  %3109 = vst.msk [vmem:[#allocation2 + $0x60] sm:$0x1] %vm3104, -inf
  %3110 = vst.msk [vmem:[#allocation2 + $0x78] sm:$0x1] %vm3104, -inf
  %3111 = vst.msk [vmem:[#allocation2 + $0x90] sm:$0x1] %vm3104, -inf
  %3112 = vst.msk [vmem:[#allocation2 + $0xa8] sm:$0x1] %vm3104, -inf
  %3113 = vst.msk [vmem:[#allocation2 + $0xc0] sm:$0x1] %vm3104, -inf
  %3114 = vst.msk [vmem:[#allocation2 + $0xd8] sm:$0x1] %vm3104, -inf
  %3115 = vst.msk [vmem:[#allocation2 + $0xf0] sm:$0x1] %vm3104, -inf
  %3116 = vst.msk [vmem:[#allocation2 + $0x108] sm:$0x1] %vm3104, -inf
  %3117 = vst.msk [vmem:[#allocation2 + $0x120] sm:$0x1] %vm3104, -inf
  %3118 = vst.msk [vmem:[#allocation2 + $0x138] sm:$0x1] %vm3104, -inf
  %3119 = vst.msk [vmem:[#allocation2 + $0x150] sm:$0x1] %vm3104, -inf
  %3120 = vst.msk [vmem:[#allocation2 + $0x168] sm:$0x1] %vm3104, -inf
  %3121 = vst.msk [vmem:[#allocation2 + $0x180] sm:$0x1] %vm3104, -inf
  %3122 = vst.msk [vmem:[#allocation2 + $0x198] sm:$0x1] %vm3104, -inf
  %3123 = vst.msk [vmem:[#allocation2 + $0x1b0] sm:$0x1] %vm3104, -inf
  %3124 = vst.msk [vmem:[#allocation2 + $0x1c8] sm:$0x1] %vm3104, -inf
  %3125 = vst.msk [vmem:[#allocation2 + $0x1e0] sm:$0x1] %vm3104, -inf
  %3126 = vst.msk [vmem:[#allocation2 + $0x1f8] sm:$0x1] %vm3104, -inf
  %3127 = vst.msk [vmem:[#allocation2 + $0x210] sm:$0x1] %vm3104, -inf
  %3128 = vst.msk [vmem:[#allocation2 + $0x228] sm:$0x1] %vm3104, -inf
  %3129 = vst.msk [vmem:[#allocation2 + $0x240] sm:$0x1] %vm3104, -inf
  %3130 = vst.msk [vmem:[#allocation2 + $0x258] sm:$0x1] %vm3104, -inf
  %3131 = vst.msk [vmem:[#allocation2 + $0x270] sm:$0x1] %vm3104, -inf
  %3132 = vst.msk [vmem:[#allocation2 + $0x288] sm:$0x1] %vm3104, -inf
  %3133 = vst.msk [vmem:[#allocation2 + $0x2a0] sm:$0x1] %vm3104, -inf
  %3134 = vst.msk [vmem:[#allocation2 + $0x2b8] sm:$0x1] %vm3104, -inf
  %3135 = vst.msk [vmem:[#allocation2 + $0x2d0] sm:$0x1] %vm3104, -inf
  %3136 = vst.msk [vmem:[#allocation2 + $0x2e8] sm:$0x1] %vm3104, -inf
  %3137 = vst.msk [vmem:[#allocation2 + $0x300] sm:$0x1] %vm3104, -inf
  %3138 = vst.msk [vmem:[#allocation2 + $0x318] sm:$0x1] %vm3104, -inf
  %3139 = vst.msk [vmem:[#allocation2 + $0x330] sm:$0x1] %vm3104, -inf
  %3140 = vst.msk [vmem:[#allocation2 + $0x348] sm:$0x1] %vm3104, -inf
  %3141 = vst.msk [vmem:[#allocation2 + $0x11] sm:$0x1] %vm3104, -inf
  %3142 = vst.msk [vmem:[#allocation2 + $0x29] sm:$0x1] %vm3104, -inf
  %3143 = vst.msk [vmem:[#allocation2 + $0x41] sm:$0x1] %vm3104, -inf
  %3144 = vst.msk [vmem:[#allocation2 + $0x59] sm:$0x1] %vm3104, -inf
  %3145 = vst.msk [vmem:[#allocation2 + $0x71] sm:$0x1] %vm3104, -inf
  %3146 = vst.msk [vmem:[#allocation2 + $0x89] sm:$0x1] %vm3104, -inf
  %3147 = vst.msk [vmem:[#allocation2 + $0xa1] sm:$0x1] %vm3104, -inf
  %3148 = vst.msk [vmem:[#allocation2 + $0xb9] sm:$0x1] %vm3104, -inf
  %3149 = vst.msk [vmem:[#allocation2 + $0xd1] sm:$0x1] %vm3104, -inf
  %3150 = vst.msk [vmem:[#allocation2 + $0xe9] sm:$0x1] %vm3104, -inf
  %3151 = vst.msk [vmem:[#allocation2 + $0x101] sm:$0x1] %vm3104, -inf
  %3152 = vst.msk [vmem:[#allocation2 + $0x119] sm:$0x1] %vm3104, -inf
  %3153 = vst.msk [vmem:[#allocation2 + $0x131] sm:$0x1] %vm3104, -inf
  %3154 = vst.msk [vmem:[#allocation2 + $0x149] sm:$0x1] %vm3104, -inf
  %3155 = vst.msk [vmem:[#allocation2 + $0x161] sm:$0x1] %vm3104, -inf
  %3156 = vst.msk [vmem:[#allocation2 + $0x179] sm:$0x1] %vm3104, -inf
  %3157 = vst.msk [vmem:[#allocation2 + $0x191] sm:$0x1] %vm3104, -inf
  %3158 = vst.msk [vmem:[#allocation2 + $0x1a9] sm:$0x1] %vm3104, -inf
  %3159 = vst.msk [vmem:[#allocation2 + $0x1c1] sm:$0x1] %vm3104, -inf
  %3160 = vst.msk [vmem:[#allocation2 + $0x1d9] sm:$0x1] %vm3104, -inf
  %3161 = vst.msk [vmem:[#allocation2 + $0x1f1] sm:$0x1] %vm3104, -inf
  %3162 = vst.msk [vmem:[#allocation2 + $0x209] sm:$0x1] %vm3104, -inf
  %3163 = vst.msk [vmem:[#allocation2 + $0x221] sm:$0x1] %vm3104, -inf
  %3164 = vst.msk [vmem:[#allocation2 + $0x239] sm:$0x1] %vm3104, -inf
  %3165 = vst.msk [vmem:[#allocation2 + $0x251] sm:$0x1] %vm3104, -inf
  %3166 = vst.msk [vmem:[#allocation2 + $0x269] sm:$0x1] %vm3104, -inf
  %3167 = vst.msk [vmem:[#allocation2 + $0x281] sm:$0x1] %vm3104, -inf
  %3168 = vst.msk [vmem:[#allocation2 + $0x299] sm:$0x1] %vm3104, -inf
  %3169 = vst.msk [vmem:[#allocation2 + $0x2b1] sm:$0x1] %vm3104, -inf
  %3170 = vst.msk [vmem:[#allocation2 + $0x2c9] sm:$0x1] %vm3104, -inf
  %3171 = vst.msk [vmem:[#allocation2 + $0x2e1] sm:$0x1] %vm3104, -inf
  %3172 = vst.msk [vmem:[#allocation2 + $0x2f9] sm:$0x1] %vm3104, -inf
  %3173 = vst.msk [vmem:[#allocation2 + $0x311] sm:$0x1] %vm3104, -inf
  %3174 = vst.msk [vmem:[#allocation2 + $0x329] sm:$0x1] %vm3104, -inf
  %3175 = vst.msk [vmem:[#allocation2 + $0x341] sm:$0x1] %vm3104, -inf
  %3176 = vst.msk [vmem:[#allocation2 + $0x359] sm:$0x1] %vm3104, -inf
  %s3177 = scalar_lea.vmem [#allocation2], 24
  %3178 = vst.msk [vmem:[%s3177 + $0x1] sm:$0xff] %vm2220, %v2899
  %3179 = vst.msk [vmem:[%s3177 + $0x9] sm:$0xff] %vm2220, %v2902
  %3180 = vst.msk [vmem:[%s3177 + $0x19] sm:$0xff] %vm2220, %v2905
  %3181 = vst.msk [vmem:[%s3177 + $0x21] sm:$0xff] %vm2220, %v2908
  %3182 = vst.msk [vmem:[%s3177 + $0x31] sm:$0xff] %vm2220, %v2911
  %3183 = vst.msk [vmem:[%s3177 + $0x39] sm:$0xff] %vm2220, %v2914
  %3184 = vst.msk [vmem:[%s3177 + $0x49] sm:$0xff] %vm2220, %v2917
  %3185 = vst.msk [vmem:[%s3177 + $0x51] sm:$0xff] %vm2220, %v2920
  %3186 = vst.msk [vmem:[%s3177 + $0x61] sm:$0xff] %vm2220, %v2923
  %3187 = vst.msk [vmem:[%s3177 + $0x69] sm:$0xff] %vm2220, %v2926
  %3188 = vst.msk [vmem:[%s3177 + $0x79] sm:$0xff] %vm2220, %v2929
  %3189 = vst.msk [vmem:[%s3177 + $0x81] sm:$0xff] %vm2220, %v2932
  %3190 = vst.msk [vmem:[%s3177 + $0x91] sm:$0xff] %vm2220, %v2935
  %3191 = vst.msk [vmem:[%s3177 + $0x99] sm:$0xff] %vm2220, %v2938
  %3192 = vst.msk [vmem:[%s3177 + $0xa9] sm:$0xff] %vm2220, %v2941
  %3193 = vst.msk [vmem:[%s3177 + $0xb1] sm:$0xff] %vm2220, %v2944
  %3194 = vst.msk [vmem:[%s3177 + $0xc1] sm:$0xff] %vm2220, %v2947
  %3195 = vst.msk [vmem:[%s3177 + $0xc9] sm:$0xff] %vm2220, %v2950
  %3196 = vst.msk [vmem:[%s3177 + $0xd9] sm:$0xff] %vm2220, %v2953
  %3197 = vst.msk [vmem:[%s3177 + $0xe1] sm:$0xff] %vm2220, %v2956
  %3198 = vst.msk [vmem:[%s3177 + $0xf1] sm:$0xff] %vm2220, %v2959
  %3199 = vst.msk [vmem:[%s3177 + $0xf9] sm:$0xff] %vm2220, %v2962
  %3200 = vst.msk [vmem:[%s3177 + $0x109] sm:$0xff] %vm2220, %v2965
  %3201 = vst.msk [vmem:[%s3177 + $0x111] sm:$0xff] %vm2220, %v2968
  %3202 = vst.msk [vmem:[%s3177 + $0x121] sm:$0xff] %vm2220, %v2971
  %3203 = vst.msk [vmem:[%s3177 + $0x129] sm:$0xff] %vm2220, %v2974
  %3204 = vst.msk [vmem:[%s3177 + $0x139] sm:$0xff] %vm2220, %v2977
  %3205 = vst.msk [vmem:[%s3177 + $0x141] sm:$0xff] %vm2220, %v2980
  %3206 = vst.msk [vmem:[%s3177 + $0x151] sm:$0xff] %vm2220, %v2983
  %3207 = vst.msk [vmem:[%s3177 + $0x159] sm:$0xff] %vm2220, %v2986
  %3208 = vst.msk [vmem:[%s3177 + $0x169] sm:$0xff] %vm2220, %v2989
  %3209 = vst.msk [vmem:[%s3177 + $0x171] sm:$0xff] %vm2220, %v2992
  %3210 = vst.msk [vmem:[%s3177 + $0x1b1] sm:$0xff] %vm2220, %v2995
  %3211 = vst.msk [vmem:[%s3177 + $0x1b9] sm:$0xff] %vm2220, %v2998
  %3212 = vst.msk [vmem:[%s3177 + $0x1c9] sm:$0xff] %vm2220, %v3001
  %3213 = vst.msk [vmem:[%s3177 + $0x1d1] sm:$0xff] %vm2220, %v3004
  %3214 = vst.msk [vmem:[%s3177 + $0x1e1] sm:$0xff] %vm2220, %v3007
  %3215 = vst.msk [vmem:[%s3177 + $0x1e9] sm:$0xff] %vm2220, %v3010
  %3216 = vst.msk [vmem:[%s3177 + $0x1f9] sm:$0xff] %vm2220, %v3013
  %3217 = vst.msk [vmem:[%s3177 + $0x201] sm:$0xff] %vm2220, %v3016
  %3218 = vst.msk [vmem:[%s3177 + $0x211] sm:$0xff] %vm2220, %v3019
  %3219 = vst.msk [vmem:[%s3177 + $0x219] sm:$0xff] %vm2220, %v3022
  %3220 = vst.msk [vmem:[%s3177 + $0x229] sm:$0xff] %vm2220, %v3025
  %3221 = vst.msk [vmem:[%s3177 + $0x231] sm:$0xff] %vm2220, %v3028
  %3222 = vst.msk [vmem:[%s3177 + $0x241] sm:$0xff] %vm2220, %v3031
  %3223 = vst.msk [vmem:[%s3177 + $0x249] sm:$0xff] %vm2220, %v3034
  %3224 = vst.msk [vmem:[%s3177 + $0x259] sm:$0xff] %vm2220, %v3037
  %3225 = vst.msk [vmem:[%s3177 + $0x261] sm:$0xff] %vm2220, %v3040
  %3226 = vst.msk [vmem:[%s3177 + $0x271] sm:$0xff] %vm2220, %v3043
  %3227 = vst.msk [vmem:[%s3177 + $0x279] sm:$0xff] %vm2220, %v3046
  %3228 = vst.msk [vmem:[%s3177 + $0x289] sm:$0xff] %vm2220, %v3049
  %3229 = vst.msk [vmem:[%s3177 + $0x291] sm:$0xff] %vm2220, %v3052
  %3230 = vst.msk [vmem:[%s3177 + $0x2a1] sm:$0xff] %vm2220, %v3055
  %3231 = vst.msk [vmem:[%s3177 + $0x2a9] sm:$0xff] %vm2220, %v3058
  %3232 = vst.msk [vmem:[%s3177 + $0x2b9] sm:$0xff] %vm2220, %v3061
  %3233 = vst.msk [vmem:[%s3177 + $0x2c1] sm:$0xff] %vm2220, %v3064
  %3234 = vst.msk [vmem:[%s3177 + $0x2d1] sm:$0xff] %vm2220, %v3067
  %3235 = vst.msk [vmem:[%s3177 + $0x2d9] sm:$0xff] %vm2220, %v3070
  %3236 = vst.msk [vmem:[%s3177 + $0x2e9] sm:$0xff] %vm2220, %v3073
  %3237 = vst.msk [vmem:[%s3177 + $0x2f1] sm:$0xff] %vm2220, %v3076
  %3238 = vst.msk [vmem:[%s3177 + $0x301] sm:$0xff] %vm2220, %v3079
  %3239 = vst.msk [vmem:[%s3177 + $0x309] sm:$0xff] %vm2220, %v3082
  %3240 = vst.msk [vmem:[%s3177 + $0x319] sm:$0xff] %vm2220, %v3085
  %3241 = vst.msk [vmem:[%s3177 + $0x321] sm:$0xff] %vm2220, %v3088
  %v3242 = vld [vmem:[#allocation2] sm:$0xff]
  %v3243 = vld [vmem:[#allocation2 + $0x8] sm:$0xff]
  %v3244 = vld [vmem:[#allocation2 + $0x10] sm:$0x3]
  %v3245 = vld [vmem:[#allocation2 + $0x18] sm:$0xff]
  %v3246 = vld [vmem:[#allocation2 + $0x20] sm:$0xff]
  %v3247 = vld [vmem:[#allocation2 + $0x28] sm:$0x3]
  %v3248 = vld [vmem:[#allocation2 + $0x30] sm:$0xff]
  %v3249 = vld [vmem:[#allocation2 + $0x38] sm:$0xff]
  %v3250 = vld [vmem:[#allocation2 + $0x40] sm:$0x3]
  %v3251 = vld [vmem:[#allocation2 + $0x48] sm:$0xff]
  %v3252 = vld [vmem:[#allocation2 + $0x50] sm:$0xff]
  %v3253 = vld [vmem:[#allocation2 + $0x58] sm:$0x3]
  %v3254 = vld [vmem:[#allocation2 + $0x60] sm:$0xff]
  %v3255 = vld [vmem:[#allocation2 + $0x68] sm:$0xff]
  %v3256 = vld [vmem:[#allocation2 + $0x70] sm:$0x3]
  %v3257 = vld [vmem:[#allocation2 + $0x78] sm:$0xff]
  %v3258 = vld [vmem:[#allocation2 + $0x80] sm:$0xff]
  %v3259 = vld [vmem:[#allocation2 + $0x88] sm:$0x3]
  %v3260 = vld [vmem:[#allocation2 + $0x90] sm:$0xff]
  %v3261 = vld [vmem:[#allocation2 + $0x98] sm:$0xff]
  %v3262 = vld [vmem:[#allocation2 + $0xa0] sm:$0x3]
  %v3263 = vld [vmem:[#allocation2 + $0xa8] sm:$0xff]
  %v3264 = vld [vmem:[#allocation2 + $0xb0] sm:$0xff]
  %v3265 = vld [vmem:[#allocation2 + $0xb8] sm:$0x3]
  %v3266 = vld [vmem:[#allocation2 + $0xc0] sm:$0xff]
  %v3267 = vld [vmem:[#allocation2 + $0xc8] sm:$0xff]
  %v3268 = vld [vmem:[#allocation2 + $0xd0] sm:$0x3]
  %v3269 = vld [vmem:[#allocation2 + $0xd8] sm:$0xff]
  %v3270 = vld [vmem:[#allocation2 + $0xe0] sm:$0xff]
  %v3271 = vld [vmem:[#allocation2 + $0xe8] sm:$0x3]
  %v3272 = vld [vmem:[#allocation2 + $0xf0] sm:$0xff]
  %v3273 = vld [vmem:[#allocation2 + $0xf8] sm:$0xff]
  %v3274 = vld [vmem:[#allocation2 + $0x100] sm:$0x3]
  %v3275 = vld [vmem:[#allocation2 + $0x108] sm:$0xff]
  %v3276 = vld [vmem:[#allocation2 + $0x110] sm:$0xff]
  %v3277 = vld [vmem:[#allocation2 + $0x118] sm:$0x3]
  %v3278 = vld [vmem:[#allocation2 + $0x120] sm:$0xff]
  %v3279 = vld [vmem:[#allocation2 + $0x128] sm:$0xff]
  %v3280 = vld [vmem:[#allocation2 + $0x130] sm:$0x3]
  %v3281 = vld [vmem:[#allocation2 + $0x138] sm:$0xff]
  %v3282 = vld [vmem:[#allocation2 + $0x140] sm:$0xff]
  %v3283 = vld [vmem:[#allocation2 + $0x148] sm:$0x3]
  %v3284 = vld [vmem:[#allocation2 + $0x150] sm:$0xff]
  %v3285 = vld [vmem:[#allocation2 + $0x158] sm:$0xff]
  %v3286 = vld [vmem:[#allocation2 + $0x160] sm:$0x3]
  %v3287 = vld [vmem:[#allocation2 + $0x168] sm:$0xff]
  %v3288 = vld [vmem:[#allocation2 + $0x170] sm:$0xff]
  %v3289 = vld [vmem:[#allocation2 + $0x178] sm:$0x3]
  %v3290 = vld [vmem:[#allocation2 + $0x180] sm:$0xff]
  %v3291 = vld [vmem:[#allocation2 + $0x188] sm:$0xff]
  %v3292 = vld [vmem:[#allocation2 + $0x190] sm:$0x3]
  %v3293 = vld [vmem:[#allocation2 + $0x198] sm:$0xff]
  %v3294 = vld [vmem:[#allocation2 + $0x1a0] sm:$0xff]
  %v3295 = vld [vmem:[#allocation2 + $0x1a8] sm:$0x3]
  %v3296 = vld [vmem:[#allocation2 + $0x1b0] sm:$0xff]
  %v3297 = vld [vmem:[#allocation2 + $0x1b8] sm:$0xff]
  %v3298 = vld [vmem:[#allocation2 + $0x1c0] sm:$0x3]
  %v3299 = vld [vmem:[#allocation2 + $0x1c8] sm:$0xff]
  %v3300 = vld [vmem:[#allocation2 + $0x1d0] sm:$0xff]
  %v3301 = vld [vmem:[#allocation2 + $0x1d8] sm:$0x3]
  %v3302 = vld [vmem:[#allocation2 + $0x1e0] sm:$0xff]
  %v3303 = vld [vmem:[#allocation2 + $0x1e8] sm:$0xff]
  %v3304 = vld [vmem:[#allocation2 + $0x1f0] sm:$0x3]
  %v3305 = vld [vmem:[#allocation2 + $0x1f8] sm:$0xff]
  %v3306 = vld [vmem:[#allocation2 + $0x200] sm:$0xff]
  %v3307 = vld [vmem:[#allocation2 + $0x208] sm:$0x3]
  %v3308 = vld [vmem:[#allocation2 + $0x210] sm:$0xff]
  %v3309 = vld [vmem:[#allocation2 + $0x218] sm:$0xff]
  %v3310 = vld [vmem:[#allocation2 + $0x220] sm:$0x3]
  %v3311 = vld [vmem:[#allocation2 + $0x228] sm:$0xff]
  %v3312 = vld [vmem:[#allocation2 + $0x230] sm:$0xff]
  %v3313 = vld [vmem:[#allocation2 + $0x238] sm:$0x3]
  %v3314 = vld [vmem:[#allocation2 + $0x240] sm:$0xff]
  %v3315 = vld [vmem:[#allocation2 + $0x248] sm:$0xff]
  %v3316 = vld [vmem:[#allocation2 + $0x250] sm:$0x3]
  %v3317 = vld [vmem:[#allocation2 + $0x258] sm:$0xff]
  %v3318 = vld [vmem:[#allocation2 + $0x260] sm:$0xff]
  %v3319 = vld [vmem:[#allocation2 + $0x268] sm:$0x3]
  %v3320 = vld [vmem:[#allocation2 + $0x270] sm:$0xff]
  %v3321 = vld [vmem:[#allocation2 + $0x278] sm:$0xff]
  %v3322 = vld [vmem:[#allocation2 + $0x280] sm:$0x3]
  %v3323 = vld [vmem:[#allocation2 + $0x288] sm:$0xff]
  %v3324 = vld [vmem:[#allocation2 + $0x290] sm:$0xff]
  %v3325 = vld [vmem:[#allocation2 + $0x298] sm:$0x3]
  %v3326 = vld [vmem:[#allocation2 + $0x2a0] sm:$0xff]
  %v3327 = vld [vmem:[#allocation2 + $0x2a8] sm:$0xff]
  %v3328 = vld [vmem:[#allocation2 + $0x2b0] sm:$0x3]
  %v3329 = vld [vmem:[#allocation2 + $0x2b8] sm:$0xff]
  %v3330 = vld [vmem:[#allocation2 + $0x2c0] sm:$0xff]
  %v3331 = vld [vmem:[#allocation2 + $0x2c8] sm:$0x3]
  %v3332 = vld [vmem:[#allocation2 + $0x2d0] sm:$0xff]
  %v3333 = vld [vmem:[#allocation2 + $0x2d8] sm:$0xff]
  %v3334 = vld [vmem:[#allocation2 + $0x2e0] sm:$0x3]
  %v3335 = vld [vmem:[#allocation2 + $0x2e8] sm:$0xff]
  %v3336 = vld [vmem:[#allocation2 + $0x2f0] sm:$0xff]
  %v3337 = vld [vmem:[#allocation2 + $0x2f8] sm:$0x3]
  %v3338 = vld [vmem:[#allocation2 + $0x300] sm:$0xff]
  %v3339 = vld [vmem:[#allocation2 + $0x308] sm:$0xff]
  %v3340 = vld [vmem:[#allocation2 + $0x310] sm:$0x3]
  %v3341 = vld [vmem:[#allocation2 + $0x318] sm:$0xff]
  %v3342 = vld [vmem:[#allocation2 + $0x320] sm:$0xff]
  %v3343 = vld [vmem:[#allocation2 + $0x328] sm:$0x3]
  %v3344 = vld [vmem:[#allocation2 + $0x330] sm:$0xff]
  %v3345 = vld [vmem:[#allocation2 + $0x338] sm:$0xff]
  %v3346 = vld [vmem:[#allocation2 + $0x340] sm:$0x3]
  %v3347 = vld [vmem:[#allocation2 + $0x348] sm:$0xff]
  %v3348 = vld [vmem:[#allocation2 + $0x350] sm:$0xff]
  %v3349 = vld [vmem:[#allocation2 + $0x358] sm:$0x3]
  %v3446 = vrot.slane %v3242, 1
  %v3447 = vrot.slane %v3243, 1
  %v3448 = vsel %vm245, %v3446, %v3447
  %v3449 = vrot.slane %v3244, 1
  %v3450 = vsel %vm245, %v3447, %v3449
  %v3451 = vrot.slane %v3245, 1
  %v3452 = vrot.slane %v3246, 1
  %v3453 = vsel %vm245, %v3451, %v3452
  %v3454 = vrot.slane %v3247, 1
  %v3455 = vsel %vm245, %v3452, %v3454
  %v3456 = vrot.slane %v3248, 1
  %v3457 = vrot.slane %v3249, 1
  %v3458 = vsel %vm245, %v3456, %v3457
  %v3459 = vrot.slane %v3250, 1
  %v3460 = vsel %vm245, %v3457, %v3459
  %v3461 = vrot.slane %v3251, 1
  %v3462 = vrot.slane %v3252, 1
  %v3463 = vsel %vm245, %v3461, %v3462
  %v3464 = vrot.slane %v3253, 1
  %v3465 = vsel %vm245, %v3462, %v3464
  %v3466 = vrot.slane %v3254, 1
  %v3467 = vrot.slane %v3255, 1
  %v3468 = vsel %vm245, %v3466, %v3467
  %v3469 = vrot.slane %v3256, 1
  %v3470 = vsel %vm245, %v3467, %v3469
  %v3471 = vrot.slane %v3257, 1
  %v3472 = vrot.slane %v3258, 1
  %v3473 = vsel %vm245, %v3471, %v3472
  %v3474 = vrot.slane %v3259, 1
  %v3475 = vsel %vm245, %v3472, %v3474
  %v3476 = vrot.slane %v3260, 1
  %v3477 = vrot.slane %v3261, 1
  %v3478 = vsel %vm245, %v3476, %v3477
  %v3479 = vrot.slane %v3262, 1
  %v3480 = vsel %vm245, %v3477, %v3479
  %v3481 = vrot.slane %v3263, 1
  %v3482 = vrot.slane %v3264, 1
  %v3483 = vsel %vm245, %v3481, %v3482
  %v3484 = vrot.slane %v3265, 1
  %v3485 = vsel %vm245, %v3482, %v3484
  %v3486 = vrot.slane %v3266, 1
  %v3487 = vrot.slane %v3267, 1
  %v3488 = vsel %vm245, %v3486, %v3487
  %v3489 = vrot.slane %v3268, 1
  %v3490 = vsel %vm245, %v3487, %v3489
  %v3491 = vrot.slane %v3269, 1
  %v3492 = vrot.slane %v3270, 1
  %v3493 = vsel %vm245, %v3491, %v3492
  %v3494 = vrot.slane %v3271, 1
  %v3495 = vsel %vm245, %v3492, %v3494
  %v3496 = vrot.slane %v3272, 1
  %v3497 = vrot.slane %v3273, 1
  %v3498 = vsel %vm245, %v3496, %v3497
  %v3499 = vrot.slane %v3274, 1
  %v3500 = vsel %vm245, %v3497, %v3499
  %v3501 = vrot.slane %v3275, 1
  %v3502 = vrot.slane %v3276, 1
  %v3503 = vsel %vm245, %v3501, %v3502
  %v3504 = vrot.slane %v3277, 1
  %v3505 = vsel %vm245, %v3502, %v3504
  %v3506 = vrot.slane %v3278, 1
  %v3507 = vrot.slane %v3279, 1
  %v3508 = vsel %vm245, %v3506, %v3507
  %v3509 = vrot.slane %v3280, 1
  %v3510 = vsel %vm245, %v3507, %v3509
  %v3511 = vrot.slane %v3281, 1
  %v3512 = vrot.slane %v3282, 1
  %v3513 = vsel %vm245, %v3511, %v3512
  %v3514 = vrot.slane %v3283, 1
  %v3515 = vsel %vm245, %v3512, %v3514
  %v3516 = vrot.slane %v3284, 1
  %v3517 = vrot.slane %v3285, 1
  %v3518 = vsel %vm245, %v3516, %v3517
  %v3519 = vrot.slane %v3286, 1
  %v3520 = vsel %vm245, %v3517, %v3519
  %v3521 = vrot.slane %v3287, 1
  %v3522 = vrot.slane %v3288, 1
  %v3523 = vsel %vm245, %v3521, %v3522
  %v3524 = vrot.slane %v3289, 1
  %v3525 = vsel %vm245, %v3522, %v3524
  %v3526 = vrot.slane %v3296, 1
  %v3527 = vrot.slane %v3297, 1
  %v3528 = vsel %vm245, %v3526, %v3527
  %v3529 = vrot.slane %v3298, 1
  %v3530 = vsel %vm245, %v3527, %v3529
  %v3531 = vrot.slane %v3299, 1
  %v3532 = vrot.slane %v3300, 1
  %v3533 = vsel %vm245, %v3531, %v3532
  %v3534 = vrot.slane %v3301, 1
  %v3535 = vsel %vm245, %v3532, %v3534
  %v3536 = vrot.slane %v3302, 1
  %v3537 = vrot.slane %v3303, 1
  %v3538 = vsel %vm245, %v3536, %v3537
  %v3539 = vrot.slane %v3304, 1
  %v3540 = vsel %vm245, %v3537, %v3539
  %v3541 = vrot.slane %v3305, 1
  %v3542 = vrot.slane %v3306, 1
  %v3543 = vsel %vm245, %v3541, %v3542
  %v3544 = vrot.slane %v3307, 1
  %v3545 = vsel %vm245, %v3542, %v3544
  %v3546 = vrot.slane %v3308, 1
  %v3547 = vrot.slane %v3309, 1
  %v3548 = vsel %vm245, %v3546, %v3547
  %v3549 = vrot.slane %v3310, 1
  %v3550 = vsel %vm245, %v3547, %v3549
  %v3551 = vrot.slane %v3311, 1
  %v3552 = vrot.slane %v3312, 1
  %v3553 = vsel %vm245, %v3551, %v3552
  %v3554 = vrot.slane %v3313, 1
  %v3555 = vsel %vm245, %v3552, %v3554
  %v3556 = vrot.slane %v3314, 1
  %v3557 = vrot.slane %v3315, 1
  %v3558 = vsel %vm245, %v3556, %v3557
  %v3559 = vrot.slane %v3316, 1
  %v3560 = vsel %vm245, %v3557, %v3559
  %v3561 = vrot.slane %v3317, 1
  %v3562 = vrot.slane %v3318, 1
  %v3563 = vsel %vm245, %v3561, %v3562
  %v3564 = vrot.slane %v3319, 1
  %v3565 = vsel %vm245, %v3562, %v3564
  %v3566 = vrot.slane %v3320, 1
  %v3567 = vrot.slane %v3321, 1
  %v3568 = vsel %vm245, %v3566, %v3567
  %v3569 = vrot.slane %v3322, 1
  %v3570 = vsel %vm245, %v3567, %v3569
  %v3571 = vrot.slane %v3323, 1
  %v3572 = vrot.slane %v3324, 1
  %v3573 = vsel %vm245, %v3571, %v3572
  %v3574 = vrot.slane %v3325, 1
  %v3575 = vsel %vm245, %v3572, %v3574
  %v3576 = vrot.slane %v3326, 1
  %v3577 = vrot.slane %v3327, 1
  %v3578 = vsel %vm245, %v3576, %v3577
  %v3579 = vrot.slane %v3328, 1
  %v3580 = vsel %vm245, %v3577, %v3579
  %v3581 = vrot.slane %v3329, 1
  %v3582 = vrot.slane %v3330, 1
  %v3583 = vsel %vm245, %v3581, %v3582
  %v3584 = vrot.slane %v3331, 1
  %v3585 = vsel %vm245, %v3582, %v3584
  %v3586 = vrot.slane %v3332, 1
  %v3587 = vrot.slane %v3333, 1
  %v3588 = vsel %vm245, %v3586, %v3587
  %v3589 = vrot.slane %v3334, 1
  %v3590 = vsel %vm245, %v3587, %v3589
  %v3591 = vrot.slane %v3335, 1
  %v3592 = vrot.slane %v3336, 1
  %v3593 = vsel %vm245, %v3591, %v3592
  %v3594 = vrot.slane %v3337, 1
  %v3595 = vsel %vm245, %v3592, %v3594
  %v3596 = vrot.slane %v3338, 1
  %v3597 = vrot.slane %v3339, 1
  %v3598 = vsel %vm245, %v3596, %v3597
  %v3599 = vrot.slane %v3340, 1
  %v3600 = vsel %vm245, %v3597, %v3599
  %v3601 = vrot.slane %v3341, 1
  %v3602 = vrot.slane %v3342, 1
  %v3603 = vsel %vm245, %v3601, %v3602
  %v3604 = vrot.slane %v3343, 1
  %v3605 = vsel %vm245, %v3602, %v3604
  %v3670 = vmax.f32 %v3242, %v3448
  %v3671 = vmax.f32 %v3243, %v3450
  %v3672 = vmax.f32 %v3245, %v3453
  %v3673 = vmax.f32 %v3246, %v3455
  %v3674 = vmax.f32 %v3248, %v3458
  %v3675 = vmax.f32 %v3249, %v3460
  %v3676 = vmax.f32 %v3251, %v3463
  %v3677 = vmax.f32 %v3252, %v3465
  %v3678 = vmax.f32 %v3254, %v3468
  %v3679 = vmax.f32 %v3255, %v3470
  %v3680 = vmax.f32 %v3257, %v3473
  %v3681 = vmax.f32 %v3258, %v3475
  %v3682 = vmax.f32 %v3260, %v3478
  %v3683 = vmax.f32 %v3261, %v3480
  %v3684 = vmax.f32 %v3263, %v3483
  %v3685 = vmax.f32 %v3264, %v3485
  %v3686 = vmax.f32 %v3266, %v3488
  %v3687 = vmax.f32 %v3267, %v3490
  %v3688 = vmax.f32 %v3269, %v3493
  %v3689 = vmax.f32 %v3270, %v3495
  %v3690 = vmax.f32 %v3272, %v3498
  %v3691 = vmax.f32 %v3273, %v3500
  %v3692 = vmax.f32 %v3275, %v3503
  %v3693 = vmax.f32 %v3276, %v3505
  %v3694 = vmax.f32 %v3278, %v3508
  %v3695 = vmax.f32 %v3279, %v3510
  %v3696 = vmax.f32 %v3281, %v3513
  %v3697 = vmax.f32 %v3282, %v3515
  %v3698 = vmax.f32 %v3284, %v3518
  %v3699 = vmax.f32 %v3285, %v3520
  %v3700 = vmax.f32 %v3287, %v3523
  %v3701 = vmax.f32 %v3288, %v3525
  %v3702 = vmax.f32 %v3296, %v3528
  %v3703 = vmax.f32 %v3297, %v3530
  %v3704 = vmax.f32 %v3299, %v3533
  %v3705 = vmax.f32 %v3300, %v3535
  %v3706 = vmax.f32 %v3302, %v3538
  %v3707 = vmax.f32 %v3303, %v3540
  %v3708 = vmax.f32 %v3305, %v3543
  %v3709 = vmax.f32 %v3306, %v3545
  %v3710 = vmax.f32 %v3308, %v3548
  %v3711 = vmax.f32 %v3309, %v3550
  %v3712 = vmax.f32 %v3311, %v3553
  %v3713 = vmax.f32 %v3312, %v3555
  %v3714 = vmax.f32 %v3314, %v3558
  %v3715 = vmax.f32 %v3315, %v3560
  %v3716 = vmax.f32 %v3317, %v3563
  %v3717 = vmax.f32 %v3318, %v3565
  %v3718 = vmax.f32 %v3320, %v3568
  %v3719 = vmax.f32 %v3321, %v3570
  %v3720 = vmax.f32 %v3323, %v3573
  %v3721 = vmax.f32 %v3324, %v3575
  %v3722 = vmax.f32 %v3326, %v3578
  %v3723 = vmax.f32 %v3327, %v3580
  %v3724 = vmax.f32 %v3329, %v3583
  %v3725 = vmax.f32 %v3330, %v3585
  %v3726 = vmax.f32 %v3332, %v3588
  %v3727 = vmax.f32 %v3333, %v3590
  %v3728 = vmax.f32 %v3335, %v3593
  %v3729 = vmax.f32 %v3336, %v3595
  %v3730 = vmax.f32 %v3338, %v3598
  %v3731 = vmax.f32 %v3339, %v3600
  %v3732 = vmax.f32 %v3341, %v3603
  %v3733 = vmax.f32 %v3342, %v3605
  %v3734 = vrot.slane %v3242, 2
  %v3735 = vrot.slane %v3243, 2
  %v3736 = vsel %vm598, %v3734, %v3735
  %v3737 = vrot.slane %v3244, 2
  %v3738 = vsel %vm598, %v3735, %v3737
  %v3739 = vrot.slane %v3245, 2
  %v3740 = vrot.slane %v3246, 2
  %v3741 = vsel %vm598, %v3739, %v3740
  %v3742 = vrot.slane %v3247, 2
  %v3743 = vsel %vm598, %v3740, %v3742
  %v3744 = vrot.slane %v3248, 2
  %v3745 = vrot.slane %v3249, 2
  %v3746 = vsel %vm598, %v3744, %v3745
  %v3747 = vrot.slane %v3250, 2
  %v3748 = vsel %vm598, %v3745, %v3747
  %v3749 = vrot.slane %v3251, 2
  %v3750 = vrot.slane %v3252, 2
  %v3751 = vsel %vm598, %v3749, %v3750
  %v3752 = vrot.slane %v3253, 2
  %v3753 = vsel %vm598, %v3750, %v3752
  %v3754 = vrot.slane %v3254, 2
  %v3755 = vrot.slane %v3255, 2
  %v3756 = vsel %vm598, %v3754, %v3755
  %v3757 = vrot.slane %v3256, 2
  %v3758 = vsel %vm598, %v3755, %v3757
  %v3759 = vrot.slane %v3257, 2
  %v3760 = vrot.slane %v3258, 2
  %v3761 = vsel %vm598, %v3759, %v3760
  %v3762 = vrot.slane %v3259, 2
  %v3763 = vsel %vm598, %v3760, %v3762
  %v3764 = vrot.slane %v3260, 2
  %v3765 = vrot.slane %v3261, 2
  %v3766 = vsel %vm598, %v3764, %v3765
  %v3767 = vrot.slane %v3262, 2
  %v3768 = vsel %vm598, %v3765, %v3767
  %v3769 = vrot.slane %v3263, 2
  %v3770 = vrot.slane %v3264, 2
  %v3771 = vsel %vm598, %v3769, %v3770
  %v3772 = vrot.slane %v3265, 2
  %v3773 = vsel %vm598, %v3770, %v3772
  %v3774 = vrot.slane %v3266, 2
  %v3775 = vrot.slane %v3267, 2
  %v3776 = vsel %vm598, %v3774, %v3775
  %v3777 = vrot.slane %v3268, 2
  %v3778 = vsel %vm598, %v3775, %v3777
  %v3779 = vrot.slane %v3269, 2
  %v3780 = vrot.slane %v3270, 2
  %v3781 = vsel %vm598, %v3779, %v3780
  %v3782 = vrot.slane %v3271, 2
  %v3783 = vsel %vm598, %v3780, %v3782
  %v3784 = vrot.slane %v3272, 2
  %v3785 = vrot.slane %v3273, 2
  %v3786 = vsel %vm598, %v3784, %v3785
  %v3787 = vrot.slane %v3274, 2
  %v3788 = vsel %vm598, %v3785, %v3787
  %v3789 = vrot.slane %v3275, 2
  %v3790 = vrot.slane %v3276, 2
  %v3791 = vsel %vm598, %v3789, %v3790
  %v3792 = vrot.slane %v3277, 2
  %v3793 = vsel %vm598, %v3790, %v3792
  %v3794 = vrot.slane %v3278, 2
  %v3795 = vrot.slane %v3279, 2
  %v3796 = vsel %vm598, %v3794, %v3795
  %v3797 = vrot.slane %v3280, 2
  %v3798 = vsel %vm598, %v3795, %v3797
  %v3799 = vrot.slane %v3281, 2
  %v3800 = vrot.slane %v3282, 2
  %v3801 = vsel %vm598, %v3799, %v3800
  %v3802 = vrot.slane %v3283, 2
  %v3803 = vsel %vm598, %v3800, %v3802
  %v3804 = vrot.slane %v3284, 2
  %v3805 = vrot.slane %v3285, 2
  %v3806 = vsel %vm598, %v3804, %v3805
  %v3807 = vrot.slane %v3286, 2
  %v3808 = vsel %vm598, %v3805, %v3807
  %v3809 = vrot.slane %v3287, 2
  %v3810 = vrot.slane %v3288, 2
  %v3811 = vsel %vm598, %v3809, %v3810
  %v3812 = vrot.slane %v3289, 2
  %v3813 = vsel %vm598, %v3810, %v3812
  %v3814 = vrot.slane %v3296, 2
  %v3815 = vrot.slane %v3297, 2
  %v3816 = vsel %vm598, %v3814, %v3815
  %v3817 = vrot.slane %v3298, 2
  %v3818 = vsel %vm598, %v3815, %v3817
  %v3819 = vrot.slane %v3299, 2
  %v3820 = vrot.slane %v3300, 2
  %v3821 = vsel %vm598, %v3819, %v3820
  %v3822 = vrot.slane %v3301, 2
  %v3823 = vsel %vm598, %v3820, %v3822
  %v3824 = vrot.slane %v3302, 2
  %v3825 = vrot.slane %v3303, 2
  %v3826 = vsel %vm598, %v3824, %v3825
  %v3827 = vrot.slane %v3304, 2
  %v3828 = vsel %vm598, %v3825, %v3827
  %v3829 = vrot.slane %v3305, 2
  %v3830 = vrot.slane %v3306, 2
  %v3831 = vsel %vm598, %v3829, %v3830
  %v3832 = vrot.slane %v3307, 2
  %v3833 = vsel %vm598, %v3830, %v3832
  %v3834 = vrot.slane %v3308, 2
  %v3835 = vrot.slane %v3309, 2
  %v3836 = vsel %vm598, %v3834, %v3835
  %v3837 = vrot.slane %v3310, 2
  %v3838 = vsel %vm598, %v3835, %v3837
  %v3839 = vrot.slane %v3311, 2
  %v3840 = vrot.slane %v3312, 2
  %v3841 = vsel %vm598, %v3839, %v3840
  %v3842 = vrot.slane %v3313, 2
  %v3843 = vsel %vm598, %v3840, %v3842
  %v3844 = vrot.slane %v3314, 2
  %v3845 = vrot.slane %v3315, 2
  %v3846 = vsel %vm598, %v3844, %v3845
  %v3847 = vrot.slane %v3316, 2
  %v3848 = vsel %vm598, %v3845, %v3847
  %v3849 = vrot.slane %v3317, 2
  %v3850 = vrot.slane %v3318, 2
  %v3851 = vsel %vm598, %v3849, %v3850
  %v3852 = vrot.slane %v3319, 2
  %v3853 = vsel %vm598, %v3850, %v3852
  %v3854 = vrot.slane %v3320, 2
  %v3855 = vrot.slane %v3321, 2
  %v3856 = vsel %vm598, %v3854, %v3855
  %v3857 = vrot.slane %v3322, 2
  %v3858 = vsel %vm598, %v3855, %v3857
  %v3859 = vrot.slane %v3323, 2
  %v3860 = vrot.slane %v3324, 2
  %v3861 = vsel %vm598, %v3859, %v3860
  %v3862 = vrot.slane %v3325, 2
  %v3863 = vsel %vm598, %v3860, %v3862
  %v3864 = vrot.slane %v3326, 2
  %v3865 = vrot.slane %v3327, 2
  %v3866 = vsel %vm598, %v3864, %v3865
  %v3867 = vrot.slane %v3328, 2
  %v3868 = vsel %vm598, %v3865, %v3867
  %v3869 = vrot.slane %v3329, 2
  %v3870 = vrot.slane %v3330, 2
  %v3871 = vsel %vm598, %v3869, %v3870
  %v3872 = vrot.slane %v3331, 2
  %v3873 = vsel %vm598, %v3870, %v3872
  %v3874 = vrot.slane %v3332, 2
  %v3875 = vrot.slane %v3333, 2
  %v3876 = vsel %vm598, %v3874, %v3875
  %v3877 = vrot.slane %v3334, 2
  %v3878 = vsel %vm598, %v3875, %v3877
  %v3879 = vrot.slane %v3335, 2
  %v3880 = vrot.slane %v3336, 2
  %v3881 = vsel %vm598, %v3879, %v3880
  %v3882 = vrot.slane %v3337, 2
  %v3883 = vsel %vm598, %v3880, %v3882
  %v3884 = vrot.slane %v3338, 2
  %v3885 = vrot.slane %v3339, 2
  %v3886 = vsel %vm598, %v3884, %v3885
  %v3887 = vrot.slane %v3340, 2
  %v3888 = vsel %vm598, %v3885, %v3887
  %v3889 = vrot.slane %v3341, 2
  %v3890 = vrot.slane %v3342, 2
  %v3891 = vsel %vm598, %v3889, %v3890
  %v3892 = vrot.slane %v3343, 2
  %v3893 = vsel %vm598, %v3890, %v3892
  %v3958 = vmax.f32 %v3670, %v3736
  %v3959 = vmax.f32 %v3671, %v3738
  %v3960 = vmax.f32 %v3672, %v3741
  %v3961 = vmax.f32 %v3673, %v3743
  %v3962 = vmax.f32 %v3674, %v3746
  %v3963 = vmax.f32 %v3675, %v3748
  %v3964 = vmax.f32 %v3676, %v3751
  %v3965 = vmax.f32 %v3677, %v3753
  %v3966 = vmax.f32 %v3678, %v3756
  %v3967 = vmax.f32 %v3679, %v3758
  %v3968 = vmax.f32 %v3680, %v3761
  %v3969 = vmax.f32 %v3681, %v3763
  %v3970 = vmax.f32 %v3682, %v3766
  %v3971 = vmax.f32 %v3683, %v3768
  %v3972 = vmax.f32 %v3684, %v3771
  %v3973 = vmax.f32 %v3685, %v3773
  %v3974 = vmax.f32 %v3686, %v3776
  %v3975 = vmax.f32 %v3687, %v3778
  %v3976 = vmax.f32 %v3688, %v3781
  %v3977 = vmax.f32 %v3689, %v3783
  %v3978 = vmax.f32 %v3690, %v3786
  %v3979 = vmax.f32 %v3691, %v3788
  %v3980 = vmax.f32 %v3692, %v3791
  %v3981 = vmax.f32 %v3693, %v3793
  %v3982 = vmax.f32 %v3694, %v3796
  %v3983 = vmax.f32 %v3695, %v3798
  %v3984 = vmax.f32 %v3696, %v3801
  %v3985 = vmax.f32 %v3697, %v3803
  %v3986 = vmax.f32 %v3698, %v3806
  %v3987 = vmax.f32 %v3699, %v3808
  %v3988 = vmax.f32 %v3700, %v3811
  %v3989 = vmax.f32 %v3701, %v3813
  %v3990 = vmax.f32 %v3702, %v3816
  %v3991 = vmax.f32 %v3703, %v3818
  %v3992 = vmax.f32 %v3704, %v3821
  %v3993 = vmax.f32 %v3705, %v3823
  %v3994 = vmax.f32 %v3706, %v3826
  %v3995 = vmax.f32 %v3707, %v3828
  %v3996 = vmax.f32 %v3708, %v3831
  %v3997 = vmax.f32 %v3709, %v3833
  %v3998 = vmax.f32 %v3710, %v3836
  %v3999 = vmax.f32 %v3711, %v3838
  %v4000 = vmax.f32 %v3712, %v3841
  %v4001 = vmax.f32 %v3713, %v3843
  %v4002 = vmax.f32 %v3714, %v3846
  %v4003 = vmax.f32 %v3715, %v3848
  %v4004 = vmax.f32 %v3716, %v3851
  %v4005 = vmax.f32 %v3717, %v3853
  %v4006 = vmax.f32 %v3718, %v3856
  %v4007 = vmax.f32 %v3719, %v3858
  %v4008 = vmax.f32 %v3720, %v3861
  %v4009 = vmax.f32 %v3721, %v3863
  %v4010 = vmax.f32 %v3722, %v3866
  %v4011 = vmax.f32 %v3723, %v3868
  %v4012 = vmax.f32 %v3724, %v3871
  %v4013 = vmax.f32 %v3725, %v3873
  %v4014 = vmax.f32 %v3726, %v3876
  %v4015 = vmax.f32 %v3727, %v3878
  %v4016 = vmax.f32 %v3728, %v3881
  %v4017 = vmax.f32 %v3729, %v3883
  %v4018 = vmax.f32 %v3730, %v3886
  %v4019 = vmax.f32 %v3731, %v3888
  %v4020 = vmax.f32 %v3732, %v3891
  %v4021 = vmax.f32 %v3733, %v3893
  %v4022 = vmax.f32 %v3958, %v3245
  %v4023 = vmax.f32 %v3959, %v3246
  %v4024 = vmax.f32 %v3960, %v3248
  %v4025 = vmax.f32 %v3961, %v3249
  %v4026 = vmax.f32 %v3962, %v3251
  %v4027 = vmax.f32 %v3963, %v3252
  %v4028 = vmax.f32 %v3964, %v3254
  %v4029 = vmax.f32 %v3965, %v3255
  %v4030 = vmax.f32 %v3966, %v3257
  %v4031 = vmax.f32 %v3967, %v3258
  %v4032 = vmax.f32 %v3968, %v3260
  %v4033 = vmax.f32 %v3969, %v3261
  %v4034 = vmax.f32 %v3970, %v3263
  %v4035 = vmax.f32 %v3971, %v3264
  %v4036 = vmax.f32 %v3972, %v3266
  %v4037 = vmax.f32 %v3973, %v3267
  %v4038 = vmax.f32 %v3974, %v3269
  %v4039 = vmax.f32 %v3975, %v3270
  %v4040 = vmax.f32 %v3976, %v3272
  %v4041 = vmax.f32 %v3977, %v3273
  %v4042 = vmax.f32 %v3978, %v3275
  %v4043 = vmax.f32 %v3979, %v3276
  %v4044 = vmax.f32 %v3980, %v3278
  %v4045 = vmax.f32 %v3981, %v3279
  %v4046 = vmax.f32 %v3982, %v3281
  %v4047 = vmax.f32 %v3983, %v3282
  %v4048 = vmax.f32 %v3984, %v3284
  %v4049 = vmax.f32 %v3985, %v3285
  %v4050 = vmax.f32 %v3986, %v3287
  %v4051 = vmax.f32 %v3987, %v3288
  %v4052 = vmax.f32 %v3988, %v3290
  %v4053 = vmax.f32 %v3989, %v3291
  %v4054 = vmax.f32 %v3990, %v3299
  %v4055 = vmax.f32 %v3991, %v3300
  %v4056 = vmax.f32 %v3992, %v3302
  %v4057 = vmax.f32 %v3993, %v3303
  %v4058 = vmax.f32 %v3994, %v3305
  %v4059 = vmax.f32 %v3995, %v3306
  %v4060 = vmax.f32 %v3996, %v3308
  %v4061 = vmax.f32 %v3997, %v3309
  %v4062 = vmax.f32 %v3998, %v3311
  %v4063 = vmax.f32 %v3999, %v3312
  %v4064 = vmax.f32 %v4000, %v3314
  %v4065 = vmax.f32 %v4001, %v3315
  %v4066 = vmax.f32 %v4002, %v3317
  %v4067 = vmax.f32 %v4003, %v3318
  %v4068 = vmax.f32 %v4004, %v3320
  %v4069 = vmax.f32 %v4005, %v3321
  %v4070 = vmax.f32 %v4006, %v3323
  %v4071 = vmax.f32 %v4007, %v3324
  %v4072 = vmax.f32 %v4008, %v3326
  %v4073 = vmax.f32 %v4009, %v3327
  %v4074 = vmax.f32 %v4010, %v3329
  %v4075 = vmax.f32 %v4011, %v3330
  %v4076 = vmax.f32 %v4012, %v3332
  %v4077 = vmax.f32 %v4013, %v3333
  %v4078 = vmax.f32 %v4014, %v3335
  %v4079 = vmax.f32 %v4015, %v3336
  %v4080 = vmax.f32 %v4016, %v3338
  %v4081 = vmax.f32 %v4017, %v3339
  %v4082 = vmax.f32 %v4018, %v3341
  %v4083 = vmax.f32 %v4019, %v3342
  %v4084 = vmax.f32 %v4020, %v3344
  %v4085 = vmax.f32 %v4021, %v3345
  %v4092 = vrot.slane %v3290, 1
  %v4093 = vrot.slane %v3291, 1
  %v4094 = vsel %vm245, %v4092, %v4093
  %v4095 = vrot.slane %v3292, 1
  %v4096 = vsel %vm245, %v4093, %v4095
  %v4097 = vrot.slane %v3344, 1
  %v4098 = vrot.slane %v3345, 1
  %v4099 = vsel %vm245, %v4097, %v4098
  %v4100 = vrot.slane %v3346, 1
  %v4101 = vsel %vm245, %v4098, %v4100
  %v4106 = vmax.f32 %v4022, %v3453
  %v4107 = vmax.f32 %v4023, %v3455
  %v4108 = vmax.f32 %v4024, %v3458
  %v4109 = vmax.f32 %v4025, %v3460
  %v4110 = vmax.f32 %v4026, %v3463
  %v4111 = vmax.f32 %v4027, %v3465
  %v4112 = vmax.f32 %v4028, %v3468
  %v4113 = vmax.f32 %v4029, %v3470
  %v4114 = vmax.f32 %v4030, %v3473
  %v4115 = vmax.f32 %v4031, %v3475
  %v4116 = vmax.f32 %v4032, %v3478
  %v4117 = vmax.f32 %v4033, %v3480
  %v4118 = vmax.f32 %v4034, %v3483
  %v4119 = vmax.f32 %v4035, %v3485
  %v4120 = vmax.f32 %v4036, %v3488
  %v4121 = vmax.f32 %v4037, %v3490
  %v4122 = vmax.f32 %v4038, %v3493
  %v4123 = vmax.f32 %v4039, %v3495
  %v4124 = vmax.f32 %v4040, %v3498
  %v4125 = vmax.f32 %v4041, %v3500
  %v4126 = vmax.f32 %v4042, %v3503
  %v4127 = vmax.f32 %v4043, %v3505
  %v4128 = vmax.f32 %v4044, %v3508
  %v4129 = vmax.f32 %v4045, %v3510
  %v4130 = vmax.f32 %v4046, %v3513
  %v4131 = vmax.f32 %v4047, %v3515
  %v4132 = vmax.f32 %v4048, %v3518
  %v4133 = vmax.f32 %v4049, %v3520
  %v4134 = vmax.f32 %v4050, %v3523
  %v4135 = vmax.f32 %v4051, %v3525
  %v4136 = vmax.f32 %v4052, %v4094
  %v4137 = vmax.f32 %v4053, %v4096
  %v4138 = vmax.f32 %v4054, %v3533
  %v4139 = vmax.f32 %v4055, %v3535
  %v4140 = vmax.f32 %v4056, %v3538
  %v4141 = vmax.f32 %v4057, %v3540
  %v4142 = vmax.f32 %v4058, %v3543
  %v4143 = vmax.f32 %v4059, %v3545
  %v4144 = vmax.f32 %v4060, %v3548
  %v4145 = vmax.f32 %v4061, %v3550
  %v4146 = vmax.f32 %v4062, %v3553
  %v4147 = vmax.f32 %v4063, %v3555
  %v4148 = vmax.f32 %v4064, %v3558
  %v4149 = vmax.f32 %v4065, %v3560
  %v4150 = vmax.f32 %v4066, %v3563
  %v4151 = vmax.f32 %v4067, %v3565
  %v4152 = vmax.f32 %v4068, %v3568
  %v4153 = vmax.f32 %v4069, %v3570
  %v4154 = vmax.f32 %v4070, %v3573
  %v4155 = vmax.f32 %v4071, %v3575
  %v4156 = vmax.f32 %v4072, %v3578
  %v4157 = vmax.f32 %v4073, %v3580
  %v4158 = vmax.f32 %v4074, %v3583
  %v4159 = vmax.f32 %v4075, %v3585
  %v4160 = vmax.f32 %v4076, %v3588
  %v4161 = vmax.f32 %v4077, %v3590
  %v4162 = vmax.f32 %v4078, %v3593
  %v4163 = vmax.f32 %v4079, %v3595
  %v4164 = vmax.f32 %v4080, %v3598
  %v4165 = vmax.f32 %v4081, %v3600
  %v4166 = vmax.f32 %v4082, %v3603
  %v4167 = vmax.f32 %v4083, %v3605
  %v4168 = vmax.f32 %v4084, %v4099
  %v4169 = vmax.f32 %v4085, %v4101
  %v4170 = vrot.slane %v3290, 2
  %v4171 = vrot.slane %v3291, 2
  %v4172 = vsel %vm598, %v4170, %v4171
  %v4173 = vrot.slane %v3292, 2
  %v4174 = vsel %vm598, %v4171, %v4173
  %v4175 = vrot.slane %v3344, 2
  %v4176 = vrot.slane %v3345, 2
  %v4177 = vsel %vm598, %v4175, %v4176
  %v4178 = vrot.slane %v3346, 2
  %v4179 = vsel %vm598, %v4176, %v4178
  %v4184 = vmax.f32 %v4106, %v3741
  %v4185 = vmax.f32 %v4107, %v3743
  %v4186 = vmax.f32 %v4108, %v3746
  %v4187 = vmax.f32 %v4109, %v3748
  %v4188 = vmax.f32 %v4110, %v3751
  %v4189 = vmax.f32 %v4111, %v3753
  %v4190 = vmax.f32 %v4112, %v3756
  %v4191 = vmax.f32 %v4113, %v3758
  %v4192 = vmax.f32 %v4114, %v3761
  %v4193 = vmax.f32 %v4115, %v3763
  %v4194 = vmax.f32 %v4116, %v3766
  %v4195 = vmax.f32 %v4117, %v3768
  %v4196 = vmax.f32 %v4118, %v3771
  %v4197 = vmax.f32 %v4119, %v3773
  %v4198 = vmax.f32 %v4120, %v3776
  %v4199 = vmax.f32 %v4121, %v3778
  %v4200 = vmax.f32 %v4122, %v3781
  %v4201 = vmax.f32 %v4123, %v3783
  %v4202 = vmax.f32 %v4124, %v3786
  %v4203 = vmax.f32 %v4125, %v3788
  %v4204 = vmax.f32 %v4126, %v3791
  %v4205 = vmax.f32 %v4127, %v3793
  %v4206 = vmax.f32 %v4128, %v3796
  %v4207 = vmax.f32 %v4129, %v3798
  %v4208 = vmax.f32 %v4130, %v3801
  %v4209 = vmax.f32 %v4131, %v3803
  %v4210 = vmax.f32 %v4132, %v3806
  %v4211 = vmax.f32 %v4133, %v3808
  %v4212 = vmax.f32 %v4134, %v3811
  %v4213 = vmax.f32 %v4135, %v3813
  %v4214 = vmax.f32 %v4136, %v4172
  %v4215 = vmax.f32 %v4137, %v4174
  %v4216 = vmax.f32 %v4138, %v3821
  %v4217 = vmax.f32 %v4139, %v3823
  %v4218 = vmax.f32 %v4140, %v3826
  %v4219 = vmax.f32 %v4141, %v3828
  %v4220 = vmax.f32 %v4142, %v3831
  %v4221 = vmax.f32 %v4143, %v3833
  %v4222 = vmax.f32 %v4144, %v3836
  %v4223 = vmax.f32 %v4145, %v3838
  %v4224 = vmax.f32 %v4146, %v3841
  %v4225 = vmax.f32 %v4147, %v3843
  %v4226 = vmax.f32 %v4148, %v3846
  %v4227 = vmax.f32 %v4149, %v3848
  %v4228 = vmax.f32 %v4150, %v3851
  %v4229 = vmax.f32 %v4151, %v3853
  %v4230 = vmax.f32 %v4152, %v3856
  %v4231 = vmax.f32 %v4153, %v3858
  %v4232 = vmax.f32 %v4154, %v3861
  %v4233 = vmax.f32 %v4155, %v3863
  %v4234 = vmax.f32 %v4156, %v3866
  %v4235 = vmax.f32 %v4157, %v3868
  %v4236 = vmax.f32 %v4158, %v3871
  %v4237 = vmax.f32 %v4159, %v3873
  %v4238 = vmax.f32 %v4160, %v3876
  %v4239 = vmax.f32 %v4161, %v3878
  %v4240 = vmax.f32 %v4162, %v3881
  %v4241 = vmax.f32 %v4163, %v3883
  %v4242 = vmax.f32 %v4164, %v3886
  %v4243 = vmax.f32 %v4165, %v3888
  %v4244 = vmax.f32 %v4166, %v3891
  %v4245 = vmax.f32 %v4167, %v3893
  %v4246 = vmax.f32 %v4168, %v4177
  %v4247 = vmax.f32 %v4169, %v4179
  %v4248 = vmax.f32 %v4184, %v3248
  %v4249 = vmax.f32 %v4185, %v3249
  %v4250 = vmax.f32 %v4186, %v3251
  %v4251 = vmax.f32 %v4187, %v3252
  %v4252 = vmax.f32 %v4188, %v3254
  %v4253 = vmax.f32 %v4189, %v3255
  %v4254 = vmax.f32 %v4190, %v3257
  %v4255 = vmax.f32 %v4191, %v3258
  %v4256 = vmax.f32 %v4192, %v3260
  %v4257 = vmax.f32 %v4193, %v3261
  %v4258 = vmax.f32 %v4194, %v3263
  %v4259 = vmax.f32 %v4195, %v3264
  %v4260 = vmax.f32 %v4196, %v3266
  %v4261 = vmax.f32 %v4197, %v3267
  %v4262 = vmax.f32 %v4198, %v3269
  %v4263 = vmax.f32 %v4199, %v3270
  %v4264 = vmax.f32 %v4200, %v3272
  %v4265 = vmax.f32 %v4201, %v3273
  %v4266 = vmax.f32 %v4202, %v3275
  %v4267 = vmax.f32 %v4203, %v3276
  %v4268 = vmax.f32 %v4204, %v3278
  %v4269 = vmax.f32 %v4205, %v3279
  %v4270 = vmax.f32 %v4206, %v3281
  %v4271 = vmax.f32 %v4207, %v3282
  %v4272 = vmax.f32 %v4208, %v3284
  %v4273 = vmax.f32 %v4209, %v3285
  %v4274 = vmax.f32 %v4210, %v3287
  %v4275 = vmax.f32 %v4211, %v3288
  %v4276 = vmax.f32 %v4212, %v3290
  %v4277 = vmax.f32 %v4213, %v3291
  %v4278 = vmax.f32 %v4214, %v3293
  %v4279 = vmax.f32 %v4215, %v3294
  %v4280 = vmax.f32 %v4216, %v3302
  %v4281 = vmax.f32 %v4217, %v3303
  %v4282 = vmax.f32 %v4218, %v3305
  %v4283 = vmax.f32 %v4219, %v3306
  %v4284 = vmax.f32 %v4220, %v3308
  %v4285 = vmax.f32 %v4221, %v3309
  %v4286 = vmax.f32 %v4222, %v3311
  %v4287 = vmax.f32 %v4223, %v3312
  %v4288 = vmax.f32 %v4224, %v3314
  %v4289 = vmax.f32 %v4225, %v3315
  %v4290 = vmax.f32 %v4226, %v3317
  %v4291 = vmax.f32 %v4227, %v3318
  %v4292 = vmax.f32 %v4228, %v3320
  %v4293 = vmax.f32 %v4229, %v3321
  %v4294 = vmax.f32 %v4230, %v3323
  %v4295 = vmax.f32 %v4231, %v3324
  %v4296 = vmax.f32 %v4232, %v3326
  %v4297 = vmax.f32 %v4233, %v3327
  %v4298 = vmax.f32 %v4234, %v3329
  %v4299 = vmax.f32 %v4235, %v3330
  %v4300 = vmax.f32 %v4236, %v3332
  %v4301 = vmax.f32 %v4237, %v3333
  %v4302 = vmax.f32 %v4238, %v3335
  %v4303 = vmax.f32 %v4239, %v3336
  %v4304 = vmax.f32 %v4240, %v3338
  %v4305 = vmax.f32 %v4241, %v3339
  %v4306 = vmax.f32 %v4242, %v3341
  %v4307 = vmax.f32 %v4243, %v3342
  %v4308 = vmax.f32 %v4244, %v3344
  %v4309 = vmax.f32 %v4245, %v3345
  %v4310 = vmax.f32 %v4246, %v3347
  %v4311 = vmax.f32 %v4247, %v3348
  %v4318 = vrot.slane %v3293, 1
  %v4319 = vrot.slane %v3294, 1
  %v4320 = vsel %vm245, %v4318, %v4319
  %v4321 = vrot.slane %v3295, 1
  %v4322 = vsel %vm245, %v4319, %v4321
  %v4323 = vrot.slane %v3347, 1
  %v4324 = vrot.slane %v3348, 1
  %v4325 = vsel %vm245, %v4323, %v4324
  %v4326 = vrot.slane %v3349, 1
  %v4327 = vsel %vm245, %v4324, %v4326
  %v4332 = vmax.f32 %v4248, %v3458
  %v4333 = vmax.f32 %v4249, %v3460
  %v4334 = vmax.f32 %v4250, %v3463
  %v4335 = vmax.f32 %v4251, %v3465
  %v4336 = vmax.f32 %v4252, %v3468
  %v4337 = vmax.f32 %v4253, %v3470
  %v4338 = vmax.f32 %v4254, %v3473
  %v4339 = vmax.f32 %v4255, %v3475
  %v4340 = vmax.f32 %v4256, %v3478
  %v4341 = vmax.f32 %v4257, %v3480
  %v4342 = vmax.f32 %v4258, %v3483
  %v4343 = vmax.f32 %v4259, %v3485
  %v4344 = vmax.f32 %v4260, %v3488
  %v4345 = vmax.f32 %v4261, %v3490
  %v4346 = vmax.f32 %v4262, %v3493
  %v4347 = vmax.f32 %v4263, %v3495
  %v4348 = vmax.f32 %v4264, %v3498
  %v4349 = vmax.f32 %v4265, %v3500
  %v4350 = vmax.f32 %v4266, %v3503
  %v4351 = vmax.f32 %v4267, %v3505
  %v4352 = vmax.f32 %v4268, %v3508
  %v4353 = vmax.f32 %v4269, %v3510
  %v4354 = vmax.f32 %v4270, %v3513
  %v4355 = vmax.f32 %v4271, %v3515
  %v4356 = vmax.f32 %v4272, %v3518
  %v4357 = vmax.f32 %v4273, %v3520
  %v4358 = vmax.f32 %v4274, %v3523
  %v4359 = vmax.f32 %v4275, %v3525
  %v4360 = vmax.f32 %v4276, %v4094
  %v4361 = vmax.f32 %v4277, %v4096
  %v4362 = vmax.f32 %v4278, %v4320
  %v4363 = vmax.f32 %v4279, %v4322
  %v4364 = vmax.f32 %v4280, %v3538
  %v4365 = vmax.f32 %v4281, %v3540
  %v4366 = vmax.f32 %v4282, %v3543
  %v4367 = vmax.f32 %v4283, %v3545
  %v4368 = vmax.f32 %v4284, %v3548
  %v4369 = vmax.f32 %v4285, %v3550
  %v4370 = vmax.f32 %v4286, %v3553
  %v4371 = vmax.f32 %v4287, %v3555
  %v4372 = vmax.f32 %v4288, %v3558
  %v4373 = vmax.f32 %v4289, %v3560
  %v4374 = vmax.f32 %v4290, %v3563
  %v4375 = vmax.f32 %v4291, %v3565
  %v4376 = vmax.f32 %v4292, %v3568
  %v4377 = vmax.f32 %v4293, %v3570
  %v4378 = vmax.f32 %v4294, %v3573
  %v4379 = vmax.f32 %v4295, %v3575
  %v4380 = vmax.f32 %v4296, %v3578
  %v4381 = vmax.f32 %v4297, %v3580
  %v4382 = vmax.f32 %v4298, %v3583
  %v4383 = vmax.f32 %v4299, %v3585
  %v4384 = vmax.f32 %v4300, %v3588
  %v4385 = vmax.f32 %v4301, %v3590
  %v4386 = vmax.f32 %v4302, %v3593
  %v4387 = vmax.f32 %v4303, %v3595
  %v4388 = vmax.f32 %v4304, %v3598
  %v4389 = vmax.f32 %v4305, %v3600
  %v4390 = vmax.f32 %v4306, %v3603
  %v4391 = vmax.f32 %v4307, %v3605
  %v4392 = vmax.f32 %v4308, %v4099
  %v4393 = vmax.f32 %v4309, %v4101
  %v4394 = vmax.f32 %v4310, %v4325
  %v4395 = vmax.f32 %v4311, %v4327
  %v4396 = vrot.slane %v3293, 2
  %v4397 = vrot.slane %v3294, 2
  %v4398 = vsel %vm598, %v4396, %v4397
  %v4399 = vrot.slane %v3295, 2
  %v4400 = vsel %vm598, %v4397, %v4399
  %v4401 = vrot.slane %v3347, 2
  %v4402 = vrot.slane %v3348, 2
  %v4403 = vsel %vm598, %v4401, %v4402
  %v4404 = vrot.slane %v3349, 2
  %v4405 = vsel %vm598, %v4402, %v4404
  %v4410 = vmax.f32 %v4332, %v3746
  %v4411 = vmax.f32 %v4333, %v3748
  %v4412 = vmax.f32 %v4334, %v3751
  %v4413 = vmax.f32 %v4335, %v3753
  %v4414 = vmax.f32 %v4336, %v3756
  %v4415 = vmax.f32 %v4337, %v3758
  %v4416 = vmax.f32 %v4338, %v3761
  %v4417 = vmax.f32 %v4339, %v3763
  %v4418 = vmax.f32 %v4340, %v3766
  %v4419 = vmax.f32 %v4341, %v3768
  %v4420 = vmax.f32 %v4342, %v3771
  %v4421 = vmax.f32 %v4343, %v3773
  %v4422 = vmax.f32 %v4344, %v3776
  %v4423 = vmax.f32 %v4345, %v3778
  %v4424 = vmax.f32 %v4346, %v3781
  %v4425 = vmax.f32 %v4347, %v3783
  %v4426 = vmax.f32 %v4348, %v3786
  %v4427 = vmax.f32 %v4349, %v3788
  %v4428 = vmax.f32 %v4350, %v3791
  %v4429 = vmax.f32 %v4351, %v3793
  %v4430 = vmax.f32 %v4352, %v3796
  %v4431 = vmax.f32 %v4353, %v3798
  %v4432 = vmax.f32 %v4354, %v3801
  %v4433 = vmax.f32 %v4355, %v3803
  %v4434 = vmax.f32 %v4356, %v3806
  %v4435 = vmax.f32 %v4357, %v3808
  %v4436 = vmax.f32 %v4358, %v3811
  %v4437 = vmax.f32 %v4359, %v3813
  %v4438 = vmax.f32 %v4360, %v4172
  %v4439 = vmax.f32 %v4361, %v4174
  %v4440 = vmax.f32 %v4362, %v4398
  %v4441 = vmax.f32 %v4363, %v4400
  %v4442 = vmax.f32 %v4364, %v3826
  %v4443 = vmax.f32 %v4365, %v3828
  %v4444 = vmax.f32 %v4366, %v3831
  %v4445 = vmax.f32 %v4367, %v3833
  %v4446 = vmax.f32 %v4368, %v3836
  %v4447 = vmax.f32 %v4369, %v3838
  %v4448 = vmax.f32 %v4370, %v3841
  %v4449 = vmax.f32 %v4371, %v3843
  %v4450 = vmax.f32 %v4372, %v3846
  %v4451 = vmax.f32 %v4373, %v3848
  %v4452 = vmax.f32 %v4374, %v3851
  %v4453 = vmax.f32 %v4375, %v3853
  %v4454 = vmax.f32 %v4376, %v3856
  %v4455 = vmax.f32 %v4377, %v3858
  %v4456 = vmax.f32 %v4378, %v3861
  %v4457 = vmax.f32 %v4379, %v3863
  %v4458 = vmax.f32 %v4380, %v3866
  %v4459 = vmax.f32 %v4381, %v3868
  %v4460 = vmax.f32 %v4382, %v3871
  %v4461 = vmax.f32 %v4383, %v3873
  %v4462 = vmax.f32 %v4384, %v3876
  %v4463 = vmax.f32 %v4385, %v3878
  %v4464 = vmax.f32 %v4386, %v3881
  %v4465 = vmax.f32 %v4387, %v3883
  %v4466 = vmax.f32 %v4388, %v3886
  %v4467 = vmax.f32 %v4389, %v3888
  %v4468 = vmax.f32 %v4390, %v3891
  %v4469 = vmax.f32 %v4391, %v3893
  %v4470 = vmax.f32 %v4392, %v4177
  %v4471 = vmax.f32 %v4393, %v4179
  %v4472 = vmax.f32 %v4394, %v4403
  %v4473 = vmax.f32 %v4395, %v4405
  %v4474 = vld [vmem:[%s1] sm:$0xff]
  %v4475 = vld [vmem:[%s1 + $0x8] sm:$0xff]
  %v4476 = vld [vmem:[%s1 + $0x10] sm:$0xff]
  %v4477 = vld [vmem:[%s1 + $0x18] sm:$0xff]
  %v4478 = vld [vmem:[%s1 + $0x20] sm:$0xff]
  %v4479 = vld [vmem:[%s1 + $0x28] sm:$0xff]
  %v4480 = vld [vmem:[%s1 + $0x30] sm:$0xff]
  %v4481 = vld [vmem:[%s1 + $0x38] sm:$0xff]
  %v4482 = vld [vmem:[%s1 + $0x40] sm:$0xff]
  %v4483 = vld [vmem:[%s1 + $0x48] sm:$0xff]
  %v4484 = vld [vmem:[%s1 + $0x50] sm:$0xff]
  %v4485 = vld [vmem:[%s1 + $0x58] sm:$0xff]
  %v4486 = vld [vmem:[%s1 + $0x60] sm:$0xff]
  %v4487 = vld [vmem:[%s1 + $0x68] sm:$0xff]
  %v4488 = vld [vmem:[%s1 + $0x70] sm:$0xff]
  %v4489 = vld [vmem:[%s1 + $0x78] sm:$0xff]
  %4490 = vmatpush.msra.mxu0 %v4425
  %4491 = vmatpush.msra.mxu0 %v4424
  %4492 = vmatpush.msra.mxu0 %v4423
  %4493 = vmatpush.msra.mxu0 %v4422
  %4494 = vmatpush.msra.mxu0 %v4421
  %4495 = vmatpush.msra.mxu0 %v4420
  %4496 = vmatpush.msra.mxu0 %v4419
  %4497 = vmatpush.msra.mxu0 %v4418
  %4498 = vmatpush.msra.mxu0 %v4417
  %4499 = vmatpush.msra.mxu0 %v4416
  %4500 = vmatpush.msra.mxu0 %v4415
  %4501 = vmatpush.msra.mxu0 %v4414
  %4502 = vmatpush.msra.mxu0 %v4413
  %4503 = vmatpush.msra.mxu0 %v4412
  %4504 = vmatpush.msra.mxu0 %v4411
  %4505 = vmatpush.msra.mxu0 %v4410
  %4506 = vmatmul.f32.gmra.mxu0 %v4474
  %v4507 = vpop.f32.mrf.mxu0
  %v4508 = vadd.f32 0.0, %v4507
  %4509 = vmatmul.f32.gmra.mxu0 %v4476
  %v4510 = vpop.f32.mrf.mxu0
  %v4511 = vadd.f32 0.0, %v4510
  %4512 = vmatmul.f32.gmra.mxu0 %v4478
  %v4513 = vpop.f32.mrf.mxu0
  %v4514 = vadd.f32 0.0, %v4513
  %4515 = vmatmul.f32.gmra.mxu0 %v4480
  %v4516 = vpop.f32.mrf.mxu0
  %v4517 = vadd.f32 0.0, %v4516
  %4518 = vmatmul.f32.gmra.mxu0 %v4482
  %v4519 = vpop.f32.mrf.mxu0
  %v4520 = vadd.f32 0.0, %v4519
  %4521 = vmatmul.f32.gmra.mxu0 %v4484
  %v4522 = vpop.f32.mrf.mxu0
  %v4523 = vadd.f32 0.0, %v4522
  %4524 = vmatmul.f32.gmra.mxu0 %v4486
  %v4525 = vpop.f32.mrf.mxu0
  %v4526 = vadd.f32 0.0, %v4525
  %4527 = vmatmul.f32.gmra.mxu0 %v4488
  %v4528 = vpop.f32.mrf.mxu0
  %v4529 = vadd.f32 0.0, %v4528
  %4530 = vdwg.mxu0
  %4531 = vmatpush.msra.mxu0 %v4441
  %4532 = vmatpush.msra.mxu0 %v4440
  %4533 = vmatpush.msra.mxu0 %v4439
  %4534 = vmatpush.msra.mxu0 %v4438
  %4535 = vmatpush.msra.mxu0 %v4437
  %4536 = vmatpush.msra.mxu0 %v4436
  %4537 = vmatpush.msra.mxu0 %v4435
  %4538 = vmatpush.msra.mxu0 %v4434
  %4539 = vmatpush.msra.mxu0 %v4433
  %4540 = vmatpush.msra.mxu0 %v4432
  %4541 = vmatpush.msra.mxu0 %v4431
  %4542 = vmatpush.msra.mxu0 %v4430
  %4543 = vmatpush.msra.mxu0 %v4429
  %4544 = vmatpush.msra.mxu0 %v4428
  %4545 = vmatpush.msra.mxu0 %v4427
  %4546 = vmatpush.msra.mxu0 %v4426
  %4547 = vmatmul.f32.gmra.mxu0 %v4475
  %v4548 = vpop.f32.mrf.mxu0
  %v4549 = vadd.f32 %v4508, %v4548
  %4550 = vmatmul.f32.gmra.mxu0 %v4477
  %v4551 = vpop.f32.mrf.mxu0
  %v4552 = vadd.f32 %v4511, %v4551
  %4553 = vmatmul.f32.gmra.mxu0 %v4479
  %v4554 = vpop.f32.mrf.mxu0
  %v4555 = vadd.f32 %v4514, %v4554
  %4556 = vmatmul.f32.gmra.mxu0 %v4481
  %v4557 = vpop.f32.mrf.mxu0
  %v4558 = vadd.f32 %v4517, %v4557
  %4559 = vmatmul.f32.gmra.mxu0 %v4483
  %v4560 = vpop.f32.mrf.mxu0
  %v4561 = vadd.f32 %v4520, %v4560
  %4562 = vmatmul.f32.gmra.mxu0 %v4485
  %v4563 = vpop.f32.mrf.mxu0
  %v4564 = vadd.f32 %v4523, %v4563
  %4565 = vmatmul.f32.gmra.mxu0 %v4487
  %v4566 = vpop.f32.mrf.mxu0
  %v4567 = vadd.f32 %v4526, %v4566
  %4568 = vmatmul.f32.gmra.mxu0 %v4489
  %v4569 = vpop.f32.mrf.mxu0
  %v4570 = vadd.f32 %v4529, %v4569
  %4571 = vdwg.mxu0
  %4572 = vmatpush.msra.mxu0 %v4457
  %4573 = vmatpush.msra.mxu0 %v4456
  %4574 = vmatpush.msra.mxu0 %v4455
  %4575 = vmatpush.msra.mxu0 %v4454
  %4576 = vmatpush.msra.mxu0 %v4453
  %4577 = vmatpush.msra.mxu0 %v4452
  %4578 = vmatpush.msra.mxu0 %v4451
  %4579 = vmatpush.msra.mxu0 %v4450
  %4580 = vmatpush.msra.mxu0 %v4449
  %4581 = vmatpush.msra.mxu0 %v4448
  %4582 = vmatpush.msra.mxu0 %v4447
  %4583 = vmatpush.msra.mxu0 %v4446
  %4584 = vmatpush.msra.mxu0 %v4445
  %4585 = vmatpush.msra.mxu0 %v4444
  %4586 = vmatpush.msra.mxu0 %v4443
  %4587 = vmatpush.msra.mxu0 %v4442
  %4588 = vmatmul.f32.gmra.mxu0 %v4474
  %v4589 = vpop.f32.mrf.mxu0
  %v4590 = vadd.f32 0.0, %v4589
  %4591 = vmatmul.f32.gmra.mxu0 %v4476
  %v4592 = vpop.f32.mrf.mxu0
  %v4593 = vadd.f32 0.0, %v4592
  %4594 = vmatmul.f32.gmra.mxu0 %v4478
  %v4595 = vpop.f32.mrf.mxu0
  %v4596 = vadd.f32 0.0, %v4595
  %4597 = vmatmul.f32.gmra.mxu0 %v4480
  %v4598 = vpop.f32.mrf.mxu0
  %v4599 = vadd.f32 0.0, %v4598
  %4600 = vmatmul.f32.gmra.mxu0 %v4482
  %v4601 = vpop.f32.mrf.mxu0
  %v4602 = vadd.f32 0.0, %v4601
  %4603 = vmatmul.f32.gmra.mxu0 %v4484
  %v4604 = vpop.f32.mrf.mxu0
  %v4605 = vadd.f32 0.0, %v4604
  %4606 = vmatmul.f32.gmra.mxu0 %v4486
  %v4607 = vpop.f32.mrf.mxu0
  %v4608 = vadd.f32 0.0, %v4607
  %4609 = vmatmul.f32.gmra.mxu0 %v4488
  %v4610 = vpop.f32.mrf.mxu0
  %v4611 = vadd.f32 0.0, %v4610
  %4612 = vdwg.mxu0
  %4613 = vmatpush.msra.mxu0 %v4473
  %4614 = vmatpush.msra.mxu0 %v4472
  %4615 = vmatpush.msra.mxu0 %v4471
  %4616 = vmatpush.msra.mxu0 %v4470
  %4617 = vmatpush.msra.mxu0 %v4469
  %4618 = vmatpush.msra.mxu0 %v4468
  %4619 = vmatpush.msra.mxu0 %v4467
  %4620 = vmatpush.msra.mxu0 %v4466
  %4621 = vmatpush.msra.mxu0 %v4465
  %4622 = vmatpush.msra.mxu0 %v4464
  %4623 = vmatpush.msra.mxu0 %v4463
  %4624 = vmatpush.msra.mxu0 %v4462
  %4625 = vmatpush.msra.mxu0 %v4461
  %4626 = vmatpush.msra.mxu0 %v4460
  %4627 = vmatpush.msra.mxu0 %v4459
  %4628 = vmatpush.msra.mxu0 %v4458
  %4629 = vmatmul.f32.gmra.mxu0 %v4475
  %v4630 = vpop.f32.mrf.mxu0
  %v4631 = vadd.f32 %v4590, %v4630
  %4632 = vmatmul.f32.gmra.mxu0 %v4477
  %v4633 = vpop.f32.mrf.mxu0
  %v4634 = vadd.f32 %v4593, %v4633
  %4635 = vmatmul.f32.gmra.mxu0 %v4479
  %v4636 = vpop.f32.mrf.mxu0
  %v4637 = vadd.f32 %v4596, %v4636
  %4638 = vmatmul.f32.gmra.mxu0 %v4481
  %v4639 = vpop.f32.mrf.mxu0
  %v4640 = vadd.f32 %v4599, %v4639
  %4641 = vmatmul.f32.gmra.mxu0 %v4483
  %v4642 = vpop.f32.mrf.mxu0
  %v4643 = vadd.f32 %v4602, %v4642
  %4644 = vmatmul.f32.gmra.mxu0 %v4485
  %v4645 = vpop.f32.mrf.mxu0
  %v4646 = vadd.f32 %v4605, %v4645
  %4647 = vmatmul.f32.gmra.mxu0 %v4487
  %v4648 = vpop.f32.mrf.mxu0
  %v4649 = vadd.f32 %v4608, %v4648
  %4650 = vmatmul.f32.gmra.mxu0 %v4489
  %v4651 = vpop.f32.mrf.mxu0
  %v4652 = vadd.f32 %v4611, %v4651
  %4653 = vdwg.mxu0
  %4654 = vst.msk [vmem:[#allocation3] sm:$0xff] %vm2220, 0.0
  %4655 = vst.msk [vmem:[#allocation3 + $0x8] sm:$0x3] %vm3092, 0.0
  %4656 = vst.msk [vmem:[#allocation3 + $0xa0] sm:$0xff] %vm2220, 0.0
  %4657 = vst.msk [vmem:[#allocation3 + $0xa8] sm:$0x3] %vm3092, 0.0
  %s4658 = scalar_lea.vmem [#allocation3], 144
  %4659 = vst.msk [vmem:[%s4658] sm:$0xff] %vm2220, 0.0
  %4660 = vst.msk [vmem:[%s4658 + $0x8] sm:$0x3] %vm3092, 0.0
  %4661 = vst.msk [vmem:[%s4658 + $0xa0] sm:$0xff] %vm2220, 0.0
  %4662 = vst.msk [vmem:[%s4658 + $0xa8] sm:$0x3] %vm3092, 0.0
  %4663 = vst.msk [vmem:[#allocation3] sm:$0x1] %vm3104, 0.0
  %4664 = vst.msk [vmem:[#allocation3 + $0x10] sm:$0x1] %vm3104, 0.0
  %4665 = vst.msk [vmem:[#allocation3 + $0x20] sm:$0x1] %vm3104, 0.0
  %4666 = vst.msk [vmem:[#allocation3 + $0x30] sm:$0x1] %vm3104, 0.0
  %4667 = vst.msk [vmem:[#allocation3 + $0x40] sm:$0x1] %vm3104, 0.0
  %4668 = vst.msk [vmem:[#allocation3 + $0x50] sm:$0x1] %vm3104, 0.0
  %4669 = vst.msk [vmem:[#allocation3 + $0x60] sm:$0x1] %vm3104, 0.0
  %4670 = vst.msk [vmem:[#allocation3 + $0x70] sm:$0x1] %vm3104, 0.0
  %4671 = vst.msk [vmem:[#allocation3 + $0x80] sm:$0x1] %vm3104, 0.0
  %4672 = vst.msk [vmem:[#allocation3 + $0x90] sm:$0x1] %vm3104, 0.0
  %4673 = vst.msk [vmem:[#allocation3 + $0xa0] sm:$0x1] %vm3104, 0.0
  %4674 = vst.msk [vmem:[#allocation3 + $0xb0] sm:$0x1] %vm3104, 0.0
  %4675 = vst.msk [vmem:[#allocation3 + $0xc0] sm:$0x1] %vm3104, 0.0
  %4676 = vst.msk [vmem:[#allocation3 + $0xd0] sm:$0x1] %vm3104, 0.0
  %4677 = vst.msk [vmem:[#allocation3 + $0xe0] sm:$0x1] %vm3104, 0.0
  %4678 = vst.msk [vmem:[#allocation3 + $0xf0] sm:$0x1] %vm3104, 0.0
  %4679 = vst.msk [vmem:[#allocation3 + $0x100] sm:$0x1] %vm3104, 0.0
  %4680 = vst.msk [vmem:[#allocation3 + $0x110] sm:$0x1] %vm3104, 0.0
  %4681 = vst.msk [vmem:[#allocation3 + $0x120] sm:$0x1] %vm3104, 0.0
  %4682 = vst.msk [vmem:[#allocation3 + $0x130] sm:$0x1] %vm3104, 0.0
  %4683 = vst.msk [vmem:[#allocation3 + $0x9] sm:$0x1] %vm3104, 0.0
  %4684 = vst.msk [vmem:[#allocation3 + $0x19] sm:$0x1] %vm3104, 0.0
  %4685 = vst.msk [vmem:[#allocation3 + $0x29] sm:$0x1] %vm3104, 0.0
  %4686 = vst.msk [vmem:[#allocation3 + $0x39] sm:$0x1] %vm3104, 0.0
  %4687 = vst.msk [vmem:[#allocation3 + $0x49] sm:$0x1] %vm3104, 0.0
  %4688 = vst.msk [vmem:[#allocation3 + $0x59] sm:$0x1] %vm3104, 0.0
  %4689 = vst.msk [vmem:[#allocation3 + $0x69] sm:$0x1] %vm3104, 0.0
  %4690 = vst.msk [vmem:[#allocation3 + $0x79] sm:$0x1] %vm3104, 0.0
  %4691 = vst.msk [vmem:[#allocation3 + $0x89] sm:$0x1] %vm3104, 0.0
  %4692 = vst.msk [vmem:[#allocation3 + $0x99] sm:$0x1] %vm3104, 0.0
  %4693 = vst.msk [vmem:[#allocation3 + $0xa9] sm:$0x1] %vm3104, 0.0
  %4694 = vst.msk [vmem:[#allocation3 + $0xb9] sm:$0x1] %vm3104, 0.0
  %4695 = vst.msk [vmem:[#allocation3 + $0xc9] sm:$0x1] %vm3104, 0.0
  %4696 = vst.msk [vmem:[#allocation3 + $0xd9] sm:$0x1] %vm3104, 0.0
  %4697 = vst.msk [vmem:[#allocation3 + $0xe9] sm:$0x1] %vm3104, 0.0
  %4698 = vst.msk [vmem:[#allocation3 + $0xf9] sm:$0x1] %vm3104, 0.0
  %4699 = vst.msk [vmem:[#allocation3 + $0x109] sm:$0x1] %vm3104, 0.0
  %4700 = vst.msk [vmem:[#allocation3 + $0x119] sm:$0x1] %vm3104, 0.0
  %4701 = vst.msk [vmem:[#allocation3 + $0x129] sm:$0x1] %vm3104, 0.0
  %4702 = vst.msk [vmem:[#allocation3 + $0x139] sm:$0x1] %vm3104, 0.0
  %v4703 = vmax.f32 %v4549, 0.0
  %v4704 = vmax.f32 %v4552, 0.0
  %v4705 = vmax.f32 %v4555, 0.0
  %v4706 = vmax.f32 %v4558, 0.0
  %v4707 = vmax.f32 %v4561, 0.0
  %v4708 = vmax.f32 %v4564, 0.0
  %v4709 = vmax.f32 %v4567, 0.0
  %v4710 = vmax.f32 %v4570, 0.0
  %v4711 = vmax.f32 %v4631, 0.0
  %v4712 = vmax.f32 %v4634, 0.0
  %v4713 = vmax.f32 %v4637, 0.0
  %v4714 = vmax.f32 %v4640, 0.0
  %v4715 = vmax.f32 %v4643, 0.0
  %v4716 = vmax.f32 %v4646, 0.0
  %v4717 = vmax.f32 %v4649, 0.0
  %v4718 = vmax.f32 %v4652, 0.0
  %s4719 = scalar_lea.vmem [#allocation3], 16
  %4720 = vst.msk [vmem:[%s4719 + $0x1] sm:$0xff] %vm2220, %v4703
  %4721 = vst.msk [vmem:[%s4719 + $0x11] sm:$0xff] %vm2220, %v4704
  %4722 = vst.msk [vmem:[%s4719 + $0x21] sm:$0xff] %vm2220, %v4705
  %4723 = vst.msk [vmem:[%s4719 + $0x31] sm:$0xff] %vm2220, %v4706
  %4724 = vst.msk [vmem:[%s4719 + $0x41] sm:$0xff] %vm2220, %v4707
  %4725 = vst.msk [vmem:[%s4719 + $0x51] sm:$0xff] %vm2220, %v4708
  %4726 = vst.msk [vmem:[%s4719 + $0x61] sm:$0xff] %vm2220, %v4709
  %4727 = vst.msk [vmem:[%s4719 + $0x71] sm:$0xff] %vm2220, %v4710
  %4728 = vst.msk [vmem:[%s4719 + $0xa1] sm:$0xff] %vm2220, %v4711
  %4729 = vst.msk [vmem:[%s4719 + $0xb1] sm:$0xff] %vm2220, %v4712
  %4730 = vst.msk [vmem:[%s4719 + $0xc1] sm:$0xff] %vm2220, %v4713
  %4731 = vst.msk [vmem:[%s4719 + $0xd1] sm:$0xff] %vm2220, %v4714
  %4732 = vst.msk [vmem:[%s4719 + $0xe1] sm:$0xff] %vm2220, %v4715
  %4733 = vst.msk [vmem:[%s4719 + $0xf1] sm:$0xff] %vm2220, %v4716
  %4734 = vst.msk [vmem:[%s4719 + $0x101] sm:$0xff] %vm2220, %v4717
  %4735 = vst.msk [vmem:[%s4719 + $0x111] sm:$0xff] %vm2220, %v4718
  %v4736 = vld [vmem:[#allocation3] sm:$0xff]
  %v4737 = vld [vmem:[#allocation3 + $0x8] sm:$0x3]
  %v4738 = vld [vmem:[#allocation3 + $0x10] sm:$0xff]
  %v4739 = vld [vmem:[#allocation3 + $0x18] sm:$0x3]
  %v4740 = vld [vmem:[#allocation3 + $0x20] sm:$0xff]
  %v4741 = vld [vmem:[#allocation3 + $0x28] sm:$0x3]
  %v4742 = vld [vmem:[#allocation3 + $0x30] sm:$0xff]
  %v4743 = vld [vmem:[#allocation3 + $0x38] sm:$0x3]
  %v4744 = vld [vmem:[#allocation3 + $0x40] sm:$0xff]
  %v4745 = vld [vmem:[#allocation3 + $0x48] sm:$0x3]
  %v4746 = vld [vmem:[#allocation3 + $0x50] sm:$0xff]
  %v4747 = vld [vmem:[#allocation3 + $0x58] sm:$0x3]
  %v4748 = vld [vmem:[#allocation3 + $0x60] sm:$0xff]
  %v4749 = vld [vmem:[#allocation3 + $0x68] sm:$0x3]
  %v4750 = vld [vmem:[#allocation3 + $0x70] sm:$0xff]
  %v4751 = vld [vmem:[#allocation3 + $0x78] sm:$0x3]
  %v4752 = vld [vmem:[#allocation3 + $0x80] sm:$0xff]
  %v4753 = vld [vmem:[#allocation3 + $0x88] sm:$0x3]
  %v4754 = vld [vmem:[#allocation3 + $0x90] sm:$0xff]
  %v4755 = vld [vmem:[#allocation3 + $0x98] sm:$0x3]
  %v4756 = vld [vmem:[#allocation3 + $0xa0] sm:$0xff]
  %v4757 = vld [vmem:[#allocation3 + $0xa8] sm:$0x3]
  %v4758 = vld [vmem:[#allocation3 + $0xb0] sm:$0xff]
  %v4759 = vld [vmem:[#allocation3 + $0xb8] sm:$0x3]
  %v4760 = vld [vmem:[#allocation3 + $0xc0] sm:$0xff]
  %v4761 = vld [vmem:[#allocation3 + $0xc8] sm:$0x3]
  %v4762 = vld [vmem:[#allocation3 + $0xd0] sm:$0xff]
  %v4763 = vld [vmem:[#allocation3 + $0xd8] sm:$0x3]
  %v4764 = vld [vmem:[#allocation3 + $0xe0] sm:$0xff]
  %v4765 = vld [vmem:[#allocation3 + $0xe8] sm:$0x3]
  %v4766 = vld [vmem:[#allocation3 + $0xf0] sm:$0xff]
  %v4767 = vld [vmem:[#allocation3 + $0xf8] sm:$0x3]
  %v4768 = vld [vmem:[#allocation3 + $0x100] sm:$0xff]
  %v4769 = vld [vmem:[#allocation3 + $0x108] sm:$0x3]
  %v4770 = vld [vmem:[#allocation3 + $0x110] sm:$0xff]
  %v4771 = vld [vmem:[#allocation3 + $0x118] sm:$0x3]
  %v4772 = vld [vmem:[#allocation3 + $0x120] sm:$0xff]
  %v4773 = vld [vmem:[#allocation3 + $0x128] sm:$0x3]
  %v4774 = vld [vmem:[#allocation3 + $0x130] sm:$0xff]
  %v4775 = vld [vmem:[#allocation3 + $0x138] sm:$0x3]
  %v4808 = vrot.slane %v4736, 1
  %v4809 = vrot.slane %v4737, 1
  %v4810 = vsel %vm245, %v4808, %v4809
  %v4811 = vrot.slane %v4738, 1
  %v4812 = vrot.slane %v4739, 1
  %v4813 = vsel %vm245, %v4811, %v4812
  %v4814 = vrot.slane %v4740, 1
  %v4815 = vrot.slane %v4741, 1
  %v4816 = vsel %vm245, %v4814, %v4815
  %v4817 = vrot.slane %v4742, 1
  %v4818 = vrot.slane %v4743, 1
  %v4819 = vsel %vm245, %v4817, %v4818
  %v4820 = vrot.slane %v4744, 1
  %v4821 = vrot.slane %v4745, 1
  %v4822 = vsel %vm245, %v4820, %v4821
  %v4823 = vrot.slane %v4746, 1
  %v4824 = vrot.slane %v4747, 1
  %v4825 = vsel %vm245, %v4823, %v4824
  %v4826 = vrot.slane %v4748, 1
  %v4827 = vrot.slane %v4749, 1
  %v4828 = vsel %vm245, %v4826, %v4827
  %v4829 = vrot.slane %v4750, 1
  %v4830 = vrot.slane %v4751, 1
  %v4831 = vsel %vm245, %v4829, %v4830
  %v4832 = vrot.slane %v4756, 1
  %v4833 = vrot.slane %v4757, 1
  %v4834 = vsel %vm245, %v4832, %v4833
  %v4835 = vrot.slane %v4758, 1
  %v4836 = vrot.slane %v4759, 1
  %v4837 = vsel %vm245, %v4835, %v4836
  %v4838 = vrot.slane %v4760, 1
  %v4839 = vrot.slane %v4761, 1
  %v4840 = vsel %vm245, %v4838, %v4839
  %v4841 = vrot.slane %v4762, 1
  %v4842 = vrot.slane %v4763, 1
  %v4843 = vsel %vm245, %v4841, %v4842
  %v4844 = vrot.slane %v4764, 1
  %v4845 = vrot.slane %v4765, 1
  %v4846 = vsel %vm245, %v4844, %v4845
  %v4847 = vrot.slane %v4766, 1
  %v4848 = vrot.slane %v4767, 1
  %v4849 = vsel %vm245, %v4847, %v4848
  %v4850 = vrot.slane %v4768, 1
  %v4851 = vrot.slane %v4769, 1
  %v4852 = vsel %vm245, %v4850, %v4851
  %v4853 = vrot.slane %v4770, 1
  %v4854 = vrot.slane %v4771, 1
  %v4855 = vsel %vm245, %v4853, %v4854
  %4856 = vrot.lane.b32.xlu0 %v4810, 8
  %v4857 = vpop.permute.xlu0 %4856
  %4858 = vrot.lane.b32.xlu0 %v4813, 8
  %v4859 = vpop.permute.xlu0 %4858
  %4860 = vrot.lane.b32.xlu0 %v4816, 8
  %v4861 = vpop.permute.xlu0 %4860
  %4862 = vrot.lane.b32.xlu0 %v4819, 8
  %v4863 = vpop.permute.xlu0 %4862
  %4864 = vrot.lane.b32.xlu0 %v4822, 8
  %v4865 = vpop.permute.xlu0 %4864
  %4866 = vrot.lane.b32.xlu0 %v4825, 8
  %v4867 = vpop.permute.xlu0 %4866
  %4868 = vrot.lane.b32.xlu0 %v4828, 8
  %v4869 = vpop.permute.xlu0 %4868
  %4870 = vrot.lane.b32.xlu0 %v4831, 8
  %v4871 = vpop.permute.xlu0 %4870
  %4872 = vrot.lane.b32.xlu0 %v4834, 8
  %v4873 = vpop.permute.xlu0 %4872
  %4874 = vrot.lane.b32.xlu0 %v4837, 8
  %v4875 = vpop.permute.xlu0 %4874
  %4876 = vrot.lane.b32.xlu0 %v4840, 8
  %v4877 = vpop.permute.xlu0 %4876
  %4878 = vrot.lane.b32.xlu0 %v4843, 8
  %v4879 = vpop.permute.xlu0 %4878
  %4880 = vrot.lane.b32.xlu0 %v4846, 8
  %v4881 = vpop.permute.xlu0 %4880
  %4882 = vrot.lane.b32.xlu0 %v4849, 8
  %v4883 = vpop.permute.xlu0 %4882
  %4884 = vrot.lane.b32.xlu0 %v4852, 8
  %v4885 = vpop.permute.xlu0 %4884
  %4886 = vrot.lane.b32.xlu0 %v4855, 8
  %v4887 = vpop.permute.xlu0 %4886
  %v4904 = vrot.slane %v4736, 2
  %v4905 = vrot.slane %v4737, 2
  %v4906 = vsel %vm598, %v4904, %v4905
  %v4907 = vrot.slane %v4738, 2
  %v4908 = vrot.slane %v4739, 2
  %v4909 = vsel %vm598, %v4907, %v4908
  %v4910 = vrot.slane %v4740, 2
  %v4911 = vrot.slane %v4741, 2
  %v4912 = vsel %vm598, %v4910, %v4911
  %v4913 = vrot.slane %v4742, 2
  %v4914 = vrot.slane %v4743, 2
  %v4915 = vsel %vm598, %v4913, %v4914
  %v4916 = vrot.slane %v4744, 2
  %v4917 = vrot.slane %v4745, 2
  %v4918 = vsel %vm598, %v4916, %v4917
  %v4919 = vrot.slane %v4746, 2
  %v4920 = vrot.slane %v4747, 2
  %v4921 = vsel %vm598, %v4919, %v4920
  %v4922 = vrot.slane %v4748, 2
  %v4923 = vrot.slane %v4749, 2
  %v4924 = vsel %vm598, %v4922, %v4923
  %v4925 = vrot.slane %v4750, 2
  %v4926 = vrot.slane %v4751, 2
  %v4927 = vsel %vm598, %v4925, %v4926
  %v4928 = vrot.slane %v4756, 2
  %v4929 = vrot.slane %v4757, 2
  %v4930 = vsel %vm598, %v4928, %v4929
  %v4931 = vrot.slane %v4758, 2
  %v4932 = vrot.slane %v4759, 2
  %v4933 = vsel %vm598, %v4931, %v4932
  %v4934 = vrot.slane %v4760, 2
  %v4935 = vrot.slane %v4761, 2
  %v4936 = vsel %vm598, %v4934, %v4935
  %v4937 = vrot.slane %v4762, 2
  %v4938 = vrot.slane %v4763, 2
  %v4939 = vsel %vm598, %v4937, %v4938
  %v4940 = vrot.slane %v4764, 2
  %v4941 = vrot.slane %v4765, 2
  %v4942 = vsel %vm598, %v4940, %v4941
  %v4943 = vrot.slane %v4766, 2
  %v4944 = vrot.slane %v4767, 2
  %v4945 = vsel %vm598, %v4943, %v4944
  %v4946 = vrot.slane %v4768, 2
  %v4947 = vrot.slane %v4769, 2
  %v4948 = vsel %vm598, %v4946, %v4947
  %v4949 = vrot.slane %v4770, 2
  %v4950 = vrot.slane %v4771, 2
  %v4951 = vsel %vm598, %v4949, %v4950
  %4952 = vrot.lane.b32.xlu0 %v4906, 16
  %v4953 = vpop.permute.xlu0 %4952
  %4954 = vrot.lane.b32.xlu0 %v4909, 16
  %v4955 = vpop.permute.xlu0 %4954
  %4956 = vrot.lane.b32.xlu0 %v4912, 16
  %v4957 = vpop.permute.xlu0 %4956
  %4958 = vrot.lane.b32.xlu0 %v4915, 16
  %v4959 = vpop.permute.xlu0 %4958
  %4960 = vrot.lane.b32.xlu0 %v4918, 16
  %v4961 = vpop.permute.xlu0 %4960
  %4962 = vrot.lane.b32.xlu0 %v4921, 16
  %v4963 = vpop.permute.xlu0 %4962
  %4964 = vrot.lane.b32.xlu0 %v4924, 16
  %v4965 = vpop.permute.xlu0 %4964
  %4966 = vrot.lane.b32.xlu0 %v4927, 16
  %v4967 = vpop.permute.xlu0 %4966
  %4968 = vrot.lane.b32.xlu0 %v4930, 16
  %v4969 = vpop.permute.xlu0 %4968
  %4970 = vrot.lane.b32.xlu0 %v4933, 16
  %v4971 = vpop.permute.xlu0 %4970
  %4972 = vrot.lane.b32.xlu0 %v4936, 16
  %v4973 = vpop.permute.xlu0 %4972
  %4974 = vrot.lane.b32.xlu0 %v4939, 16
  %v4975 = vpop.permute.xlu0 %4974
  %4976 = vrot.lane.b32.xlu0 %v4942, 16
  %v4977 = vpop.permute.xlu0 %4976
  %4978 = vrot.lane.b32.xlu0 %v4945, 16
  %v4979 = vpop.permute.xlu0 %4978
  %4980 = vrot.lane.b32.xlu0 %v4948, 16
  %v4981 = vpop.permute.xlu0 %4980
  %4982 = vrot.lane.b32.xlu0 %v4951, 16
  %v4983 = vpop.permute.xlu0 %4982
  %5002 = vrot.lane.b32.xlu0 %v4738, 24
  %v5003 = vpop.permute.xlu0 %5002
  %5004 = vrot.lane.b32.xlu0 %v4740, 24
  %v5005 = vpop.permute.xlu0 %5004
  %5006 = vrot.lane.b32.xlu0 %v4742, 24
  %v5007 = vpop.permute.xlu0 %5006
  %5008 = vrot.lane.b32.xlu0 %v4744, 24
  %v5009 = vpop.permute.xlu0 %5008
  %5010 = vrot.lane.b32.xlu0 %v4746, 24
  %v5011 = vpop.permute.xlu0 %5010
  %5012 = vrot.lane.b32.xlu0 %v4748, 24
  %v5013 = vpop.permute.xlu0 %5012
  %5014 = vrot.lane.b32.xlu0 %v4750, 24
  %v5015 = vpop.permute.xlu0 %5014
  %5016 = vrot.lane.b32.xlu0 %v4752, 24
  %v5017 = vpop.permute.xlu0 %5016
  %5018 = vrot.lane.b32.xlu0 %v4758, 24
  %v5019 = vpop.permute.xlu0 %5018
  %5020 = vrot.lane.b32.xlu0 %v4760, 24
  %v5021 = vpop.permute.xlu0 %5020
  %5022 = vrot.lane.b32.xlu0 %v4762, 24
  %v5023 = vpop.permute.xlu0 %5022
  %5024 = vrot.lane.b32.xlu0 %v4764, 24
  %v5025 = vpop.permute.xlu0 %5024
  %5026 = vrot.lane.b32.xlu0 %v4766, 24
  %v5027 = vpop.permute.xlu0 %5026
  %5028 = vrot.lane.b32.xlu0 %v4768, 24
  %v5029 = vpop.permute.xlu0 %5028
  %5030 = vrot.lane.b32.xlu0 %v4770, 24
  %v5031 = vpop.permute.xlu0 %5030
  %5032 = vrot.lane.b32.xlu0 %v4772, 24
  %v5033 = vpop.permute.xlu0 %5032
  %v5052 = vrot.slane %v4752, 1
  %v5053 = vrot.slane %v4753, 1
  %v5054 = vsel %vm245, %v5052, %v5053
  %v5055 = vrot.slane %v4772, 1
  %v5056 = vrot.slane %v4773, 1
  %v5057 = vsel %vm245, %v5055, %v5056
  %5058 = vrot.lane.b32.xlu0 %v4813, 32
  %v5059 = vpop.permute.xlu0 %5058
  %5060 = vrot.lane.b32.xlu0 %v4816, 32
  %v5061 = vpop.permute.xlu0 %5060
  %5062 = vrot.lane.b32.xlu0 %v4819, 32
  %v5063 = vpop.permute.xlu0 %5062
  %5064 = vrot.lane.b32.xlu0 %v4822, 32
  %v5065 = vpop.permute.xlu0 %5064
  %5066 = vrot.lane.b32.xlu0 %v4825, 32
  %v5067 = vpop.permute.xlu0 %5066
  %5068 = vrot.lane.b32.xlu0 %v4828, 32
  %v5069 = vpop.permute.xlu0 %5068
  %5070 = vrot.lane.b32.xlu0 %v4831, 32
  %v5071 = vpop.permute.xlu0 %5070
  %5072 = vrot.lane.b32.xlu0 %v5054, 32
  %v5073 = vpop.permute.xlu0 %5072
  %5074 = vrot.lane.b32.xlu0 %v4837, 32
  %v5075 = vpop.permute.xlu0 %5074
  %5076 = vrot.lane.b32.xlu0 %v4840, 32
  %v5077 = vpop.permute.xlu0 %5076
  %5078 = vrot.lane.b32.xlu0 %v4843, 32
  %v5079 = vpop.permute.xlu0 %5078
  %5080 = vrot.lane.b32.xlu0 %v4846, 32
  %v5081 = vpop.permute.xlu0 %5080
  %5082 = vrot.lane.b32.xlu0 %v4849, 32
  %v5083 = vpop.permute.xlu0 %5082
  %5084 = vrot.lane.b32.xlu0 %v4852, 32
  %v5085 = vpop.permute.xlu0 %5084
  %5086 = vrot.lane.b32.xlu0 %v4855, 32
  %v5087 = vpop.permute.xlu0 %5086
  %5088 = vrot.lane.b32.xlu0 %v5057, 32
  %v5089 = vpop.permute.xlu0 %5088
  %v5106 = vrot.slane %v4752, 2
  %v5107 = vrot.slane %v4753, 2
  %v5108 = vsel %vm598, %v5106, %v5107
  %v5109 = vrot.slane %v4772, 2
  %v5110 = vrot.slane %v4773, 2
  %v5111 = vsel %vm598, %v5109, %v5110
  %5112 = vrot.lane.b32.xlu0 %v4909, 40
  %v5113 = vpop.permute.xlu0 %5112
  %5114 = vrot.lane.b32.xlu0 %v4912, 40
  %v5115 = vpop.permute.xlu0 %5114
  %5116 = vrot.lane.b32.xlu0 %v4915, 40
  %v5117 = vpop.permute.xlu0 %5116
  %5118 = vrot.lane.b32.xlu0 %v4918, 40
  %v5119 = vpop.permute.xlu0 %5118
  %5120 = vrot.lane.b32.xlu0 %v4921, 40
  %v5121 = vpop.permute.xlu0 %5120
  %5122 = vrot.lane.b32.xlu0 %v4924, 40
  %v5123 = vpop.permute.xlu0 %5122
  %5124 = vrot.lane.b32.xlu0 %v4927, 40
  %v5125 = vpop.permute.xlu0 %5124
  %5126 = vrot.lane.b32.xlu0 %v5108, 40
  %v5127 = vpop.permute.xlu0 %5126
  %5128 = vrot.lane.b32.xlu0 %v4933, 40
  %v5129 = vpop.permute.xlu0 %5128
  %5130 = vrot.lane.b32.xlu0 %v4936, 40
  %v5131 = vpop.permute.xlu0 %5130
  %5132 = vrot.lane.b32.xlu0 %v4939, 40
  %v5133 = vpop.permute.xlu0 %5132
  %5134 = vrot.lane.b32.xlu0 %v4942, 40
  %v5135 = vpop.permute.xlu0 %5134
  %5136 = vrot.lane.b32.xlu0 %v4945, 40
  %v5137 = vpop.permute.xlu0 %5136
  %5138 = vrot.lane.b32.xlu0 %v4948, 40
  %v5139 = vpop.permute.xlu0 %5138
  %5140 = vrot.lane.b32.xlu0 %v4951, 40
  %v5141 = vpop.permute.xlu0 %5140
  %5142 = vrot.lane.b32.xlu0 %v5111, 40
  %v5143 = vpop.permute.xlu0 %5142
  %5162 = vrot.lane.b32.xlu0 %v4740, 48
  %v5163 = vpop.permute.xlu0 %5162
  %5164 = vrot.lane.b32.xlu0 %v4742, 48
  %v5165 = vpop.permute.xlu0 %5164
  %5166 = vrot.lane.b32.xlu0 %v4744, 48
  %v5167 = vpop.permute.xlu0 %5166
  %5168 = vrot.lane.b32.xlu0 %v4746, 48
  %v5169 = vpop.permute.xlu0 %5168
  %5170 = vrot.lane.b32.xlu0 %v4748, 48
  %v5171 = vpop.permute.xlu0 %5170
  %5172 = vrot.lane.b32.xlu0 %v4750, 48
  %v5173 = vpop.permute.xlu0 %5172
  %5174 = vrot.lane.b32.xlu0 %v4752, 48
  %v5175 = vpop.permute.xlu0 %5174
  %5176 = vrot.lane.b32.xlu0 %v4754, 48
  %v5177 = vpop.permute.xlu0 %5176
  %5178 = vrot.lane.b32.xlu0 %v4760, 48
  %v5179 = vpop.permute.xlu0 %5178
  %5180 = vrot.lane.b32.xlu0 %v4762, 48
  %v5181 = vpop.permute.xlu0 %5180
  %5182 = vrot.lane.b32.xlu0 %v4764, 48
  %v5183 = vpop.permute.xlu0 %5182
  %5184 = vrot.lane.b32.xlu0 %v4766, 48
  %v5185 = vpop.permute.xlu0 %5184
  %5186 = vrot.lane.b32.xlu0 %v4768, 48
  %v5187 = vpop.permute.xlu0 %5186
  %5188 = vrot.lane.b32.xlu0 %v4770, 48
  %v5189 = vpop.permute.xlu0 %5188
  %5190 = vrot.lane.b32.xlu0 %v4772, 48
  %v5191 = vpop.permute.xlu0 %5190
  %5192 = vrot.lane.b32.xlu0 %v4774, 48
  %v5193 = vpop.permute.xlu0 %5192
  %v5212 = vrot.slane %v4754, 1
  %v5213 = vrot.slane %v4755, 1
  %v5214 = vsel %vm245, %v5212, %v5213
  %v5215 = vrot.slane %v4774, 1
  %v5216 = vrot.slane %v4775, 1
  %v5217 = vsel %vm245, %v5215, %v5216
  %5218 = vrot.lane.b32.xlu0 %v4816, 56
  %v5219 = vpop.permute.xlu0 %5218
  %5220 = vrot.lane.b32.xlu0 %v4819, 56
  %v5221 = vpop.permute.xlu0 %5220
  %5222 = vrot.lane.b32.xlu0 %v4822, 56
  %v5223 = vpop.permute.xlu0 %5222
  %5224 = vrot.lane.b32.xlu0 %v4825, 56
  %v5225 = vpop.permute.xlu0 %5224
  %5226 = vrot.lane.b32.xlu0 %v4828, 56
  %v5227 = vpop.permute.xlu0 %5226
  %5228 = vrot.lane.b32.xlu0 %v4831, 56
  %v5229 = vpop.permute.xlu0 %5228
  %5230 = vrot.lane.b32.xlu0 %v5054, 56
  %v5231 = vpop.permute.xlu0 %5230
  %5232 = vrot.lane.b32.xlu0 %v5214, 56
  %v5233 = vpop.permute.xlu0 %5232
  %5234 = vrot.lane.b32.xlu0 %v4840, 56
  %v5235 = vpop.permute.xlu0 %5234
  %5236 = vrot.lane.b32.xlu0 %v4843, 56
  %v5237 = vpop.permute.xlu0 %5236
  %5238 = vrot.lane.b32.xlu0 %v4846, 56
  %v5239 = vpop.permute.xlu0 %5238
  %5240 = vrot.lane.b32.xlu0 %v4849, 56
  %v5241 = vpop.permute.xlu0 %5240
  %5242 = vrot.lane.b32.xlu0 %v4852, 56
  %v5243 = vpop.permute.xlu0 %5242
  %5244 = vrot.lane.b32.xlu0 %v4855, 56
  %v5245 = vpop.permute.xlu0 %5244
  %5246 = vrot.lane.b32.xlu0 %v5057, 56
  %v5247 = vpop.permute.xlu0 %5246
  %5248 = vrot.lane.b32.xlu0 %v5217, 56
  %v5249 = vpop.permute.xlu0 %5248
  %v5266 = vrot.slane %v4754, 2
  %v5267 = vrot.slane %v4755, 2
  %v5268 = vsel %vm598, %v5266, %v5267
  %v5269 = vrot.slane %v4774, 2
  %v5270 = vrot.slane %v4775, 2
  %v5271 = vsel %vm598, %v5269, %v5270
  %5272 = vrot.lane.b32.xlu0 %v4912, 64
  %v5273 = vpop.permute.xlu0 %5272
  %5274 = vrot.lane.b32.xlu0 %v4915, 64
  %v5275 = vpop.permute.xlu0 %5274
  %5276 = vrot.lane.b32.xlu0 %v4918, 64
  %v5277 = vpop.permute.xlu0 %5276
  %5278 = vrot.lane.b32.xlu0 %v4921, 64
  %v5279 = vpop.permute.xlu0 %5278
  %5280 = vrot.lane.b32.xlu0 %v4924, 64
  %v5281 = vpop.permute.xlu0 %5280
  %5282 = vrot.lane.b32.xlu0 %v4927, 64
  %v5283 = vpop.permute.xlu0 %5282
  %5284 = vrot.lane.b32.xlu0 %v5108, 64
  %v5285 = vpop.permute.xlu0 %5284
  %5286 = vrot.lane.b32.xlu0 %v5268, 64
  %v5287 = vpop.permute.xlu0 %5286
  %5288 = vrot.lane.b32.xlu0 %v4936, 64
  %v5289 = vpop.permute.xlu0 %5288
  %5290 = vrot.lane.b32.xlu0 %v4939, 64
  %v5291 = vpop.permute.xlu0 %5290
  %5292 = vrot.lane.b32.xlu0 %v4942, 64
  %v5293 = vpop.permute.xlu0 %5292
  %5294 = vrot.lane.b32.xlu0 %v4945, 64
  %v5295 = vpop.permute.xlu0 %5294
  %5296 = vrot.lane.b32.xlu0 %v4948, 64
  %v5297 = vpop.permute.xlu0 %5296
  %5298 = vrot.lane.b32.xlu0 %v4951, 64
  %v5299 = vpop.permute.xlu0 %5298
  %5300 = vrot.lane.b32.xlu0 %v5111, 64
  %v5301 = vpop.permute.xlu0 %5300
  %5302 = vrot.lane.b32.xlu0 %v5271, 64
  %v5303 = vpop.permute.xlu0 %5302
  %v5320 = vsel %vm2220, %v4736, %v4857
  %v5321 = vsel %vm2220, %v4738, %v4859
  %v5322 = vsel %vm2220, %v4740, %v4861
  %v5323 = vsel %vm2220, %v4742, %v4863
  %v5324 = vsel %vm2220, %v4744, %v4865
  %v5325 = vsel %vm2220, %v4746, %v4867
  %v5326 = vsel %vm2220, %v4748, %v4869
  %v5327 = vsel %vm2220, %v4750, %v4871
  %v5328 = vsel %vm2220, %v4756, %v4873
  %v5329 = vsel %vm2220, %v4758, %v4875
  %v5330 = vsel %vm2220, %v4760, %v4877
  %v5331 = vsel %vm2220, %v4762, %v4879
  %v5332 = vsel %vm2220, %v4764, %v4881
  %v5333 = vsel %vm2220, %v4766, %v4883
  %v5334 = vsel %vm2220, %v4768, %v4885
  %v5335 = vsel %vm2220, %v4770, %v4887
  %v5336 = vsel %vm2350, %v5320, %v4953
  %v5337 = vsel %vm2350, %v5321, %v4955
  %v5338 = vsel %vm2350, %v5322, %v4957
  %v5339 = vsel %vm2350, %v5323, %v4959
  %v5340 = vsel %vm2350, %v5324, %v4961
  %v5341 = vsel %vm2350, %v5325, %v4963
  %v5342 = vsel %vm2350, %v5326, %v4965
  %v5343 = vsel %vm2350, %v5327, %v4967
  %v5344 = vsel %vm2350, %v5328, %v4969
  %v5345 = vsel %vm2350, %v5329, %v4971
  %v5346 = vsel %vm2350, %v5330, %v4973
  %v5347 = vsel %vm2350, %v5331, %v4975
  %v5348 = vsel %vm2350, %v5332, %v4977
  %v5349 = vsel %vm2350, %v5333, %v4979
  %v5350 = vsel %vm2350, %v5334, %v4981
  %v5351 = vsel %vm2350, %v5335, %v4983
  %v5352 = vsel %vm2480, %v5336, %v5003
  %v5353 = vsel %vm2480, %v5337, %v5005
  %v5354 = vsel %vm2480, %v5338, %v5007
  %v5355 = vsel %vm2480, %v5339, %v5009
  %v5356 = vsel %vm2480, %v5340, %v5011
  %v5357 = vsel %vm2480, %v5341, %v5013
  %v5358 = vsel %vm2480, %v5342, %v5015
  %v5359 = vsel %vm2480, %v5343, %v5017
  %v5360 = vsel %vm2480, %v5344, %v5019
  %v5361 = vsel %vm2480, %v5345, %v5021
  %v5362 = vsel %vm2480, %v5346, %v5023
  %v5363 = vsel %vm2480, %v5347, %v5025
  %v5364 = vsel %vm2480, %v5348, %v5027
  %v5365 = vsel %vm2480, %v5349, %v5029
  %v5366 = vsel %vm2480, %v5350, %v5031
  %v5367 = vsel %vm2480, %v5351, %v5033
  %v5368 = vsel %vm2610, %v5352, %v5059
  %v5369 = vsel %vm2610, %v5353, %v5061
  %v5370 = vsel %vm2610, %v5354, %v5063
  %v5371 = vsel %vm2610, %v5355, %v5065
  %v5372 = vsel %vm2610, %v5356, %v5067
  %v5373 = vsel %vm2610, %v5357, %v5069
  %v5374 = vsel %vm2610, %v5358, %v5071
  %v5375 = vsel %vm2610, %v5359, %v5073
  %v5376 = vsel %vm2610, %v5360, %v5075
  %v5377 = vsel %vm2610, %v5361, %v5077
  %v5378 = vsel %vm2610, %v5362, %v5079
  %v5379 = vsel %vm2610, %v5363, %v5081
  %v5380 = vsel %vm2610, %v5364, %v5083
  %v5381 = vsel %vm2610, %v5365, %v5085
  %v5382 = vsel %vm2610, %v5366, %v5087
  %v5383 = vsel %vm2610, %v5367, %v5089
  %vm5384 = vcmask 326656
  %v5385 = vsel %vm5384, %v5368, %v5113
  %v5386 = vsel %vm5384, %v5369, %v5115
  %v5387 = vsel %vm5384, %v5370, %v5117
  %v5388 = vsel %vm5384, %v5371, %v5119
  %v5389 = vsel %vm5384, %v5372, %v5121
  %v5390 = vsel %vm5384, %v5373, %v5123
  %v5391 = vsel %vm5384, %v5374, %v5125
  %v5392 = vsel %vm5384, %v5375, %v5127
  %v5393 = vsel %vm5384, %v5376, %v5129
  %v5394 = vsel %vm5384, %v5377, %v5131
  %v5395 = vsel %vm5384, %v5378, %v5133
  %v5396 = vsel %vm5384, %v5379, %v5135
  %v5397 = vsel %vm5384, %v5380, %v5137
  %v5398 = vsel %vm5384, %v5381, %v5139
  %v5399 = vsel %vm5384, %v5382, %v5141
  %v5400 = vsel %vm5384, %v5383, %v5143
  %vm5401 = vcmask 392192
  %v5402 = vsel %vm5401, %v5385, %v5163
  %v5403 = vsel %vm5401, %v5386, %v5165
  %v5404 = vsel %vm5401, %v5387, %v5167
  %v5405 = vsel %vm5401, %v5388, %v5169
  %v5406 = vsel %vm5401, %v5389, %v5171
  %v5407 = vsel %vm5401, %v5390, %v5173
  %v5408 = vsel %vm5401, %v5391, %v5175
  %v5409 = vsel %vm5401, %v5392, %v5177
  %v5410 = vsel %vm5401, %v5393, %v5179
  %v5411 = vsel %vm5401, %v5394, %v5181
  %v5412 = vsel %vm5401, %v5395, %v5183
  %v5413 = vsel %vm5401, %v5396, %v5185
  %v5414 = vsel %vm5401, %v5397, %v5187
  %v5415 = vsel %vm5401, %v5398, %v5189
  %v5416 = vsel %vm5401, %v5399, %v5191
  %v5417 = vsel %vm5401, %v5400, %v5193
  %vm5418 = vcmask 457728
  %v5419 = vsel %vm5418, %v5402, %v5219
  %v5420 = vsel %vm5418, %v5403, %v5221
  %v5421 = vsel %vm5418, %v5404, %v5223
  %v5422 = vsel %vm5418, %v5405, %v5225
  %v5423 = vsel %vm5418, %v5406, %v5227
  %v5424 = vsel %vm5418, %v5407, %v5229
  %v5425 = vsel %vm5418, %v5408, %v5231
  %v5426 = vsel %vm5418, %v5409, %v5233
  %v5427 = vsel %vm5418, %v5410, %v5235
  %v5428 = vsel %vm5418, %v5411, %v5237
  %v5429 = vsel %vm5418, %v5412, %v5239
  %v5430 = vsel %vm5418, %v5413, %v5241
  %v5431 = vsel %vm5418, %v5414, %v5243
  %v5432 = vsel %vm5418, %v5415, %v5245
  %v5433 = vsel %vm5418, %v5416, %v5247
  %v5434 = vsel %vm5418, %v5417, %v5249
  %vm5435 = vcmask 523264
  %v5436 = vsel %vm5435, %v5419, %v5273
  %v5437 = vsel %vm5435, %v5420, %v5275
  %v5438 = vsel %vm5435, %v5421, %v5277
  %v5439 = vsel %vm5435, %v5422, %v5279
  %v5440 = vsel %vm5435, %v5423, %v5281
  %v5441 = vsel %vm5435, %v5424, %v5283
  %v5442 = vsel %vm5435, %v5425, %v5285
  %v5443 = vsel %vm5435, %v5426, %v5287
  %v5444 = vsel %vm5435, %v5427, %v5289
  %v5445 = vsel %vm5435, %v5428, %v5291
  %v5446 = vsel %vm5435, %v5429, %v5293
  %v5447 = vsel %vm5435, %v5430, %v5295
  %v5448 = vsel %vm5435, %v5431, %v5297
  %v5449 = vsel %vm5435, %v5432, %v5299
  %v5450 = vsel %vm5435, %v5433, %v5301
  %v5451 = vsel %vm5435, %v5434, %v5303
  %v5452 = vld [vmem:[%s4] sm:$0xff]
  %v5453 = vld [vmem:[%s4 + $0x8] sm:$0xff]
  %v5454 = vld [vmem:[%s4 + $0x10] sm:$0xff]
  %v5455 = vld [vmem:[%s4 + $0x18] sm:$0xff]
  %v5456 = vld [vmem:[%s4 + $0x20] sm:$0xff]
  %v5457 = vld [vmem:[%s4 + $0x28] sm:$0xff]
  %v5458 = vld [vmem:[%s4 + $0x30] sm:$0xff]
  %v5459 = vld [vmem:[%s4 + $0x38] sm:$0xff]
  %v5460 = vld [vmem:[%s4 + $0x40] sm:$0xff]
  %v5461 = vld [vmem:[%s5] sm:$0x1]
  %v5463 = vperm.slane %v5461, 0
  %vm5465 = vcmask 588800
  %v5467 = vsel %vm5465, %v5436, 0
  %v5470 = vsel %vm5465, %v5437, 0
  %v5473 = vsel %vm5465, %v5438, 0
  %v5476 = vsel %vm5465, %v5439, 0
  %v5479 = vsel %vm5465, %v5440, 0
  %v5482 = vsel %vm5465, %v5441, 0
  %v5485 = vsel %vm5465, %v5442, 0
  %v5488 = vsel %vm5465, %v5443, 0
  %v5491 = vsel %vm5465, %v5444, 0
  %v5494 = vsel %vm5465, %v5445, 0
  %v5497 = vsel %vm5465, %v5446, 0
  %v5500 = vsel %vm5465, %v5447, 0
  %v5503 = vsel %vm5465, %v5448, 0
  %v5506 = vsel %vm5465, %v5449, 0
  %v5509 = vsel %vm5465, %v5450, 0
  %v5512 = vsel %vm5465, %v5451, 0
  %5514 = vmatpush.msra.mxu0 0.0
  %5515 = vmatpush.msra.mxu0 0.0
  %5516 = vmatpush.msra.mxu0 0.0
  %5517 = vmatpush.msra.mxu0 0.0
  %5518 = vmatpush.msra.mxu0 0.0
  %5519 = vmatpush.msra.mxu0 0.0
  %5520 = vmatpush.msra.mxu0 0.0
  %5521 = vmatpush.msra.mxu0 %v5460
  %5522 = vmatpush.msra.mxu0 %v5459
  %5523 = vmatpush.msra.mxu0 %v5458
  %5524 = vmatpush.msra.mxu0 %v5457
  %5525 = vmatpush.msra.mxu0 %v5456
  %5526 = vmatpush.msra.mxu0 %v5455
  %5527 = vmatpush.msra.mxu0 %v5454
  %5528 = vmatpush.msra.mxu0 %v5453
  %5529 = vmatpush.msra.mxu0 %v5452
  %5530 = vmatmul.f32.gmra.mxu0 %v5467
  %v5531 = vpop.f32.mrf.mxu0
  %v5532 = vadd.f32 %v5463, %v5531
  %5533 = vmatmul.f32.gmra.mxu0 %v5470
  %v5534 = vpop.f32.mrf.mxu0
  %v5535 = vadd.f32 %v5463, %v5534
  %5536 = vmatmul.f32.gmra.mxu0 %v5473
  %v5537 = vpop.f32.mrf.mxu0
  %v5538 = vadd.f32 %v5463, %v5537
  %5539 = vmatmul.f32.gmra.mxu0 %v5476
  %v5540 = vpop.f32.mrf.mxu0
  %v5541 = vadd.f32 %v5463, %v5540
  %5542 = vmatmul.f32.gmra.mxu0 %v5479
  %v5543 = vpop.f32.mrf.mxu0
  %v5544 = vadd.f32 %v5463, %v5543
  %5545 = vmatmul.f32.gmra.mxu0 %v5482
  %v5546 = vpop.f32.mrf.mxu0
  %v5547 = vadd.f32 %v5463, %v5546
  %5548 = vmatmul.f32.gmra.mxu0 %v5485
  %v5549 = vpop.f32.mrf.mxu0
  %v5550 = vadd.f32 %v5463, %v5549
  %5551 = vmatmul.f32.gmra.mxu0 %v5488
  %v5552 = vpop.f32.mrf.mxu0
  %v5553 = vadd.f32 %v5463, %v5552
  %5554 = vmatmul.f32.gmra.mxu0 %v5491
  %v5555 = vpop.f32.mrf.mxu0
  %v5556 = vadd.f32 %v5463, %v5555
  %5557 = vmatmul.f32.gmra.mxu0 %v5494
  %v5558 = vpop.f32.mrf.mxu0
  %v5559 = vadd.f32 %v5463, %v5558
  %5560 = vmatmul.f32.gmra.mxu0 %v5497
  %v5561 = vpop.f32.mrf.mxu0
  %v5562 = vadd.f32 %v5463, %v5561
  %5563 = vmatmul.f32.gmra.mxu0 %v5500
  %v5564 = vpop.f32.mrf.mxu0
  %v5565 = vadd.f32 %v5463, %v5564
  %5566 = vmatmul.f32.gmra.mxu0 %v5503
  %v5567 = vpop.f32.mrf.mxu0
  %v5568 = vadd.f32 %v5463, %v5567
  %5569 = vmatmul.f32.gmra.mxu0 %v5506
  %v5570 = vpop.f32.mrf.mxu0
  %v5571 = vadd.f32 %v5463, %v5570
  %5572 = vmatmul.f32.gmra.mxu0 %v5509
  %v5573 = vpop.f32.mrf.mxu0
  %v5574 = vadd.f32 %v5463, %v5573
  %5575 = vmatmul.f32.gmra.mxu0 %v5512
  %v5576 = vpop.f32.mrf.mxu0
  %v5577 = vadd.f32 %v5463, %v5576
  %5578 = vdwg.mxu0
  %v5579 = vmax.f32 %v5532, 0.0
  %v5580 = vmax.f32 %v5535, 0.0
  %v5581 = vmax.f32 %v5538, 0.0
  %v5582 = vmax.f32 %v5541, 0.0
  %v5583 = vmax.f32 %v5544, 0.0
  %v5584 = vmax.f32 %v5547, 0.0
  %v5585 = vmax.f32 %v5550, 0.0
  %v5586 = vmax.f32 %v5553, 0.0
  %v5587 = vmax.f32 %v5556, 0.0
  %v5588 = vmax.f32 %v5559, 0.0
  %v5589 = vmax.f32 %v5562, 0.0
  %v5590 = vmax.f32 %v5565, 0.0
  %v5591 = vmax.f32 %v5568, 0.0
  %v5592 = vmax.f32 %v5571, 0.0
  %v5593 = vmax.f32 %v5574, 0.0
  %v5594 = vmax.f32 %v5577, 0.0
  %5595 = vst.msk [vmem:[%s4719 + $0x1] sm:$0xff] %vm2220, %v5579
  %5596 = vst.msk [vmem:[%s4719 + $0x11] sm:$0xff] %vm2220, %v5580
  %5597 = vst.msk [vmem:[%s4719 + $0x21] sm:$0xff] %vm2220, %v5581
  %5598 = vst.msk [vmem:[%s4719 + $0x31] sm:$0xff] %vm2220, %v5582
  %5599 = vst.msk [vmem:[%s4719 + $0x41] sm:$0xff] %vm2220, %v5583
  %5600 = vst.msk [vmem:[%s4719 + $0x51] sm:$0xff] %vm2220, %v5584
  %5601 = vst.msk [vmem:[%s4719 + $0x61] sm:$0xff] %vm2220, %v5585
  %5602 = vst.msk [vmem:[%s4719 + $0x71] sm:$0xff] %vm2220, %v5586
  %5603 = vst.msk [vmem:[%s4719 + $0xa1] sm:$0xff] %vm2220, %v5587
  %5604 = vst.msk [vmem:[%s4719 + $0xb1] sm:$0xff] %vm2220, %v5588
  %5605 = vst.msk [vmem:[%s4719 + $0xc1] sm:$0xff] %vm2220, %v5589
  %5606 = vst.msk [vmem:[%s4719 + $0xd1] sm:$0xff] %vm2220, %v5590
  %5607 = vst.msk [vmem:[%s4719 + $0xe1] sm:$0xff] %vm2220, %v5591
  %5608 = vst.msk [vmem:[%s4719 + $0xf1] sm:$0xff] %vm2220, %v5592
  %5609 = vst.msk [vmem:[%s4719 + $0x101] sm:$0xff] %vm2220, %v5593
  %5610 = vst.msk [vmem:[%s4719 + $0x111] sm:$0xff] %vm2220, %v5594
  %v5611 = vld [vmem:[#allocation3] sm:$0xff]
  %v5612 = vld [vmem:[#allocation3 + $0x8] sm:$0x3]
  %v5613 = vld [vmem:[#allocation3 + $0x10] sm:$0xff]
  %v5614 = vld [vmem:[#allocation3 + $0x18] sm:$0x3]
  %v5615 = vld [vmem:[#allocation3 + $0x20] sm:$0xff]
  %v5616 = vld [vmem:[#allocation3 + $0x28] sm:$0x3]
  %v5617 = vld [vmem:[#allocation3 + $0x30] sm:$0xff]
  %v5618 = vld [vmem:[#allocation3 + $0x38] sm:$0x3]
  %v5619 = vld [vmem:[#allocation3 + $0x40] sm:$0xff]
  %v5620 = vld [vmem:[#allocation3 + $0x48] sm:$0x3]
  %v5621 = vld [vmem:[#allocation3 + $0x50] sm:$0xff]
  %v5622 = vld [vmem:[#allocation3 + $0x58] sm:$0x3]
  %v5623 = vld [vmem:[#allocation3 + $0x60] sm:$0xff]
  %v5624 = vld [vmem:[#allocation3 + $0x68] sm:$0x3]
  %v5625 = vld [vmem:[#allocation3 + $0x70] sm:$0xff]
  %v5626 = vld [vmem:[#allocation3 + $0x78] sm:$0x3]
  %v5627 = vld [vmem:[#allocation3 + $0x80] sm:$0xff]
  %v5628 = vld [vmem:[#allocation3 + $0x88] sm:$0x3]
  %v5629 = vld [vmem:[#allocation3 + $0x90] sm:$0xff]
  %v5630 = vld [vmem:[#allocation3 + $0x98] sm:$0x3]
  %v5631 = vld [vmem:[#allocation3 + $0xa0] sm:$0xff]
  %v5632 = vld [vmem:[#allocation3 + $0xa8] sm:$0x3]
  %v5633 = vld [vmem:[#allocation3 + $0xb0] sm:$0xff]
  %v5634 = vld [vmem:[#allocation3 + $0xb8] sm:$0x3]
  %v5635 = vld [vmem:[#allocation3 + $0xc0] sm:$0xff]
  %v5636 = vld [vmem:[#allocation3 + $0xc8] sm:$0x3]
  %v5637 = vld [vmem:[#allocation3 + $0xd0] sm:$0xff]
  %v5638 = vld [vmem:[#allocation3 + $0xd8] sm:$0x3]
  %v5639 = vld [vmem:[#allocation3 + $0xe0] sm:$0xff]
  %v5640 = vld [vmem:[#allocation3 + $0xe8] sm:$0x3]
  %v5641 = vld [vmem:[#allocation3 + $0xf0] sm:$0xff]
  %v5642 = vld [vmem:[#allocation3 + $0xf8] sm:$0x3]
  %v5643 = vld [vmem:[#allocation3 + $0x100] sm:$0xff]
  %v5644 = vld [vmem:[#allocation3 + $0x108] sm:$0x3]
  %v5645 = vld [vmem:[#allocation3 + $0x110] sm:$0xff]
  %v5646 = vld [vmem:[#allocation3 + $0x118] sm:$0x3]
  %v5647 = vld [vmem:[#allocation3 + $0x120] sm:$0xff]
  %v5648 = vld [vmem:[#allocation3 + $0x128] sm:$0x3]
  %v5649 = vld [vmem:[#allocation3 + $0x130] sm:$0xff]
  %v5650 = vld [vmem:[#allocation3 + $0x138] sm:$0x3]
  %v5683 = vrot.slane %v5611, 1
  %v5684 = vrot.slane %v5612, 1
  %v5685 = vsel %vm245, %v5683, %v5684
  %v5686 = vrot.slane %v5613, 1
  %v5687 = vrot.slane %v5614, 1
  %v5688 = vsel %vm245, %v5686, %v5687
  %v5689 = vrot.slane %v5615, 1
  %v5690 = vrot.slane %v5616, 1
  %v5691 = vsel %vm245, %v5689, %v5690
  %v5692 = vrot.slane %v5617, 1
  %v5693 = vrot.slane %v5618, 1
  %v5694 = vsel %vm245, %v5692, %v5693
  %v5695 = vrot.slane %v5619, 1
  %v5696 = vrot.slane %v5620, 1
  %v5697 = vsel %vm245, %v5695, %v5696
  %v5698 = vrot.slane %v5621, 1
  %v5699 = vrot.slane %v5622, 1
  %v5700 = vsel %vm245, %v5698, %v5699
  %v5701 = vrot.slane %v5623, 1
  %v5702 = vrot.slane %v5624, 1
  %v5703 = vsel %vm245, %v5701, %v5702
  %v5704 = vrot.slane %v5625, 1
  %v5705 = vrot.slane %v5626, 1
  %v5706 = vsel %vm245, %v5704, %v5705
  %v5707 = vrot.slane %v5631, 1
  %v5708 = vrot.slane %v5632, 1
  %v5709 = vsel %vm245, %v5707, %v5708
  %v5710 = vrot.slane %v5633, 1
  %v5711 = vrot.slane %v5634, 1
  %v5712 = vsel %vm245, %v5710, %v5711
  %v5713 = vrot.slane %v5635, 1
  %v5714 = vrot.slane %v5636, 1
  %v5715 = vsel %vm245, %v5713, %v5714
  %v5716 = vrot.slane %v5637, 1
  %v5717 = vrot.slane %v5638, 1
  %v5718 = vsel %vm245, %v5716, %v5717
  %v5719 = vrot.slane %v5639, 1
  %v5720 = vrot.slane %v5640, 1
  %v5721 = vsel %vm245, %v5719, %v5720
  %v5722 = vrot.slane %v5641, 1
  %v5723 = vrot.slane %v5642, 1
  %v5724 = vsel %vm245, %v5722, %v5723
  %v5725 = vrot.slane %v5643, 1
  %v5726 = vrot.slane %v5644, 1
  %v5727 = vsel %vm245, %v5725, %v5726
  %v5728 = vrot.slane %v5645, 1
  %v5729 = vrot.slane %v5646, 1
  %v5730 = vsel %vm245, %v5728, %v5729
  %5731 = vrot.lane.b32.xlu0 %v5685, 8
  %v5732 = vpop.permute.xlu0 %5731
  %5733 = vrot.lane.b32.xlu0 %v5688, 8
  %v5734 = vpop.permute.xlu0 %5733
  %5735 = vrot.lane.b32.xlu0 %v5691, 8
  %v5736 = vpop.permute.xlu0 %5735
  %5737 = vrot.lane.b32.xlu0 %v5694, 8
  %v5738 = vpop.permute.xlu0 %5737
  %5739 = vrot.lane.b32.xlu0 %v5697, 8
  %v5740 = vpop.permute.xlu0 %5739
  %5741 = vrot.lane.b32.xlu0 %v5700, 8
  %v5742 = vpop.permute.xlu0 %5741
  %5743 = vrot.lane.b32.xlu0 %v5703, 8
  %v5744 = vpop.permute.xlu0 %5743
  %5745 = vrot.lane.b32.xlu0 %v5706, 8
  %v5746 = vpop.permute.xlu0 %5745
  %5747 = vrot.lane.b32.xlu0 %v5709, 8
  %v5748 = vpop.permute.xlu0 %5747
  %5749 = vrot.lane.b32.xlu0 %v5712, 8
  %v5750 = vpop.permute.xlu0 %5749
  %5751 = vrot.lane.b32.xlu0 %v5715, 8
  %v5752 = vpop.permute.xlu0 %5751
  %5753 = vrot.lane.b32.xlu0 %v5718, 8
  %v5754 = vpop.permute.xlu0 %5753
  %5755 = vrot.lane.b32.xlu0 %v5721, 8
  %v5756 = vpop.permute.xlu0 %5755
  %5757 = vrot.lane.b32.xlu0 %v5724, 8
  %v5758 = vpop.permute.xlu0 %5757
  %5759 = vrot.lane.b32.xlu0 %v5727, 8
  %v5760 = vpop.permute.xlu0 %5759
  %5761 = vrot.lane.b32.xlu0 %v5730, 8
  %v5762 = vpop.permute.xlu0 %5761
  %v5779 = vrot.slane %v5611, 2
  %v5780 = vrot.slane %v5612, 2
  %v5781 = vsel %vm598, %v5779, %v5780
  %v5782 = vrot.slane %v5613, 2
  %v5783 = vrot.slane %v5614, 2
  %v5784 = vsel %vm598, %v5782, %v5783
  %v5785 = vrot.slane %v5615, 2
  %v5786 = vrot.slane %v5616, 2
  %v5787 = vsel %vm598, %v5785, %v5786
  %v5788 = vrot.slane %v5617, 2
  %v5789 = vrot.slane %v5618, 2
  %v5790 = vsel %vm598, %v5788, %v5789
  %v5791 = vrot.slane %v5619, 2
  %v5792 = vrot.slane %v5620, 2
  %v5793 = vsel %vm598, %v5791, %v5792
  %v5794 = vrot.slane %v5621, 2
  %v5795 = vrot.slane %v5622, 2
  %v5796 = vsel %vm598, %v5794, %v5795
  %v5797 = vrot.slane %v5623, 2
  %v5798 = vrot.slane %v5624, 2
  %v5799 = vsel %vm598, %v5797, %v5798
  %v5800 = vrot.slane %v5625, 2
  %v5801 = vrot.slane %v5626, 2
  %v5802 = vsel %vm598, %v5800, %v5801
  %v5803 = vrot.slane %v5631, 2
  %v5804 = vrot.slane %v5632, 2
  %v5805 = vsel %vm598, %v5803, %v5804
  %v5806 = vrot.slane %v5633, 2
  %v5807 = vrot.slane %v5634, 2
  %v5808 = vsel %vm598, %v5806, %v5807
  %v5809 = vrot.slane %v5635, 2
  %v5810 = vrot.slane %v5636, 2
  %v5811 = vsel %vm598, %v5809, %v5810
  %v5812 = vrot.slane %v5637, 2
  %v5813 = vrot.slane %v5638, 2
  %v5814 = vsel %vm598, %v5812, %v5813
  %v5815 = vrot.slane %v5639, 2
  %v5816 = vrot.slane %v5640, 2
  %v5817 = vsel %vm598, %v5815, %v5816
  %v5818 = vrot.slane %v5641, 2
  %v5819 = vrot.slane %v5642, 2
  %v5820 = vsel %vm598, %v5818, %v5819
  %v5821 = vrot.slane %v5643, 2
  %v5822 = vrot.slane %v5644, 2
  %v5823 = vsel %vm598, %v5821, %v5822
  %v5824 = vrot.slane %v5645, 2
  %v5825 = vrot.slane %v5646, 2
  %v5826 = vsel %vm598, %v5824, %v5825
  %5827 = vrot.lane.b32.xlu0 %v5781, 16
  %v5828 = vpop.permute.xlu0 %5827
  %5829 = vrot.lane.b32.xlu0 %v5784, 16
  %v5830 = vpop.permute.xlu0 %5829
  %5831 = vrot.lane.b32.xlu0 %v5787, 16
  %v5832 = vpop.permute.xlu0 %5831
  %5833 = vrot.lane.b32.xlu0 %v5790, 16
  %v5834 = vpop.permute.xlu0 %5833
  %5835 = vrot.lane.b32.xlu0 %v5793, 16
  %v5836 = vpop.permute.xlu0 %5835
  %5837 = vrot.lane.b32.xlu0 %v5796, 16
  %v5838 = vpop.permute.xlu0 %5837
  %5839 = vrot.lane.b32.xlu0 %v5799, 16
  %v5840 = vpop.permute.xlu0 %5839
  %5841 = vrot.lane.b32.xlu0 %v5802, 16
  %v5842 = vpop.permute.xlu0 %5841
  %5843 = vrot.lane.b32.xlu0 %v5805, 16
  %v5844 = vpop.permute.xlu0 %5843
  %5845 = vrot.lane.b32.xlu0 %v5808, 16
  %v5846 = vpop.permute.xlu0 %5845
  %5847 = vrot.lane.b32.xlu0 %v5811, 16
  %v5848 = vpop.permute.xlu0 %5847
  %5849 = vrot.lane.b32.xlu0 %v5814, 16
  %v5850 = vpop.permute.xlu0 %5849
  %5851 = vrot.lane.b32.xlu0 %v5817, 16
  %v5852 = vpop.permute.xlu0 %5851
  %5853 = vrot.lane.b32.xlu0 %v5820, 16
  %v5854 = vpop.permute.xlu0 %5853
  %5855 = vrot.lane.b32.xlu0 %v5823, 16
  %v5856 = vpop.permute.xlu0 %5855
  %5857 = vrot.lane.b32.xlu0 %v5826, 16
  %v5858 = vpop.permute.xlu0 %5857
  %5877 = vrot.lane.b32.xlu0 %v5613, 24
  %v5878 = vpop.permute.xlu0 %5877
  %5879 = vrot.lane.b32.xlu0 %v5615, 24
  %v5880 = vpop.permute.xlu0 %5879
  %5881 = vrot.lane.b32.xlu0 %v5617, 24
  %v5882 = vpop.permute.xlu0 %5881
  %5883 = vrot.lane.b32.xlu0 %v5619, 24
  %v5884 = vpop.permute.xlu0 %5883
  %5885 = vrot.lane.b32.xlu0 %v5621, 24
  %v5886 = vpop.permute.xlu0 %5885
  %5887 = vrot.lane.b32.xlu0 %v5623, 24
  %v5888 = vpop.permute.xlu0 %5887
  %5889 = vrot.lane.b32.xlu0 %v5625, 24
  %v5890 = vpop.permute.xlu0 %5889
  %5891 = vrot.lane.b32.xlu0 %v5627, 24
  %v5892 = vpop.permute.xlu0 %5891
  %5893 = vrot.lane.b32.xlu0 %v5633, 24
  %v5894 = vpop.permute.xlu0 %5893
  %5895 = vrot.lane.b32.xlu0 %v5635, 24
  %v5896 = vpop.permute.xlu0 %5895
  %5897 = vrot.lane.b32.xlu0 %v5637, 24
  %v5898 = vpop.permute.xlu0 %5897
  %5899 = vrot.lane.b32.xlu0 %v5639, 24
  %v5900 = vpop.permute.xlu0 %5899
  %5901 = vrot.lane.b32.xlu0 %v5641, 24
  %v5902 = vpop.permute.xlu0 %5901
  %5903 = vrot.lane.b32.xlu0 %v5643, 24
  %v5904 = vpop.permute.xlu0 %5903
  %5905 = vrot.lane.b32.xlu0 %v5645, 24
  %v5906 = vpop.permute.xlu0 %5905
  %5907 = vrot.lane.b32.xlu0 %v5647, 24
  %v5908 = vpop.permute.xlu0 %5907
  %v5927 = vrot.slane %v5627, 1
  %v5928 = vrot.slane %v5628, 1
  %v5929 = vsel %vm245, %v5927, %v5928
  %v5930 = vrot.slane %v5647, 1
  %v5931 = vrot.slane %v5648, 1
  %v5932 = vsel %vm245, %v5930, %v5931
  %5933 = vrot.lane.b32.xlu0 %v5688, 32
  %v5934 = vpop.permute.xlu0 %5933
  %5935 = vrot.lane.b32.xlu0 %v5691, 32
  %v5936 = vpop.permute.xlu0 %5935
  %5937 = vrot.lane.b32.xlu0 %v5694, 32
  %v5938 = vpop.permute.xlu0 %5937
  %5939 = vrot.lane.b32.xlu0 %v5697, 32
  %v5940 = vpop.permute.xlu0 %5939
  %5941 = vrot.lane.b32.xlu0 %v5700, 32
  %v5942 = vpop.permute.xlu0 %5941
  %5943 = vrot.lane.b32.xlu0 %v5703, 32
  %v5944 = vpop.permute.xlu0 %5943
  %5945 = vrot.lane.b32.xlu0 %v5706, 32
  %v5946 = vpop.permute.xlu0 %5945
  %5947 = vrot.lane.b32.xlu0 %v5929, 32
  %v5948 = vpop.permute.xlu0 %5947
  %5949 = vrot.lane.b32.xlu0 %v5712, 32
  %v5950 = vpop.permute.xlu0 %5949
  %5951 = vrot.lane.b32.xlu0 %v5715, 32
  %v5952 = vpop.permute.xlu0 %5951
  %5953 = vrot.lane.b32.xlu0 %v5718, 32
  %v5954 = vpop.permute.xlu0 %5953
  %5955 = vrot.lane.b32.xlu0 %v5721, 32
  %v5956 = vpop.permute.xlu0 %5955
  %5957 = vrot.lane.b32.xlu0 %v5724, 32
  %v5958 = vpop.permute.xlu0 %5957
  %5959 = vrot.lane.b32.xlu0 %v5727, 32
  %v5960 = vpop.permute.xlu0 %5959
  %5961 = vrot.lane.b32.xlu0 %v5730, 32
  %v5962 = vpop.permute.xlu0 %5961
  %5963 = vrot.lane.b32.xlu0 %v5932, 32
  %v5964 = vpop.permute.xlu0 %5963
  %v5981 = vrot.slane %v5627, 2
  %v5982 = vrot.slane %v5628, 2
  %v5983 = vsel %vm598, %v5981, %v5982
  %v5984 = vrot.slane %v5647, 2
  %v5985 = vrot.slane %v5648, 2
  %v5986 = vsel %vm598, %v5984, %v5985
  %5987 = vrot.lane.b32.xlu0 %v5784, 40
  %v5988 = vpop.permute.xlu0 %5987
  %5989 = vrot.lane.b32.xlu0 %v5787, 40
  %v5990 = vpop.permute.xlu0 %5989
  %5991 = vrot.lane.b32.xlu0 %v5790, 40
  %v5992 = vpop.permute.xlu0 %5991
  %5993 = vrot.lane.b32.xlu0 %v5793, 40
  %v5994 = vpop.permute.xlu0 %5993
  %5995 = vrot.lane.b32.xlu0 %v5796, 40
  %v5996 = vpop.permute.xlu0 %5995
  %5997 = vrot.lane.b32.xlu0 %v5799, 40
  %v5998 = vpop.permute.xlu0 %5997
  %5999 = vrot.lane.b32.xlu0 %v5802, 40
  %v6000 = vpop.permute.xlu0 %5999
  %6001 = vrot.lane.b32.xlu0 %v5983, 40
  %v6002 = vpop.permute.xlu0 %6001
  %6003 = vrot.lane.b32.xlu0 %v5808, 40
  %v6004 = vpop.permute.xlu0 %6003
  %6005 = vrot.lane.b32.xlu0 %v5811, 40
  %v6006 = vpop.permute.xlu0 %6005
  %6007 = vrot.lane.b32.xlu0 %v5814, 40
  %v6008 = vpop.permute.xlu0 %6007
  %6009 = vrot.lane.b32.xlu0 %v5817, 40
  %v6010 = vpop.permute.xlu0 %6009
  %6011 = vrot.lane.b32.xlu0 %v5820, 40
  %v6012 = vpop.permute.xlu0 %6011
  %6013 = vrot.lane.b32.xlu0 %v5823, 40
  %v6014 = vpop.permute.xlu0 %6013
  %6015 = vrot.lane.b32.xlu0 %v5826, 40
  %v6016 = vpop.permute.xlu0 %6015
  %6017 = vrot.lane.b32.xlu0 %v5986, 40
  %v6018 = vpop.permute.xlu0 %6017
  %6037 = vrot.lane.b32.xlu0 %v5615, 48
  %v6038 = vpop.permute.xlu0 %6037
  %6039 = vrot.lane.b32.xlu0 %v5617, 48
  %v6040 = vpop.permute.xlu0 %6039
  %6041 = vrot.lane.b32.xlu0 %v5619, 48
  %v6042 = vpop.permute.xlu0 %6041
  %6043 = vrot.lane.b32.xlu0 %v5621, 48
  %v6044 = vpop.permute.xlu0 %6043
  %6045 = vrot.lane.b32.xlu0 %v5623, 48
  %v6046 = vpop.permute.xlu0 %6045
  %6047 = vrot.lane.b32.xlu0 %v5625, 48
  %v6048 = vpop.permute.xlu0 %6047
  %6049 = vrot.lane.b32.xlu0 %v5627, 48
  %v6050 = vpop.permute.xlu0 %6049
  %6051 = vrot.lane.b32.xlu0 %v5629, 48
  %v6052 = vpop.permute.xlu0 %6051
  %6053 = vrot.lane.b32.xlu0 %v5635, 48
  %v6054 = vpop.permute.xlu0 %6053
  %6055 = vrot.lane.b32.xlu0 %v5637, 48
  %v6056 = vpop.permute.xlu0 %6055
  %6057 = vrot.lane.b32.xlu0 %v5639, 48
  %v6058 = vpop.permute.xlu0 %6057
  %6059 = vrot.lane.b32.xlu0 %v5641, 48
  %v6060 = vpop.permute.xlu0 %6059
  %6061 = vrot.lane.b32.xlu0 %v5643, 48
  %v6062 = vpop.permute.xlu0 %6061
  %6063 = vrot.lane.b32.xlu0 %v5645, 48
  %v6064 = vpop.permute.xlu0 %6063
  %6065 = vrot.lane.b32.xlu0 %v5647, 48
  %v6066 = vpop.permute.xlu0 %6065
  %6067 = vrot.lane.b32.xlu0 %v5649, 48
  %v6068 = vpop.permute.xlu0 %6067
  %v6087 = vrot.slane %v5629, 1
  %v6088 = vrot.slane %v5630, 1
  %v6089 = vsel %vm245, %v6087, %v6088
  %v6090 = vrot.slane %v5649, 1
  %v6091 = vrot.slane %v5650, 1
  %v6092 = vsel %vm245, %v6090, %v6091
  %6093 = vrot.lane.b32.xlu0 %v5691, 56
  %v6094 = vpop.permute.xlu0 %6093
  %6095 = vrot.lane.b32.xlu0 %v5694, 56
  %v6096 = vpop.permute.xlu0 %6095
  %6097 = vrot.lane.b32.xlu0 %v5697, 56
  %v6098 = vpop.permute.xlu0 %6097
  %6099 = vrot.lane.b32.xlu0 %v5700, 56
  %v6100 = vpop.permute.xlu0 %6099
  %6101 = vrot.lane.b32.xlu0 %v5703, 56
  %v6102 = vpop.permute.xlu0 %6101
  %6103 = vrot.lane.b32.xlu0 %v5706, 56
  %v6104 = vpop.permute.xlu0 %6103
  %6105 = vrot.lane.b32.xlu0 %v5929, 56
  %v6106 = vpop.permute.xlu0 %6105
  %6107 = vrot.lane.b32.xlu0 %v6089, 56
  %v6108 = vpop.permute.xlu0 %6107
  %6109 = vrot.lane.b32.xlu0 %v5715, 56
  %v6110 = vpop.permute.xlu0 %6109
  %6111 = vrot.lane.b32.xlu0 %v5718, 56
  %v6112 = vpop.permute.xlu0 %6111
  %6113 = vrot.lane.b32.xlu0 %v5721, 56
  %v6114 = vpop.permute.xlu0 %6113
  %6115 = vrot.lane.b32.xlu0 %v5724, 56
  %v6116 = vpop.permute.xlu0 %6115
  %6117 = vrot.lane.b32.xlu0 %v5727, 56
  %v6118 = vpop.permute.xlu0 %6117
  %6119 = vrot.lane.b32.xlu0 %v5730, 56
  %v6120 = vpop.permute.xlu0 %6119
  %6121 = vrot.lane.b32.xlu0 %v5932, 56
  %v6122 = vpop.permute.xlu0 %6121
  %6123 = vrot.lane.b32.xlu0 %v6092, 56
  %v6124 = vpop.permute.xlu0 %6123
  %v6141 = vrot.slane %v5629, 2
  %v6142 = vrot.slane %v5630, 2
  %v6143 = vsel %vm598, %v6141, %v6142
  %v6144 = vrot.slane %v5649, 2
  %v6145 = vrot.slane %v5650, 2
  %v6146 = vsel %vm598, %v6144, %v6145
  %6147 = vrot.lane.b32.xlu0 %v5787, 64
  %v6148 = vpop.permute.xlu0 %6147
  %6149 = vrot.lane.b32.xlu0 %v5790, 64
  %v6150 = vpop.permute.xlu0 %6149
  %6151 = vrot.lane.b32.xlu0 %v5793, 64
  %v6152 = vpop.permute.xlu0 %6151
  %6153 = vrot.lane.b32.xlu0 %v5796, 64
  %v6154 = vpop.permute.xlu0 %6153
  %6155 = vrot.lane.b32.xlu0 %v5799, 64
  %v6156 = vpop.permute.xlu0 %6155
  %6157 = vrot.lane.b32.xlu0 %v5802, 64
  %v6158 = vpop.permute.xlu0 %6157
  %6159 = vrot.lane.b32.xlu0 %v5983, 64
  %v6160 = vpop.permute.xlu0 %6159
  %6161 = vrot.lane.b32.xlu0 %v6143, 64
  %v6162 = vpop.permute.xlu0 %6161
  %6163 = vrot.lane.b32.xlu0 %v5811, 64
  %v6164 = vpop.permute.xlu0 %6163
  %6165 = vrot.lane.b32.xlu0 %v5814, 64
  %v6166 = vpop.permute.xlu0 %6165
  %6167 = vrot.lane.b32.xlu0 %v5817, 64
  %v6168 = vpop.permute.xlu0 %6167
  %6169 = vrot.lane.b32.xlu0 %v5820, 64
  %v6170 = vpop.permute.xlu0 %6169
  %6171 = vrot.lane.b32.xlu0 %v5823, 64
  %v6172 = vpop.permute.xlu0 %6171
  %6173 = vrot.lane.b32.xlu0 %v5826, 64
  %v6174 = vpop.permute.xlu0 %6173
  %6175 = vrot.lane.b32.xlu0 %v5986, 64
  %v6176 = vpop.permute.xlu0 %6175
  %6177 = vrot.lane.b32.xlu0 %v6146, 64
  %v6178 = vpop.permute.xlu0 %6177
  %v6195 = vsel %vm2220, %v5611, %v5732
  %v6196 = vsel %vm2220, %v5613, %v5734
  %v6197 = vsel %vm2220, %v5615, %v5736
  %v6198 = vsel %vm2220, %v5617, %v5738
  %v6199 = vsel %vm2220, %v5619, %v5740
  %v6200 = vsel %vm2220, %v5621, %v5742
  %v6201 = vsel %vm2220, %v5623, %v5744
  %v6202 = vsel %vm2220, %v5625, %v5746
  %v6203 = vsel %vm2220, %v5631, %v5748
  %v6204 = vsel %vm2220, %v5633, %v5750
  %v6205 = vsel %vm2220, %v5635, %v5752
  %v6206 = vsel %vm2220, %v5637, %v5754
  %v6207 = vsel %vm2220, %v5639, %v5756
  %v6208 = vsel %vm2220, %v5641, %v5758
  %v6209 = vsel %vm2220, %v5643, %v5760
  %v6210 = vsel %vm2220, %v5645, %v5762
  %v6211 = vsel %vm2350, %v6195, %v5828
  %v6212 = vsel %vm2350, %v6196, %v5830
  %v6213 = vsel %vm2350, %v6197, %v5832
  %v6214 = vsel %vm2350, %v6198, %v5834
  %v6215 = vsel %vm2350, %v6199, %v5836
  %v6216 = vsel %vm2350, %v6200, %v5838
  %v6217 = vsel %vm2350, %v6201, %v5840
  %v6218 = vsel %vm2350, %v6202, %v5842
  %v6219 = vsel %vm2350, %v6203, %v5844
  %v6220 = vsel %vm2350, %v6204, %v5846
  %v6221 = vsel %vm2350, %v6205, %v5848
  %v6222 = vsel %vm2350, %v6206, %v5850
  %v6223 = vsel %vm2350, %v6207, %v5852
  %v6224 = vsel %vm2350, %v6208, %v5854
  %v6225 = vsel %vm2350, %v6209, %v5856
  %v6226 = vsel %vm2350, %v6210, %v5858
  %v6227 = vsel %vm2480, %v6211, %v5878
  %v6228 = vsel %vm2480, %v6212, %v5880
  %v6229 = vsel %vm2480, %v6213, %v5882
  %v6230 = vsel %vm2480, %v6214, %v5884
  %v6231 = vsel %vm2480, %v6215, %v5886
  %v6232 = vsel %vm2480, %v6216, %v5888
  %v6233 = vsel %vm2480, %v6217, %v5890
  %v6234 = vsel %vm2480, %v6218, %v5892
  %v6235 = vsel %vm2480, %v6219, %v5894
  %v6236 = vsel %vm2480, %v6220, %v5896
  %v6237 = vsel %vm2480, %v6221, %v5898
  %v6238 = vsel %vm2480, %v6222, %v5900
  %v6239 = vsel %vm2480, %v6223, %v5902
  %v6240 = vsel %vm2480, %v6224, %v5904
  %v6241 = vsel %vm2480, %v6225, %v5906
  %v6242 = vsel %vm2480, %v6226, %v5908
  %v6243 = vsel %vm2610, %v6227, %v5934
  %v6244 = vsel %vm2610, %v6228, %v5936
  %v6245 = vsel %vm2610, %v6229, %v5938
  %v6246 = vsel %vm2610, %v6230, %v5940
  %v6247 = vsel %vm2610, %v6231, %v5942
  %v6248 = vsel %vm2610, %v6232, %v5944
  %v6249 = vsel %vm2610, %v6233, %v5946
  %v6250 = vsel %vm2610, %v6234, %v5948
  %v6251 = vsel %vm2610, %v6235, %v5950
  %v6252 = vsel %vm2610, %v6236, %v5952
  %v6253 = vsel %vm2610, %v6237, %v5954
  %v6254 = vsel %vm2610, %v6238, %v5956
  %v6255 = vsel %vm2610, %v6239, %v5958
  %v6256 = vsel %vm2610, %v6240, %v5960
  %v6257 = vsel %vm2610, %v6241, %v5962
  %v6258 = vsel %vm2610, %v6242, %v5964
  %v6259 = vsel %vm5384, %v6243, %v5988
  %v6260 = vsel %vm5384, %v6244, %v5990
  %v6261 = vsel %vm5384, %v6245, %v5992
  %v6262 = vsel %vm5384, %v6246, %v5994
  %v6263 = vsel %vm5384, %v6247, %v5996
  %v6264 = vsel %vm5384, %v6248, %v5998
  %v6265 = vsel %vm5384, %v6249, %v6000
  %v6266 = vsel %vm5384, %v6250, %v6002
  %v6267 = vsel %vm5384, %v6251, %v6004
  %v6268 = vsel %vm5384, %v6252, %v6006
  %v6269 = vsel %vm5384, %v6253, %v6008
  %v6270 = vsel %vm5384, %v6254, %v6010
  %v6271 = vsel %vm5384, %v6255, %v6012
  %v6272 = vsel %vm5384, %v6256, %v6014
  %v6273 = vsel %vm5384, %v6257, %v6016
  %v6274 = vsel %vm5384, %v6258, %v6018
  %v6275 = vsel %vm5401, %v6259, %v6038
  %v6276 = vsel %vm5401, %v6260, %v6040
  %v6277 = vsel %vm5401, %v6261, %v6042
  %v6278 = vsel %vm5401, %v6262, %v6044
  %v6279 = vsel %vm5401, %v6263, %v6046
  %v6280 = vsel %vm5401, %v6264, %v6048
  %v6281 = vsel %vm5401, %v6265, %v6050
  %v6282 = vsel %vm5401, %v6266, %v6052
  %v6283 = vsel %vm5401, %v6267, %v6054
  %v6284 = vsel %vm5401, %v6268, %v6056
  %v6285 = vsel %vm5401, %v6269, %v6058
  %v6286 = vsel %vm5401, %v6270, %v6060
  %v6287 = vsel %vm5401, %v6271, %v6062
  %v6288 = vsel %vm5401, %v6272, %v6064
  %v6289 = vsel %vm5401, %v6273, %v6066
  %v6290 = vsel %vm5401, %v6274, %v6068
  %v6291 = vsel %vm5418, %v6275, %v6094
  %v6292 = vsel %vm5418, %v6276, %v6096
  %v6293 = vsel %vm5418, %v6277, %v6098
  %v6294 = vsel %vm5418, %v6278, %v6100
  %v6295 = vsel %vm5418, %v6279, %v6102
  %v6296 = vsel %vm5418, %v6280, %v6104
  %v6297 = vsel %vm5418, %v6281, %v6106
  %v6298 = vsel %vm5418, %v6282, %v6108
  %v6299 = vsel %vm5418, %v6283, %v6110
  %v6300 = vsel %vm5418, %v6284, %v6112
  %v6301 = vsel %vm5418, %v6285, %v6114
  %v6302 = vsel %vm5418, %v6286, %v6116
  %v6303 = vsel %vm5418, %v6287, %v6118
  %v6304 = vsel %vm5418, %v6288, %v6120
  %v6305 = vsel %vm5418, %v6289, %v6122
  %v6306 = vsel %vm5418, %v6290, %v6124
  %v6307 = vsel %vm5435, %v6291, %v6148
  %v6308 = vsel %vm5435, %v6292, %v6150
  %v6309 = vsel %vm5435, %v6293, %v6152
  %v6310 = vsel %vm5435, %v6294, %v6154
  %v6311 = vsel %vm5435, %v6295, %v6156
  %v6312 = vsel %vm5435, %v6296, %v6158
  %v6313 = vsel %vm5435, %v6297, %v6160
  %v6314 = vsel %vm5435, %v6298, %v6162
  %v6315 = vsel %vm5435, %v6299, %v6164
  %v6316 = vsel %vm5435, %v6300, %v6166
  %v6317 = vsel %vm5435, %v6301, %v6168
  %v6318 = vsel %vm5435, %v6302, %v6170
  %v6319 = vsel %vm5435, %v6303, %v6172
  %v6320 = vsel %vm5435, %v6304, %v6174
  %v6321 = vsel %vm5435, %v6305, %v6176
  %v6322 = vsel %vm5435, %v6306, %v6178
  %v6323 = vld [vmem:[%s6] sm:$0xff]
  %v6324 = vld [vmem:[%s6 + $0x8] sm:$0xff]
  %v6325 = vld [vmem:[%s6 + $0x10] sm:$0xff]
  %v6326 = vld [vmem:[%s6 + $0x18] sm:$0xff]
  %v6327 = vld [vmem:[%s6 + $0x20] sm:$0xff]
  %v6328 = vld [vmem:[%s6 + $0x28] sm:$0xff]
  %v6329 = vld [vmem:[%s6 + $0x30] sm:$0xff]
  %v6330 = vld [vmem:[%s6 + $0x38] sm:$0xff]
  %v6331 = vld [vmem:[%s6 + $0x40] sm:$0xff]
  %v6332 = vld [vmem:[%s7] sm:$0x1]
  %v6334 = vperm.slane %v6332, 0
  %v6337 = vsel %vm5465, %v6307, 0
  %v6340 = vsel %vm5465, %v6308, 0
  %v6343 = vsel %vm5465, %v6309, 0
  %v6346 = vsel %vm5465, %v6310, 0
  %v6349 = vsel %vm5465, %v6311, 0
  %v6352 = vsel %vm5465, %v6312, 0
  %v6355 = vsel %vm5465, %v6313, 0
  %v6358 = vsel %vm5465, %v6314, 0
  %v6361 = vsel %vm5465, %v6315, 0
  %v6364 = vsel %vm5465, %v6316, 0
  %v6367 = vsel %vm5465, %v6317, 0
  %v6370 = vsel %vm5465, %v6318, 0
  %v6373 = vsel %vm5465, %v6319, 0
  %v6376 = vsel %vm5465, %v6320, 0
  %v6379 = vsel %vm5465, %v6321, 0
  %v6382 = vsel %vm5465, %v6322, 0
  %6384 = vmatpush.msra.mxu0 0.0
  %6385 = vmatpush.msra.mxu0 0.0
  %6386 = vmatpush.msra.mxu0 0.0
  %6387 = vmatpush.msra.mxu0 0.0
  %6388 = vmatpush.msra.mxu0 0.0
  %6389 = vmatpush.msra.mxu0 0.0
  %6390 = vmatpush.msra.mxu0 0.0
  %6391 = vmatpush.msra.mxu0 %v6331
  %6392 = vmatpush.msra.mxu0 %v6330
  %6393 = vmatpush.msra.mxu0 %v6329
  %6394 = vmatpush.msra.mxu0 %v6328
  %6395 = vmatpush.msra.mxu0 %v6327
  %6396 = vmatpush.msra.mxu0 %v6326
  %6397 = vmatpush.msra.mxu0 %v6325
  %6398 = vmatpush.msra.mxu0 %v6324
  %6399 = vmatpush.msra.mxu0 %v6323
  %6400 = vmatmul.f32.gmra.mxu0 %v6337
  %v6401 = vpop.f32.mrf.mxu0
  %v6402 = vadd.f32 %v6334, %v6401
  %6403 = vmatmul.f32.gmra.mxu0 %v6340
  %v6404 = vpop.f32.mrf.mxu0
  %v6405 = vadd.f32 %v6334, %v6404
  %6406 = vmatmul.f32.gmra.mxu0 %v6343
  %v6407 = vpop.f32.mrf.mxu0
  %v6408 = vadd.f32 %v6334, %v6407
  %6409 = vmatmul.f32.gmra.mxu0 %v6346
  %v6410 = vpop.f32.mrf.mxu0
  %v6411 = vadd.f32 %v6334, %v6410
  %6412 = vmatmul.f32.gmra.mxu0 %v6349
  %v6413 = vpop.f32.mrf.mxu0
  %v6414 = vadd.f32 %v6334, %v6413
  %6415 = vmatmul.f32.gmra.mxu0 %v6352
  %v6416 = vpop.f32.mrf.mxu0
  %v6417 = vadd.f32 %v6334, %v6416
  %6418 = vmatmul.f32.gmra.mxu0 %v6355
  %v6419 = vpop.f32.mrf.mxu0
  %v6420 = vadd.f32 %v6334, %v6419
  %6421 = vmatmul.f32.gmra.mxu0 %v6358
  %v6422 = vpop.f32.mrf.mxu0
  %v6423 = vadd.f32 %v6334, %v6422
  %6424 = vmatmul.f32.gmra.mxu0 %v6361
  %v6425 = vpop.f32.mrf.mxu0
  %v6426 = vadd.f32 %v6334, %v6425
  %6427 = vmatmul.f32.gmra.mxu0 %v6364
  %v6428 = vpop.f32.mrf.mxu0
  %v6429 = vadd.f32 %v6334, %v6428
  %6430 = vmatmul.f32.gmra.mxu0 %v6367
  %v6431 = vpop.f32.mrf.mxu0
  %v6432 = vadd.f32 %v6334, %v6431
  %6433 = vmatmul.f32.gmra.mxu0 %v6370
  %v6434 = vpop.f32.mrf.mxu0
  %v6435 = vadd.f32 %v6334, %v6434
  %6436 = vmatmul.f32.gmra.mxu0 %v6373
  %v6437 = vpop.f32.mrf.mxu0
  %v6438 = vadd.f32 %v6334, %v6437
  %6439 = vmatmul.f32.gmra.mxu0 %v6376
  %v6440 = vpop.f32.mrf.mxu0
  %v6441 = vadd.f32 %v6334, %v6440
  %6442 = vmatmul.f32.gmra.mxu0 %v6379
  %v6443 = vpop.f32.mrf.mxu0
  %v6444 = vadd.f32 %v6334, %v6443
  %6445 = vmatmul.f32.gmra.mxu0 %v6382
  %v6446 = vpop.f32.mrf.mxu0
  %v6447 = vadd.f32 %v6334, %v6446
  %6448 = vdwg.mxu0
  %v6449 = vadd.f32 %v6402, %v4549
  %v6450 = vadd.f32 %v6405, %v4552
  %v6451 = vadd.f32 %v6408, %v4555
  %v6452 = vadd.f32 %v6411, %v4558
  %v6453 = vadd.f32 %v6414, %v4561
  %v6454 = vadd.f32 %v6417, %v4564
  %v6455 = vadd.f32 %v6420, %v4567
  %v6456 = vadd.f32 %v6423, %v4570
  %v6457 = vadd.f32 %v6426, %v4631
  %v6458 = vadd.f32 %v6429, %v4634
  %v6459 = vadd.f32 %v6432, %v4637
  %v6460 = vadd.f32 %v6435, %v4640
  %v6461 = vadd.f32 %v6438, %v4643
  %v6462 = vadd.f32 %v6441, %v4646
  %v6463 = vadd.f32 %v6444, %v4649
  %v6464 = vadd.f32 %v6447, %v4652
  %v6465 = vmax.f32 %v6449, 0.0
  %v6466 = vmax.f32 %v6450, 0.0
  %v6467 = vmax.f32 %v6451, 0.0
  %v6468 = vmax.f32 %v6452, 0.0
  %v6469 = vmax.f32 %v6453, 0.0
  %v6470 = vmax.f32 %v6454, 0.0
  %v6471 = vmax.f32 %v6455, 0.0
  %v6472 = vmax.f32 %v6456, 0.0
  %v6473 = vmax.f32 %v6457, 0.0
  %v6474 = vmax.f32 %v6458, 0.0
  %v6475 = vmax.f32 %v6459, 0.0
  %v6476 = vmax.f32 %v6460, 0.0
  %v6477 = vmax.f32 %v6461, 0.0
  %v6478 = vmax.f32 %v6462, 0.0
  %v6479 = vmax.f32 %v6463, 0.0
  %v6480 = vmax.f32 %v6464, 0.0
  %6481 = vst.msk [vmem:[%s4719 + $0x1] sm:$0xff] %vm2220, %v6465
  %6482 = vst.msk [vmem:[%s4719 + $0x11] sm:$0xff] %vm2220, %v6466
  %6483 = vst.msk [vmem:[%s4719 + $0x21] sm:$0xff] %vm2220, %v6467
  %6484 = vst.msk [vmem:[%s4719 + $0x31] sm:$0xff] %vm2220, %v6468
  %6485 = vst.msk [vmem:[%s4719 + $0x41] sm:$0xff] %vm2220, %v6469
  %6486 = vst.msk [vmem:[%s4719 + $0x51] sm:$0xff] %vm2220, %v6470
  %6487 = vst.msk [vmem:[%s4719 + $0x61] sm:$0xff] %vm2220, %v6471
  %6488 = vst.msk [vmem:[%s4719 + $0x71] sm:$0xff] %vm2220, %v6472
  %6489 = vst.msk [vmem:[%s4719 + $0xa1] sm:$0xff] %vm2220, %v6473
  %6490 = vst.msk [vmem:[%s4719 + $0xb1] sm:$0xff] %vm2220, %v6474
  %6491 = vst.msk [vmem:[%s4719 + $0xc1] sm:$0xff] %vm2220, %v6475
  %6492 = vst.msk [vmem:[%s4719 + $0xd1] sm:$0xff] %vm2220, %v6476
  %6493 = vst.msk [vmem:[%s4719 + $0xe1] sm:$0xff] %vm2220, %v6477
  %6494 = vst.msk [vmem:[%s4719 + $0xf1] sm:$0xff] %vm2220, %v6478
  %6495 = vst.msk [vmem:[%s4719 + $0x101] sm:$0xff] %vm2220, %v6479
  %6496 = vst.msk [vmem:[%s4719 + $0x111] sm:$0xff] %vm2220, %v6480
  %v6497 = vld [vmem:[#allocation3] sm:$0xff]
  %v6498 = vld [vmem:[#allocation3 + $0x8] sm:$0x3]
  %v6499 = vld [vmem:[#allocation3 + $0x10] sm:$0xff]
  %v6500 = vld [vmem:[#allocation3 + $0x18] sm:$0x3]
  %v6501 = vld [vmem:[#allocation3 + $0x20] sm:$0xff]
  %v6502 = vld [vmem:[#allocation3 + $0x28] sm:$0x3]
  %v6503 = vld [vmem:[#allocation3 + $0x30] sm:$0xff]
  %v6504 = vld [vmem:[#allocation3 + $0x38] sm:$0x3]
  %v6505 = vld [vmem:[#allocation3 + $0x40] sm:$0xff]
  %v6506 = vld [vmem:[#allocation3 + $0x48] sm:$0x3]
  %v6507 = vld [vmem:[#allocation3 + $0x50] sm:$0xff]
  %v6508 = vld [vmem:[#allocation3 + $0x58] sm:$0x3]
  %v6509 = vld [vmem:[#allocation3 + $0x60] sm:$0xff]
  %v6510 = vld [vmem:[#allocation3 + $0x68] sm:$0x3]
  %v6511 = vld [vmem:[#allocation3 + $0x70] sm:$0xff]
  %v6512 = vld [vmem:[#allocation3 + $0x78] sm:$0x3]
  %v6513 = vld [vmem:[#allocation3 + $0x80] sm:$0xff]
  %v6514 = vld [vmem:[#allocation3 + $0x88] sm:$0x3]
  %v6515 = vld [vmem:[#allocation3 + $0x90] sm:$0xff]
  %v6516 = vld [vmem:[#allocation3 + $0x98] sm:$0x3]
  %v6517 = vld [vmem:[#allocation3 + $0xa0] sm:$0xff]
  %v6518 = vld [vmem:[#allocation3 + $0xa8] sm:$0x3]
  %v6519 = vld [vmem:[#allocation3 + $0xb0] sm:$0xff]
  %v6520 = vld [vmem:[#allocation3 + $0xb8] sm:$0x3]
  %v6521 = vld [vmem:[#allocation3 + $0xc0] sm:$0xff]
  %v6522 = vld [vmem:[#allocation3 + $0xc8] sm:$0x3]
  %v6523 = vld [vmem:[#allocation3 + $0xd0] sm:$0xff]
  %v6524 = vld [vmem:[#allocation3 + $0xd8] sm:$0x3]
  %v6525 = vld [vmem:[#allocation3 + $0xe0] sm:$0xff]
  %v6526 = vld [vmem:[#allocation3 + $0xe8] sm:$0x3]
  %v6527 = vld [vmem:[#allocation3 + $0xf0] sm:$0xff]
  %v6528 = vld [vmem:[#allocation3 + $0xf8] sm:$0x3]
  %v6529 = vld [vmem:[#allocation3 + $0x100] sm:$0xff]
  %v6530 = vld [vmem:[#allocation3 + $0x108] sm:$0x3]
  %v6531 = vld [vmem:[#allocation3 + $0x110] sm:$0xff]
  %v6532 = vld [vmem:[#allocation3 + $0x118] sm:$0x3]
  %v6533 = vld [vmem:[#allocation3 + $0x120] sm:$0xff]
  %v6534 = vld [vmem:[#allocation3 + $0x128] sm:$0x3]
  %v6535 = vld [vmem:[#allocation3 + $0x130] sm:$0xff]
  %v6536 = vld [vmem:[#allocation3 + $0x138] sm:$0x3]
  %v6569 = vrot.slane %v6497, 1
  %v6570 = vrot.slane %v6498, 1
  %v6571 = vsel %vm245, %v6569, %v6570
  %v6572 = vrot.slane %v6499, 1
  %v6573 = vrot.slane %v6500, 1
  %v6574 = vsel %vm245, %v6572, %v6573
  %v6575 = vrot.slane %v6501, 1
  %v6576 = vrot.slane %v6502, 1
  %v6577 = vsel %vm245, %v6575, %v6576
  %v6578 = vrot.slane %v6503, 1
  %v6579 = vrot.slane %v6504, 1
  %v6580 = vsel %vm245, %v6578, %v6579
  %v6581 = vrot.slane %v6505, 1
  %v6582 = vrot.slane %v6506, 1
  %v6583 = vsel %vm245, %v6581, %v6582
  %v6584 = vrot.slane %v6507, 1
  %v6585 = vrot.slane %v6508, 1
  %v6586 = vsel %vm245, %v6584, %v6585
  %v6587 = vrot.slane %v6509, 1
  %v6588 = vrot.slane %v6510, 1
  %v6589 = vsel %vm245, %v6587, %v6588
  %v6590 = vrot.slane %v6511, 1
  %v6591 = vrot.slane %v6512, 1
  %v6592 = vsel %vm245, %v6590, %v6591
  %v6593 = vrot.slane %v6517, 1
  %v6594 = vrot.slane %v6518, 1
  %v6595 = vsel %vm245, %v6593, %v6594
  %v6596 = vrot.slane %v6519, 1
  %v6597 = vrot.slane %v6520, 1
  %v6598 = vsel %vm245, %v6596, %v6597
  %v6599 = vrot.slane %v6521, 1
  %v6600 = vrot.slane %v6522, 1
  %v6601 = vsel %vm245, %v6599, %v6600
  %v6602 = vrot.slane %v6523, 1
  %v6603 = vrot.slane %v6524, 1
  %v6604 = vsel %vm245, %v6602, %v6603
  %v6605 = vrot.slane %v6525, 1
  %v6606 = vrot.slane %v6526, 1
  %v6607 = vsel %vm245, %v6605, %v6606
  %v6608 = vrot.slane %v6527, 1
  %v6609 = vrot.slane %v6528, 1
  %v6610 = vsel %vm245, %v6608, %v6609
  %v6611 = vrot.slane %v6529, 1
  %v6612 = vrot.slane %v6530, 1
  %v6613 = vsel %vm245, %v6611, %v6612
  %v6614 = vrot.slane %v6531, 1
  %v6615 = vrot.slane %v6532, 1
  %v6616 = vsel %vm245, %v6614, %v6615
  %6617 = vrot.lane.b32.xlu0 %v6571, 8
  %v6618 = vpop.permute.xlu0 %6617
  %6619 = vrot.lane.b32.xlu0 %v6574, 8
  %v6620 = vpop.permute.xlu0 %6619
  %6621 = vrot.lane.b32.xlu0 %v6577, 8
  %v6622 = vpop.permute.xlu0 %6621
  %6623 = vrot.lane.b32.xlu0 %v6580, 8
  %v6624 = vpop.permute.xlu0 %6623
  %6625 = vrot.lane.b32.xlu0 %v6583, 8
  %v6626 = vpop.permute.xlu0 %6625
  %6627 = vrot.lane.b32.xlu0 %v6586, 8
  %v6628 = vpop.permute.xlu0 %6627
  %6629 = vrot.lane.b32.xlu0 %v6589, 8
  %v6630 = vpop.permute.xlu0 %6629
  %6631 = vrot.lane.b32.xlu0 %v6592, 8
  %v6632 = vpop.permute.xlu0 %6631
  %6633 = vrot.lane.b32.xlu0 %v6595, 8
  %v6634 = vpop.permute.xlu0 %6633
  %6635 = vrot.lane.b32.xlu0 %v6598, 8
  %v6636 = vpop.permute.xlu0 %6635
  %6637 = vrot.lane.b32.xlu0 %v6601, 8
  %v6638 = vpop.permute.xlu0 %6637
  %6639 = vrot.lane.b32.xlu0 %v6604, 8
  %v6640 = vpop.permute.xlu0 %6639
  %6641 = vrot.lane.b32.xlu0 %v6607, 8
  %v6642 = vpop.permute.xlu0 %6641
  %6643 = vrot.lane.b32.xlu0 %v6610, 8
  %v6644 = vpop.permute.xlu0 %6643
  %6645 = vrot.lane.b32.xlu0 %v6613, 8
  %v6646 = vpop.permute.xlu0 %6645
  %6647 = vrot.lane.b32.xlu0 %v6616, 8
  %v6648 = vpop.permute.xlu0 %6647
  %v6665 = vrot.slane %v6497, 2
  %v6666 = vrot.slane %v6498, 2
  %v6667 = vsel %vm598, %v6665, %v6666
  %v6668 = vrot.slane %v6499, 2
  %v6669 = vrot.slane %v6500, 2
  %v6670 = vsel %vm598, %v6668, %v6669
  %v6671 = vrot.slane %v6501, 2
  %v6672 = vrot.slane %v6502, 2
  %v6673 = vsel %vm598, %v6671, %v6672
  %v6674 = vrot.slane %v6503, 2
  %v6675 = vrot.slane %v6504, 2
  %v6676 = vsel %vm598, %v6674, %v6675
  %v6677 = vrot.slane %v6505, 2
  %v6678 = vrot.slane %v6506, 2
  %v6679 = vsel %vm598, %v6677, %v6678
  %v6680 = vrot.slane %v6507, 2
  %v6681 = vrot.slane %v6508, 2
  %v6682 = vsel %vm598, %v6680, %v6681
  %v6683 = vrot.slane %v6509, 2
  %v6684 = vrot.slane %v6510, 2
  %v6685 = vsel %vm598, %v6683, %v6684
  %v6686 = vrot.slane %v6511, 2
  %v6687 = vrot.slane %v6512, 2
  %v6688 = vsel %vm598, %v6686, %v6687
  %v6689 = vrot.slane %v6517, 2
  %v6690 = vrot.slane %v6518, 2
  %v6691 = vsel %vm598, %v6689, %v6690
  %v6692 = vrot.slane %v6519, 2
  %v6693 = vrot.slane %v6520, 2
  %v6694 = vsel %vm598, %v6692, %v6693
  %v6695 = vrot.slane %v6521, 2
  %v6696 = vrot.slane %v6522, 2
  %v6697 = vsel %vm598, %v6695, %v6696
  %v6698 = vrot.slane %v6523, 2
  %v6699 = vrot.slane %v6524, 2
  %v6700 = vsel %vm598, %v6698, %v6699
  %v6701 = vrot.slane %v6525, 2
  %v6702 = vrot.slane %v6526, 2
  %v6703 = vsel %vm598, %v6701, %v6702
  %v6704 = vrot.slane %v6527, 2
  %v6705 = vrot.slane %v6528, 2
  %v6706 = vsel %vm598, %v6704, %v6705
  %v6707 = vrot.slane %v6529, 2
  %v6708 = vrot.slane %v6530, 2
  %v6709 = vsel %vm598, %v6707, %v6708
  %v6710 = vrot.slane %v6531, 2
  %v6711 = vrot.slane %v6532, 2
  %v6712 = vsel %vm598, %v6710, %v6711
  %6713 = vrot.lane.b32.xlu0 %v6667, 16
  %v6714 = vpop.permute.xlu0 %6713
  %6715 = vrot.lane.b32.xlu0 %v6670, 16
  %v6716 = vpop.permute.xlu0 %6715
  %6717 = vrot.lane.b32.xlu0 %v6673, 16
  %v6718 = vpop.permute.xlu0 %6717
  %6719 = vrot.lane.b32.xlu0 %v6676, 16
  %v6720 = vpop.permute.xlu0 %6719
  %6721 = vrot.lane.b32.xlu0 %v6679, 16
  %v6722 = vpop.permute.xlu0 %6721
  %6723 = vrot.lane.b32.xlu0 %v6682, 16
  %v6724 = vpop.permute.xlu0 %6723
  %6725 = vrot.lane.b32.xlu0 %v6685, 16
  %v6726 = vpop.permute.xlu0 %6725
  %6727 = vrot.lane.b32.xlu0 %v6688, 16
  %v6728 = vpop.permute.xlu0 %6727
  %6729 = vrot.lane.b32.xlu0 %v6691, 16
  %v6730 = vpop.permute.xlu0 %6729
  %6731 = vrot.lane.b32.xlu0 %v6694, 16
  %v6732 = vpop.permute.xlu0 %6731
  %6733 = vrot.lane.b32.xlu0 %v6697, 16
  %v6734 = vpop.permute.xlu0 %6733
  %6735 = vrot.lane.b32.xlu0 %v6700, 16
  %v6736 = vpop.permute.xlu0 %6735
  %6737 = vrot.lane.b32.xlu0 %v6703, 16
  %v6738 = vpop.permute.xlu0 %6737
  %6739 = vrot.lane.b32.xlu0 %v6706, 16
  %v6740 = vpop.permute.xlu0 %6739
  %6741 = vrot.lane.b32.xlu0 %v6709, 16
  %v6742 = vpop.permute.xlu0 %6741
  %6743 = vrot.lane.b32.xlu0 %v6712, 16
  %v6744 = vpop.permute.xlu0 %6743
  %6763 = vrot.lane.b32.xlu0 %v6499, 24
  %v6764 = vpop.permute.xlu0 %6763
  %6765 = vrot.lane.b32.xlu0 %v6501, 24
  %v6766 = vpop.permute.xlu0 %6765
  %6767 = vrot.lane.b32.xlu0 %v6503, 24
  %v6768 = vpop.permute.xlu0 %6767
  %6769 = vrot.lane.b32.xlu0 %v6505, 24
  %v6770 = vpop.permute.xlu0 %6769
  %6771 = vrot.lane.b32.xlu0 %v6507, 24
  %v6772 = vpop.permute.xlu0 %6771
  %6773 = vrot.lane.b32.xlu0 %v6509, 24
  %v6774 = vpop.permute.xlu0 %6773
  %6775 = vrot.lane.b32.xlu0 %v6511, 24
  %v6776 = vpop.permute.xlu0 %6775
  %6777 = vrot.lane.b32.xlu0 %v6513, 24
  %v6778 = vpop.permute.xlu0 %6777
  %6779 = vrot.lane.b32.xlu0 %v6519, 24
  %v6780 = vpop.permute.xlu0 %6779
  %6781 = vrot.lane.b32.xlu0 %v6521, 24
  %v6782 = vpop.permute.xlu0 %6781
  %6783 = vrot.lane.b32.xlu0 %v6523, 24
  %v6784 = vpop.permute.xlu0 %6783
  %6785 = vrot.lane.b32.xlu0 %v6525, 24
  %v6786 = vpop.permute.xlu0 %6785
  %6787 = vrot.lane.b32.xlu0 %v6527, 24
  %v6788 = vpop.permute.xlu0 %6787
  %6789 = vrot.lane.b32.xlu0 %v6529, 24
  %v6790 = vpop.permute.xlu0 %6789
  %6791 = vrot.lane.b32.xlu0 %v6531, 24
  %v6792 = vpop.permute.xlu0 %6791
  %6793 = vrot.lane.b32.xlu0 %v6533, 24
  %v6794 = vpop.permute.xlu0 %6793
  %v6813 = vrot.slane %v6513, 1
  %v6814 = vrot.slane %v6514, 1
  %v6815 = vsel %vm245, %v6813, %v6814
  %v6816 = vrot.slane %v6533, 1
  %v6817 = vrot.slane %v6534, 1
  %v6818 = vsel %vm245, %v6816, %v6817
  %6819 = vrot.lane.b32.xlu0 %v6574, 32
  %v6820 = vpop.permute.xlu0 %6819
  %6821 = vrot.lane.b32.xlu0 %v6577, 32
  %v6822 = vpop.permute.xlu0 %6821
  %6823 = vrot.lane.b32.xlu0 %v6580, 32
  %v6824 = vpop.permute.xlu0 %6823
  %6825 = vrot.lane.b32.xlu0 %v6583, 32
  %v6826 = vpop.permute.xlu0 %6825
  %6827 = vrot.lane.b32.xlu0 %v6586, 32
  %v6828 = vpop.permute.xlu0 %6827
  %6829 = vrot.lane.b32.xlu0 %v6589, 32
  %v6830 = vpop.permute.xlu0 %6829
  %6831 = vrot.lane.b32.xlu0 %v6592, 32
  %v6832 = vpop.permute.xlu0 %6831
  %6833 = vrot.lane.b32.xlu0 %v6815, 32
  %v6834 = vpop.permute.xlu0 %6833
  %6835 = vrot.lane.b32.xlu0 %v6598, 32
  %v6836 = vpop.permute.xlu0 %6835
  %6837 = vrot.lane.b32.xlu0 %v6601, 32
  %v6838 = vpop.permute.xlu0 %6837
  %6839 = vrot.lane.b32.xlu0 %v6604, 32
  %v6840 = vpop.permute.xlu0 %6839
  %6841 = vrot.lane.b32.xlu0 %v6607, 32
  %v6842 = vpop.permute.xlu0 %6841
  %6843 = vrot.lane.b32.xlu0 %v6610, 32
  %v6844 = vpop.permute.xlu0 %6843
  %6845 = vrot.lane.b32.xlu0 %v6613, 32
  %v6846 = vpop.permute.xlu0 %6845
  %6847 = vrot.lane.b32.xlu0 %v6616, 32
  %v6848 = vpop.permute.xlu0 %6847
  %6849 = vrot.lane.b32.xlu0 %v6818, 32
  %v6850 = vpop.permute.xlu0 %6849
  %v6867 = vrot.slane %v6513, 2
  %v6868 = vrot.slane %v6514, 2
  %v6869 = vsel %vm598, %v6867, %v6868
  %v6870 = vrot.slane %v6533, 2
  %v6871 = vrot.slane %v6534, 2
  %v6872 = vsel %vm598, %v6870, %v6871
  %6873 = vrot.lane.b32.xlu0 %v6670, 40
  %v6874 = vpop.permute.xlu0 %6873
  %6875 = vrot.lane.b32.xlu0 %v6673, 40
  %v6876 = vpop.permute.xlu0 %6875
  %6877 = vrot.lane.b32.xlu0 %v6676, 40
  %v6878 = vpop.permute.xlu0 %6877
  %6879 = vrot.lane.b32.xlu0 %v6679, 40
  %v6880 = vpop.permute.xlu0 %6879
  %6881 = vrot.lane.b32.xlu0 %v6682, 40
  %v6882 = vpop.permute.xlu0 %6881
  %6883 = vrot.lane.b32.xlu0 %v6685, 40
  %v6884 = vpop.permute.xlu0 %6883
  %6885 = vrot.lane.b32.xlu0 %v6688, 40
  %v6886 = vpop.permute.xlu0 %6885
  %6887 = vrot.lane.b32.xlu0 %v6869, 40
  %v6888 = vpop.permute.xlu0 %6887
  %6889 = vrot.lane.b32.xlu0 %v6694, 40
  %v6890 = vpop.permute.xlu0 %6889
  %6891 = vrot.lane.b32.xlu0 %v6697, 40
  %v6892 = vpop.permute.xlu0 %6891
  %6893 = vrot.lane.b32.xlu0 %v6700, 40
  %v6894 = vpop.permute.xlu0 %6893
  %6895 = vrot.lane.b32.xlu0 %v6703, 40
  %v6896 = vpop.permute.xlu0 %6895
  %6897 = vrot.lane.b32.xlu0 %v6706, 40
  %v6898 = vpop.permute.xlu0 %6897
  %6899 = vrot.lane.b32.xlu0 %v6709, 40
  %v6900 = vpop.permute.xlu0 %6899
  %6901 = vrot.lane.b32.xlu0 %v6712, 40
  %v6902 = vpop.permute.xlu0 %6901
  %6903 = vrot.lane.b32.xlu0 %v6872, 40
  %v6904 = vpop.permute.xlu0 %6903
  %6923 = vrot.lane.b32.xlu0 %v6501, 48
  %v6924 = vpop.permute.xlu0 %6923
  %6925 = vrot.lane.b32.xlu0 %v6503, 48
  %v6926 = vpop.permute.xlu0 %6925
  %6927 = vrot.lane.b32.xlu0 %v6505, 48
  %v6928 = vpop.permute.xlu0 %6927
  %6929 = vrot.lane.b32.xlu0 %v6507, 48
  %v6930 = vpop.permute.xlu0 %6929
  %6931 = vrot.lane.b32.xlu0 %v6509, 48
  %v6932 = vpop.permute.xlu0 %6931
  %6933 = vrot.lane.b32.xlu0 %v6511, 48
  %v6934 = vpop.permute.xlu0 %6933
  %6935 = vrot.lane.b32.xlu0 %v6513, 48
  %v6936 = vpop.permute.xlu0 %6935
  %6937 = vrot.lane.b32.xlu0 %v6515, 48
  %v6938 = vpop.permute.xlu0 %6937
  %6939 = vrot.lane.b32.xlu0 %v6521, 48
  %v6940 = vpop.permute.xlu0 %6939
  %6941 = vrot.lane.b32.xlu0 %v6523, 48
  %v6942 = vpop.permute.xlu0 %6941
  %6943 = vrot.lane.b32.xlu0 %v6525, 48
  %v6944 = vpop.permute.xlu0 %6943
  %6945 = vrot.lane.b32.xlu0 %v6527, 48
  %v6946 = vpop.permute.xlu0 %6945
  %6947 = vrot.lane.b32.xlu0 %v6529, 48
  %v6948 = vpop.permute.xlu0 %6947
  %6949 = vrot.lane.b32.xlu0 %v6531, 48
  %v6950 = vpop.permute.xlu0 %6949
  %6951 = vrot.lane.b32.xlu0 %v6533, 48
  %v6952 = vpop.permute.xlu0 %6951
  %6953 = vrot.lane.b32.xlu0 %v6535, 48
  %v6954 = vpop.permute.xlu0 %6953
  %v6973 = vrot.slane %v6515, 1
  %v6974 = vrot.slane %v6516, 1
  %v6975 = vsel %vm245, %v6973, %v6974
  %v6976 = vrot.slane %v6535, 1
  %v6977 = vrot.slane %v6536, 1
  %v6978 = vsel %vm245, %v6976, %v6977
  %6979 = vrot.lane.b32.xlu0 %v6577, 56
  %v6980 = vpop.permute.xlu0 %6979
  %6981 = vrot.lane.b32.xlu0 %v6580, 56
  %v6982 = vpop.permute.xlu0 %6981
  %6983 = vrot.lane.b32.xlu0 %v6583, 56
  %v6984 = vpop.permute.xlu0 %6983
  %6985 = vrot.lane.b32.xlu0 %v6586, 56
  %v6986 = vpop.permute.xlu0 %6985
  %6987 = vrot.lane.b32.xlu0 %v6589, 56
  %v6988 = vpop.permute.xlu0 %6987
  %6989 = vrot.lane.b32.xlu0 %v6592, 56
  %v6990 = vpop.permute.xlu0 %6989
  %6991 = vrot.lane.b32.xlu0 %v6815, 56
  %v6992 = vpop.permute.xlu0 %6991
  %6993 = vrot.lane.b32.xlu0 %v6975, 56
  %v6994 = vpop.permute.xlu0 %6993
  %6995 = vrot.lane.b32.xlu0 %v6601, 56
  %v6996 = vpop.permute.xlu0 %6995
  %6997 = vrot.lane.b32.xlu0 %v6604, 56
  %v6998 = vpop.permute.xlu0 %6997
  %6999 = vrot.lane.b32.xlu0 %v6607, 56
  %v7000 = vpop.permute.xlu0 %6999
  %7001 = vrot.lane.b32.xlu0 %v6610, 56
  %v7002 = vpop.permute.xlu0 %7001
  %7003 = vrot.lane.b32.xlu0 %v6613, 56
  %v7004 = vpop.permute.xlu0 %7003
  %7005 = vrot.lane.b32.xlu0 %v6616, 56
  %v7006 = vpop.permute.xlu0 %7005
  %7007 = vrot.lane.b32.xlu0 %v6818, 56
  %v7008 = vpop.permute.xlu0 %7007
  %7009 = vrot.lane.b32.xlu0 %v6978, 56
  %v7010 = vpop.permute.xlu0 %7009
  %v7027 = vrot.slane %v6515, 2
  %v7028 = vrot.slane %v6516, 2
  %v7029 = vsel %vm598, %v7027, %v7028
  %v7030 = vrot.slane %v6535, 2
  %v7031 = vrot.slane %v6536, 2
  %v7032 = vsel %vm598, %v7030, %v7031
  %7033 = vrot.lane.b32.xlu0 %v6673, 64
  %v7034 = vpop.permute.xlu0 %7033
  %7035 = vrot.lane.b32.xlu0 %v6676, 64
  %v7036 = vpop.permute.xlu0 %7035
  %7037 = vrot.lane.b32.xlu0 %v6679, 64
  %v7038 = vpop.permute.xlu0 %7037
  %7039 = vrot.lane.b32.xlu0 %v6682, 64
  %v7040 = vpop.permute.xlu0 %7039
  %7041 = vrot.lane.b32.xlu0 %v6685, 64
  %v7042 = vpop.permute.xlu0 %7041
  %7043 = vrot.lane.b32.xlu0 %v6688, 64
  %v7044 = vpop.permute.xlu0 %7043
  %7045 = vrot.lane.b32.xlu0 %v6869, 64
  %v7046 = vpop.permute.xlu0 %7045
  %7047 = vrot.lane.b32.xlu0 %v7029, 64
  %v7048 = vpop.permute.xlu0 %7047
  %7049 = vrot.lane.b32.xlu0 %v6697, 64
  %v7050 = vpop.permute.xlu0 %7049
  %7051 = vrot.lane.b32.xlu0 %v6700, 64
  %v7052 = vpop.permute.xlu0 %7051
  %7053 = vrot.lane.b32.xlu0 %v6703, 64
  %v7054 = vpop.permute.xlu0 %7053
  %7055 = vrot.lane.b32.xlu0 %v6706, 64
  %v7056 = vpop.permute.xlu0 %7055
  %7057 = vrot.lane.b32.xlu0 %v6709, 64
  %v7058 = vpop.permute.xlu0 %7057
  %7059 = vrot.lane.b32.xlu0 %v6712, 64
  %v7060 = vpop.permute.xlu0 %7059
  %7061 = vrot.lane.b32.xlu0 %v6872, 64
  %v7062 = vpop.permute.xlu0 %7061
  %7063 = vrot.lane.b32.xlu0 %v7032, 64
  %v7064 = vpop.permute.xlu0 %7063
  %v7081 = vsel %vm2220, %v6497, %v6618
  %v7082 = vsel %vm2220, %v6499, %v6620
  %v7083 = vsel %vm2220, %v6501, %v6622
  %v7084 = vsel %vm2220, %v6503, %v6624
  %v7085 = vsel %vm2220, %v6505, %v6626
  %v7086 = vsel %vm2220, %v6507, %v6628
  %v7087 = vsel %vm2220, %v6509, %v6630
  %v7088 = vsel %vm2220, %v6511, %v6632
  %v7089 = vsel %vm2220, %v6517, %v6634
  %v7090 = vsel %vm2220, %v6519, %v6636
  %v7091 = vsel %vm2220, %v6521, %v6638
  %v7092 = vsel %vm2220, %v6523, %v6640
  %v7093 = vsel %vm2220, %v6525, %v6642
  %v7094 = vsel %vm2220, %v6527, %v6644
  %v7095 = vsel %vm2220, %v6529, %v6646
  %v7096 = vsel %vm2220, %v6531, %v6648
  %v7097 = vsel %vm2350, %v7081, %v6714
  %v7098 = vsel %vm2350, %v7082, %v6716
  %v7099 = vsel %vm2350, %v7083, %v6718
  %v7100 = vsel %vm2350, %v7084, %v6720
  %v7101 = vsel %vm2350, %v7085, %v6722
  %v7102 = vsel %vm2350, %v7086, %v6724
  %v7103 = vsel %vm2350, %v7087, %v6726
  %v7104 = vsel %vm2350, %v7088, %v6728
  %v7105 = vsel %vm2350, %v7089, %v6730
  %v7106 = vsel %vm2350, %v7090, %v6732
  %v7107 = vsel %vm2350, %v7091, %v6734
  %v7108 = vsel %vm2350, %v7092, %v6736
  %v7109 = vsel %vm2350, %v7093, %v6738
  %v7110 = vsel %vm2350, %v7094, %v6740
  %v7111 = vsel %vm2350, %v7095, %v6742
  %v7112 = vsel %vm2350, %v7096, %v6744
  %v7113 = vsel %vm2480, %v7097, %v6764
  %v7114 = vsel %vm2480, %v7098, %v6766
  %v7115 = vsel %vm2480, %v7099, %v6768
  %v7116 = vsel %vm2480, %v7100, %v6770
  %v7117 = vsel %vm2480, %v7101, %v6772
  %v7118 = vsel %vm2480, %v7102, %v6774
  %v7119 = vsel %vm2480, %v7103, %v6776
  %v7120 = vsel %vm2480, %v7104, %v6778
  %v7121 = vsel %vm2480, %v7105, %v6780
  %v7122 = vsel %vm2480, %v7106, %v6782
  %v7123 = vsel %vm2480, %v7107, %v6784
  %v7124 = vsel %vm2480, %v7108, %v6786
  %v7125 = vsel %vm2480, %v7109, %v6788
  %v7126 = vsel %vm2480, %v7110, %v6790
  %v7127 = vsel %vm2480, %v7111, %v6792
  %v7128 = vsel %vm2480, %v7112, %v6794
  %v7129 = vsel %vm2610, %v7113, %v6820
  %v7130 = vsel %vm2610, %v7114, %v6822
  %v7131 = vsel %vm2610, %v7115, %v6824
  %v7132 = vsel %vm2610, %v7116, %v6826
  %v7133 = vsel %vm2610, %v7117, %v6828
  %v7134 = vsel %vm2610, %v7118, %v6830
  %v7135 = vsel %vm2610, %v7119, %v6832
  %v7136 = vsel %vm2610, %v7120, %v6834
  %v7137 = vsel %vm2610, %v7121, %v6836
  %v7138 = vsel %vm2610, %v7122, %v6838
  %v7139 = vsel %vm2610, %v7123, %v6840
  %v7140 = vsel %vm2610, %v7124, %v6842
  %v7141 = vsel %vm2610, %v7125, %v6844
  %v7142 = vsel %vm2610, %v7126, %v6846
  %v7143 = vsel %vm2610, %v7127, %v6848
  %v7144 = vsel %vm2610, %v7128, %v6850
  %v7145 = vsel %vm5384, %v7129, %v6874
  %v7146 = vsel %vm5384, %v7130, %v6876
  %v7147 = vsel %vm5384, %v7131, %v6878
  %v7148 = vsel %vm5384, %v7132, %v6880
  %v7149 = vsel %vm5384, %v7133, %v6882
  %v7150 = vsel %vm5384, %v7134, %v6884
  %v7151 = vsel %vm5384, %v7135, %v6886
  %v7152 = vsel %vm5384, %v7136, %v6888
  %v7153 = vsel %vm5384, %v7137, %v6890
  %v7154 = vsel %vm5384, %v7138, %v6892
  %v7155 = vsel %vm5384, %v7139, %v6894
  %v7156 = vsel %vm5384, %v7140, %v6896
  %v7157 = vsel %vm5384, %v7141, %v6898
  %v7158 = vsel %vm5384, %v7142, %v6900
  %v7159 = vsel %vm5384, %v7143, %v6902
  %v7160 = vsel %vm5384, %v7144, %v6904
  %v7161 = vsel %vm5401, %v7145, %v6924
  %v7162 = vsel %vm5401, %v7146, %v6926
  %v7163 = vsel %vm5401, %v7147, %v6928
  %v7164 = vsel %vm5401, %v7148, %v6930
  %v7165 = vsel %vm5401, %v7149, %v6932
  %v7166 = vsel %vm5401, %v7150, %v6934
  %v7167 = vsel %vm5401, %v7151, %v6936
  %v7168 = vsel %vm5401, %v7152, %v6938
  %v7169 = vsel %vm5401, %v7153, %v6940
  %v7170 = vsel %vm5401, %v7154, %v6942
  %v7171 = vsel %vm5401, %v7155, %v6944
  %v7172 = vsel %vm5401, %v7156, %v6946
  %v7173 = vsel %vm5401, %v7157, %v6948
  %v7174 = vsel %vm5401, %v7158, %v6950
  %v7175 = vsel %vm5401, %v7159, %v6952
  %v7176 = vsel %vm5401, %v7160, %v6954
  %v7177 = vsel %vm5418, %v7161, %v6980
  %v7178 = vsel %vm5418, %v7162, %v6982
  %v7179 = vsel %vm5418, %v7163, %v6984
  %v7180 = vsel %vm5418, %v7164, %v6986
  %v7181 = vsel %vm5418, %v7165, %v6988
  %v7182 = vsel %vm5418, %v7166, %v6990
  %v7183 = vsel %vm5418, %v7167, %v6992
  %v7184 = vsel %vm5418, %v7168, %v6994
  %v7185 = vsel %vm5418, %v7169, %v6996
  %v7186 = vsel %vm5418, %v7170, %v6998
  %v7187 = vsel %vm5418, %v7171, %v7000
  %v7188 = vsel %vm5418, %v7172, %v7002
  %v7189 = vsel %vm5418, %v7173, %v7004
  %v7190 = vsel %vm5418, %v7174, %v7006
  %v7191 = vsel %vm5418, %v7175, %v7008
  %v7192 = vsel %vm5418, %v7176, %v7010
  %v7193 = vsel %vm5435, %v7177, %v7034
  %v7194 = vsel %vm5435, %v7178, %v7036
  %v7195 = vsel %vm5435, %v7179, %v7038
  %v7196 = vsel %vm5435, %v7180, %v7040
  %v7197 = vsel %vm5435, %v7181, %v7042
  %v7198 = vsel %vm5435, %v7182, %v7044
  %v7199 = vsel %vm5435, %v7183, %v7046
  %v7200 = vsel %vm5435, %v7184, %v7048
  %v7201 = vsel %vm5435, %v7185, %v7050
  %v7202 = vsel %vm5435, %v7186, %v7052
  %v7203 = vsel %vm5435, %v7187, %v7054
  %v7204 = vsel %vm5435, %v7188, %v7056
  %v7205 = vsel %vm5435, %v7189, %v7058
  %v7206 = vsel %vm5435, %v7190, %v7060
  %v7207 = vsel %vm5435, %v7191, %v7062
  %v7208 = vsel %vm5435, %v7192, %v7064
  %v7209 = vld [vmem:[%s8] sm:$0xff]
  %v7210 = vld [vmem:[%s8 + $0x8] sm:$0xff]
  %v7211 = vld [vmem:[%s8 + $0x10] sm:$0xff]
  %v7212 = vld [vmem:[%s8 + $0x18] sm:$0xff]
  %v7213 = vld [vmem:[%s8 + $0x20] sm:$0xff]
  %v7214 = vld [vmem:[%s8 + $0x28] sm:$0xff]
  %v7215 = vld [vmem:[%s8 + $0x30] sm:$0xff]
  %v7216 = vld [vmem:[%s8 + $0x38] sm:$0xff]
  %v7217 = vld [vmem:[%s8 + $0x40] sm:$0xff]
  %v7218 = vld [vmem:[%s9] sm:$0x1]
  %v7220 = vperm.slane %v7218, 0
  %v7223 = vsel %vm5465, %v7193, 0
  %v7226 = vsel %vm5465, %v7194, 0
  %v7229 = vsel %vm5465, %v7195, 0
  %v7232 = vsel %vm5465, %v7196, 0
  %v7235 = vsel %vm5465, %v7197, 0
  %v7238 = vsel %vm5465, %v7198, 0
  %v7241 = vsel %vm5465, %v7199, 0
  %v7244 = vsel %vm5465, %v7200, 0
  %v7247 = vsel %vm5465, %v7201, 0
  %v7250 = vsel %vm5465, %v7202, 0
  %v7253 = vsel %vm5465, %v7203, 0
  %v7256 = vsel %vm5465, %v7204, 0
  %v7259 = vsel %vm5465, %v7205, 0
  %v7262 = vsel %vm5465, %v7206, 0
  %v7265 = vsel %vm5465, %v7207, 0
  %v7268 = vsel %vm5465, %v7208, 0
  %7270 = vmatpush.msra.mxu0 0.0
  %7271 = vmatpush.msra.mxu0 0.0
  %7272 = vmatpush.msra.mxu0 0.0
  %7273 = vmatpush.msra.mxu0 0.0
  %7274 = vmatpush.msra.mxu0 0.0
  %7275 = vmatpush.msra.mxu0 0.0
  %7276 = vmatpush.msra.mxu0 0.0
  %7277 = vmatpush.msra.mxu0 %v7217
  %7278 = vmatpush.msra.mxu0 %v7216
  %7279 = vmatpush.msra.mxu0 %v7215
  %7280 = vmatpush.msra.mxu0 %v7214
  %7281 = vmatpush.msra.mxu0 %v7213
  %7282 = vmatpush.msra.mxu0 %v7212
  %7283 = vmatpush.msra.mxu0 %v7211
  %7284 = vmatpush.msra.mxu0 %v7210
  %7285 = vmatpush.msra.mxu0 %v7209
  %7286 = vmatmul.f32.gmra.mxu0 %v7223
  %v7287 = vpop.f32.mrf.mxu0
  %v7288 = vadd.f32 %v7220, %v7287
  %7289 = vmatmul.f32.gmra.mxu0 %v7226
  %v7290 = vpop.f32.mrf.mxu0
  %v7291 = vadd.f32 %v7220, %v7290
  %7292 = vmatmul.f32.gmra.mxu0 %v7229
  %v7293 = vpop.f32.mrf.mxu0
  %v7294 = vadd.f32 %v7220, %v7293
  %7295 = vmatmul.f32.gmra.mxu0 %v7232
  %v7296 = vpop.f32.mrf.mxu0
  %v7297 = vadd.f32 %v7220, %v7296
  %7298 = vmatmul.f32.gmra.mxu0 %v7235
  %v7299 = vpop.f32.mrf.mxu0
  %v7300 = vadd.f32 %v7220, %v7299
  %7301 = vmatmul.f32.gmra.mxu0 %v7238
  %v7302 = vpop.f32.mrf.mxu0
  %v7303 = vadd.f32 %v7220, %v7302
  %7304 = vmatmul.f32.gmra.mxu0 %v7241
  %v7305 = vpop.f32.mrf.mxu0
  %v7306 = vadd.f32 %v7220, %v7305
  %7307 = vmatmul.f32.gmra.mxu0 %v7244
  %v7308 = vpop.f32.mrf.mxu0
  %v7309 = vadd.f32 %v7220, %v7308
  %7310 = vmatmul.f32.gmra.mxu0 %v7247
  %v7311 = vpop.f32.mrf.mxu0
  %v7312 = vadd.f32 %v7220, %v7311
  %7313 = vmatmul.f32.gmra.mxu0 %v7250
  %v7314 = vpop.f32.mrf.mxu0
  %v7315 = vadd.f32 %v7220, %v7314
  %7316 = vmatmul.f32.gmra.mxu0 %v7253
  %v7317 = vpop.f32.mrf.mxu0
  %v7318 = vadd.f32 %v7220, %v7317
  %7319 = vmatmul.f32.gmra.mxu0 %v7256
  %v7320 = vpop.f32.mrf.mxu0
  %v7321 = vadd.f32 %v7220, %v7320
  %7322 = vmatmul.f32.gmra.mxu0 %v7259
  %v7323 = vpop.f32.mrf.mxu0
  %v7324 = vadd.f32 %v7220, %v7323
  %7325 = vmatmul.f32.gmra.mxu0 %v7262
  %v7326 = vpop.f32.mrf.mxu0
  %v7327 = vadd.f32 %v7220, %v7326
  %7328 = vmatmul.f32.gmra.mxu0 %v7265
  %v7329 = vpop.f32.mrf.mxu0
  %v7330 = vadd.f32 %v7220, %v7329
  %7331 = vmatmul.f32.gmra.mxu0 %v7268
  %v7332 = vpop.f32.mrf.mxu0
  %v7333 = vadd.f32 %v7220, %v7332
  %7334 = vdwg.mxu0
  %v7335 = vmax.f32 %v7288, 0.0
  %v7336 = vmax.f32 %v7291, 0.0
  %v7337 = vmax.f32 %v7294, 0.0
  %v7338 = vmax.f32 %v7297, 0.0
  %v7339 = vmax.f32 %v7300, 0.0
  %v7340 = vmax.f32 %v7303, 0.0
  %v7341 = vmax.f32 %v7306, 0.0
  %v7342 = vmax.f32 %v7309, 0.0
  %v7343 = vmax.f32 %v7312, 0.0
  %v7344 = vmax.f32 %v7315, 0.0
  %v7345 = vmax.f32 %v7318, 0.0
  %v7346 = vmax.f32 %v7321, 0.0
  %v7347 = vmax.f32 %v7324, 0.0
  %v7348 = vmax.f32 %v7327, 0.0
  %v7349 = vmax.f32 %v7330, 0.0
  %v7350 = vmax.f32 %v7333, 0.0
  %7351 = vst.msk [vmem:[%s4719 + $0x1] sm:$0xff] %vm2220, %v7335
  %7352 = vst.msk [vmem:[%s4719 + $0x11] sm:$0xff] %vm2220, %v7336
  %7353 = vst.msk [vmem:[%s4719 + $0x21] sm:$0xff] %vm2220, %v7337
  %7354 = vst.msk [vmem:[%s4719 + $0x31] sm:$0xff] %vm2220, %v7338
  %7355 = vst.msk [vmem:[%s4719 + $0x41] sm:$0xff] %vm2220, %v7339
  %7356 = vst.msk [vmem:[%s4719 + $0x51] sm:$0xff] %vm2220, %v7340
  %7357 = vst.msk [vmem:[%s4719 + $0x61] sm:$0xff] %vm2220, %v7341
  %7358 = vst.msk [vmem:[%s4719 + $0x71] sm:$0xff] %vm2220, %v7342
  %7359 = vst.msk [vmem:[%s4719 + $0xa1] sm:$0xff] %vm2220, %v7343
  %7360 = vst.msk [vmem:[%s4719 + $0xb1] sm:$0xff] %vm2220, %v7344
  %7361 = vst.msk [vmem:[%s4719 + $0xc1] sm:$0xff] %vm2220, %v7345
  %7362 = vst.msk [vmem:[%s4719 + $0xd1] sm:$0xff] %vm2220, %v7346
  %7363 = vst.msk [vmem:[%s4719 + $0xe1] sm:$0xff] %vm2220, %v7347
  %7364 = vst.msk [vmem:[%s4719 + $0xf1] sm:$0xff] %vm2220, %v7348
  %7365 = vst.msk [vmem:[%s4719 + $0x101] sm:$0xff] %vm2220, %v7349
  %7366 = vst.msk [vmem:[%s4719 + $0x111] sm:$0xff] %vm2220, %v7350
  %v7367 = vld [vmem:[#allocation3] sm:$0xff]
  %v7368 = vld [vmem:[#allocation3 + $0x8] sm:$0x3]
  %v7369 = vld [vmem:[#allocation3 + $0x10] sm:$0xff]
  %v7370 = vld [vmem:[#allocation3 + $0x18] sm:$0x3]
  %v7371 = vld [vmem:[#allocation3 + $0x20] sm:$0xff]
  %v7372 = vld [vmem:[#allocation3 + $0x28] sm:$0x3]
  %v7373 = vld [vmem:[#allocation3 + $0x30] sm:$0xff]
  %v7374 = vld [vmem:[#allocation3 + $0x38] sm:$0x3]
  %v7375 = vld [vmem:[#allocation3 + $0x40] sm:$0xff]
  %v7376 = vld [vmem:[#allocation3 + $0x48] sm:$0x3]
  %v7377 = vld [vmem:[#allocation3 + $0x50] sm:$0xff]
  %v7378 = vld [vmem:[#allocation3 + $0x58] sm:$0x3]
  %v7379 = vld [vmem:[#allocation3 + $0x60] sm:$0xff]
  %v7380 = vld [vmem:[#allocation3 + $0x68] sm:$0x3]
  %v7381 = vld [vmem:[#allocation3 + $0x70] sm:$0xff]
  %v7382 = vld [vmem:[#allocation3 + $0x78] sm:$0x3]
  %v7383 = vld [vmem:[#allocation3 + $0x80] sm:$0xff]
  %v7384 = vld [vmem:[#allocation3 + $0x88] sm:$0x3]
  %v7385 = vld [vmem:[#allocation3 + $0x90] sm:$0xff]
  %v7386 = vld [vmem:[#allocation3 + $0x98] sm:$0x3]
  %v7387 = vld [vmem:[#allocation3 + $0xa0] sm:$0xff]
  %v7388 = vld [vmem:[#allocation3 + $0xa8] sm:$0x3]
  %v7389 = vld [vmem:[#allocation3 + $0xb0] sm:$0xff]
  %v7390 = vld [vmem:[#allocation3 + $0xb8] sm:$0x3]
  %v7391 = vld [vmem:[#allocation3 + $0xc0] sm:$0xff]
  %v7392 = vld [vmem:[#allocation3 + $0xc8] sm:$0x3]
  %v7393 = vld [vmem:[#allocation3 + $0xd0] sm:$0xff]
  %v7394 = vld [vmem:[#allocation3 + $0xd8] sm:$0x3]
  %v7395 = vld [vmem:[#allocation3 + $0xe0] sm:$0xff]
  %v7396 = vld [vmem:[#allocation3 + $0xe8] sm:$0x3]
  %v7397 = vld [vmem:[#allocation3 + $0xf0] sm:$0xff]
  %v7398 = vld [vmem:[#allocation3 + $0xf8] sm:$0x3]
  %v7399 = vld [vmem:[#allocation3 + $0x100] sm:$0xff]
  %v7400 = vld [vmem:[#allocation3 + $0x108] sm:$0x3]
  %v7401 = vld [vmem:[#allocation3 + $0x110] sm:$0xff]
  %v7402 = vld [vmem:[#allocation3 + $0x118] sm:$0x3]
  %v7403 = vld [vmem:[#allocation3 + $0x120] sm:$0xff]
  %v7404 = vld [vmem:[#allocation3 + $0x128] sm:$0x3]
  %v7405 = vld [vmem:[#allocation3 + $0x130] sm:$0xff]
  %v7406 = vld [vmem:[#allocation3 + $0x138] sm:$0x3]
  %v7439 = vrot.slane %v7367, 1
  %v7440 = vrot.slane %v7368, 1
  %v7441 = vsel %vm245, %v7439, %v7440
  %v7442 = vrot.slane %v7369, 1
  %v7443 = vrot.slane %v7370, 1
  %v7444 = vsel %vm245, %v7442, %v7443
  %v7445 = vrot.slane %v7371, 1
  %v7446 = vrot.slane %v7372, 1
  %v7447 = vsel %vm245, %v7445, %v7446
  %v7448 = vrot.slane %v7373, 1
  %v7449 = vrot.slane %v7374, 1
  %v7450 = vsel %vm245, %v7448, %v7449
  %v7451 = vrot.slane %v7375, 1
  %v7452 = vrot.slane %v7376, 1
  %v7453 = vsel %vm245, %v7451, %v7452
  %v7454 = vrot.slane %v7377, 1
  %v7455 = vrot.slane %v7378, 1
  %v7456 = vsel %vm245, %v7454, %v7455
  %v7457 = vrot.slane %v7379, 1
  %v7458 = vrot.slane %v7380, 1
  %v7459 = vsel %vm245, %v7457, %v7458
  %v7460 = vrot.slane %v7381, 1
  %v7461 = vrot.slane %v7382, 1
  %v7462 = vsel %vm245, %v7460, %v7461
  %v7463 = vrot.slane %v7387, 1
  %v7464 = vrot.slane %v7388, 1
  %v7465 = vsel %vm245, %v7463, %v7464
  %v7466 = vrot.slane %v7389, 1
  %v7467 = vrot.slane %v7390, 1
  %v7468 = vsel %vm245, %v7466, %v7467
  %v7469 = vrot.slane %v7391, 1
  %v7470 = vrot.slane %v7392, 1
  %v7471 = vsel %vm245, %v7469, %v7470
  %v7472 = vrot.slane %v7393, 1
  %v7473 = vrot.slane %v7394, 1
  %v7474 = vsel %vm245, %v7472, %v7473
  %v7475 = vrot.slane %v7395, 1
  %v7476 = vrot.slane %v7396, 1
  %v7477 = vsel %vm245, %v7475, %v7476
  %v7478 = vrot.slane %v7397, 1
  %v7479 = vrot.slane %v7398, 1
  %v7480 = vsel %vm245, %v7478, %v7479
  %v7481 = vrot.slane %v7399, 1
  %v7482 = vrot.slane %v7400, 1
  %v7483 = vsel %vm245, %v7481, %v7482
  %v7484 = vrot.slane %v7401, 1
  %v7485 = vrot.slane %v7402, 1
  %v7486 = vsel %vm245, %v7484, %v7485
  %7487 = vrot.lane.b32.xlu0 %v7441, 8
  %v7488 = vpop.permute.xlu0 %7487
  %7489 = vrot.lane.b32.xlu0 %v7444, 8
  %v7490 = vpop.permute.xlu0 %7489
  %7491 = vrot.lane.b32.xlu0 %v7447, 8
  %v7492 = vpop.permute.xlu0 %7491
  %7493 = vrot.lane.b32.xlu0 %v7450, 8
  %v7494 = vpop.permute.xlu0 %7493
  %7495 = vrot.lane.b32.xlu0 %v7453, 8
  %v7496 = vpop.permute.xlu0 %7495
  %7497 = vrot.lane.b32.xlu0 %v7456, 8
  %v7498 = vpop.permute.xlu0 %7497
  %7499 = vrot.lane.b32.xlu0 %v7459, 8
  %v7500 = vpop.permute.xlu0 %7499
  %7501 = vrot.lane.b32.xlu0 %v7462, 8
  %v7502 = vpop.permute.xlu0 %7501
  %7503 = vrot.lane.b32.xlu0 %v7465, 8
  %v7504 = vpop.permute.xlu0 %7503
  %7505 = vrot.lane.b32.xlu0 %v7468, 8
  %v7506 = vpop.permute.xlu0 %7505
  %7507 = vrot.lane.b32.xlu0 %v7471, 8
  %v7508 = vpop.permute.xlu0 %7507
  %7509 = vrot.lane.b32.xlu0 %v7474, 8
  %v7510 = vpop.permute.xlu0 %7509
  %7511 = vrot.lane.b32.xlu0 %v7477, 8
  %v7512 = vpop.permute.xlu0 %7511
  %7513 = vrot.lane.b32.xlu0 %v7480, 8
  %v7514 = vpop.permute.xlu0 %7513
  %7515 = vrot.lane.b32.xlu0 %v7483, 8
  %v7516 = vpop.permute.xlu0 %7515
  %7517 = vrot.lane.b32.xlu0 %v7486, 8
  %v7518 = vpop.permute.xlu0 %7517
  %v7535 = vrot.slane %v7367, 2
  %v7536 = vrot.slane %v7368, 2
  %v7537 = vsel %vm598, %v7535, %v7536
  %v7538 = vrot.slane %v7369, 2
  %v7539 = vrot.slane %v7370, 2
  %v7540 = vsel %vm598, %v7538, %v7539
  %v7541 = vrot.slane %v7371, 2
  %v7542 = vrot.slane %v7372, 2
  %v7543 = vsel %vm598, %v7541, %v7542
  %v7544 = vrot.slane %v7373, 2
  %v7545 = vrot.slane %v7374, 2
  %v7546 = vsel %vm598, %v7544, %v7545
  %v7547 = vrot.slane %v7375, 2
  %v7548 = vrot.slane %v7376, 2
  %v7549 = vsel %vm598, %v7547, %v7548
  %v7550 = vrot.slane %v7377, 2
  %v7551 = vrot.slane %v7378, 2
  %v7552 = vsel %vm598, %v7550, %v7551
  %v7553 = vrot.slane %v7379, 2
  %v7554 = vrot.slane %v7380, 2
  %v7555 = vsel %vm598, %v7553, %v7554
  %v7556 = vrot.slane %v7381, 2
  %v7557 = vrot.slane %v7382, 2
  %v7558 = vsel %vm598, %v7556, %v7557
  %v7559 = vrot.slane %v7387, 2
  %v7560 = vrot.slane %v7388, 2
  %v7561 = vsel %vm598, %v7559, %v7560
  %v7562 = vrot.slane %v7389, 2
  %v7563 = vrot.slane %v7390, 2
  %v7564 = vsel %vm598, %v7562, %v7563
  %v7565 = vrot.slane %v7391, 2
  %v7566 = vrot.slane %v7392, 2
  %v7567 = vsel %vm598, %v7565, %v7566
  %v7568 = vrot.slane %v7393, 2
  %v7569 = vrot.slane %v7394, 2
  %v7570 = vsel %vm598, %v7568, %v7569
  %v7571 = vrot.slane %v7395, 2
  %v7572 = vrot.slane %v7396, 2
  %v7573 = vsel %vm598, %v7571, %v7572
  %v7574 = vrot.slane %v7397, 2
  %v7575 = vrot.slane %v7398, 2
  %v7576 = vsel %vm598, %v7574, %v7575
  %v7577 = vrot.slane %v7399, 2
  %v7578 = vrot.slane %v7400, 2
  %v7579 = vsel %vm598, %v7577, %v7578
  %v7580 = vrot.slane %v7401, 2
  %v7581 = vrot.slane %v7402, 2
  %v7582 = vsel %vm598, %v7580, %v7581
  %7583 = vrot.lane.b32.xlu0 %v7537, 16
  %v7584 = vpop.permute.xlu0 %7583
  %7585 = vrot.lane.b32.xlu0 %v7540, 16
  %v7586 = vpop.permute.xlu0 %7585
  %7587 = vrot.lane.b32.xlu0 %v7543, 16
  %v7588 = vpop.permute.xlu0 %7587
  %7589 = vrot.lane.b32.xlu0 %v7546, 16
  %v7590 = vpop.permute.xlu0 %7589
  %7591 = vrot.lane.b32.xlu0 %v7549, 16
  %v7592 = vpop.permute.xlu0 %7591
  %7593 = vrot.lane.b32.xlu0 %v7552, 16
  %v7594 = vpop.permute.xlu0 %7593
  %7595 = vrot.lane.b32.xlu0 %v7555, 16
  %v7596 = vpop.permute.xlu0 %7595
  %7597 = vrot.lane.b32.xlu0 %v7558, 16
  %v7598 = vpop.permute.xlu0 %7597
  %7599 = vrot.lane.b32.xlu0 %v7561, 16
  %v7600 = vpop.permute.xlu0 %7599
  %7601 = vrot.lane.b32.xlu0 %v7564, 16
  %v7602 = vpop.permute.xlu0 %7601
  %7603 = vrot.lane.b32.xlu0 %v7567, 16
  %v7604 = vpop.permute.xlu0 %7603
  %7605 = vrot.lane.b32.xlu0 %v7570, 16
  %v7606 = vpop.permute.xlu0 %7605
  %7607 = vrot.lane.b32.xlu0 %v7573, 16
  %v7608 = vpop.permute.xlu0 %7607
  %7609 = vrot.lane.b32.xlu0 %v7576, 16
  %v7610 = vpop.permute.xlu0 %7609
  %7611 = vrot.lane.b32.xlu0 %v7579, 16
  %v7612 = vpop.permute.xlu0 %7611
  %7613 = vrot.lane.b32.xlu0 %v7582, 16
  %v7614 = vpop.permute.xlu0 %7613
  %7633 = vrot.lane.b32.xlu0 %v7369, 24
  %v7634 = vpop.permute.xlu0 %7633
  %7635 = vrot.lane.b32.xlu0 %v7371, 24
  %v7636 = vpop.permute.xlu0 %7635
  %7637 = vrot.lane.b32.xlu0 %v7373, 24
  %v7638 = vpop.permute.xlu0 %7637
  %7639 = vrot.lane.b32.xlu0 %v7375, 24
  %v7640 = vpop.permute.xlu0 %7639
  %7641 = vrot.lane.b32.xlu0 %v7377, 24
  %v7642 = vpop.permute.xlu0 %7641
  %7643 = vrot.lane.b32.xlu0 %v7379, 24
  %v7644 = vpop.permute.xlu0 %7643
  %7645 = vrot.lane.b32.xlu0 %v7381, 24
  %v7646 = vpop.permute.xlu0 %7645
  %7647 = vrot.lane.b32.xlu0 %v7383, 24
  %v7648 = vpop.permute.xlu0 %7647
  %7649 = vrot.lane.b32.xlu0 %v7389, 24
  %v7650 = vpop.permute.xlu0 %7649
  %7651 = vrot.lane.b32.xlu0 %v7391, 24
  %v7652 = vpop.permute.xlu0 %7651
  %7653 = vrot.lane.b32.xlu0 %v7393, 24
  %v7654 = vpop.permute.xlu0 %7653
  %7655 = vrot.lane.b32.xlu0 %v7395, 24
  %v7656 = vpop.permute.xlu0 %7655
  %7657 = vrot.lane.b32.xlu0 %v7397, 24
  %v7658 = vpop.permute.xlu0 %7657
  %7659 = vrot.lane.b32.xlu0 %v7399, 24
  %v7660 = vpop.permute.xlu0 %7659
  %7661 = vrot.lane.b32.xlu0 %v7401, 24
  %v7662 = vpop.permute.xlu0 %7661
  %7663 = vrot.lane.b32.xlu0 %v7403, 24
  %v7664 = vpop.permute.xlu0 %7663
  %v7683 = vrot.slane %v7383, 1
  %v7684 = vrot.slane %v7384, 1
  %v7685 = vsel %vm245, %v7683, %v7684
  %v7686 = vrot.slane %v7403, 1
  %v7687 = vrot.slane %v7404, 1
  %v7688 = vsel %vm245, %v7686, %v7687
  %7689 = vrot.lane.b32.xlu0 %v7444, 32
  %v7690 = vpop.permute.xlu0 %7689
  %7691 = vrot.lane.b32.xlu0 %v7447, 32
  %v7692 = vpop.permute.xlu0 %7691
  %7693 = vrot.lane.b32.xlu0 %v7450, 32
  %v7694 = vpop.permute.xlu0 %7693
  %7695 = vrot.lane.b32.xlu0 %v7453, 32
  %v7696 = vpop.permute.xlu0 %7695
  %7697 = vrot.lane.b32.xlu0 %v7456, 32
  %v7698 = vpop.permute.xlu0 %7697
  %7699 = vrot.lane.b32.xlu0 %v7459, 32
  %v7700 = vpop.permute.xlu0 %7699
  %7701 = vrot.lane.b32.xlu0 %v7462, 32
  %v7702 = vpop.permute.xlu0 %7701
  %7703 = vrot.lane.b32.xlu0 %v7685, 32
  %v7704 = vpop.permute.xlu0 %7703
  %7705 = vrot.lane.b32.xlu0 %v7468, 32
  %v7706 = vpop.permute.xlu0 %7705
  %7707 = vrot.lane.b32.xlu0 %v7471, 32
  %v7708 = vpop.permute.xlu0 %7707
  %7709 = vrot.lane.b32.xlu0 %v7474, 32
  %v7710 = vpop.permute.xlu0 %7709
  %7711 = vrot.lane.b32.xlu0 %v7477, 32
  %v7712 = vpop.permute.xlu0 %7711
  %7713 = vrot.lane.b32.xlu0 %v7480, 32
  %v7714 = vpop.permute.xlu0 %7713
  %7715 = vrot.lane.b32.xlu0 %v7483, 32
  %v7716 = vpop.permute.xlu0 %7715
  %7717 = vrot.lane.b32.xlu0 %v7486, 32
  %v7718 = vpop.permute.xlu0 %7717
  %7719 = vrot.lane.b32.xlu0 %v7688, 32
  %v7720 = vpop.permute.xlu0 %7719
  %v7737 = vrot.slane %v7383, 2
  %v7738 = vrot.slane %v7384, 2
  %v7739 = vsel %vm598, %v7737, %v7738
  %v7740 = vrot.slane %v7403, 2
  %v7741 = vrot.slane %v7404, 2
  %v7742 = vsel %vm598, %v7740, %v7741
  %7743 = vrot.lane.b32.xlu0 %v7540, 40
  %v7744 = vpop.permute.xlu0 %7743
  %7745 = vrot.lane.b32.xlu0 %v7543, 40
  %v7746 = vpop.permute.xlu0 %7745
  %7747 = vrot.lane.b32.xlu0 %v7546, 40
  %v7748 = vpop.permute.xlu0 %7747
  %7749 = vrot.lane.b32.xlu0 %v7549, 40
  %v7750 = vpop.permute.xlu0 %7749
  %7751 = vrot.lane.b32.xlu0 %v7552, 40
  %v7752 = vpop.permute.xlu0 %7751
  %7753 = vrot.lane.b32.xlu0 %v7555, 40
  %v7754 = vpop.permute.xlu0 %7753
  %7755 = vrot.lane.b32.xlu0 %v7558, 40
  %v7756 = vpop.permute.xlu0 %7755
  %7757 = vrot.lane.b32.xlu0 %v7739, 40
  %v7758 = vpop.permute.xlu0 %7757
  %7759 = vrot.lane.b32.xlu0 %v7564, 40
  %v7760 = vpop.permute.xlu0 %7759
  %7761 = vrot.lane.b32.xlu0 %v7567, 40
  %v7762 = vpop.permute.xlu0 %7761
  %7763 = vrot.lane.b32.xlu0 %v7570, 40
  %v7764 = vpop.permute.xlu0 %7763
  %7765 = vrot.lane.b32.xlu0 %v7573, 40
  %v7766 = vpop.permute.xlu0 %7765
  %7767 = vrot.lane.b32.xlu0 %v7576, 40
  %v7768 = vpop.permute.xlu0 %7767
  %7769 = vrot.lane.b32.xlu0 %v7579, 40
  %v7770 = vpop.permute.xlu0 %7769
  %7771 = vrot.lane.b32.xlu0 %v7582, 40
  %v7772 = vpop.permute.xlu0 %7771
  %7773 = vrot.lane.b32.xlu0 %v7742, 40
  %v7774 = vpop.permute.xlu0 %7773
  %7793 = vrot.lane.b32.xlu0 %v7371, 48
  %v7794 = vpop.permute.xlu0 %7793
  %7795 = vrot.lane.b32.xlu0 %v7373, 48
  %v7796 = vpop.permute.xlu0 %7795
  %7797 = vrot.lane.b32.xlu0 %v7375, 48
  %v7798 = vpop.permute.xlu0 %7797
  %7799 = vrot.lane.b32.xlu0 %v7377, 48
  %v7800 = vpop.permute.xlu0 %7799
  %7801 = vrot.lane.b32.xlu0 %v7379, 48
  %v7802 = vpop.permute.xlu0 %7801
  %7803 = vrot.lane.b32.xlu0 %v7381, 48
  %v7804 = vpop.permute.xlu0 %7803
  %7805 = vrot.lane.b32.xlu0 %v7383, 48
  %v7806 = vpop.permute.xlu0 %7805
  %7807 = vrot.lane.b32.xlu0 %v7385, 48
  %v7808 = vpop.permute.xlu0 %7807
  %7809 = vrot.lane.b32.xlu0 %v7391, 48
  %v7810 = vpop.permute.xlu0 %7809
  %7811 = vrot.lane.b32.xlu0 %v7393, 48
  %v7812 = vpop.permute.xlu0 %7811
  %7813 = vrot.lane.b32.xlu0 %v7395, 48
  %v7814 = vpop.permute.xlu0 %7813
  %7815 = vrot.lane.b32.xlu0 %v7397, 48
  %v7816 = vpop.permute.xlu0 %7815
  %7817 = vrot.lane.b32.xlu0 %v7399, 48
  %v7818 = vpop.permute.xlu0 %7817
  %7819 = vrot.lane.b32.xlu0 %v7401, 48
  %v7820 = vpop.permute.xlu0 %7819
  %7821 = vrot.lane.b32.xlu0 %v7403, 48
  %v7822 = vpop.permute.xlu0 %7821
  %7823 = vrot.lane.b32.xlu0 %v7405, 48
  %v7824 = vpop.permute.xlu0 %7823
  %v7843 = vrot.slane %v7385, 1
  %v7844 = vrot.slane %v7386, 1
  %v7845 = vsel %vm245, %v7843, %v7844
  %v7846 = vrot.slane %v7405, 1
  %v7847 = vrot.slane %v7406, 1
  %v7848 = vsel %vm245, %v7846, %v7847
  %7849 = vrot.lane.b32.xlu0 %v7447, 56
  %v7850 = vpop.permute.xlu0 %7849
  %7851 = vrot.lane.b32.xlu0 %v7450, 56
  %v7852 = vpop.permute.xlu0 %7851
  %7853 = vrot.lane.b32.xlu0 %v7453, 56
  %v7854 = vpop.permute.xlu0 %7853
  %7855 = vrot.lane.b32.xlu0 %v7456, 56
  %v7856 = vpop.permute.xlu0 %7855
  %7857 = vrot.lane.b32.xlu0 %v7459, 56
  %v7858 = vpop.permute.xlu0 %7857
  %7859 = vrot.lane.b32.xlu0 %v7462, 56
  %v7860 = vpop.permute.xlu0 %7859
  %7861 = vrot.lane.b32.xlu0 %v7685, 56
  %v7862 = vpop.permute.xlu0 %7861
  %7863 = vrot.lane.b32.xlu0 %v7845, 56
  %v7864 = vpop.permute.xlu0 %7863
  %7865 = vrot.lane.b32.xlu0 %v7471, 56
  %v7866 = vpop.permute.xlu0 %7865
  %7867 = vrot.lane.b32.xlu0 %v7474, 56
  %v7868 = vpop.permute.xlu0 %7867
  %7869 = vrot.lane.b32.xlu0 %v7477, 56
  %v7870 = vpop.permute.xlu0 %7869
  %7871 = vrot.lane.b32.xlu0 %v7480, 56
  %v7872 = vpop.permute.xlu0 %7871
  %7873 = vrot.lane.b32.xlu0 %v7483, 56
  %v7874 = vpop.permute.xlu0 %7873
  %7875 = vrot.lane.b32.xlu0 %v7486, 56
  %v7876 = vpop.permute.xlu0 %7875
  %7877 = vrot.lane.b32.xlu0 %v7688, 56
  %v7878 = vpop.permute.xlu0 %7877
  %7879 = vrot.lane.b32.xlu0 %v7848, 56
  %v7880 = vpop.permute.xlu0 %7879
  %v7897 = vrot.slane %v7385, 2
  %v7898 = vrot.slane %v7386, 2
  %v7899 = vsel %vm598, %v7897, %v7898
  %v7900 = vrot.slane %v7405, 2
  %v7901 = vrot.slane %v7406, 2
  %v7902 = vsel %vm598, %v7900, %v7901
  %7903 = vrot.lane.b32.xlu0 %v7543, 64
  %v7904 = vpop.permute.xlu0 %7903
  %7905 = vrot.lane.b32.xlu0 %v7546, 64
  %v7906 = vpop.permute.xlu0 %7905
  %7907 = vrot.lane.b32.xlu0 %v7549, 64
  %v7908 = vpop.permute.xlu0 %7907
  %7909 = vrot.lane.b32.xlu0 %v7552, 64
  %v7910 = vpop.permute.xlu0 %7909
  %7911 = vrot.lane.b32.xlu0 %v7555, 64
  %v7912 = vpop.permute.xlu0 %7911
  %7913 = vrot.lane.b32.xlu0 %v7558, 64
  %v7914 = vpop.permute.xlu0 %7913
  %7915 = vrot.lane.b32.xlu0 %v7739, 64
  %v7916 = vpop.permute.xlu0 %7915
  %7917 = vrot.lane.b32.xlu0 %v7899, 64
  %v7918 = vpop.permute.xlu0 %7917
  %7919 = vrot.lane.b32.xlu0 %v7567, 64
  %v7920 = vpop.permute.xlu0 %7919
  %7921 = vrot.lane.b32.xlu0 %v7570, 64
  %v7922 = vpop.permute.xlu0 %7921
  %7923 = vrot.lane.b32.xlu0 %v7573, 64
  %v7924 = vpop.permute.xlu0 %7923
  %7925 = vrot.lane.b32.xlu0 %v7576, 64
  %v7926 = vpop.permute.xlu0 %7925
  %7927 = vrot.lane.b32.xlu0 %v7579, 64
  %v7928 = vpop.permute.xlu0 %7927
  %7929 = vrot.lane.b32.xlu0 %v7582, 64
  %v7930 = vpop.permute.xlu0 %7929
  %7931 = vrot.lane.b32.xlu0 %v7742, 64
  %v7932 = vpop.permute.xlu0 %7931
  %7933 = vrot.lane.b32.xlu0 %v7902, 64
  %v7934 = vpop.permute.xlu0 %7933
  %v7951 = vsel %vm2220, %v7367, %v7488
  %v7952 = vsel %vm2220, %v7369, %v7490
  %v7953 = vsel %vm2220, %v7371, %v7492
  %v7954 = vsel %vm2220, %v7373, %v7494
  %v7955 = vsel %vm2220, %v7375, %v7496
  %v7956 = vsel %vm2220, %v7377, %v7498
  %v7957 = vsel %vm2220, %v7379, %v7500
  %v7958 = vsel %vm2220, %v7381, %v7502
  %v7959 = vsel %vm2220, %v7387, %v7504
  %v7960 = vsel %vm2220, %v7389, %v7506
  %v7961 = vsel %vm2220, %v7391, %v7508
  %v7962 = vsel %vm2220, %v7393, %v7510
  %v7963 = vsel %vm2220, %v7395, %v7512
  %v7964 = vsel %vm2220, %v7397, %v7514
  %v7965 = vsel %vm2220, %v7399, %v7516
  %v7966 = vsel %vm2220, %v7401, %v7518
  %v7967 = vsel %vm2350, %v7951, %v7584
  %v7968 = vsel %vm2350, %v7952, %v7586
  %v7969 = vsel %vm2350, %v7953, %v7588
  %v7970 = vsel %vm2350, %v7954, %v7590
  %v7971 = vsel %vm2350, %v7955, %v7592
  %v7972 = vsel %vm2350, %v7956, %v7594
  %v7973 = vsel %vm2350, %v7957, %v7596
  %v7974 = vsel %vm2350, %v7958, %v7598
  %v7975 = vsel %vm2350, %v7959, %v7600
  %v7976 = vsel %vm2350, %v7960, %v7602
  %v7977 = vsel %vm2350, %v7961, %v7604
  %v7978 = vsel %vm2350, %v7962, %v7606
  %v7979 = vsel %vm2350, %v7963, %v7608
  %v7980 = vsel %vm2350, %v7964, %v7610
  %v7981 = vsel %vm2350, %v7965, %v7612
  %v7982 = vsel %vm2350, %v7966, %v7614
  %v7983 = vsel %vm2480, %v7967, %v7634
  %v7984 = vsel %vm2480, %v7968, %v7636
  %v7985 = vsel %vm2480, %v7969, %v7638
  %v7986 = vsel %vm2480, %v7970, %v7640
  %v7987 = vsel %vm2480, %v7971, %v7642
  %v7988 = vsel %vm2480, %v7972, %v7644
  %v7989 = vsel %vm2480, %v7973, %v7646
  %v7990 = vsel %vm2480, %v7974, %v7648
  %v7991 = vsel %vm2480, %v7975, %v7650
  %v7992 = vsel %vm2480, %v7976, %v7652
  %v7993 = vsel %vm2480, %v7977, %v7654
  %v7994 = vsel %vm2480, %v7978, %v7656
  %v7995 = vsel %vm2480, %v7979, %v7658
  %v7996 = vsel %vm2480, %v7980, %v7660
  %v7997 = vsel %vm2480, %v7981, %v7662
  %v7998 = vsel %vm2480, %v7982, %v7664
  %v7999 = vsel %vm2610, %v7983, %v7690
  %v8000 = vsel %vm2610, %v7984, %v7692
  %v8001 = vsel %vm2610, %v7985, %v7694
  %v8002 = vsel %vm2610, %v7986, %v7696
  %v8003 = vsel %vm2610, %v7987, %v7698
  %v8004 = vsel %vm2610, %v7988, %v7700
  %v8005 = vsel %vm2610, %v7989, %v7702
  %v8006 = vsel %vm2610, %v7990, %v7704
  %v8007 = vsel %vm2610, %v7991, %v7706
  %v8008 = vsel %vm2610, %v7992, %v7708
  %v8009 = vsel %vm2610, %v7993, %v7710
  %v8010 = vsel %vm2610, %v7994, %v7712
  %v8011 = vsel %vm2610, %v7995, %v7714
  %v8012 = vsel %vm2610, %v7996, %v7716
  %v8013 = vsel %vm2610, %v7997, %v7718
  %v8014 = vsel %vm2610, %v7998, %v7720
  %v8015 = vsel %vm5384, %v7999, %v7744
  %v8016 = vsel %vm5384, %v8000, %v7746
  %v8017 = vsel %vm5384, %v8001, %v7748
  %v8018 = vsel %vm5384, %v8002, %v7750
  %v8019 = vsel %vm5384, %v8003, %v7752
  %v8020 = vsel %vm5384, %v8004, %v7754
  %v8021 = vsel %vm5384, %v8005, %v7756
  %v8022 = vsel %vm5384, %v8006, %v7758
  %v8023 = vsel %vm5384, %v8007, %v7760
  %v8024 = vsel %vm5384, %v8008, %v7762
  %v8025 = vsel %vm5384, %v8009, %v7764
  %v8026 = vsel %vm5384, %v8010, %v7766
  %v8027 = vsel %vm5384, %v8011, %v7768
  %v8028 = vsel %vm5384, %v8012, %v7770
  %v8029 = vsel %vm5384, %v8013, %v7772
  %v8030 = vsel %vm5384, %v8014, %v7774
  %v8031 = vsel %vm5401, %v8015, %v7794
  %v8032 = vsel %vm5401, %v8016, %v7796
  %v8033 = vsel %vm5401, %v8017, %v7798
  %v8034 = vsel %vm5401, %v8018, %v7800
  %v8035 = vsel %vm5401, %v8019, %v7802
  %v8036 = vsel %vm5401, %v8020, %v7804
  %v8037 = vsel %vm5401, %v8021, %v7806
  %v8038 = vsel %vm5401, %v8022, %v7808
  %v8039 = vsel %vm5401, %v8023, %v7810
  %v8040 = vsel %vm5401, %v8024, %v7812
  %v8041 = vsel %vm5401, %v8025, %v7814
  %v8042 = vsel %vm5401, %v8026, %v7816
  %v8043 = vsel %vm5401, %v8027, %v7818
  %v8044 = vsel %vm5401, %v8028, %v7820
  %v8045 = vsel %vm5401, %v8029, %v7822
  %v8046 = vsel %vm5401, %v8030, %v7824
  %v8047 = vsel %vm5418, %v8031, %v7850
  %v8048 = vsel %vm5418, %v8032, %v7852
  %v8049 = vsel %vm5418, %v8033, %v7854
  %v8050 = vsel %vm5418, %v8034, %v7856
  %v8051 = vsel %vm5418, %v8035, %v7858
  %v8052 = vsel %vm5418, %v8036, %v7860
  %v8053 = vsel %vm5418, %v8037, %v7862
  %v8054 = vsel %vm5418, %v8038, %v7864
  %v8055 = vsel %vm5418, %v8039, %v7866
  %v8056 = vsel %vm5418, %v8040, %v7868
  %v8057 = vsel %vm5418, %v8041, %v7870
  %v8058 = vsel %vm5418, %v8042, %v7872
  %v8059 = vsel %vm5418, %v8043, %v7874
  %v8060 = vsel %vm5418, %v8044, %v7876
  %v8061 = vsel %vm5418, %v8045, %v7878
  %v8062 = vsel %vm5418, %v8046, %v7880
  %v8063 = vsel %vm5435, %v8047, %v7904
  %v8064 = vsel %vm5435, %v8048, %v7906
  %v8065 = vsel %vm5435, %v8049, %v7908
  %v8066 = vsel %vm5435, %v8050, %v7910
  %v8067 = vsel %vm5435, %v8051, %v7912
  %v8068 = vsel %vm5435, %v8052, %v7914
  %v8069 = vsel %vm5435, %v8053, %v7916
  %v8070 = vsel %vm5435, %v8054, %v7918
  %v8071 = vsel %vm5435, %v8055, %v7920
  %v8072 = vsel %vm5435, %v8056, %v7922
  %v8073 = vsel %vm5435, %v8057, %v7924
  %v8074 = vsel %vm5435, %v8058, %v7926
  %v8075 = vsel %vm5435, %v8059, %v7928
  %v8076 = vsel %vm5435, %v8060, %v7930
  %v8077 = vsel %vm5435, %v8061, %v7932
  %v8078 = vsel %vm5435, %v8062, %v7934
  %v8079 = vld [vmem:[%s10] sm:$0xff]
  %v8080 = vld [vmem:[%s10 + $0x8] sm:$0xff]
  %v8081 = vld [vmem:[%s10 + $0x10] sm:$0xff]
  %v8082 = vld [vmem:[%s10 + $0x18] sm:$0xff]
  %v8083 = vld [vmem:[%s10 + $0x20] sm:$0xff]
  %v8084 = vld [vmem:[%s10 + $0x28] sm:$0xff]
  %v8085 = vld [vmem:[%s10 + $0x30] sm:$0xff]
  %v8086 = vld [vmem:[%s10 + $0x38] sm:$0xff]
  %v8087 = vld [vmem:[%s10 + $0x40] sm:$0xff]
  %v8088 = vld [vmem:[%s11] sm:$0x1]
  %v8090 = vperm.slane %v8088, 0
  %v8093 = vsel %vm5465, %v8063, 0
  %v8096 = vsel %vm5465, %v8064, 0
  %v8099 = vsel %vm5465, %v8065, 0
  %v8102 = vsel %vm5465, %v8066, 0
  %v8105 = vsel %vm5465, %v8067, 0
  %v8108 = vsel %vm5465, %v8068, 0
  %v8111 = vsel %vm5465, %v8069, 0
  %v8114 = vsel %vm5465, %v8070, 0
  %v8117 = vsel %vm5465, %v8071, 0
  %v8120 = vsel %vm5465, %v8072, 0
  %v8123 = vsel %vm5465, %v8073, 0
  %v8126 = vsel %vm5465, %v8074, 0
  %v8129 = vsel %vm5465, %v8075, 0
  %v8132 = vsel %vm5465, %v8076, 0
  %v8135 = vsel %vm5465, %v8077, 0
  %v8138 = vsel %vm5465, %v8078, 0
  %8140 = vmatpush.msra.mxu0 0.0
  %8141 = vmatpush.msra.mxu0 0.0
  %8142 = vmatpush.msra.mxu0 0.0
  %8143 = vmatpush.msra.mxu0 0.0
  %8144 = vmatpush.msra.mxu0 0.0
  %8145 = vmatpush.msra.mxu0 0.0
  %8146 = vmatpush.msra.mxu0 0.0
  %8147 = vmatpush.msra.mxu0 %v8087
  %8148 = vmatpush.msra.mxu0 %v8086
  %8149 = vmatpush.msra.mxu0 %v8085
  %8150 = vmatpush.msra.mxu0 %v8084
  %8151 = vmatpush.msra.mxu0 %v8083
  %8152 = vmatpush.msra.mxu0 %v8082
  %8153 = vmatpush.msra.mxu0 %v8081
  %8154 = vmatpush.msra.mxu0 %v8080
  %8155 = vmatpush.msra.mxu0 %v8079
  %8156 = vmatmul.f32.gmra.mxu0 %v8093
  %v8157 = vpop.f32.mrf.mxu0
  %v8158 = vadd.f32 %v8090, %v8157
  %8159 = vmatmul.f32.gmra.mxu0 %v8096
  %v8160 = vpop.f32.mrf.mxu0
  %v8161 = vadd.f32 %v8090, %v8160
  %8162 = vmatmul.f32.gmra.mxu0 %v8099
  %v8163 = vpop.f32.mrf.mxu0
  %v8164 = vadd.f32 %v8090, %v8163
  %8165 = vmatmul.f32.gmra.mxu0 %v8102
  %v8166 = vpop.f32.mrf.mxu0
  %v8167 = vadd.f32 %v8090, %v8166
  %8168 = vmatmul.f32.gmra.mxu0 %v8105
  %v8169 = vpop.f32.mrf.mxu0
  %v8170 = vadd.f32 %v8090, %v8169
  %8171 = vmatmul.f32.gmra.mxu0 %v8108
  %v8172 = vpop.f32.mrf.mxu0
  %v8173 = vadd.f32 %v8090, %v8172
  %8174 = vmatmul.f32.gmra.mxu0 %v8111
  %v8175 = vpop.f32.mrf.mxu0
  %v8176 = vadd.f32 %v8090, %v8175
  %8177 = vmatmul.f32.gmra.mxu0 %v8114
  %v8178 = vpop.f32.mrf.mxu0
  %v8179 = vadd.f32 %v8090, %v8178
  %8180 = vmatmul.f32.gmra.mxu0 %v8117
  %v8181 = vpop.f32.mrf.mxu0
  %v8182 = vadd.f32 %v8090, %v8181
  %8183 = vmatmul.f32.gmra.mxu0 %v8120
  %v8184 = vpop.f32.mrf.mxu0
  %v8185 = vadd.f32 %v8090, %v8184
  %8186 = vmatmul.f32.gmra.mxu0 %v8123
  %v8187 = vpop.f32.mrf.mxu0
  %v8188 = vadd.f32 %v8090, %v8187
  %8189 = vmatmul.f32.gmra.mxu0 %v8126
  %v8190 = vpop.f32.mrf.mxu0
  %v8191 = vadd.f32 %v8090, %v8190
  %8192 = vmatmul.f32.gmra.mxu0 %v8129
  %v8193 = vpop.f32.mrf.mxu0
  %v8194 = vadd.f32 %v8090, %v8193
  %8195 = vmatmul.f32.gmra.mxu0 %v8132
  %v8196 = vpop.f32.mrf.mxu0
  %v8197 = vadd.f32 %v8090, %v8196
  %8198 = vmatmul.f32.gmra.mxu0 %v8135
  %v8199 = vpop.f32.mrf.mxu0
  %v8200 = vadd.f32 %v8090, %v8199
  %8201 = vmatmul.f32.gmra.mxu0 %v8138
  %v8202 = vpop.f32.mrf.mxu0
  %v8203 = vadd.f32 %v8090, %v8202
  %8204 = vdwg.mxu0
  %v8205 = vadd.f32 %v8158, %v6449
  %v8206 = vadd.f32 %v8161, %v6450
  %v8207 = vadd.f32 %v8164, %v6451
  %v8208 = vadd.f32 %v8167, %v6452
  %v8209 = vadd.f32 %v8170, %v6453
  %v8210 = vadd.f32 %v8173, %v6454
  %v8211 = vadd.f32 %v8176, %v6455
  %v8212 = vadd.f32 %v8179, %v6456
  %v8213 = vadd.f32 %v8182, %v6457
  %v8214 = vadd.f32 %v8185, %v6458
  %v8215 = vadd.f32 %v8188, %v6459
  %v8216 = vadd.f32 %v8191, %v6460
  %v8217 = vadd.f32 %v8194, %v6461
  %v8218 = vadd.f32 %v8197, %v6462
  %v8219 = vadd.f32 %v8200, %v6463
  %v8220 = vadd.f32 %v8203, %v6464
  %8221 = vxpose.xlu0.b32.start [1/16] %v8205, 128
  %8222 = vxpose.xlu0.b32.cont [2/16] %v8206, 128
  %8223 = vxpose.xlu0.b32.cont [3/16] %v8207, 128
  %8224 = vxpose.xlu0.b32.cont [4/16] %v8208, 128
  %8225 = vxpose.xlu0.b32.cont [5/16] %v8209, 128
  %8226 = vxpose.xlu0.b32.cont [6/16] %v8210, 128
  %8227 = vxpose.xlu0.b32.cont [7/16] %v8211, 128
  %8228 = vxpose.xlu0.b32.cont [8/16] %v8212, 128
  %8229 = vxpose.xlu0.b32.cont [9/16] %v8213, 128
  %8230 = vxpose.xlu0.b32.cont [10/16] %v8214, 128
  %8231 = vxpose.xlu0.b32.cont [11/16] %v8215, 128
  %8232 = vxpose.xlu0.b32.cont [12/16] %v8216, 128
  %8233 = vxpose.xlu0.b32.cont [13/16] %v8217, 128
  %8234 = vxpose.xlu0.b32.cont [14/16] %v8218, 128
  %8235 = vxpose.xlu0.b32.cont [15/16] %v8219, 128
  %8236 = vxpose.xlu0.b32.end [16/16] %v8220, 128
  %v8237 = vpop.trf.xlu0
  %v8238 = vpop.trf.xlu0
  %v8239 = vpop.trf.xlu0
  %v8240 = vpop.trf.xlu0
  %v8241 = vpop.trf.xlu0
  %v8242 = vpop.trf.xlu0
  %v8243 = vpop.trf.xlu0
  %v8244 = vpop.trf.xlu0
  %v8245 = vpop.trf.xlu0
  %v8246 = vpop.trf.xlu0
  %v8247 = vpop.trf.xlu0
  %v8248 = vpop.trf.xlu0
  %v8249 = vpop.trf.xlu0
  %v8250 = vpop.trf.xlu0
  %v8251 = vpop.trf.xlu0
  %v8252 = vpop.trf.xlu0
  %8253 = vst [vmem:[%s12] sm:$0xff] %v8237
  // Predicated region
  $region50: #{conv_sequence.1} parent=0 // pred_check
    _
  $region51: #{conv_sequence.1} parent=0 // pred_check_branch
    %8255 = sbr.rel (0) target = $region53
  $region52: #{conv_sequence.1} parent=0 // pred_region
    _
  $region53: #{conv_sequence.1} parent=0 // pred_fallthru
    _
  // Predicated region
  $region54: #{conv_sequence.1} parent=0 // pred_check
    _
  $region55: #{conv_sequence.1} parent=0 // pred_check_branch
    %8257 = sbr.rel (0) target = $region57
  $region56: #{conv_sequence.1} parent=0 // pred_region
    _
  $region57: #{conv_sequence.1} parent=0 // pred_fallthru
    _

</llo_original>
